<compile_context>
chip_gen: v6e
topology: v6e:2x2x1
jax: 0.10.0
libtpu: 0.0.40
codegen_flags: <defaults>
</compile_context>

<pallas_src>
import math
from functools import partial

import jax
import jax.numpy as jnp
from jax import lax
from jax.experimental import pallas as pl
from jax.experimental.pallas import tpu as pltpu


# -----------------------------------------------------------------------------
# In-kernel helpers
# -----------------------------------------------------------------------------

def _layer_norm(x, gamma, beta, eps=1e-5):
    x = x.astype(jnp.float32)
    mu = jnp.mean(x, axis=-1, keepdims=True)
    var = jnp.mean(jnp.square(x - mu), axis=-1, keepdims=True)
    return (x - mu) * lax.rsqrt(var + eps) * gamma + beta


def _complex_from_stacked(p, m, n, b_minus, b_plus):
    """p = [yr;yi] @ [wr|wi]  (shape (2m, 2n)) -> (real, imag) each (m, n).

    ComplexLinear: yr' = yr@wr - yi@wi + (br - bi)
                   yi' = yi@wr + yr@wi + (br + bi)
    """
    rr = p[:m, :n]
    ri = p[:m, n:]
    ir = p[m:, :n]
    ii = p[m:, n:]
    return rr - ii + b_minus, ir + ri + b_plus


def _softmax_lastdim(s):
    s = s - jnp.max(s, axis=-1, keepdims=True)
    ex = jnp.exp(s)
    # Exact normalization: the combined a_real = softmax(.) - softmax(.) rows
    # cancel to ~0, so approximate-reciprocal error would be amplified.
    return ex / jnp.sum(ex, axis=-1, keepdims=True)


def _swap01(t):
    """(A, B, D) -> (B, A, D); layout-aware einshape when available."""
    einshape = getattr(pltpu, "einshape", None)
    if einshape is not None:
        return einshape("mhd->hmd", t)
    return jnp.swapaxes(t, 0, 1)


def _batch_tile(batch, seq):
    """Batch tile: >= 2 'parallel' grid steps when possible (v7x dual
    TensorCore / megacore) while bounding per-step rows (v7x 64 MiB VMEM).
    Falls back to a single full-extent step if sub-tiles would violate the
    (8,128) row rule."""
    if batch <= 1:
        return 1
    for tb in (4, 2, 1):
        if batch % tb == 0 and batch // tb >= 2 and (tb * seq) % 8 == 0:
            return tb
    return batch


def _nbytes(x):
    return math.prod(x.shape) * jnp.dtype(x.dtype).itemsize


def _vmem_limit(block_bytes):
    # Double-buffered blocks + headroom for in-kernel f32 temporaries,
    # clamped so we never request beyond ~75% of v7x's 64 MiB physical VMEM.
    est = 8 * block_bytes
    return int(min(max(est, 32 * 1024 * 1024), 48 * 1024 * 1024))


# -----------------------------------------------------------------------------
# Kernels
# -----------------------------------------------------------------------------

def _input_proj_kernel(a_ref, b_ref, pos_ref,
                       wa_ref, ba_ref, wb_ref, bb_ref,
                       wp_ref, bpm_ref, bpp_ref,
                       x2_ref, *, nb, seq, embed_scale):
    # fc_a / fc_b (real / imag input projections to d=512), bf16 MXU, f32 acc.
    cdt = wa_ref.dtype
    a = jnp.dot(a_ref[...].astype(cdt), wa_ref[...],
                preferred_element_type=jnp.float32) + ba_ref[...]
    b = jnp.dot(b_ref[...].astype(cdt), wb_ref[...],
                preferred_element_type=jnp.float32) + bb_ref[...]
    m = nb * seq
    e = wp_ref.shape[1] // 2

    # Complex projection (512 -> E) as one wide stacked matmul.
    ab = jnp.concatenate([a, b], axis=0).astype(wp_ref.dtype)          # (2M, 512)
    p = jnp.dot(ab, wp_ref[...], preferred_element_type=jnp.float32)   # (2M, 2E)
    xr, xi = _complex_from_stacked(p, m, e, bpm_ref[...], bpp_ref[...])

    # Encoder input: sqrt(E) scaling + sinusoidal positional embedding.
    # Only the (seq, E) table is streamed; broadcast per batch in-kernel.
    pos = jnp.broadcast_to(pos_ref[...][None, :, :], (nb, seq, e)).reshape(m, e)
    xr = xr * embed_scale + pos
    xi = xi * embed_scale + pos

    # Lane-dense single output slab [xr | xi].
    x2_ref[...] = jnp.concatenate([xr, xi], axis=1).astype(x2_ref.dtype)


def _layer_kernel(x2_ref,
                  g0r_ref, b0r_ref, g0i_ref, b0i_ref,
                  wqkv_ref, bqm_ref, bqp_ref,
                  wout_ref, bom_ref, bop_ref,
                  g1r_ref, b1r_ref, g1i_ref, b1i_ref,
                  w1_ref, b1m_ref, b1p_ref,
                  w2_ref, b2m_ref, b2p_ref,
                  gfr_ref, bfr_ref, gfi_ref, bfi_ref,
                  o2_ref,
                  *, nb, seq, num_heads, head_dim, scale, apply_final_ln):
    e = num_heads * head_dim
    m = nb * seq
    x2 = x2_ref[...]                      # (M, 2E) = [xr | xi], batch-major rows
    xr = x2[:, :e].astype(jnp.float32)
    xi = x2[:, e:].astype(jnp.float32)

    # ------------------------- attention sub-block -------------------------
    yr = _layer_norm(xr, g0r_ref[...], b0r_ref[...])
    yi = _layer_norm(xi, g0i_ref[...], b0i_ref[...])

    # Complex QKV in-projection: ONE wide stacked bf16 matmul (2M, E)@(E, 6E).
    y2 = jnp.concatenate([yr, yi], axis=0).astype(wqkv_ref.dtype)
    p = jnp.dot(y2, wqkv_ref[...], preferred_element_type=jnp.float32)
    qkv_r, qkv_i = _complex_from_stacked(p, m, 3 * e, bqm_ref[...], bqp_ref[...])

    def to_heads(t):          # (M, E) -> (H*nb, L, Dh): all heads batched
        t = t.reshape(m, num_heads, head_dim)
        return _swap01(t).reshape(num_heads * nb, seq, head_dim)

    def from_heads(t):        # (H*nb, L, Dh) -> (M, E)
        t = t.reshape(num_heads, m, head_dim)
        return _swap01(t).reshape(m, e)

    qr = to_heads(qkv_r[:, :e] * scale).astype(jnp.bfloat16)
    qi = to_heads(qkv_i[:, :e] * scale).astype(jnp.bfloat16)
    kr = to_heads(qkv_r[:, e:2 * e])
    ki = to_heads(qkv_i[:, e:2 * e])
    vr = to_heads(qkv_r[:, 2 * e:])
    vi = to_heads(qkv_i[:, 2 * e:])

    # 4 score blocks from 2 wide bf16 MXU einsums against stacked K=[Kr;Ki],
    # batched over (head x batch) in one pass (no per-head Python loop).
    k2 = jnp.concatenate([kr, ki], axis=1).astype(jnp.bfloat16)      # (HB, 2L, Dh)
    s_r = jnp.einsum('bqd,bkd->bqk', qr, k2,
                     preferred_element_type=jnp.float32)             # [Qr.Kr | Qr.Ki]
    s_i = jnp.einsum('bqd,bkd->bqk', qi, k2,
                     preferred_element_type=jnp.float32)             # [Qi.Kr | Qi.Ki]

    a_real = _softmax_lastdim(s_r[:, :, :seq]) - _softmax_lastdim(s_i[:, :, seq:])
    a_imag = _softmax_lastdim(s_r[:, :, seq:]) + _softmax_lastdim(s_i[:, :, :seq])
    # TODO(synk): attn_dropout is eval-mode identity here.
    # TODO(synk): attn_mask=True (causal mask) is not implemented; the module
    #             default attn_mask=False is what this forward matches.

    # 4 output blocks from 2 wide bf16 MXU einsums against stacked V=[Vr|Vi].
    v2 = jnp.concatenate([vr, vi], axis=2).astype(jnp.bfloat16)      # (HB, L, 2Dh)
    o_real = jnp.einsum('bqk,bkd->bqd', a_real.astype(jnp.bfloat16), v2,
                        preferred_element_type=jnp.float32)          # [aR.Vr | aR.Vi]
    o_imag = jnp.einsum('bqk,bkd->bqd', a_imag.astype(jnp.bfloat16), v2,
                        preferred_element_type=jnp.float32)          # [aI.Vr | aI.Vi]

    ar = from_heads(o_real[:, :, :head_dim] - o_imag[:, :, head_dim:])
    ai = from_heads(o_real[:, :, head_dim:] + o_imag[:, :, :head_dim])

    # Complex out-projection (stacked wide bf16 matmul) + residual.
    a2 = jnp.concatenate([ar, ai], axis=0).astype(wout_ref.dtype)
    po = jnp.dot(a2, wout_ref[...], preferred_element_type=jnp.float32)
    pr, pi = _complex_from_stacked(po, m, e, bom_ref[...], bop_ref[...])
    xr = xr + pr
    xi = xi + pi
    # TODO(synk): res_dropout is eval-mode identity here.

    # ------------------------ feed-forward sub-block ------------------------
    yr = _layer_norm(xr, g1r_ref[...], b1r_ref[...])
    yi = _layer_norm(xi, g1i_ref[...], b1i_ref[...])

    h = w1_ref.shape[1] // 2
    y2 = jnp.concatenate([yr, yi], axis=0).astype(w1_ref.dtype)
    p1 = jnp.dot(y2, w1_ref[...], preferred_element_type=jnp.float32)
    fr, fi = _complex_from_stacked(p1, m, h, b1m_ref[...], b1p_ref[...])
    fr = jnp.maximum(fr, 0.0)
    fi = jnp.maximum(fi, 0.0)
    # TODO(synk): relu_dropout is eval-mode identity here.

    f2 = jnp.concatenate([fr, fi], axis=0).astype(w2_ref.dtype)
    p2 = jnp.dot(f2, w2_ref[...], preferred_element_type=jnp.float32)
    gr, gi = _complex_from_stacked(p2, m, e, b2m_ref[...], b2p_ref[...])
    xr = xr + gr
    xi = xi + gi

    # Final dual LayerNorm folded into the last layer's kernel (no extra call).
    if apply_final_ln:
        xr = _layer_norm(xr, gfr_ref[...], bfr_ref[...])
        xi = _layer_norm(xi, gfi_ref[...], bfi_ref[...])

    o2_ref[...] = jnp.concatenate([xr, xi], axis=1).astype(o2_ref.dtype)


# -----------------------------------------------------------------------------
# pallas_call wrappers
# -----------------------------------------------------------------------------

def _full_spec(arr):
    return pl.BlockSpec(arr.shape, lambda i: (0,) * arr.ndim)


def input_projection(a, b, pos, params, *, batch, seq, embed_scale):
    m, cin = a.shape
    e = pos.shape[1]
    tb = _batch_tile(batch, seq)
    rows = tb * seq
    row = lambda d: pl.BlockSpec((rows, d), lambda i: (i, 0))
    args = (a, b, pos,
            params["fc_a_w"], params["fc_a_b"],
            params["fc_b_w"], params["fc_b_b"],
            params["proj"]["w"], params["proj"]["bm"], params["proj"]["bp"])
    block_bytes = (2 * rows * cin * 4 + rows * 2 * e * 4
                   + sum(_nbytes(x) for x in args[2:]))
    return pl.pallas_call(
        partial(_input_proj_kernel, nb=tb, seq=seq, embed_scale=embed_scale),
        grid=(batch // tb,),
        in_specs=[row(cin), row(cin)] + [_full_spec(x) for x in args[2:]],
        out_specs=row(2 * e),
        out_shape=jax.ShapeDtypeStruct((m, 2 * e), jnp.float32),
        compiler_params=pltpu.CompilerParams(
            dimension_semantics=("parallel",),
            vmem_limit_bytes=_vmem_limit(block_bytes)),
    )(*args)


def transformer_layer(x2, lp, fln, *, batch, seq, num_heads, apply_final_ln):
    m, e2 = x2.shape
    e = e2 // 2
    head_dim = e // num_heads
    tb = _batch_tile(batch, seq)
    rows = tb * seq
    row = pl.BlockSpec((rows, e2), lambda i: (i, 0))
    args = (x2,
            lp["ln0r_g"], lp["ln0r_b"], lp["ln0i_g"], lp["ln0i_b"],
            lp["qkv"]["w"], lp["qkv"]["bm"], lp["qkv"]["bp"],
            lp["out"]["w"], lp["out"]["bm"], lp["out"]["bp"],
            lp["ln1r_g"], lp["ln1r_b"], lp["ln1i_g"], lp["ln1i_b"],
            lp["fc1"]["w"], lp["fc1"]["bm"], lp["fc1"]["bp"],
            lp["fc2"]["w"], lp["fc2"]["bm"], lp["fc2"]["bp"],
            fln["g_r"], fln["b_r"], fln["g_i"], fln["b_i"])
    block_bytes = 2 * rows * e2 * 4 + sum(_nbytes(x) for x in args[1:])
    return pl.pallas_call(
        partial(_layer_kernel, nb=tb, seq=seq, num_heads=num_heads,
                head_dim=head_dim, scale=head_dim ** -0.5,
                apply_final_ln=apply_final_ln),
        grid=(batch // tb,),
        in_specs=[row] + [_full_spec(x) for x in args[1:]],
        out_specs=row,
        out_shape=jax.ShapeDtypeStruct((m, e2), jnp.float32),
        compiler_params=pltpu.CompilerParams(
            dimension_semantics=("parallel",),
            vmem_limit_bytes=_vmem_limit(block_bytes)),
    )(*args)


# -----------------------------------------------------------------------------
# Parameters (deterministic, synthetic init mimicking nn.Linear scale).
# Weights pre-transposed to (K, N), complex pairs pre-concatenated to [wr|wi]
# and pre-cast to bf16; bias combos (br-bi)/(br+bi) precomputed.
# -----------------------------------------------------------------------------

def _init_dense(key, fan_in, fan_out):
    k1, k2 = jax.random.split(key)
    bound = 1.0 / math.sqrt(fan_in)
    w = jax.random.uniform(k1, (fan_in, fan_out), jnp.float32, -bound, bound)
    b = jax.random.uniform(k2, (fan_out,), jnp.float32, -bound, bound)
    return w, b


def _init_complex(key, fan_in, fan_out):
    k1, k2 = jax.random.split(key)
    wr, br = _init_dense(k1, fan_in, fan_out)
    wi, bi = _init_dense(k2, fan_in, fan_out)
    return {
        "w": jnp.concatenate([wr, wi], axis=1).astype(jnp.bfloat16),   # (K, 2N)
        "bm": (br - bi).reshape(1, fan_out),
        "bp": (br + bi).reshape(1, fan_out),
    }


def init_params(key, input_dim, num_layers):
    embed_dim = input_dim
    d = 512
    keys = iter(jax.random.split(key, 3 + 4 * num_layers))

    params = {}
    wa, ba = _init_dense(next(keys), input_dim, d)
    wb, bb = _init_dense(next(keys), input_dim, d)
    params["fc_a_w"] = wa.astype(jnp.bfloat16)
    params["fc_a_b"] = ba.reshape(1, d)
    params["fc_b_w"] = wb.astype(jnp.bfloat16)
    params["fc_b_b"] = bb.reshape(1, d)
    params["proj"] = _init_complex(next(keys), d, embed_dim)

    ones = lambda: jnp.ones((1, embed_dim), jnp.float32)
    zeros = lambda: jnp.zeros((1, embed_dim), jnp.float32)

    layers = []
    for _ in range(num_layers):
        layers.append({
            "qkv": _init_complex(next(keys), embed_dim, 3 * embed_dim),
            "out": _init_complex(next(keys), embed_dim, embed_dim),
            "fc1": _init_complex(next(keys), embed_dim, 4 * embed_dim),
            "fc2": _init_complex(next(keys), 4 * embed_dim, embed_dim),
            "ln0r_g": ones(), "ln0r_b": zeros(),
            "ln0i_g": ones(), "ln0i_b": zeros(),
            "ln1r_g": ones(), "ln1r_b": zeros(),
            "ln1i_g": ones(), "ln1i_b": zeros(),
        })
    params["layers"] = layers
    params["lnf_r_g"] = ones()
    params["lnf_r_b"] = zeros()
    params["lnf_i_g"] = ones()
    params["lnf_i_b"] = zeros()
    return params


# -----------------------------------------------------------------------------
# Forward (plain-JAX glue is only reshapes / pos-table / the layer loop)
# -----------------------------------------------------------------------------

def sinusoidal_pos_emb(seq_len, dim, padding_idx=0):
    """fairseq-style sinusoidal positional embedding (positions start at 1)."""
    half = dim // 2
    step = math.log(10000.0) / (half - 1)
    freqs = jnp.exp(jnp.arange(half, dtype=jnp.float32) * -step)
    pos = jnp.arange(padding_idx + 1, padding_idx + 1 + seq_len, dtype=jnp.float32)
    args = pos[:, None] * freqs[None, :]
    pe = jnp.concatenate([jnp.sin(args), jnp.cos(args)], axis=1)
    if dim % 2 == 1:
        pe = jnp.concatenate([pe, jnp.zeros((seq_len, 1), jnp.float32)], axis=1)
    return pe  # (seq_len, dim)


def complex_transformer_forward(params, input_a, input_b, *, num_heads, embed_dim):
    # input_a/input_b: (N, L, C_in)
    batch, seq, c_in = input_a.shape
    m = batch * seq

    # Batch-major (N*L, C) rows: a pure row permutation of the PyTorch (L,N,C)
    # layout; every op (LN, linear, per-batch attention, residual) is
    # permutation-equivariant, so the module's transpose(0,1) disappears.
    a = input_a.reshape(m, c_in)
    b = input_b.reshape(m, c_in)

    pos = sinusoidal_pos_emb(seq, embed_dim)          # (L, E) table only
    embed_scale = math.sqrt(embed_dim)

    # fc_a + fc_b + complex proj + scale + pos-emb: one fused kernel.
    x2 = input_projection(a, b, pos, params, batch=batch, seq=seq,
                          embed_scale=embed_scale)
    # TODO(synk): encoder-input dropout is eval-mode identity here.

    fln = {"g_r": params["lnf_r_g"], "b_r": params["lnf_r_b"],
           "g_i": params["lnf_i_g"], "b_i": params["lnf_i_b"]}
    n_layers = len(params["layers"])
    for li, lp in enumerate(params["layers"]):
        # One fused pallas_call per layer: LN+QKV+attention+out-proj+residual
        # + LN+fc1+ReLU+fc2+residual (+ final dual LN on the last layer).
        x2 = transformer_layer(x2, lp, fln, batch=batch, seq=seq,
                               num_heads=num_heads,
                               apply_final_ln=(li == n_layers - 1))

    h_a = x2[:, :embed_dim].reshape(batch, seq, embed_dim)
    h_b = x2[:, embed_dim:].reshape(batch, seq, embed_dim)
    return h_a, h_b


# -----------------------------------------------------------------------------
# Main
# -----------------------------------------------------------------------------

if __name__ == "__main__":
    # Small config consistent with the module:
    #   layers=2, time_step(seq)=8, input_dim=embed_dim=32, hidden_size=32,
    #   output_dim=16 (unused by forward), num_heads=4, batch=2.
    LAYERS, BATCH, SEQ, INPUT_DIM, NUM_HEADS = 2, 2, 8, 32, 4

    key = jax.random.PRNGKey(0)
    k_a, k_b, k_p = jax.random.split(key, 3)
    input_a = jax.random.normal(k_a, (BATCH, SEQ, INPUT_DIM), jnp.float32)
    input_b = jax.random.normal(k_b, (BATCH, SEQ, INPUT_DIM), jnp.float32)

    params = init_params(k_p, INPUT_DIM, LAYERS)

    fwd = jax.jit(partial(complex_transformer_forward,
                          num_heads=NUM_HEADS, embed_dim=INPUT_DIM))
    h_as, h_bs = fwd(params, input_a, input_b)
    jax.block_until_ready((h_as, h_bs))

    assert h_as.shape == (BATCH, SEQ, INPUT_DIM)
    assert h_bs.shape == (BATCH, SEQ, INPUT_DIM)
    assert bool(jnp.all(jnp.isfinite(h_as))) and bool(jnp.all(jnp.isfinite(h_bs)))
    # TODO(synk): training-mode dropout (attn/relu/res/out) is not implemented
    # (forward here matches eval-mode semantics).
    print("KERNEL_OK")
</pallas_src>

<mosaic_0001>
module attributes {stable_mosaic.version = 11 : i64} {
  func.func @_input_proj_kernel(%arg0: i32, %arg1: memref<8x32xf32, #tpu.memory_space<vmem>>, %arg2: memref<8x32xf32, #tpu.memory_space<vmem>>, %arg3: memref<8x32xf32, #tpu.memory_space<vmem>>, %arg4: memref<32x512xbf16, #tpu.memory_space<vmem>>, %arg5: memref<1x512xf32, #tpu.memory_space<vmem>>, %arg6: memref<32x512xbf16, #tpu.memory_space<vmem>>, %arg7: memref<1x512xf32, #tpu.memory_space<vmem>>, %arg8: memref<512x64xbf16, #tpu.memory_space<vmem>>, %arg9: memref<1x32xf32, #tpu.memory_space<vmem>>, %arg10: memref<1x32xf32, #tpu.memory_space<vmem>>, %arg11: memref<8x64xf32, #tpu.memory_space<vmem>>) attributes {dimension_semantics = [#tpu.dimension_semantics<parallel>], iteration_bounds = array<i64: 2>, scalar_prefetch = 0 : i64, scratch_operands = 0 : i64, tpu.core_type = #tpu.core_type<tc>, window_params = [{transform_indices = @transform_0, window_bounds = array<i64: 8, 32>}, {transform_indices = @transform_1, window_bounds = array<i64: 8, 32>}, {pipeline_mode = #tpu.pipeline_mode<synchronous>, transform_indices = @transform_2, window_bounds = array<i64: 8, 32>}, {pipeline_mode = #tpu.pipeline_mode<synchronous>, transform_indices = @transform_3, window_bounds = array<i64: 32, 512>}, {pipeline_mode = #tpu.pipeline_mode<synchronous>, transform_indices = @transform_4, window_bounds = array<i64: 1, 512>}, {pipeline_mode = #tpu.pipeline_mode<synchronous>, transform_indices = @transform_5, window_bounds = array<i64: 32, 512>}, {pipeline_mode = #tpu.pipeline_mode<synchronous>, transform_indices = @transform_6, window_bounds = array<i64: 1, 512>}, {pipeline_mode = #tpu.pipeline_mode<synchronous>, transform_indices = @transform_7, window_bounds = array<i64: 512, 64>}, {pipeline_mode = #tpu.pipeline_mode<synchronous>, transform_indices = @transform_8, window_bounds = array<i64: 1, 32>}, {pipeline_mode = #tpu.pipeline_mode<synchronous>, transform_indices = @transform_9, window_bounds = array<i64: 1, 32>}, {transform_indices = @transform_10, window_bounds = array<i64: 8, 64>}]} {
    %c0 = arith.constant 0 : index
    %c0_0 = arith.constant 0 : index
    %0 = vector.load %arg1[%c0, %c0_0] : memref<8x32xf32, #tpu.memory_space<vmem>>, vector<8x32xf32>
    %1 = arith.truncf %0 : vector<8x32xf32> to vector<8x32xbf16>
    %c0_1 = arith.constant 0 : index
    %c0_2 = arith.constant 0 : index
    %2 = vector.load %arg4[%c0_1, %c0_2] : memref<32x512xbf16, #tpu.memory_space<vmem>>, vector<32x512xbf16>
    %cst = arith.constant dense<0.000000e+00> : vector<8x512xf32>
    %3 = tpu.matmul %1, %2, %cst {dimension_numbers = #tpu.dot_dimension_numbers<[1], [0], [0], [1], [0, 0, 1, 1], [], []>} : vector<8x32xbf16>, vector<32x512xbf16>, vector<8x512xf32> -> vector<8x512xf32>
    %c0_3 = arith.constant 0 : index
    %c0_4 = arith.constant 0 : index
    %4 = vector.load %arg5[%c0_3, %c0_4] : memref<1x512xf32, #tpu.memory_space<vmem>>, vector<1x512xf32>
    %5 = vector.broadcast %4 : vector<1x512xf32> to vector<8x512xf32>
    %6 = arith.addf %3, %5 : vector<8x512xf32>
    %c0_5 = arith.constant 0 : index
    %c0_6 = arith.constant 0 : index
    %7 = vector.load %arg2[%c0_5, %c0_6] : memref<8x32xf32, #tpu.memory_space<vmem>>, vector<8x32xf32>
    %8 = arith.truncf %7 : vector<8x32xf32> to vector<8x32xbf16>
    %c0_7 = arith.constant 0 : index
    %c0_8 = arith.constant 0 : index
    %9 = vector.load %arg6[%c0_7, %c0_8] : memref<32x512xbf16, #tpu.memory_space<vmem>>, vector<32x512xbf16>
    %cst_9 = arith.constant dense<0.000000e+00> : vector<8x512xf32>
    %10 = tpu.matmul %8, %9, %cst_9 {dimension_numbers = #tpu.dot_dimension_numbers<[1], [0], [0], [1], [0, 0, 1, 1], [], []>} : vector<8x32xbf16>, vector<32x512xbf16>, vector<8x512xf32> -> vector<8x512xf32>
    %c0_10 = arith.constant 0 : index
    %c0_11 = arith.constant 0 : index
    %11 = vector.load %arg7[%c0_10, %c0_11] : memref<1x512xf32, #tpu.memory_space<vmem>>, vector<1x512xf32>
    %12 = vector.broadcast %11 : vector<1x512xf32> to vector<8x512xf32>
    %13 = arith.addf %10, %12 : vector<8x512xf32>
    %14 = tpu.concatenate %6, %13 in 0 : vector<8x512xf32>, vector<8x512xf32> -> vector<16x512xf32>
    %15 = arith.truncf %14 : vector<16x512xf32> to vector<16x512xbf16>
    %c0_12 = arith.constant 0 : index
    %c0_13 = arith.constant 0 : index
    %16 = vector.load %arg8[%c0_12, %c0_13] : memref<512x64xbf16, #tpu.memory_space<vmem>>, vector<512x64xbf16>
    %cst_14 = arith.constant dense<0.000000e+00> : vector<16x64xf32>
    %17 = tpu.matmul %15, %16, %cst_14 {dimension_numbers = #tpu.dot_dimension_numbers<[1], [0], [0], [1], [0, 0, 1, 1], [], []>} : vector<16x512xbf16>, vector<512x64xbf16>, vector<16x64xf32> -> vector<16x64xf32>
    %c0_15 = arith.constant 0 : index
    %c0_16 = arith.constant 0 : index
    %18 = vector.load %arg9[%c0_15, %c0_16] : memref<1x32xf32, #tpu.memory_space<vmem>>, vector<1x32xf32>
    %c0_17 = arith.constant 0 : index
    %c0_18 = arith.constant 0 : index
    %19 = vector.load %arg10[%c0_17, %c0_18] : memref<1x32xf32, #tpu.memory_space<vmem>>, vector<1x32xf32>
    %20 = vector.extract_strided_slice %17 {offsets = [0, 0], sizes = [8, 32], strides = [1, 1]} : vector<16x64xf32> to vector<8x32xf32>
    %21 = vector.extract_strided_slice %17 {offsets = [0, 32], sizes = [8, 32], strides = [1, 1]} : vector<16x64xf32> to vector<8x32xf32>
    %22 = vector.extract_strided_slice %17 {offsets = [8, 0], sizes = [8, 32], strides = [1, 1]} : vector<16x64xf32> to vector<8x32xf32>
    %23 = vector.extract_strided_slice %17 {offsets = [8, 32], sizes = [8, 32], strides = [1, 1]} : vector<16x64xf32> to vector<8x32xf32>
    %24 = arith.subf %20, %23 : vector<8x32xf32>
    %25 = vector.broadcast %18 : vector<1x32xf32> to vector<8x32xf32>
    %26 = arith.addf %24, %25 : vector<8x32xf32>
    %27 = arith.addf %22, %21 : vector<8x32xf32>
    %28 = vector.broadcast %19 : vector<1x32xf32> to vector<8x32xf32>
    %29 = arith.addf %27, %28 : vector<8x32xf32>
    %c0_19 = arith.constant 0 : index
    %c0_20 = arith.constant 0 : index
    %30 = vector.load %arg3[%c0_19, %c0_20] : memref<8x32xf32, #tpu.memory_space<vmem>>, vector<8x32xf32>
    %31 = vector.shape_cast %30 : vector<8x32xf32> to vector<1x8x32xf32>
    %32 = vector.shape_cast %31 : vector<1x8x32xf32> to vector<8x32xf32>
    %cst_21 = arith.constant 5.65685415 : f32
    %33 = vector.broadcast %cst_21 : f32 to vector<8x32xf32>
    %34 = arith.mulf %26, %33 : vector<8x32xf32>
    %35 = arith.addf %34, %32 : vector<8x32xf32>
    %cst_22 = arith.constant 5.65685415 : f32
    %36 = vector.broadcast %cst_22 : f32 to vector<8x32xf32>
    %37 = arith.mulf %29, %36 : vector<8x32xf32>
    %38 = arith.addf %37, %32 : vector<8x32xf32>
    %39 = tpu.concatenate %35, %38 in 1 : vector<8x32xf32>, vector<8x32xf32> -> vector<8x64xf32>
    %c0_23 = arith.constant 0 : index
    %c0_24 = arith.constant 0 : index
    %40 = vector.load %arg11[%c0_23, %c0_24] : memref<8x64xf32, #tpu.memory_space<vmem>>, vector<8x64xf32>
    tpu.vector_store %arg11[%c0_23, %c0_24], %39 {strides = array<i32>} : memref<8x64xf32, #tpu.memory_space<vmem>>, vector<8x64xf32>,
    return
  }
  func.func @transform_0(%arg0: i32) -> (i32, i32) {
    %c0_i32 = arith.constant 0 : i32
    %c0_i32_0 = arith.constant 0 : i32
    return %arg0, %c0_i32 : i32, i32
  }
  func.func @transform_1(%arg0: i32) -> (i32, i32) {
    %c0_i32 = arith.constant 0 : i32
    %c0_i32_0 = arith.constant 0 : i32
    return %arg0, %c0_i32 : i32, i32
  }
  func.func @transform_2(%arg0: i32) -> (i32, i32) {
    %c0_i32 = arith.constant 0 : i32
    %c0_i32_0 = arith.constant 0 : i32
    %c0_i32_1 = arith.constant 0 : i32
    return %c0_i32, %c0_i32_0 : i32, i32
  }
  func.func @transform_3(%arg0: i32) -> (i32, i32) {
    %c0_i32 = arith.constant 0 : i32
    %c0_i32_0 = arith.constant 0 : i32
    %c0_i32_1 = arith.constant 0 : i32
    return %c0_i32, %c0_i32_0 : i32, i32
  }
  func.func @transform_4(%arg0: i32) -> (i32, i32) {
    %c0_i32 = arith.constant 0 : i32
    %c0_i32_0 = arith.constant 0 : i32
    %c0_i32_1 = arith.constant 0 : i32
    return %c0_i32, %c0_i32_0 : i32, i32
  }
  func.func @transform_5(%arg0: i32) -> (i32, i32) {
    %c0_i32 = arith.constant 0 : i32
    %c0_i32_0 = arith.constant 0 : i32
    %c0_i32_1 = arith.constant 0 : i32
    return %c0_i32, %c0_i32_0 : i32, i32
  }
  func.func @transform_6(%arg0: i32) -> (i32, i32) {
    %c0_i32 = arith.constant 0 : i32
    %c0_i32_0 = arith.constant 0 : i32
    %c0_i32_1 = arith.constant 0 : i32
    return %c0_i32, %c0_i32_0 : i32, i32
  }
  func.func @transform_7(%arg0: i32) -> (i32, i32) {
    %c0_i32 = arith.constant 0 : i32
    %c0_i32_0 = arith.constant 0 : i32
    %c0_i32_1 = arith.constant 0 : i32
    return %c0_i32, %c0_i32_0 : i32, i32
  }
  func.func @transform_8(%arg0: i32) -> (i32, i32) {
    %c0_i32 = arith.constant 0 : i32
    %c0_i32_0 = arith.constant 0 : i32
    %c0_i32_1 = arith.constant 0 : i32
    return %c0_i32, %c0_i32_0 : i32, i32
  }
  func.func @transform_9(%arg0: i32) -> (i32, i32) {
    %c0_i32 = arith.constant 0 : i32
    %c0_i32_0 = arith.constant 0 : i32
    %c0_i32_1 = arith.constant 0 : i32
    return %c0_i32, %c0_i32_0 : i32, i32
  }
  func.func @transform_10(%arg0: i32) -> (i32, i32) {
    %c0_i32 = arith.constant 0 : i32
    %c0_i32_0 = arith.constant 0 : i32
    return %arg0, %c0_i32 : i32, i32
  }
}

module attributes {stable_mosaic.version = 11 : i64} {
  func.func @_layer_kernel(%arg0: i32, %arg1: memref<8x64xf32, #tpu.memory_space<vmem>>, %arg2: memref<1x32xf32, #tpu.memory_space<vmem>>, %arg3: memref<1x32xf32, #tpu.memory_space<vmem>>, %arg4: memref<1x32xf32, #tpu.memory_space<vmem>>, %arg5: memref<1x32xf32, #tpu.memory_space<vmem>>, %arg6: memref<32x192xbf16, #tpu.memory_space<vmem>>, %arg7: memref<1x96xf32, #tpu.memory_space<vmem>>, %arg8: memref<1x96xf32, #tpu.memory_space<vmem>>, %arg9: memref<32x64xbf16, #tpu.memory_space<vmem>>, %arg10: memref<1x32xf32, #tpu.memory_space<vmem>>, %arg11: memref<1x32xf32, #tpu.memory_space<vmem>>, %arg12: memref<1x32xf32, #tpu.memory_space<vmem>>, %arg13: memref<1x32xf32, #tpu.memory_space<vmem>>, %arg14: memref<1x32xf32, #tpu.memory_space<vmem>>, %arg15: memref<1x32xf32, #tpu.memory_space<vmem>>, %arg16: memref<32x256xbf16, #tpu.memory_space<vmem>>, %arg17: memref<1x128xf32, #tpu.memory_space<vmem>>, %arg18: memref<1x128xf32, #tpu.memory_space<vmem>>, %arg19: memref<128x64xbf16, #tpu.memory_space<vmem>>, %arg20: memref<1x32xf32, #tpu.memory_space<vmem>>, %arg21: memref<1x32xf32, #tpu.memory_space<vmem>>, %arg22: memref<1x32xf32, #tpu.memory_space<vmem>>, %arg23: memref<1x32xf32, #tpu.memory_space<vmem>>, %arg24: memref<1x32xf32, #tpu.memory_space<vmem>>, %arg25: memref<1x32xf32, #tpu.memory_space<vmem>>, %arg26: memref<8x64xf32, #tpu.memory_space<vmem>>) attributes {dimension_semantics = [#tpu.dimension_semantics<parallel>], iteration_bounds = array<i64: 2>, scalar_prefetch = 0 : i64, scratch_operands = 0 : i64, tpu.core_type = #tpu.core_type<tc>, window_params = [{transform_indices = @transform_0, window_bounds = array<i64: 8, 64>}, {pipeline_mode = #tpu.pipeline_mode<synchronous>, transform_indices = @transform_1, window_bounds = array<i64: 1, 32>}, {pipeline_mode = #tpu.pipeline_mode<synchronous>, transform_indices = @transform_2, window_bounds = array<i64: 1, 32>}, {pipeline_mode = #tpu.pipeline_mode<synchronous>, transform_indices = @transform_3, window_bounds = array<i64: 1, 32>}, {pipeline_mode = #tpu.pipeline_mode<synchronous>, transform_indices = @transform_4, window_bounds = array<i64: 1, 32>}, {pipeline_mode = #tpu.pipeline_mode<synchronous>, transform_indices = @transform_5, window_bounds = array<i64: 32, 192>}, {pipeline_mode = #tpu.pipeline_mode<synchronous>, transform_indices = @transform_6, window_bounds = array<i64: 1, 96>}, {pipeline_mode = #tpu.pipeline_mode<synchronous>, transform_indices = @transform_7, window_bounds = array<i64: 1, 96>}, {pipeline_mode = #tpu.pipeline_mode<synchronous>, transform_indices = @transform_8, window_bounds = array<i64: 32, 64>}, {pipeline_mode = #tpu.pipeline_mode<synchronous>, transform_indices = @transform_9, window_bounds = array<i64: 1, 32>}, {pipeline_mode = #tpu.pipeline_mode<synchronous>, transform_indices = @transform_10, window_bounds = array<i64: 1, 32>}, {pipeline_mode = #tpu.pipeline_mode<synchronous>, transform_indices = @transform_11, window_bounds = array<i64: 1, 32>}, {pipeline_mode = #tpu.pipeline_mode<synchronous>, transform_indices = @transform_12, window_bounds = array<i64: 1, 32>}, {pipeline_mode = #tpu.pipeline_mode<synchronous>, transform_indices = @transform_13, window_bounds = array<i64: 1, 32>}, {pipeline_mode = #tpu.pipeline_mode<synchronous>, transform_indices = @transform_14, window_bounds = array<i64: 1, 32>}, {pipeline_mode = #tpu.pipeline_mode<synchronous>, transform_indices = @transform_15, window_bounds = array<i64: 32, 256>}, {pipeline_mode = #tpu.pipeline_mode<synchronous>, transform_indices = @transform_16, window_bounds = array<i64: 1, 128>}, {pipeline_mode = #tpu.pipeline_mode<synchronous>, transform_indices = @transform_17, window_bounds = array<i64: 1, 128>}, {pipeline_mode = #tpu.pipeline_mode<synchronous>, transform_indices = @transform_18, window_bounds = array<i64: 128, 64>}, {pipeline_mode = #tpu.pipeline_mode<synchronous>, transform_indices = @transform_19, window_bounds = array<i64: 1, 32>}, {pipeline_mode = #tpu.pipeline_mode<synchronous>, transform_indices = @transform_20, window_bounds = array<i64: 1, 32>}, {pipeline_mode = #tpu.pipeline_mode<synchronous>, transform_indices = @transform_21, window_bounds = array<i64: 1, 32>}, {pipeline_mode = #tpu.pipeline_mode<synchronous>, transform_indices = @transform_22, window_bounds = array<i64: 1, 32>}, {pipeline_mode = #tpu.pipeline_mode<synchronous>, transform_indices = @transform_23, window_bounds = array<i64: 1, 32>}, {pipeline_mode = #tpu.pipeline_mode<synchronous>, transform_indices = @transform_24, window_bounds = array<i64: 1, 32>}, {transform_indices = @transform_25, window_bounds = array<i64: 8, 64>}]} {
    %c0 = arith.constant 0 : index
    %c0_0 = arith.constant 0 : index
    %0 = vector.load %arg1[%c0, %c0_0] : memref<8x64xf32, #tpu.memory_space<vmem>>, vector<8x64xf32>
    %1 = vector.extract_strided_slice %0 {offsets = [0, 0], sizes = [8, 32], strides = [1, 1]} : vector<8x64xf32> to vector<8x32xf32>
    %2 = vector.extract_strided_slice %0 {offsets = [0, 32], sizes = [8, 32], strides = [1, 1]} : vector<8x64xf32> to vector<8x32xf32>
    %c0_1 = arith.constant 0 : index
    %c0_2 = arith.constant 0 : index
    %3 = vector.load %arg2[%c0_1, %c0_2] : memref<1x32xf32, #tpu.memory_space<vmem>>, vector<1x32xf32>
    %c0_3 = arith.constant 0 : index
    %c0_4 = arith.constant 0 : index
    %4 = vector.load %arg3[%c0_3, %c0_4] : memref<1x32xf32, #tpu.memory_space<vmem>>, vector<1x32xf32>
    %cst = arith.constant dense<0.000000e+00> : vector<8xf32>
    %5 = vector.multi_reduction <add>, %1, %cst [1] : vector<8x32xf32> to vector<8xf32>
    %6 = vector.shape_cast %5 : vector<8xf32> to vector<8x1xf32>
    %cst_5 = arith.constant 3.200000e+01 : f32
    %7 = vector.broadcast %cst_5 : f32 to vector<8x1xf32>
    %8 = arith.divf %6, %7 : vector<8x1xf32>
    %9 = vector.broadcast %8 : vector<8x1xf32> to vector<8x32xf32>
    %10 = arith.subf %1, %9 : vector<8x32xf32>
    %11 = arith.mulf %10, %10 : vector<8x32xf32>
    %cst_6 = arith.constant dense<0.000000e+00> : vector<8xf32>
    %12 = vector.multi_reduction <add>, %11, %cst_6 [1] : vector<8x32xf32> to vector<8xf32>
    %13 = vector.shape_cast %12 : vector<8xf32> to vector<8x1xf32>
    %cst_7 = arith.constant 3.200000e+01 : f32
    %14 = vector.broadcast %cst_7 : f32 to vector<8x1xf32>
    %15 = arith.divf %13, %14 : vector<8x1xf32>
    %16 = vector.broadcast %8 : vector<8x1xf32> to vector<8x32xf32>
    %17 = arith.subf %1, %16 : vector<8x32xf32>
    %cst_8 = arith.constant 9.99999974E-6 : f32
    %18 = vector.broadcast %cst_8 : f32 to vector<8x1xf32>
    %19 = arith.addf %15, %18 : vector<8x1xf32>
    %20 = math.rsqrt %19 : vector<8x1xf32>
    %21 = vector.broadcast %20 : vector<8x1xf32> to vector<8x32xf32>
    %22 = arith.mulf %17, %21 : vector<8x32xf32>
    %23 = vector.broadcast %3 : vector<1x32xf32> to vector<8x32xf32>
    %24 = arith.mulf %22, %23 : vector<8x32xf32>
    %25 = vector.broadcast %4 : vector<1x32xf32> to vector<8x32xf32>
    %26 = arith.addf %24, %25 : vector<8x32xf32>
    %c0_9 = arith.constant 0 : index
    %c0_10 = arith.constant 0 : index
    %27 = vector.load %arg4[%c0_9, %c0_10] : memref<1x32xf32, #tpu.memory_space<vmem>>, vector<1x32xf32>
    %c0_11 = arith.constant 0 : index
    %c0_12 = arith.constant 0 : index
    %28 = vector.load %arg5[%c0_11, %c0_12] : memref<1x32xf32, #tpu.memory_space<vmem>>, vector<1x32xf32>
    %cst_13 = arith.constant dense<0.000000e+00> : vector<8xf32>
    %29 = vector.multi_reduction <add>, %2, %cst_13 [1] : vector<8x32xf32> to vector<8xf32>
    %30 = vector.shape_cast %29 : vector<8xf32> to vector<8x1xf32>
    %cst_14 = arith.constant 3.200000e+01 : f32
    %31 = vector.broadcast %cst_14 : f32 to vector<8x1xf32>
    %32 = arith.divf %30, %31 : vector<8x1xf32>
    %33 = vector.broadcast %32 : vector<8x1xf32> to vector<8x32xf32>
    %34 = arith.subf %2, %33 : vector<8x32xf32>
    %35 = arith.mulf %34, %34 : vector<8x32xf32>
    %cst_15 = arith.constant dense<0.000000e+00> : vector<8xf32>
    %36 = vector.multi_reduction <add>, %35, %cst_15 [1] : vector<8x32xf32> to vector<8xf32>
    %37 = vector.shape_cast %36 : vector<8xf32> to vector<8x1xf32>
    %cst_16 = arith.constant 3.200000e+01 : f32
    %38 = vector.broadcast %cst_16 : f32 to vector<8x1xf32>
    %39 = arith.divf %37, %38 : vector<8x1xf32>
    %40 = vector.broadcast %32 : vector<8x1xf32> to vector<8x32xf32>
    %41 = arith.subf %2, %40 : vector<8x32xf32>
    %cst_17 = arith.constant 9.99999974E-6 : f32
    %42 = vector.broadcast %cst_17 : f32 to vector<8x1xf32>
    %43 = arith.addf %39, %42 : vector<8x1xf32>
    %44 = math.rsqrt %43 : vector<8x1xf32>
    %45 = vector.broadcast %44 : vector<8x1xf32> to vector<8x32xf32>
    %46 = arith.mulf %41, %45 : vector<8x32xf32>
    %47 = vector.broadcast %27 : vector<1x32xf32> to vector<8x32xf32>
    %48 = arith.mulf %46, %47 : vector<8x32xf32>
    %49 = vector.broadcast %28 : vector<1x32xf32> to vector<8x32xf32>
    %50 = arith.addf %48, %49 : vector<8x32xf32>
    %51 = tpu.concatenate %26, %50 in 0 : vector<8x32xf32>, vector<8x32xf32> -> vector<16x32xf32>
    %52 = arith.truncf %51 : vector<16x32xf32> to vector<16x32xbf16>
    %c0_18 = arith.constant 0 : index
    %c0_19 = arith.constant 0 : index
    %53 = vector.load %arg6[%c0_18, %c0_19] : memref<32x192xbf16, #tpu.memory_space<vmem>>, vector<32x192xbf16>
    %cst_20 = arith.constant dense<0.000000e+00> : vector<16x192xf32>
    %54 = tpu.matmul %52, %53, %cst_20 {dimension_numbers = #tpu.dot_dimension_numbers<[1], [0], [0], [1], [0, 0, 1, 1], [], []>} : vector<16x32xbf16>, vector<32x192xbf16>, vector<16x192xf32> -> vector<16x192xf32>
    %c0_21 = arith.constant 0 : index
    %c0_22 = arith.constant 0 : index
    %55 = vector.load %arg7[%c0_21, %c0_22] : memref<1x96xf32, #tpu.memory_space<vmem>>, vector<1x96xf32>
    %c0_23 = arith.constant 0 : index
    %c0_24 = arith.constant 0 : index
    %56 = vector.load %arg8[%c0_23, %c0_24] : memref<1x96xf32, #tpu.memory_space<vmem>>, vector<1x96xf32>
    %57 = vector.extract_strided_slice %54 {offsets = [0, 0], sizes = [8, 96], strides = [1, 1]} : vector<16x192xf32> to vector<8x96xf32>
    %58 = vector.extract_strided_slice %54 {offsets = [0, 96], sizes = [8, 96], strides = [1, 1]} : vector<16x192xf32> to vector<8x96xf32>
    %59 = vector.extract_strided_slice %54 {offsets = [8, 0], sizes = [8, 96], strides = [1, 1]} : vector<16x192xf32> to vector<8x96xf32>
    %60 = vector.extract_strided_slice %54 {offsets = [8, 96], sizes = [8, 96], strides = [1, 1]} : vector<16x192xf32> to vector<8x96xf32>
    %61 = arith.subf %57, %60 : vector<8x96xf32>
    %62 = vector.broadcast %55 : vector<1x96xf32> to vector<8x96xf32>
    %63 = arith.addf %61, %62 : vector<8x96xf32>
    %64 = arith.addf %59, %58 : vector<8x96xf32>
    %65 = vector.broadcast %56 : vector<1x96xf32> to vector<8x96xf32>
    %66 = arith.addf %64, %65 : vector<8x96xf32>
    %67 = vector.extract_strided_slice %63 {offsets = [0, 0], sizes = [8, 32], strides = [1, 1]} : vector<8x96xf32> to vector<8x32xf32>
    %cst_25 = arith.constant 0.353553385 : f32
    %68 = vector.broadcast %cst_25 : f32 to vector<8x32xf32>
    %69 = arith.mulf %67, %68 : vector<8x32xf32>
    %70 = vector.shape_cast %69 : vector<8x32xf32> to vector<8x4x8xf32>
    %71 = tpu.transpose %70, [1, 0, 2] : vector<8x4x8xf32> -> vector<4x8x8xf32>
    %72 = arith.truncf %71 : vector<4x8x8xf32> to vector<4x8x8xbf16>
    %73 = vector.extract_strided_slice %66 {offsets = [0, 0], sizes = [8, 32], strides = [1, 1]} : vector<8x96xf32> to vector<8x32xf32>
    %cst_26 = arith.constant 0.353553385 : f32
    %74 = vector.broadcast %cst_26 : f32 to vector<8x32xf32>
    %75 = arith.mulf %73, %74 : vector<8x32xf32>
    %76 = vector.shape_cast %75 : vector<8x32xf32> to vector<8x4x8xf32>
    %77 = tpu.transpose %76, [1, 0, 2] : vector<8x4x8xf32> -> vector<4x8x8xf32>
    %78 = arith.truncf %77 : vector<4x8x8xf32> to vector<4x8x8xbf16>
    %79 = vector.extract_strided_slice %63 {offsets = [0, 32], sizes = [8, 32], strides = [1, 1]} : vector<8x96xf32> to vector<8x32xf32>
    %80 = vector.shape_cast %79 : vector<8x32xf32> to vector<8x4x8xf32>
    %81 = tpu.transpose %80, [1, 0, 2] : vector<8x4x8xf32> -> vector<4x8x8xf32>
    %82 = vector.extract_strided_slice %66 {offsets = [0, 32], sizes = [8, 32], strides = [1, 1]} : vector<8x96xf32> to vector<8x32xf32>
    %83 = vector.shape_cast %82 : vector<8x32xf32> to vector<8x4x8xf32>
    %84 = tpu.transpose %83, [1, 0, 2] : vector<8x4x8xf32> -> vector<4x8x8xf32>
    %85 = vector.extract_strided_slice %63 {offsets = [0, 64], sizes = [8, 32], strides = [1, 1]} : vector<8x96xf32> to vector<8x32xf32>
    %86 = vector.shape_cast %85 : vector<8x32xf32> to vector<8x4x8xf32>
    %87 = tpu.transpose %86, [1, 0, 2] : vector<8x4x8xf32> -> vector<4x8x8xf32>
    %88 = vector.extract_strided_slice %66 {offsets = [0, 64], sizes = [8, 32], strides = [1, 1]} : vector<8x96xf32> to vector<8x32xf32>
    %89 = vector.shape_cast %88 : vector<8x32xf32> to vector<8x4x8xf32>
    %90 = tpu.transpose %89, [1, 0, 2] : vector<8x4x8xf32> -> vector<4x8x8xf32>
    %91 = tpu.concatenate %81, %84 in 1 : vector<4x8x8xf32>, vector<4x8x8xf32> -> vector<4x16x8xf32>
    %92 = arith.truncf %91 : vector<4x16x8xf32> to vector<4x16x8xbf16>
    "tpu.trace_start"() <{level = 10 : i32, message = "bqd,bkd->bqk"}> : () -> ()
    %cst_27 = arith.constant dense<0.000000e+00> : vector<4x8x16xf32>
    %93 = tpu.matmul %72, %92, %cst_27 {dimension_numbers = #tpu.dot_dimension_numbers<[2], [2], [1], [1], [0, 0, 0, 1, 1, 1], [0], [0]>} : vector<4x8x8xbf16>, vector<4x16x8xbf16>, vector<4x8x16xf32> -> vector<4x8x16xf32>
    %cst_28 = arith.constant dense<0.000000e+00> : vector<4x8x16xf32>
    %94 = tpu.matmul %78, %92, %cst_28 {dimension_numbers = #tpu.dot_dimension_numbers<[2], [2], [1], [1], [0, 0, 0, 1, 1, 1], [0], [0]>} : vector<4x8x8xbf16>, vector<4x16x8xbf16>, vector<4x8x16xf32> -> vector<4x8x16xf32>
    "tpu.trace_stop"() : () -> ()
    %95 = vector.extract_strided_slice %93 {offsets = [0, 0, 0], sizes = [4, 8, 8], strides = [1, 1, 1]} : vector<4x8x16xf32> to vector<4x8x8xf32>
    %cst_29 = arith.constant dense<0xFF800000> : vector<4x8xf32>
    %96 = vector.multi_reduction <maximumf>, %95, %cst_29 [2] : vector<4x8x8xf32> to vector<4x8xf32>
    %97 = vector.shape_cast %96 : vector<4x8xf32> to vector<4x8x1xf32>
    %98 = vector.broadcast %97 : vector<4x8x1xf32> to vector<4x8x8xf32>
    %99 = arith.subf %95, %98 : vector<4x8x8xf32>
    %100 = math.exp %99 : vector<4x8x8xf32>
    %cst_30 = arith.constant dense<0.000000e+00> : vector<4x8xf32>
    %101 = vector.multi_reduction <add>, %100, %cst_30 [2] : vector<4x8x8xf32> to vector<4x8xf32>
    %102 = vector.shape_cast %101 : vector<4x8xf32> to vector<4x8x1xf32>
    %103 = vector.broadcast %102 : vector<4x8x1xf32> to vector<4x8x8xf32>
    %104 = arith.divf %100, %103 : vector<4x8x8xf32>
    %105 = vector.extract_strided_slice %94 {offsets = [0, 0, 8], sizes = [4, 8, 8], strides = [1, 1, 1]} : vector<4x8x16xf32> to vector<4x8x8xf32>
    %cst_31 = arith.constant dense<0xFF800000> : vector<4x8xf32>
    %106 = vector.multi_reduction <maximumf>, %105, %cst_31 [2] : vector<4x8x8xf32> to vector<4x8xf32>
    %107 = vector.shape_cast %106 : vector<4x8xf32> to vector<4x8x1xf32>
    %108 = vector.broadcast %107 : vector<4x8x1xf32> to vector<4x8x8xf32>
    %109 = arith.subf %105, %108 : vector<4x8x8xf32>
    %110 = math.exp %109 : vector<4x8x8xf32>
    %cst_32 = arith.constant dense<0.000000e+00> : vector<4x8xf32>
    %111 = vector.multi_reduction <add>, %110, %cst_32 [2] : vector<4x8x8xf32> to vector<4x8xf32>
    %112 = vector.shape_cast %111 : vector<4x8xf32> to vector<4x8x1xf32>
    %113 = vector.broadcast %112 : vector<4x8x1xf32> to vector<4x8x8xf32>
    %114 = arith.divf %110, %113 : vector<4x8x8xf32>
    %115 = arith.subf %104, %114 : vector<4x8x8xf32>
    %116 = vector.extract_strided_slice %93 {offsets = [0, 0, 8], sizes = [4, 8, 8], strides = [1, 1, 1]} : vector<4x8x16xf32> to vector<4x8x8xf32>
    %cst_33 = arith.constant dense<0xFF800000> : vector<4x8xf32>
    %117 = vector.multi_reduction <maximumf>, %116, %cst_33 [2] : vector<4x8x8xf32> to vector<4x8xf32>
    %118 = vector.shape_cast %117 : vector<4x8xf32> to vector<4x8x1xf32>
    %119 = vector.broadcast %118 : vector<4x8x1xf32> to vector<4x8x8xf32>
    %120 = arith.subf %116, %119 : vector<4x8x8xf32>
    %121 = math.exp %120 : vector<4x8x8xf32>
    %cst_34 = arith.constant dense<0.000000e+00> : vector<4x8xf32>
    %122 = vector.multi_reduction <add>, %121, %cst_34 [2] : vector<4x8x8xf32> to vector<4x8xf32>
    %123 = vector.shape_cast %122 : vector<4x8xf32> to vector<4x8x1xf32>
    %124 = vector.broadcast %123 : vector<4x8x1xf32> to vector<4x8x8xf32>
    %125 = arith.divf %121, %124 : vector<4x8x8xf32>
    %126 = vector.extract_strided_slice %94 {offsets = [0, 0, 0], sizes = [4, 8, 8], strides = [1, 1, 1]} : vector<4x8x16xf32> to vector<4x8x8xf32>
    %cst_35 = arith.constant dense<0xFF800000> : vector<4x8xf32>
    %127 = vector.multi_reduction <maximumf>, %126, %cst_35 [2] : vector<4x8x8xf32> to vector<4x8xf32>
    %128 = vector.shape_cast %127 : vector<4x8xf32> to vector<4x8x1xf32>
    %129 = vector.broadcast %128 : vector<4x8x1xf32> to vector<4x8x8xf32>
    %130 = arith.subf %126, %129 : vector<4x8x8xf32>
    %131 = math.exp %130 : vector<4x8x8xf32>
    %cst_36 = arith.constant dense<0.000000e+00> : vector<4x8xf32>
    %132 = vector.multi_reduction <add>, %131, %cst_36 [2] : vector<4x8x8xf32> to vector<4x8xf32>
    %133 = vector.shape_cast %132 : vector<4x8xf32> to vector<4x8x1xf32>
    %134 = vector.broadcast %133 : vector<4x8x1xf32> to vector<4x8x8xf32>
    %135 = arith.divf %131, %134 : vector<4x8x8xf32>
    %136 = arith.addf %125, %135 : vector<4x8x8xf32>
    %137 = tpu.concatenate %87, %90 in 2 : vector<4x8x8xf32>, vector<4x8x8xf32> -> vector<4x8x16xf32>
    %138 = arith.truncf %137 : vector<4x8x16xf32> to vector<4x8x16xbf16>
    %139 = arith.truncf %115 : vector<4x8x8xf32> to vector<4x8x8xbf16>
    "tpu.trace_start"() <{level = 10 : i32, message = "bqk,bkd->bqd"}> : () -> ()
    %cst_37 = arith.constant dense<0.000000e+00> : vector<4x8x16xf32>
    %140 = tpu.matmul %139, %138, %cst_37 {dimension_numbers = #tpu.dot_dimension_numbers<[2], [1], [1], [2], [0, 0, 0, 1, 1, 2], [0], [0]>} : vector<4x8x8xbf16>, vector<4x8x16xbf16>, vector<4x8x16xf32> -> vector<4x8x16xf32>
    "tpu.trace_stop"() : () -> ()
    %141 = arith.truncf %136 : vector<4x8x8xf32> to vector<4x8x8xbf16>
    "tpu.trace_start"() <{level = 10 : i32, message = "bqk,bkd->bqd"}> : () -> ()
    %cst_38 = arith.constant dense<0.000000e+00> : vector<4x8x16xf32>
    %142 = tpu.matmul %141, %138, %cst_38 {dimension_numbers = #tpu.dot_dimension_numbers<[2], [1], [1], [2], [0, 0, 0, 1, 1, 2], [0], [0]>} : vector<4x8x8xbf16>, vector<4x8x16xbf16>, vector<4x8x16xf32> -> vector<4x8x16xf32>
    "tpu.trace_stop"() : () -> ()
    %143 = vector.extract_strided_slice %140 {offsets = [0, 0, 0], sizes = [4, 8, 8], strides = [1, 1, 1]} : vector<4x8x16xf32> to vector<4x8x8xf32>
    %144 = vector.extract_strided_slice %142 {offsets = [0, 0, 8], sizes = [4, 8, 8], strides = [1, 1, 1]} : vector<4x8x16xf32> to vector<4x8x8xf32>
    %145 = arith.subf %143, %144 : vector<4x8x8xf32>
    %146 = tpu.transpose %145, [1, 0, 2] : vector<4x8x8xf32> -> vector<8x4x8xf32>
    %147 = vector.shape_cast %146 : vector<8x4x8xf32> to vector<8x32xf32>
    %148 = vector.extract_strided_slice %140 {offsets = [0, 0, 8], sizes = [4, 8, 8], strides = [1, 1, 1]} : vector<4x8x16xf32> to vector<4x8x8xf32>
    %149 = vector.extract_strided_slice %142 {offsets = [0, 0, 0], sizes = [4, 8, 8], strides = [1, 1, 1]} : vector<4x8x16xf32> to vector<4x8x8xf32>
    %150 = arith.addf %148, %149 : vector<4x8x8xf32>
    %151 = tpu.transpose %150, [1, 0, 2] : vector<4x8x8xf32> -> vector<8x4x8xf32>
    %152 = vector.shape_cast %151 : vector<8x4x8xf32> to vector<8x32xf32>
    %153 = tpu.concatenate %147, %152 in 0 : vector<8x32xf32>, vector<8x32xf32> -> vector<16x32xf32>
    %154 = arith.truncf %153 : vector<16x32xf32> to vector<16x32xbf16>
    %c0_39 = arith.constant 0 : index
    %c0_40 = arith.constant 0 : index
    %155 = vector.load %arg9[%c0_39, %c0_40] : memref<32x64xbf16, #tpu.memory_space<vmem>>, vector<32x64xbf16>
    %cst_41 = arith.constant dense<0.000000e+00> : vector<16x64xf32>
    %156 = tpu.matmul %154, %155, %cst_41 {dimension_numbers = #tpu.dot_dimension_numbers<[1], [0], [0], [1], [0, 0, 1, 1], [], []>} : vector<16x32xbf16>, vector<32x64xbf16>, vector<16x64xf32> -> vector<16x64xf32>
    %c0_42 = arith.constant 0 : index
    %c0_43 = arith.constant 0 : index
    %157 = vector.load %arg10[%c0_42, %c0_43] : memref<1x32xf32, #tpu.memory_space<vmem>>, vector<1x32xf32>
    %c0_44 = arith.constant 0 : index
    %c0_45 = arith.constant 0 : index
    %158 = vector.load %arg11[%c0_44, %c0_45] : memref<1x32xf32, #tpu.memory_space<vmem>>, vector<1x32xf32>
    %159 = vector.extract_strided_slice %156 {offsets = [0, 0], sizes = [8, 32], strides = [1, 1]} : vector<16x64xf32> to vector<8x32xf32>
    %160 = vector.extract_strided_slice %156 {offsets = [0, 32], sizes = [8, 32], strides = [1, 1]} : vector<16x64xf32> to vector<8x32xf32>
    %161 = vector.extract_strided_slice %156 {offsets = [8, 0], sizes = [8, 32], strides = [1, 1]} : vector<16x64xf32> to vector<8x32xf32>
    %162 = vector.extract_strided_slice %156 {offsets = [8, 32], sizes = [8, 32], strides = [1, 1]} : vector<16x64xf32> to vector<8x32xf32>
    %163 = arith.subf %159, %162 : vector<8x32xf32>
    %164 = vector.broadcast %157 : vector<1x32xf32> to vector<8x32xf32>
    %165 = arith.addf %163, %164 : vector<8x32xf32>
    %166 = arith.addf %161, %160 : vector<8x32xf32>
    %167 = vector.broadcast %158 : vector<1x32xf32> to vector<8x32xf32>
    %168 = arith.addf %166, %167 : vector<8x32xf32>
    %169 = arith.addf %1, %165 : vector<8x32xf32>
    %170 = arith.addf %2, %168 : vector<8x32xf32>
    %c0_46 = arith.constant 0 : index
    %c0_47 = arith.constant 0 : index
    %171 = vector.load %arg12[%c0_46, %c0_47] : memref<1x32xf32, #tpu.memory_space<vmem>>, vector<1x32xf32>
    %c0_48 = arith.constant 0 : index
    %c0_49 = arith.constant 0 : index
    %172 = vector.load %arg13[%c0_48, %c0_49] : memref<1x32xf32, #tpu.memory_space<vmem>>, vector<1x32xf32>
    %cst_50 = arith.constant dense<0.000000e+00> : vector<8xf32>
    %173 = vector.multi_reduction <add>, %169, %cst_50 [1] : vector<8x32xf32> to vector<8xf32>
    %174 = vector.shape_cast %173 : vector<8xf32> to vector<8x1xf32>
    %cst_51 = arith.constant 3.200000e+01 : f32
    %175 = vector.broadcast %cst_51 : f32 to vector<8x1xf32>
    %176 = arith.divf %174, %175 : vector<8x1xf32>
    %177 = vector.broadcast %176 : vector<8x1xf32> to vector<8x32xf32>
    %178 = arith.subf %169, %177 : vector<8x32xf32>
    %179 = arith.mulf %178, %178 : vector<8x32xf32>
    %cst_52 = arith.constant dense<0.000000e+00> : vector<8xf32>
    %180 = vector.multi_reduction <add>, %179, %cst_52 [1] : vector<8x32xf32> to vector<8xf32>
    %181 = vector.shape_cast %180 : vector<8xf32> to vector<8x1xf32>
    %cst_53 = arith.constant 3.200000e+01 : f32
    %182 = vector.broadcast %cst_53 : f32 to vector<8x1xf32>
    %183 = arith.divf %181, %182 : vector<8x1xf32>
    %184 = vector.broadcast %176 : vector<8x1xf32> to vector<8x32xf32>
    %185 = arith.subf %169, %184 : vector<8x32xf32>
    %cst_54 = arith.constant 9.99999974E-6 : f32
    %186 = vector.broadcast %cst_54 : f32 to vector<8x1xf32>
    %187 = arith.addf %183, %186 : vector<8x1xf32>
    %188 = math.rsqrt %187 : vector<8x1xf32>
    %189 = vector.broadcast %188 : vector<8x1xf32> to vector<8x32xf32>
    %190 = arith.mulf %185, %189 : vector<8x32xf32>
    %191 = vector.broadcast %171 : vector<1x32xf32> to vector<8x32xf32>
    %192 = arith.mulf %190, %191 : vector<8x32xf32>
    %193 = vector.broadcast %172 : vector<1x32xf32> to vector<8x32xf32>
    %194 = arith.addf %192, %193 : vector<8x32xf32>
    %c0_55 = arith.constant 0 : index
    %c0_56 = arith.constant 0 : index
    %195 = vector.load %arg14[%c0_55, %c0_56] : memref<1x32xf32, #tpu.memory_space<vmem>>, vector<1x32xf32>
    %c0_57 = arith.constant 0 : index
    %c0_58 = arith.constant 0 : index
    %196 = vector.load %arg15[%c0_57, %c0_58] : memref<1x32xf32, #tpu.memory_space<vmem>>, vector<1x32xf32>
    %cst_59 = arith.constant dense<0.000000e+00> : vector<8xf32>
    %197 = vector.multi_reduction <add>, %170, %cst_59 [1] : vector<8x32xf32> to vector<8xf32>
    %198 = vector.shape_cast %197 : vector<8xf32> to vector<8x1xf32>
    %cst_60 = arith.constant 3.200000e+01 : f32
    %199 = vector.broadcast %cst_60 : f32 to vector<8x1xf32>
    %200 = arith.divf %198, %199 : vector<8x1xf32>
    %201 = vector.broadcast %200 : vector<8x1xf32> to vector<8x32xf32>
    %202 = arith.subf %170, %201 : vector<8x32xf32>
    %203 = arith.mulf %202, %202 : vector<8x32xf32>
    %cst_61 = arith.constant dense<0.000000e+00> : vector<8xf32>
    %204 = vector.multi_reduction <add>, %203, %cst_61 [1] : vector<8x32xf32> to vector<8xf32>
    %205 = vector.shape_cast %204 : vector<8xf32> to vector<8x1xf32>
    %cst_62 = arith.constant 3.200000e+01 : f32
    %206 = vector.broadcast %cst_62 : f32 to vector<8x1xf32>
    %207 = arith.divf %205, %206 : vector<8x1xf32>
    %208 = vector.broadcast %200 : vector<8x1xf32> to vector<8x32xf32>
    %209 = arith.subf %170, %208 : vector<8x32xf32>
    %cst_63 = arith.constant 9.99999974E-6 : f32
    %210 = vector.broadcast %cst_63 : f32 to vector<8x1xf32>
    %211 = arith.addf %207, %210 : vector<8x1xf32>
    %212 = math.rsqrt %211 : vector<8x1xf32>
    %213 = vector.broadcast %212 : vector<8x1xf32> to vector<8x32xf32>
    %214 = arith.mulf %209, %213 : vector<8x32xf32>
    %215 = vector.broadcast %195 : vector<1x32xf32> to vector<8x32xf32>
    %216 = arith.mulf %214, %215 : vector<8x32xf32>
    %217 = vector.broadcast %196 : vector<1x32xf32> to vector<8x32xf32>
    %218 = arith.addf %216, %217 : vector<8x32xf32>
    %219 = tpu.concatenate %194, %218 in 0 : vector<8x32xf32>, vector<8x32xf32> -> vector<16x32xf32>
    %220 = arith.truncf %219 : vector<16x32xf32> to vector<16x32xbf16>
    %c0_64 = arith.constant 0 : index
    %c0_65 = arith.constant 0 : index
    %221 = vector.load %arg16[%c0_64, %c0_65] : memref<32x256xbf16, #tpu.memory_space<vmem>>, vector<32x256xbf16>
    %cst_66 = arith.constant dense<0.000000e+00> : vector<16x256xf32>
    %222 = tpu.matmul %220, %221, %cst_66 {dimension_numbers = #tpu.dot_dimension_numbers<[1], [0], [0], [1], [0, 0, 1, 1], [], []>} : vector<16x32xbf16>, vector<32x256xbf16>, vector<16x256xf32> -> vector<16x256xf32>
    %c0_67 = arith.constant 0 : index
    %c0_68 = arith.constant 0 : index
    %223 = vector.load %arg17[%c0_67, %c0_68] : memref<1x128xf32, #tpu.memory_space<vmem>>, vector<1x128xf32>
    %c0_69 = arith.constant 0 : index
    %c0_70 = arith.constant 0 : index
    %224 = vector.load %arg18[%c0_69, %c0_70] : memref<1x128xf32, #tpu.memory_space<vmem>>, vector<1x128xf32>
    %225 = vector.extract_strided_slice %222 {offsets = [0, 0], sizes = [8, 128], strides = [1, 1]} : vector<16x256xf32> to vector<8x128xf32>
    %226 = vector.extract_strided_slice %222 {offsets = [0, 128], sizes = [8, 128], strides = [1, 1]} : vector<16x256xf32> to vector<8x128xf32>
    %227 = vector.extract_strided_slice %222 {offsets = [8, 0], sizes = [8, 128], strides = [1, 1]} : vector<16x256xf32> to vector<8x128xf32>
    %228 = vector.extract_strided_slice %222 {offsets = [8, 128], sizes = [8, 128], strides = [1, 1]} : vector<16x256xf32> to vector<8x128xf32>
    %229 = arith.subf %225, %228 : vector<8x128xf32>
    %230 = vector.broadcast %223 : vector<1x128xf32> to vector<8x128xf32>
    %231 = arith.addf %229, %230 : vector<8x128xf32>
    %232 = arith.addf %227, %226 : vector<8x128xf32>
    %233 = vector.broadcast %224 : vector<1x128xf32> to vector<8x128xf32>
    %234 = arith.addf %232, %233 : vector<8x128xf32>
    %cst_71 = arith.constant 0.000000e+00 : f32
    %235 = vector.broadcast %cst_71 : f32 to vector<8x128xf32>
    %236 = arith.maximumf %231, %235 : vector<8x128xf32>
    %cst_72 = arith.constant 0.000000e+00 : f32
    %237 = vector.broadcast %cst_72 : f32 to vector<8x128xf32>
    %238 = arith.maximumf %234, %237 : vector<8x128xf32>
    %239 = tpu.concatenate %236, %238 in 0 : vector<8x128xf32>, vector<8x128xf32> -> vector<16x128xf32>
    %240 = arith.truncf %239 : vector<16x128xf32> to vector<16x128xbf16>
    %c0_73 = arith.constant 0 : index
    %c0_74 = arith.constant 0 : index
    %241 = vector.load %arg19[%c0_73, %c0_74] : memref<128x64xbf16, #tpu.memory_space<vmem>>, vector<128x64xbf16>
    %cst_75 = arith.constant dense<0.000000e+00> : vector<16x64xf32>
    %242 = tpu.matmul %240, %241, %cst_75 {dimension_numbers = #tpu.dot_dimension_numbers<[1], [0], [0], [1], [0, 0, 1, 1], [], []>} : vector<16x128xbf16>, vector<128x64xbf16>, vector<16x64xf32> -> vector<16x64xf32>
    %c0_76 = arith.constant 0 : index
    %c0_77 = arith.constant 0 : index
    %243 = vector.load %arg20[%c0_76, %c0_77] : memref<1x32xf32, #tpu.memory_space<vmem>>, vector<1x32xf32>
    %c0_78 = arith.constant 0 : index
    %c0_79 = arith.constant 0 : index
    %244 = vector.load %arg21[%c0_78, %c0_79] : memref<1x32xf32, #tpu.memory_space<vmem>>, vector<1x32xf32>
    %245 = vector.extract_strided_slice %242 {offsets = [0, 0], sizes = [8, 32], strides = [1, 1]} : vector<16x64xf32> to vector<8x32xf32>
    %246 = vector.extract_strided_slice %242 {offsets = [0, 32], sizes = [8, 32], strides = [1, 1]} : vector<16x64xf32> to vector<8x32xf32>
    %247 = vector.extract_strided_slice %242 {offsets = [8, 0], sizes = [8, 32], strides = [1, 1]} : vector<16x64xf32> to vector<8x32xf32>
    %248 = vector.extract_strided_slice %242 {offsets = [8, 32], sizes = [8, 32], strides = [1, 1]} : vector<16x64xf32> to vector<8x32xf32>
    %249 = arith.subf %245, %248 : vector<8x32xf32>
    %250 = vector.broadcast %243 : vector<1x32xf32> to vector<8x32xf32>
    %251 = arith.addf %249, %250 : vector<8x32xf32>
    %252 = arith.addf %247, %246 : vector<8x32xf32>
    %253 = vector.broadcast %244 : vector<1x32xf32> to vector<8x32xf32>
    %254 = arith.addf %252, %253 : vector<8x32xf32>
    %255 = arith.addf %169, %251 : vector<8x32xf32>
    %256 = arith.addf %170, %254 : vector<8x32xf32>
    %c0_80 = arith.constant 0 : index
    %c0_81 = arith.constant 0 : index
    %257 = vector.load %arg22[%c0_80, %c0_81] : memref<1x32xf32, #tpu.memory_space<vmem>>, vector<1x32xf32>
    %c0_82 = arith.constant 0 : index
    %c0_83 = arith.constant 0 : index
    %258 = vector.load %arg23[%c0_82, %c0_83] : memref<1x32xf32, #tpu.memory_space<vmem>>, vector<1x32xf32>
    %cst_84 = arith.constant dense<0.000000e+00> : vector<8xf32>
    %259 = vector.multi_reduction <add>, %255, %cst_84 [1] : vector<8x32xf32> to vector<8xf32>
    %260 = vector.shape_cast %259 : vector<8xf32> to vector<8x1xf32>
    %cst_85 = arith.constant 3.200000e+01 : f32
    %261 = vector.broadcast %cst_85 : f32 to vector<8x1xf32>
    %262 = arith.divf %260, %261 : vector<8x1xf32>
    %263 = vector.broadcast %262 : vector<8x1xf32> to vector<8x32xf32>
    %264 = arith.subf %255, %263 : vector<8x32xf32>
    %265 = arith.mulf %264, %264 : vector<8x32xf32>
    %cst_86 = arith.constant dense<0.000000e+00> : vector<8xf32>
    %266 = vector.multi_reduction <add>, %265, %cst_86 [1] : vector<8x32xf32> to vector<8xf32>
    %267 = vector.shape_cast %266 : vector<8xf32> to vector<8x1xf32>
    %cst_87 = arith.constant 3.200000e+01 : f32
    %268 = vector.broadcast %cst_87 : f32 to vector<8x1xf32>
    %269 = arith.divf %267, %268 : vector<8x1xf32>
    %270 = vector.broadcast %262 : vector<8x1xf32> to vector<8x32xf32>
    %271 = arith.subf %255, %270 : vector<8x32xf32>
    %cst_88 = arith.constant 9.99999974E-6 : f32
    %272 = vector.broadcast %cst_88 : f32 to vector<8x1xf32>
    %273 = arith.addf %269, %272 : vector<8x1xf32>
    %274 = math.rsqrt %273 : vector<8x1xf32>
    %275 = vector.broadcast %274 : vector<8x1xf32> to vector<8x32xf32>
    %276 = arith.mulf %271, %275 : vector<8x32xf32>
    %277 = vector.broadcast %257 : vector<1x32xf32> to vector<8x32xf32>
    %278 = arith.mulf %276, %277 : vector<8x32xf32>
    %279 = vector.broadcast %258 : vector<1x32xf32> to vector<8x32xf32>
    %280 = arith.addf %278, %279 : vector<8x32xf32>
    %c0_89 = arith.constant 0 : index
    %c0_90 = arith.constant 0 : index
    %281 = vector.load %arg24[%c0_89, %c0_90] : memref<1x32xf32, #tpu.memory_space<vmem>>, vector<1x32xf32>
    %c0_91 = arith.constant 0 : index
    %c0_92 = arith.constant 0 : index
    %282 = vector.load %arg25[%c0_91, %c0_92] : memref<1x32xf32, #tpu.memory_space<vmem>>, vector<1x32xf32>
    %cst_93 = arith.constant dense<0.000000e+00> : vector<8xf32>
    %283 = vector.multi_reduction <add>, %256, %cst_93 [1] : vector<8x32xf32> to vector<8xf32>
    %284 = vector.shape_cast %283 : vector<8xf32> to vector<8x1xf32>
    %cst_94 = arith.constant 3.200000e+01 : f32
    %285 = vector.broadcast %cst_94 : f32 to vector<8x1xf32>
    %286 = arith.divf %284, %285 : vector<8x1xf32>
    %287 = vector.broadcast %286 : vector<8x1xf32> to vector<8x32xf32>
    %288 = arith.subf %256, %287 : vector<8x32xf32>
    %289 = arith.mulf %288, %288 : vector<8x32xf32>
    %cst_95 = arith.constant dense<0.000000e+00> : vector<8xf32>
    %290 = vector.multi_reduction <add>, %289, %cst_95 [1] : vector<8x32xf32> to vector<8xf32>
    %291 = vector.shape_cast %290 : vector<8xf32> to vector<8x1xf32>
    %cst_96 = arith.constant 3.200000e+01 : f32
    %292 = vector.broadcast %cst_96 : f32 to vector<8x1xf32>
    %293 = arith.divf %291, %292 : vector<8x1xf32>
    %294 = vector.broadcast %286 : vector<8x1xf32> to vector<8x32xf32>
    %295 = arith.subf %256, %294 : vector<8x32xf32>
    %cst_97 = arith.constant 9.99999974E-6 : f32
    %296 = vector.broadcast %cst_97 : f32 to vector<8x1xf32>
    %297 = arith.addf %293, %296 : vector<8x1xf32>
    %298 = math.rsqrt %297 : vector<8x1xf32>
    %299 = vector.broadcast %298 : vector<8x1xf32> to vector<8x32xf32>
    %300 = arith.mulf %295, %299 : vector<8x32xf32>
    %301 = vector.broadcast %281 : vector<1x32xf32> to vector<8x32xf32>
    %302 = arith.mulf %300, %301 : vector<8x32xf32>
    %303 = vector.broadcast %282 : vector<1x32xf32> to vector<8x32xf32>
    %304 = arith.addf %302, %303 : vector<8x32xf32>
    %305 = tpu.concatenate %280, %304 in 1 : vector<8x32xf32>, vector<8x32xf32> -> vector<8x64xf32>
    %c0_98 = arith.constant 0 : index
    %c0_99 = arith.constant 0 : index
    %306 = vector.load %arg26[%c0_98, %c0_99] : memref<8x64xf32, #tpu.memory_space<vmem>>, vector<8x64xf32>
    tpu.vector_store %arg26[%c0_98, %c0_99], %305 {strides = array<i32>} : memref<8x64xf32, #tpu.memory_space<vmem>>, vector<8x64xf32>,
    return
  }
  func.func @transform_0(%arg0: i32) -> (i32, i32) {
    %c0_i32 = arith.constant 0 : i32
    %c0_i32_0 = arith.constant 0 : i32
    return %arg0, %c0_i32 : i32, i32
  }
  func.func @transform_1(%arg0: i32) -> (i32, i32) {
    %c0_i32 = arith.constant 0 : i32
    %c0_i32_0 = arith.constant 0 : i32
    %c0_i32_1 = arith.constant 0 : i32
    return %c0_i32, %c0_i32_0 : i32, i32
  }
  func.func @transform_2(%arg0: i32) -> (i32, i32) {
    %c0_i32 = arith.constant 0 : i32
    %c0_i32_0 = arith.constant 0 : i32
    %c0_i32_1 = arith.constant 0 : i32
    return %c0_i32, %c0_i32_0 : i32, i32
  }
  func.func @transform_3(%arg0: i32) -> (i32, i32) {
    %c0_i32 = arith.constant 0 : i32
    %c0_i32_0 = arith.constant 0 : i32
    %c0_i32_1 = arith.constant 0 : i32
    return %c0_i32, %c0_i32_0 : i32, i32
  }
  func.func @transform_4(%arg0: i32) -> (i32, i32) {
    %c0_i32 = arith.constant 0 : i32
    %c0_i32_0 = arith.constant 0 : i32
    %c0_i32_1 = arith.constant 0 : i32
    return %c0_i32, %c0_i32_0 : i32, i32
  }
  func.func @transform_5(%arg0: i32) -> (i32, i32) {
    %c0_i32 = arith.constant 0 : i32
    %c0_i32_0 = arith.constant 0 : i32
    %c0_i32_1 = arith.constant 0 : i32
    return %c0_i32, %c0_i32_0 : i32, i32
  }
  func.func @transform_6(%arg0: i32) -> (i32, i32) {
    %c0_i32 = arith.constant 0 : i32
    %c0_i32_0 = arith.constant 0 : i32
    %c0_i32_1 = arith.constant 0 : i32
    return %c0_i32, %c0_i32_0 : i32, i32
  }
  func.func @transform_7(%arg0: i32) -> (i32, i32) {
    %c0_i32 = arith.constant 0 : i32
    %c0_i32_0 = arith.constant 0 : i32
    %c0_i32_1 = arith.constant 0 : i32
    return %c0_i32, %c0_i32_0 : i32, i32
  }
  func.func @transform_8(%arg0: i32) -> (i32, i32) {
    %c0_i32 = arith.constant 0 : i32
    %c0_i32_0 = arith.constant 0 : i32
    %c0_i32_1 = arith.constant 0 : i32
    return %c0_i32, %c0_i32_0 : i32, i32
  }
  func.func @transform_9(%arg0: i32) -> (i32, i32) {
    %c0_i32 = arith.constant 0 : i32
    %c0_i32_0 = arith.constant 0 : i32
    %c0_i32_1 = arith.constant 0 : i32
    return %c0_i32, %c0_i32_0 : i32, i32
  }
  func.func @transform_10(%arg0: i32) -> (i32, i32) {
    %c0_i32 = arith.constant 0 : i32
    %c0_i32_0 = arith.constant 0 : i32
    %c0_i32_1 = arith.constant 0 : i32
    return %c0_i32, %c0_i32_0 : i32, i32
  }
  func.func @transform_11(%arg0: i32) -> (i32, i32) {
    %c0_i32 = arith.constant 0 : i32
    %c0_i32_0 = arith.constant 0 : i32
    %c0_i32_1 = arith.constant 0 : i32
    return %c0_i32, %c0_i32_0 : i32, i32
  }
  func.func @transform_12(%arg0: i32) -> (i32, i32) {
    %c0_i32 = arith.constant 0 : i32
    %c0_i32_0 = arith.constant 0 : i32
    %c0_i32_1 = arith.constant 0 : i32
    return %c0_i32, %c0_i32_0 : i32, i32
  }
  func.func @transform_13(%arg0: i32) -> (i32, i32) {
    %c0_i32 = arith.constant 0 : i32
    %c0_i32_0 = arith.constant 0 : i32
    %c0_i32_1 = arith.constant 0 : i32
    return %c0_i32, %c0_i32_0 : i32, i32
  }
  func.func @transform_14(%arg0: i32) -> (i32, i32) {
    %c0_i32 = arith.constant 0 : i32
    %c0_i32_0 = arith.constant 0 : i32
    %c0_i32_1 = arith.constant 0 : i32
    return %c0_i32, %c0_i32_0 : i32, i32
  }
  func.func @transform_15(%arg0: i32) -> (i32, i32) {
    %c0_i32 = arith.constant 0 : i32
    %c0_i32_0 = arith.constant 0 : i32
    %c0_i32_1 = arith.constant 0 : i32
    return %c0_i32, %c0_i32_0 : i32, i32
  }
  func.func @transform_16(%arg0: i32) -> (i32, i32) {
    %c0_i32 = arith.constant 0 : i32
    %c0_i32_0 = arith.constant 0 : i32
    %c0_i32_1 = arith.constant 0 : i32
    return %c0_i32, %c0_i32_0 : i32, i32
  }
  func.func @transform_17(%arg0: i32) -> (i32, i32) {
    %c0_i32 = arith.constant 0 : i32
    %c0_i32_0 = arith.constant 0 : i32
    %c0_i32_1 = arith.constant 0 : i32
    return %c0_i32, %c0_i32_0 : i32, i32
  }
  func.func @transform_18(%arg0: i32) -> (i32, i32) {
    %c0_i32 = arith.constant 0 : i32
    %c0_i32_0 = arith.constant 0 : i32
    %c0_i32_1 = arith.constant 0 : i32
    return %c0_i32, %c0_i32_0 : i32, i32
  }
  func.func @transform_19(%arg0: i32) -> (i32, i32) {
    %c0_i32 = arith.constant 0 : i32
    %c0_i32_0 = arith.constant 0 : i32
    %c0_i32_1 = arith.constant 0 : i32
    return %c0_i32, %c0_i32_0 : i32, i32
  }
  func.func @transform_20(%arg0: i32) -> (i32, i32) {
    %c0_i32 = arith.constant 0 : i32
    %c0_i32_0 = arith.constant 0 : i32
    %c0_i32_1 = arith.constant 0 : i32
    return %c0_i32, %c0_i32_0 : i32, i32
  }
  func.func @transform_21(%arg0: i32) -> (i32, i32) {
    %c0_i32 = arith.constant 0 : i32
    %c0_i32_0 = arith.constant 0 : i32
    %c0_i32_1 = arith.constant 0 : i32
    return %c0_i32, %c0_i32_0 : i32, i32
  }
  func.func @transform_22(%arg0: i32) -> (i32, i32) {
    %c0_i32 = arith.constant 0 : i32
    %c0_i32_0 = arith.constant 0 : i32
    %c0_i32_1 = arith.constant 0 : i32
    return %c0_i32, %c0_i32_0 : i32, i32
  }
  func.func @transform_23(%arg0: i32) -> (i32, i32) {
    %c0_i32 = arith.constant 0 : i32
    %c0_i32_0 = arith.constant 0 : i32
    %c0_i32_1 = arith.constant 0 : i32
    return %c0_i32, %c0_i32_0 : i32, i32
  }
  func.func @transform_24(%arg0: i32) -> (i32, i32) {
    %c0_i32 = arith.constant 0 : i32
    %c0_i32_0 = arith.constant 0 : i32
    %c0_i32_1 = arith.constant 0 : i32
    return %c0_i32, %c0_i32_0 : i32, i32
  }
  func.func @transform_25(%arg0: i32) -> (i32, i32) {
    %c0_i32 = arith.constant 0 : i32
    %c0_i32_0 = arith.constant 0 : i32
    return %arg0, %c0_i32 : i32, i32
  }
}

module attributes {stable_mosaic.version = 11 : i64} {
  func.func @_layer_kernel(%arg0: i32, %arg1: memref<8x64xf32, #tpu.memory_space<vmem>>, %arg2: memref<1x32xf32, #tpu.memory_space<vmem>>, %arg3: memref<1x32xf32, #tpu.memory_space<vmem>>, %arg4: memref<1x32xf32, #tpu.memory_space<vmem>>, %arg5: memref<1x32xf32, #tpu.memory_space<vmem>>, %arg6: memref<32x192xbf16, #tpu.memory_space<vmem>>, %arg7: memref<1x96xf32, #tpu.memory_space<vmem>>, %arg8: memref<1x96xf32, #tpu.memory_space<vmem>>, %arg9: memref<32x64xbf16, #tpu.memory_space<vmem>>, %arg10: memref<1x32xf32, #tpu.memory_space<vmem>>, %arg11: memref<1x32xf32, #tpu.memory_space<vmem>>, %arg12: memref<1x32xf32, #tpu.memory_space<vmem>>, %arg13: memref<1x32xf32, #tpu.memory_space<vmem>>, %arg14: memref<1x32xf32, #tpu.memory_space<vmem>>, %arg15: memref<1x32xf32, #tpu.memory_space<vmem>>, %arg16: memref<32x256xbf16, #tpu.memory_space<vmem>>, %arg17: memref<1x128xf32, #tpu.memory_space<vmem>>, %arg18: memref<1x128xf32, #tpu.memory_space<vmem>>, %arg19: memref<128x64xbf16, #tpu.memory_space<vmem>>, %arg20: memref<1x32xf32, #tpu.memory_space<vmem>>, %arg21: memref<1x32xf32, #tpu.memory_space<vmem>>, %arg22: memref<1x32xf32, #tpu.memory_space<vmem>>, %arg23: memref<1x32xf32, #tpu.memory_space<vmem>>, %arg24: memref<1x32xf32, #tpu.memory_space<vmem>>, %arg25: memref<1x32xf32, #tpu.memory_space<vmem>>, %arg26: memref<8x64xf32, #tpu.memory_space<vmem>>) attributes {dimension_semantics = [#tpu.dimension_semantics<parallel>], iteration_bounds = array<i64: 2>, scalar_prefetch = 0 : i64, scratch_operands = 0 : i64, tpu.core_type = #tpu.core_type<tc>, window_params = [{transform_indices = @transform_0, window_bounds = array<i64: 8, 64>}, {pipeline_mode = #tpu.pipeline_mode<synchronous>, transform_indices = @transform_1, window_bounds = array<i64: 1, 32>}, {pipeline_mode = #tpu.pipeline_mode<synchronous>, transform_indices = @transform_2, window_bounds = array<i64: 1, 32>}, {pipeline_mode = #tpu.pipeline_mode<synchronous>, transform_indices = @transform_3, window_bounds = array<i64: 1, 32>}, {pipeline_mode = #tpu.pipeline_mode<synchronous>, transform_indices = @transform_4, window_bounds = array<i64: 1, 32>}, {pipeline_mode = #tpu.pipeline_mode<synchronous>, transform_indices = @transform_5, window_bounds = array<i64: 32, 192>}, {pipeline_mode = #tpu.pipeline_mode<synchronous>, transform_indices = @transform_6, window_bounds = array<i64: 1, 96>}, {pipeline_mode = #tpu.pipeline_mode<synchronous>, transform_indices = @transform_7, window_bounds = array<i64: 1, 96>}, {pipeline_mode = #tpu.pipeline_mode<synchronous>, transform_indices = @transform_8, window_bounds = array<i64: 32, 64>}, {pipeline_mode = #tpu.pipeline_mode<synchronous>, transform_indices = @transform_9, window_bounds = array<i64: 1, 32>}, {pipeline_mode = #tpu.pipeline_mode<synchronous>, transform_indices = @transform_10, window_bounds = array<i64: 1, 32>}, {pipeline_mode = #tpu.pipeline_mode<synchronous>, transform_indices = @transform_11, window_bounds = array<i64: 1, 32>}, {pipeline_mode = #tpu.pipeline_mode<synchronous>, transform_indices = @transform_12, window_bounds = array<i64: 1, 32>}, {pipeline_mode = #tpu.pipeline_mode<synchronous>, transform_indices = @transform_13, window_bounds = array<i64: 1, 32>}, {pipeline_mode = #tpu.pipeline_mode<synchronous>, transform_indices = @transform_14, window_bounds = array<i64: 1, 32>}, {pipeline_mode = #tpu.pipeline_mode<synchronous>, transform_indices = @transform_15, window_bounds = array<i64: 32, 256>}, {pipeline_mode = #tpu.pipeline_mode<synchronous>, transform_indices = @transform_16, window_bounds = array<i64: 1, 128>}, {pipeline_mode = #tpu.pipeline_mode<synchronous>, transform_indices = @transform_17, window_bounds = array<i64: 1, 128>}, {pipeline_mode = #tpu.pipeline_mode<synchronous>, transform_indices = @transform_18, window_bounds = array<i64: 128, 64>}, {pipeline_mode = #tpu.pipeline_mode<synchronous>, transform_indices = @transform_19, window_bounds = array<i64: 1, 32>}, {pipeline_mode = #tpu.pipeline_mode<synchronous>, transform_indices = @transform_20, window_bounds = array<i64: 1, 32>}, {pipeline_mode = #tpu.pipeline_mode<synchronous>, transform_indices = @transform_21, window_bounds = array<i64: 1, 32>}, {pipeline_mode = #tpu.pipeline_mode<synchronous>, transform_indices = @transform_22, window_bounds = array<i64: 1, 32>}, {pipeline_mode = #tpu.pipeline_mode<synchronous>, transform_indices = @transform_23, window_bounds = array<i64: 1, 32>}, {pipeline_mode = #tpu.pipeline_mode<synchronous>, transform_indices = @transform_24, window_bounds = array<i64: 1, 32>}, {transform_indices = @transform_25, window_bounds = array<i64: 8, 64>}]} {
    %c0 = arith.constant 0 : index
    %c0_0 = arith.constant 0 : index
    %0 = vector.load %arg1[%c0, %c0_0] : memref<8x64xf32, #tpu.memory_space<vmem>>, vector<8x64xf32>
    %1 = vector.extract_strided_slice %0 {offsets = [0, 0], sizes = [8, 32], strides = [1, 1]} : vector<8x64xf32> to vector<8x32xf32>
    %2 = vector.extract_strided_slice %0 {offsets = [0, 32], sizes = [8, 32], strides = [1, 1]} : vector<8x64xf32> to vector<8x32xf32>
    %c0_1 = arith.constant 0 : index
    %c0_2 = arith.constant 0 : index
    %3 = vector.load %arg2[%c0_1, %c0_2] : memref<1x32xf32, #tpu.memory_space<vmem>>, vector<1x32xf32>
    %c0_3 = arith.constant 0 : index
    %c0_4 = arith.constant 0 : index
    %4 = vector.load %arg3[%c0_3, %c0_4] : memref<1x32xf32, #tpu.memory_space<vmem>>, vector<1x32xf32>
    %cst = arith.constant dense<0.000000e+00> : vector<8xf32>
    %5 = vector.multi_reduction <add>, %1, %cst [1] : vector<8x32xf32> to vector<8xf32>
    %6 = vector.shape_cast %5 : vector<8xf32> to vector<8x1xf32>
    %cst_5 = arith.constant 3.200000e+01 : f32
    %7 = vector.broadcast %cst_5 : f32 to vector<8x1xf32>
    %8 = arith.divf %6, %7 : vector<8x1xf32>
    %9 = vector.broadcast %8 : vector<8x1xf32> to vector<8x32xf32>
    %10 = arith.subf %1, %9 : vector<8x32xf32>
    %11 = arith.mulf %10, %10 : vector<8x32xf32>
    %cst_6 = arith.constant dense<0.000000e+00> : vector<8xf32>
    %12 = vector.multi_reduction <add>, %11, %cst_6 [1] : vector<8x32xf32> to vector<8xf32>
    %13 = vector.shape_cast %12 : vector<8xf32> to vector<8x1xf32>
    %cst_7 = arith.constant 3.200000e+01 : f32
    %14 = vector.broadcast %cst_7 : f32 to vector<8x1xf32>
    %15 = arith.divf %13, %14 : vector<8x1xf32>
    %16 = vector.broadcast %8 : vector<8x1xf32> to vector<8x32xf32>
    %17 = arith.subf %1, %16 : vector<8x32xf32>
    %cst_8 = arith.constant 9.99999974E-6 : f32
    %18 = vector.broadcast %cst_8 : f32 to vector<8x1xf32>
    %19 = arith.addf %15, %18 : vector<8x1xf32>
    %20 = math.rsqrt %19 : vector<8x1xf32>
    %21 = vector.broadcast %20 : vector<8x1xf32> to vector<8x32xf32>
    %22 = arith.mulf %17, %21 : vector<8x32xf32>
    %23 = vector.broadcast %3 : vector<1x32xf32> to vector<8x32xf32>
    %24 = arith.mulf %22, %23 : vector<8x32xf32>
    %25 = vector.broadcast %4 : vector<1x32xf32> to vector<8x32xf32>
    %26 = arith.addf %24, %25 : vector<8x32xf32>
    %c0_9 = arith.constant 0 : index
    %c0_10 = arith.constant 0 : index
    %27 = vector.load %arg4[%c0_9, %c0_10] : memref<1x32xf32, #tpu.memory_space<vmem>>, vector<1x32xf32>
    %c0_11 = arith.constant 0 : index
    %c0_12 = arith.constant 0 : index
    %28 = vector.load %arg5[%c0_11, %c0_12] : memref<1x32xf32, #tpu.memory_space<vmem>>, vector<1x32xf32>
    %cst_13 = arith.constant dense<0.000000e+00> : vector<8xf32>
    %29 = vector.multi_reduction <add>, %2, %cst_13 [1] : vector<8x32xf32> to vector<8xf32>
    %30 = vector.shape_cast %29 : vector<8xf32> to vector<8x1xf32>
    %cst_14 = arith.constant 3.200000e+01 : f32
    %31 = vector.broadcast %cst_14 : f32 to vector<8x1xf32>
    %32 = arith.divf %30, %31 : vector<8x1xf32>
    %33 = vector.broadcast %32 : vector<8x1xf32> to vector<8x32xf32>
    %34 = arith.subf %2, %33 : vector<8x32xf32>
    %35 = arith.mulf %34, %34 : vector<8x32xf32>
    %cst_15 = arith.constant dense<0.000000e+00> : vector<8xf32>
    %36 = vector.multi_reduction <add>, %35, %cst_15 [1] : vector<8x32xf32> to vector<8xf32>
    %37 = vector.shape_cast %36 : vector<8xf32> to vector<8x1xf32>
    %cst_16 = arith.constant 3.200000e+01 : f32
    %38 = vector.broadcast %cst_16 : f32 to vector<8x1xf32>
    %39 = arith.divf %37, %38 : vector<8x1xf32>
    %40 = vector.broadcast %32 : vector<8x1xf32> to vector<8x32xf32>
    %41 = arith.subf %2, %40 : vector<8x32xf32>
    %cst_17 = arith.constant 9.99999974E-6 : f32
    %42 = vector.broadcast %cst_17 : f32 to vector<8x1xf32>
    %43 = arith.addf %39, %42 : vector<8x1xf32>
    %44 = math.rsqrt %43 : vector<8x1xf32>
    %45 = vector.broadcast %44 : vector<8x1xf32> to vector<8x32xf32>
    %46 = arith.mulf %41, %45 : vector<8x32xf32>
    %47 = vector.broadcast %27 : vector<1x32xf32> to vector<8x32xf32>
    %48 = arith.mulf %46, %47 : vector<8x32xf32>
    %49 = vector.broadcast %28 : vector<1x32xf32> to vector<8x32xf32>
    %50 = arith.addf %48, %49 : vector<8x32xf32>
    %51 = tpu.concatenate %26, %50 in 0 : vector<8x32xf32>, vector<8x32xf32> -> vector<16x32xf32>
    %52 = arith.truncf %51 : vector<16x32xf32> to vector<16x32xbf16>
    %c0_18 = arith.constant 0 : index
    %c0_19 = arith.constant 0 : index
    %53 = vector.load %arg6[%c0_18, %c0_19] : memref<32x192xbf16, #tpu.memory_space<vmem>>, vector<32x192xbf16>
    %cst_20 = arith.constant dense<0.000000e+00> : vector<16x192xf32>
    %54 = tpu.matmul %52, %53, %cst_20 {dimension_numbers = #tpu.dot_dimension_numbers<[1], [0], [0], [1], [0, 0, 1, 1], [], []>} : vector<16x32xbf16>, vector<32x192xbf16>, vector<16x192xf32> -> vector<16x192xf32>
    %c0_21 = arith.constant 0 : index
    %c0_22 = arith.constant 0 : index
    %55 = vector.load %arg7[%c0_21, %c0_22] : memref<1x96xf32, #tpu.memory_space<vmem>>, vector<1x96xf32>
    %c0_23 = arith.constant 0 : index
    %c0_24 = arith.constant 0 : index
    %56 = vector.load %arg8[%c0_23, %c0_24] : memref<1x96xf32, #tpu.memory_space<vmem>>, vector<1x96xf32>
    %57 = vector.extract_strided_slice %54 {offsets = [0, 0], sizes = [8, 96], strides = [1, 1]} : vector<16x192xf32> to vector<8x96xf32>
    %58 = vector.extract_strided_slice %54 {offsets = [0, 96], sizes = [8, 96], strides = [1, 1]} : vector<16x192xf32> to vector<8x96xf32>
    %59 = vector.extract_strided_slice %54 {offsets = [8, 0], sizes = [8, 96], strides = [1, 1]} : vector<16x192xf32> to vector<8x96xf32>
    %60 = vector.extract_strided_slice %54 {offsets = [8, 96], sizes = [8, 96], strides = [1, 1]} : vector<16x192xf32> to vector<8x96xf32>
    %61 = arith.subf %57, %60 : vector<8x96xf32>
    %62 = vector.broadcast %55 : vector<1x96xf32> to vector<8x96xf32>
    %63 = arith.addf %61, %62 : vector<8x96xf32>
    %64 = arith.addf %59, %58 : vector<8x96xf32>
    %65 = vector.broadcast %56 : vector<1x96xf32> to vector<8x96xf32>
    %66 = arith.addf %64, %65 : vector<8x96xf32>
    %67 = vector.extract_strided_slice %63 {offsets = [0, 0], sizes = [8, 32], strides = [1, 1]} : vector<8x96xf32> to vector<8x32xf32>
    %cst_25 = arith.constant 0.353553385 : f32
    %68 = vector.broadcast %cst_25 : f32 to vector<8x32xf32>
    %69 = arith.mulf %67, %68 : vector<8x32xf32>
    %70 = vector.shape_cast %69 : vector<8x32xf32> to vector<8x4x8xf32>
    %71 = tpu.transpose %70, [1, 0, 2] : vector<8x4x8xf32> -> vector<4x8x8xf32>
    %72 = arith.truncf %71 : vector<4x8x8xf32> to vector<4x8x8xbf16>
    %73 = vector.extract_strided_slice %66 {offsets = [0, 0], sizes = [8, 32], strides = [1, 1]} : vector<8x96xf32> to vector<8x32xf32>
    %cst_26 = arith.constant 0.353553385 : f32
    %74 = vector.broadcast %cst_26 : f32 to vector<8x32xf32>
    %75 = arith.mulf %73, %74 : vector<8x32xf32>
    %76 = vector.shape_cast %75 : vector<8x32xf32> to vector<8x4x8xf32>
    %77 = tpu.transpose %76, [1, 0, 2] : vector<8x4x8xf32> -> vector<4x8x8xf32>
    %78 = arith.truncf %77 : vector<4x8x8xf32> to vector<4x8x8xbf16>
    %79 = vector.extract_strided_slice %63 {offsets = [0, 32], sizes = [8, 32], strides = [1, 1]} : vector<8x96xf32> to vector<8x32xf32>
    %80 = vector.shape_cast %79 : vector<8x32xf32> to vector<8x4x8xf32>
    %81 = tpu.transpose %80, [1, 0, 2] : vector<8x4x8xf32> -> vector<4x8x8xf32>
    %82 = vector.extract_strided_slice %66 {offsets = [0, 32], sizes = [8, 32], strides = [1, 1]} : vector<8x96xf32> to vector<8x32xf32>
    %83 = vector.shape_cast %82 : vector<8x32xf32> to vector<8x4x8xf32>
    %84 = tpu.transpose %83, [1, 0, 2] : vector<8x4x8xf32> -> vector<4x8x8xf32>
    %85 = vector.extract_strided_slice %63 {offsets = [0, 64], sizes = [8, 32], strides = [1, 1]} : vector<8x96xf32> to vector<8x32xf32>
    %86 = vector.shape_cast %85 : vector<8x32xf32> to vector<8x4x8xf32>
    %87 = tpu.transpose %86, [1, 0, 2] : vector<8x4x8xf32> -> vector<4x8x8xf32>
    %88 = vector.extract_strided_slice %66 {offsets = [0, 64], sizes = [8, 32], strides = [1, 1]} : vector<8x96xf32> to vector<8x32xf32>
    %89 = vector.shape_cast %88 : vector<8x32xf32> to vector<8x4x8xf32>
    %90 = tpu.transpose %89, [1, 0, 2] : vector<8x4x8xf32> -> vector<4x8x8xf32>
    %91 = tpu.concatenate %81, %84 in 1 : vector<4x8x8xf32>, vector<4x8x8xf32> -> vector<4x16x8xf32>
    %92 = arith.truncf %91 : vector<4x16x8xf32> to vector<4x16x8xbf16>
    "tpu.trace_start"() <{level = 10 : i32, message = "bqd,bkd->bqk"}> : () -> ()
    %cst_27 = arith.constant dense<0.000000e+00> : vector<4x8x16xf32>
    %93 = tpu.matmul %72, %92, %cst_27 {dimension_numbers = #tpu.dot_dimension_numbers<[2], [2], [1], [1], [0, 0, 0, 1, 1, 1], [0], [0]>} : vector<4x8x8xbf16>, vector<4x16x8xbf16>, vector<4x8x16xf32> -> vector<4x8x16xf32>
    %cst_28 = arith.constant dense<0.000000e+00> : vector<4x8x16xf32>
    %94 = tpu.matmul %78, %92, %cst_28 {dimension_numbers = #tpu.dot_dimension_numbers<[2], [2], [1], [1], [0, 0, 0, 1, 1, 1], [0], [0]>} : vector<4x8x8xbf16>, vector<4x16x8xbf16>, vector<4x8x16xf32> -> vector<4x8x16xf32>
    "tpu.trace_stop"() : () -> ()
    %95 = vector.extract_strided_slice %93 {offsets = [0, 0, 0], sizes = [4, 8, 8], strides = [1, 1, 1]} : vector<4x8x16xf32> to vector<4x8x8xf32>
    %cst_29 = arith.constant dense<0xFF800000> : vector<4x8xf32>
    %96 = vector.multi_reduction <maximumf>, %95, %cst_29 [2] : vector<4x8x8xf32> to vector<4x8xf32>
    %97 = vector.shape_cast %96 : vector<4x8xf32> to vector<4x8x1xf32>
    %98 = vector.broadcast %97 : vector<4x8x1xf32> to vector<4x8x8xf32>
    %99 = arith.subf %95, %98 : vector<4x8x8xf32>
    %100 = math.exp %99 : vector<4x8x8xf32>
    %cst_30 = arith.constant dense<0.000000e+00> : vector<4x8xf32>
    %101 = vector.multi_reduction <add>, %100, %cst_30 [2] : vector<4x8x8xf32> to vector<4x8xf32>
    %102 = vector.shape_cast %101 : vector<4x8xf32> to vector<4x8x1xf32>
    %103 = vector.broadcast %102 : vector<4x8x1xf32> to vector<4x8x8xf32>
    %104 = arith.divf %100, %103 : vector<4x8x8xf32>
    %105 = vector.extract_strided_slice %94 {offsets = [0, 0, 8], sizes = [4, 8, 8], strides = [1, 1, 1]} : vector<4x8x16xf32> to vector<4x8x8xf32>
    %cst_31 = arith.constant dense<0xFF800000> : vector<4x8xf32>
    %106 = vector.multi_reduction <maximumf>, %105, %cst_31 [2] : vector<4x8x8xf32> to vector<4x8xf32>
    %107 = vector.shape_cast %106 : vector<4x8xf32> to vector<4x8x1xf32>
    %108 = vector.broadcast %107 : vector<4x8x1xf32> to vector<4x8x8xf32>
    %109 = arith.subf %105, %108 : vector<4x8x8xf32>
    %110 = math.exp %109 : vector<4x8x8xf32>
    %cst_32 = arith.constant dense<0.000000e+00> : vector<4x8xf32>
    %111 = vector.multi_reduction <add>, %110, %cst_32 [2] : vector<4x8x8xf32> to vector<4x8xf32>
    %112 = vector.shape_cast %111 : vector<4x8xf32> to vector<4x8x1xf32>
    %113 = vector.broadcast %112 : vector<4x8x1xf32> to vector<4x8x8xf32>
    %114 = arith.divf %110, %113 : vector<4x8x8xf32>
    %115 = arith.subf %104, %114 : vector<4x8x8xf32>
    %116 = vector.extract_strided_slice %93 {offsets = [0, 0, 8], sizes = [4, 8, 8], strides = [1, 1, 1]} : vector<4x8x16xf32> to vector<4x8x8xf32>
    %cst_33 = arith.constant dense<0xFF800000> : vector<4x8xf32>
    %117 = vector.multi_reduction <maximumf>, %116, %cst_33 [2] : vector<4x8x8xf32> to vector<4x8xf32>
    %118 = vector.shape_cast %117 : vector<4x8xf32> to vector<4x8x1xf32>
    %119 = vector.broadcast %118 : vector<4x8x1xf32> to vector<4x8x8xf32>
    %120 = arith.subf %116, %119 : vector<4x8x8xf32>
    %121 = math.exp %120 : vector<4x8x8xf32>
    %cst_34 = arith.constant dense<0.000000e+00> : vector<4x8xf32>
    %122 = vector.multi_reduction <add>, %121, %cst_34 [2] : vector<4x8x8xf32> to vector<4x8xf32>
    %123 = vector.shape_cast %122 : vector<4x8xf32> to vector<4x8x1xf32>
    %124 = vector.broadcast %123 : vector<4x8x1xf32> to vector<4x8x8xf32>
    %125 = arith.divf %121, %124 : vector<4x8x8xf32>
    %126 = vector.extract_strided_slice %94 {offsets = [0, 0, 0], sizes = [4, 8, 8], strides = [1, 1, 1]} : vector<4x8x16xf32> to vector<4x8x8xf32>
    %cst_35 = arith.constant dense<0xFF800000> : vector<4x8xf32>
    %127 = vector.multi_reduction <maximumf>, %126, %cst_35 [2] : vector<4x8x8xf32> to vector<4x8xf32>
    %128 = vector.shape_cast %127 : vector<4x8xf32> to vector<4x8x1xf32>
    %129 = vector.broadcast %128 : vector<4x8x1xf32> to vector<4x8x8xf32>
    %130 = arith.subf %126, %129 : vector<4x8x8xf32>
    %131 = math.exp %130 : vector<4x8x8xf32>
    %cst_36 = arith.constant dense<0.000000e+00> : vector<4x8xf32>
    %132 = vector.multi_reduction <add>, %131, %cst_36 [2] : vector<4x8x8xf32> to vector<4x8xf32>
    %133 = vector.shape_cast %132 : vector<4x8xf32> to vector<4x8x1xf32>
    %134 = vector.broadcast %133 : vector<4x8x1xf32> to vector<4x8x8xf32>
    %135 = arith.divf %131, %134 : vector<4x8x8xf32>
    %136 = arith.addf %125, %135 : vector<4x8x8xf32>
    %137 = tpu.concatenate %87, %90 in 2 : vector<4x8x8xf32>, vector<4x8x8xf32> -> vector<4x8x16xf32>
    %138 = arith.truncf %137 : vector<4x8x16xf32> to vector<4x8x16xbf16>
    %139 = arith.truncf %115 : vector<4x8x8xf32> to vector<4x8x8xbf16>
    "tpu.trace_start"() <{level = 10 : i32, message = "bqk,bkd->bqd"}> : () -> ()
    %cst_37 = arith.constant dense<0.000000e+00> : vector<4x8x16xf32>
    %140 = tpu.matmul %139, %138, %cst_37 {dimension_numbers = #tpu.dot_dimension_numbers<[2], [1], [1], [2], [0, 0, 0, 1, 1, 2], [0], [0]>} : vector<4x8x8xbf16>, vector<4x8x16xbf16>, vector<4x8x16xf32> -> vector<4x8x16xf32>
    "tpu.trace_stop"() : () -> ()
    %141 = arith.truncf %136 : vector<4x8x8xf32> to vector<4x8x8xbf16>
    "tpu.trace_start"() <{level = 10 : i32, message = "bqk,bkd->bqd"}> : () -> ()
    %cst_38 = arith.constant dense<0.000000e+00> : vector<4x8x16xf32>
    %142 = tpu.matmul %141, %138, %cst_38 {dimension_numbers = #tpu.dot_dimension_numbers<[2], [1], [1], [2], [0, 0, 0, 1, 1, 2], [0], [0]>} : vector<4x8x8xbf16>, vector<4x8x16xbf16>, vector<4x8x16xf32> -> vector<4x8x16xf32>
    "tpu.trace_stop"() : () -> ()
    %143 = vector.extract_strided_slice %140 {offsets = [0, 0, 0], sizes = [4, 8, 8], strides = [1, 1, 1]} : vector<4x8x16xf32> to vector<4x8x8xf32>
    %144 = vector.extract_strided_slice %142 {offsets = [0, 0, 8], sizes = [4, 8, 8], strides = [1, 1, 1]} : vector<4x8x16xf32> to vector<4x8x8xf32>
    %145 = arith.subf %143, %144 : vector<4x8x8xf32>
    %146 = tpu.transpose %145, [1, 0, 2] : vector<4x8x8xf32> -> vector<8x4x8xf32>
    %147 = vector.shape_cast %146 : vector<8x4x8xf32> to vector<8x32xf32>
    %148 = vector.extract_strided_slice %140 {offsets = [0, 0, 8], sizes = [4, 8, 8], strides = [1, 1, 1]} : vector<4x8x16xf32> to vector<4x8x8xf32>
    %149 = vector.extract_strided_slice %142 {offsets = [0, 0, 0], sizes = [4, 8, 8], strides = [1, 1, 1]} : vector<4x8x16xf32> to vector<4x8x8xf32>
    %150 = arith.addf %148, %149 : vector<4x8x8xf32>
    %151 = tpu.transpose %150, [1, 0, 2] : vector<4x8x8xf32> -> vector<8x4x8xf32>
    %152 = vector.shape_cast %151 : vector<8x4x8xf32> to vector<8x32xf32>
    %153 = tpu.concatenate %147, %152 in 0 : vector<8x32xf32>, vector<8x32xf32> -> vector<16x32xf32>
    %154 = arith.truncf %153 : vector<16x32xf32> to vector<16x32xbf16>
    %c0_39 = arith.constant 0 : index
    %c0_40 = arith.constant 0 : index
    %155 = vector.load %arg9[%c0_39, %c0_40] : memref<32x64xbf16, #tpu.memory_space<vmem>>, vector<32x64xbf16>
    %cst_41 = arith.constant dense<0.000000e+00> : vector<16x64xf32>
    %156 = tpu.matmul %154, %155, %cst_41 {dimension_numbers = #tpu.dot_dimension_numbers<[1], [0], [0], [1], [0, 0, 1, 1], [], []>} : vector<16x32xbf16>, vector<32x64xbf16>, vector<16x64xf32> -> vector<16x64xf32>
    %c0_42 = arith.constant 0 : index
    %c0_43 = arith.constant 0 : index
    %157 = vector.load %arg10[%c0_42, %c0_43] : memref<1x32xf32, #tpu.memory_space<vmem>>, vector<1x32xf32>
    %c0_44 = arith.constant 0 : index
    %c0_45 = arith.constant 0 : index
    %158 = vector.load %arg11[%c0_44, %c0_45] : memref<1x32xf32, #tpu.memory_space<vmem>>, vector<1x32xf32>
    %159 = vector.extract_strided_slice %156 {offsets = [0, 0], sizes = [8, 32], strides = [1, 1]} : vector<16x64xf32> to vector<8x32xf32>
    %160 = vector.extract_strided_slice %156 {offsets = [0, 32], sizes = [8, 32], strides = [1, 1]} : vector<16x64xf32> to vector<8x32xf32>
    %161 = vector.extract_strided_slice %156 {offsets = [8, 0], sizes = [8, 32], strides = [1, 1]} : vector<16x64xf32> to vector<8x32xf32>
    %162 = vector.extract_strided_slice %156 {offsets = [8, 32], sizes = [8, 32], strides = [1, 1]} : vector<16x64xf32> to vector<8x32xf32>
    %163 = arith.subf %159, %162 : vector<8x32xf32>
    %164 = vector.broadcast %157 : vector<1x32xf32> to vector<8x32xf32>
    %165 = arith.addf %163, %164 : vector<8x32xf32>
    %166 = arith.addf %161, %160 : vector<8x32xf32>
    %167 = vector.broadcast %158 : vector<1x32xf32> to vector<8x32xf32>
    %168 = arith.addf %166, %167 : vector<8x32xf32>
    %169 = arith.addf %1, %165 : vector<8x32xf32>
    %170 = arith.addf %2, %168 : vector<8x32xf32>
    %c0_46 = arith.constant 0 : index
    %c0_47 = arith.constant 0 : index
    %171 = vector.load %arg12[%c0_46, %c0_47] : memref<1x32xf32, #tpu.memory_space<vmem>>, vector<1x32xf32>
    %c0_48 = arith.constant 0 : index
    %c0_49 = arith.constant 0 : index
    %172 = vector.load %arg13[%c0_48, %c0_49] : memref<1x32xf32, #tpu.memory_space<vmem>>, vector<1x32xf32>
    %cst_50 = arith.constant dense<0.000000e+00> : vector<8xf32>
    %173 = vector.multi_reduction <add>, %169, %cst_50 [1] : vector<8x32xf32> to vector<8xf32>
    %174 = vector.shape_cast %173 : vector<8xf32> to vector<8x1xf32>
    %cst_51 = arith.constant 3.200000e+01 : f32
    %175 = vector.broadcast %cst_51 : f32 to vector<8x1xf32>
    %176 = arith.divf %174, %175 : vector<8x1xf32>
    %177 = vector.broadcast %176 : vector<8x1xf32> to vector<8x32xf32>
    %178 = arith.subf %169, %177 : vector<8x32xf32>
    %179 = arith.mulf %178, %178 : vector<8x32xf32>
    %cst_52 = arith.constant dense<0.000000e+00> : vector<8xf32>
    %180 = vector.multi_reduction <add>, %179, %cst_52 [1] : vector<8x32xf32> to vector<8xf32>
    %181 = vector.shape_cast %180 : vector<8xf32> to vector<8x1xf32>
    %cst_53 = arith.constant 3.200000e+01 : f32
    %182 = vector.broadcast %cst_53 : f32 to vector<8x1xf32>
    %183 = arith.divf %181, %182 : vector<8x1xf32>
    %184 = vector.broadcast %176 : vector<8x1xf32> to vector<8x32xf32>
    %185 = arith.subf %169, %184 : vector<8x32xf32>
    %cst_54 = arith.constant 9.99999974E-6 : f32
    %186 = vector.broadcast %cst_54 : f32 to vector<8x1xf32>
    %187 = arith.addf %183, %186 : vector<8x1xf32>
    %188 = math.rsqrt %187 : vector<8x1xf32>
    %189 = vector.broadcast %188 : vector<8x1xf32> to vector<8x32xf32>
    %190 = arith.mulf %185, %189 : vector<8x32xf32>
    %191 = vector.broadcast %171 : vector<1x32xf32> to vector<8x32xf32>
    %192 = arith.mulf %190, %191 : vector<8x32xf32>
    %193 = vector.broadcast %172 : vector<1x32xf32> to vector<8x32xf32>
    %194 = arith.addf %192, %193 : vector<8x32xf32>
    %c0_55 = arith.constant 0 : index
    %c0_56 = arith.constant 0 : index
    %195 = vector.load %arg14[%c0_55, %c0_56] : memref<1x32xf32, #tpu.memory_space<vmem>>, vector<1x32xf32>
    %c0_57 = arith.constant 0 : index
    %c0_58 = arith.constant 0 : index
    %196 = vector.load %arg15[%c0_57, %c0_58] : memref<1x32xf32, #tpu.memory_space<vmem>>, vector<1x32xf32>
    %cst_59 = arith.constant dense<0.000000e+00> : vector<8xf32>
    %197 = vector.multi_reduction <add>, %170, %cst_59 [1] : vector<8x32xf32> to vector<8xf32>
    %198 = vector.shape_cast %197 : vector<8xf32> to vector<8x1xf32>
    %cst_60 = arith.constant 3.200000e+01 : f32
    %199 = vector.broadcast %cst_60 : f32 to vector<8x1xf32>
    %200 = arith.divf %198, %199 : vector<8x1xf32>
    %201 = vector.broadcast %200 : vector<8x1xf32> to vector<8x32xf32>
    %202 = arith.subf %170, %201 : vector<8x32xf32>
    %203 = arith.mulf %202, %202 : vector<8x32xf32>
    %cst_61 = arith.constant dense<0.000000e+00> : vector<8xf32>
    %204 = vector.multi_reduction <add>, %203, %cst_61 [1] : vector<8x32xf32> to vector<8xf32>
    %205 = vector.shape_cast %204 : vector<8xf32> to vector<8x1xf32>
    %cst_62 = arith.constant 3.200000e+01 : f32
    %206 = vector.broadcast %cst_62 : f32 to vector<8x1xf32>
    %207 = arith.divf %205, %206 : vector<8x1xf32>
    %208 = vector.broadcast %200 : vector<8x1xf32> to vector<8x32xf32>
    %209 = arith.subf %170, %208 : vector<8x32xf32>
    %cst_63 = arith.constant 9.99999974E-6 : f32
    %210 = vector.broadcast %cst_63 : f32 to vector<8x1xf32>
    %211 = arith.addf %207, %210 : vector<8x1xf32>
    %212 = math.rsqrt %211 : vector<8x1xf32>
    %213 = vector.broadcast %212 : vector<8x1xf32> to vector<8x32xf32>
    %214 = arith.mulf %209, %213 : vector<8x32xf32>
    %215 = vector.broadcast %195 : vector<1x32xf32> to vector<8x32xf32>
    %216 = arith.mulf %214, %215 : vector<8x32xf32>
    %217 = vector.broadcast %196 : vector<1x32xf32> to vector<8x32xf32>
    %218 = arith.addf %216, %217 : vector<8x32xf32>
    %219 = tpu.concatenate %194, %218 in 0 : vector<8x32xf32>, vector<8x32xf32> -> vector<16x32xf32>
    %220 = arith.truncf %219 : vector<16x32xf32> to vector<16x32xbf16>
    %c0_64 = arith.constant 0 : index
    %c0_65 = arith.constant 0 : index
    %221 = vector.load %arg16[%c0_64, %c0_65] : memref<32x256xbf16, #tpu.memory_space<vmem>>, vector<32x256xbf16>
    %cst_66 = arith.constant dense<0.000000e+00> : vector<16x256xf32>
    %222 = tpu.matmul %220, %221, %cst_66 {dimension_numbers = #tpu.dot_dimension_numbers<[1], [0], [0], [1], [0, 0, 1, 1], [], []>} : vector<16x32xbf16>, vector<32x256xbf16>, vector<16x256xf32> -> vector<16x256xf32>
    %c0_67 = arith.constant 0 : index
    %c0_68 = arith.constant 0 : index
    %223 = vector.load %arg17[%c0_67, %c0_68] : memref<1x128xf32, #tpu.memory_space<vmem>>, vector<1x128xf32>
    %c0_69 = arith.constant 0 : index
    %c0_70 = arith.constant 0 : index
    %224 = vector.load %arg18[%c0_69, %c0_70] : memref<1x128xf32, #tpu.memory_space<vmem>>, vector<1x128xf32>
    %225 = vector.extract_strided_slice %222 {offsets = [0, 0], sizes = [8, 128], strides = [1, 1]} : vector<16x256xf32> to vector<8x128xf32>
    %226 = vector.extract_strided_slice %222 {offsets = [0, 128], sizes = [8, 128], strides = [1, 1]} : vector<16x256xf32> to vector<8x128xf32>
    %227 = vector.extract_strided_slice %222 {offsets = [8, 0], sizes = [8, 128], strides = [1, 1]} : vector<16x256xf32> to vector<8x128xf32>
    %228 = vector.extract_strided_slice %222 {offsets = [8, 128], sizes = [8, 128], strides = [1, 1]} : vector<16x256xf32> to vector<8x128xf32>
    %229 = arith.subf %225, %228 : vector<8x128xf32>
    %230 = vector.broadcast %223 : vector<1x128xf32> to vector<8x128xf32>
    %231 = arith.addf %229, %230 : vector<8x128xf32>
    %232 = arith.addf %227, %226 : vector<8x128xf32>
    %233 = vector.broadcast %224 : vector<1x128xf32> to vector<8x128xf32>
    %234 = arith.addf %232, %233 : vector<8x128xf32>
    %cst_71 = arith.constant 0.000000e+00 : f32
    %235 = vector.broadcast %cst_71 : f32 to vector<8x128xf32>
    %236 = arith.maximumf %231, %235 : vector<8x128xf32>
    %cst_72 = arith.constant 0.000000e+00 : f32
    %237 = vector.broadcast %cst_72 : f32 to vector<8x128xf32>
    %238 = arith.maximumf %234, %237 : vector<8x128xf32>
    %239 = tpu.concatenate %236, %238 in 0 : vector<8x128xf32>, vector<8x128xf32> -> vector<16x128xf32>
    %240 = arith.truncf %239 : vector<16x128xf32> to vector<16x128xbf16>
    %c0_73 = arith.constant 0 : index
    %c0_74 = arith.constant 0 : index
    %241 = vector.load %arg19[%c0_73, %c0_74] : memref<128x64xbf16, #tpu.memory_space<vmem>>, vector<128x64xbf16>
    %cst_75 = arith.constant dense<0.000000e+00> : vector<16x64xf32>
    %242 = tpu.matmul %240, %241, %cst_75 {dimension_numbers = #tpu.dot_dimension_numbers<[1], [0], [0], [1], [0, 0, 1, 1], [], []>} : vector<16x128xbf16>, vector<128x64xbf16>, vector<16x64xf32> -> vector<16x64xf32>
    %c0_76 = arith.constant 0 : index
    %c0_77 = arith.constant 0 : index
    %243 = vector.load %arg20[%c0_76, %c0_77] : memref<1x32xf32, #tpu.memory_space<vmem>>, vector<1x32xf32>
    %c0_78 = arith.constant 0 : index
    %c0_79 = arith.constant 0 : index
    %244 = vector.load %arg21[%c0_78, %c0_79] : memref<1x32xf32, #tpu.memory_space<vmem>>, vector<1x32xf32>
    %245 = vector.extract_strided_slice %242 {offsets = [0, 0], sizes = [8, 32], strides = [1, 1]} : vector<16x64xf32> to vector<8x32xf32>
    %246 = vector.extract_strided_slice %242 {offsets = [0, 32], sizes = [8, 32], strides = [1, 1]} : vector<16x64xf32> to vector<8x32xf32>
    %247 = vector.extract_strided_slice %242 {offsets = [8, 0], sizes = [8, 32], strides = [1, 1]} : vector<16x64xf32> to vector<8x32xf32>
    %248 = vector.extract_strided_slice %242 {offsets = [8, 32], sizes = [8, 32], strides = [1, 1]} : vector<16x64xf32> to vector<8x32xf32>
    %249 = arith.subf %245, %248 : vector<8x32xf32>
    %250 = vector.broadcast %243 : vector<1x32xf32> to vector<8x32xf32>
    %251 = arith.addf %249, %250 : vector<8x32xf32>
    %252 = arith.addf %247, %246 : vector<8x32xf32>
    %253 = vector.broadcast %244 : vector<1x32xf32> to vector<8x32xf32>
    %254 = arith.addf %252, %253 : vector<8x32xf32>
    %255 = arith.addf %169, %251 : vector<8x32xf32>
    %256 = arith.addf %170, %254 : vector<8x32xf32>
    %257 = tpu.concatenate %255, %256 in 1 : vector<8x32xf32>, vector<8x32xf32> -> vector<8x64xf32>
    %c0_80 = arith.constant 0 : index
    %c0_81 = arith.constant 0 : index
    %258 = vector.load %arg26[%c0_80, %c0_81] : memref<8x64xf32, #tpu.memory_space<vmem>>, vector<8x64xf32>
    tpu.vector_store %arg26[%c0_80, %c0_81], %257 {strides = array<i32>} : memref<8x64xf32, #tpu.memory_space<vmem>>, vector<8x64xf32>,
    return
  }
  func.func @transform_0(%arg0: i32) -> (i32, i32) {
    %c0_i32 = arith.constant 0 : i32
    %c0_i32_0 = arith.constant 0 : i32
    return %arg0, %c0_i32 : i32, i32
  }
  func.func @transform_1(%arg0: i32) -> (i32, i32) {
    %c0_i32 = arith.constant 0 : i32
    %c0_i32_0 = arith.constant 0 : i32
    %c0_i32_1 = arith.constant 0 : i32
    return %c0_i32, %c0_i32_0 : i32, i32
  }
  func.func @transform_2(%arg0: i32) -> (i32, i32) {
    %c0_i32 = arith.constant 0 : i32
    %c0_i32_0 = arith.constant 0 : i32
    %c0_i32_1 = arith.constant 0 : i32
    return %c0_i32, %c0_i32_0 : i32, i32
  }
  func.func @transform_3(%arg0: i32) -> (i32, i32) {
    %c0_i32 = arith.constant 0 : i32
    %c0_i32_0 = arith.constant 0 : i32
    %c0_i32_1 = arith.constant 0 : i32
    return %c0_i32, %c0_i32_0 : i32, i32
  }
  func.func @transform_4(%arg0: i32) -> (i32, i32) {
    %c0_i32 = arith.constant 0 : i32
    %c0_i32_0 = arith.constant 0 : i32
    %c0_i32_1 = arith.constant 0 : i32
    return %c0_i32, %c0_i32_0 : i32, i32
  }
  func.func @transform_5(%arg0: i32) -> (i32, i32) {
    %c0_i32 = arith.constant 0 : i32
    %c0_i32_0 = arith.constant 0 : i32
    %c0_i32_1 = arith.constant 0 : i32
    return %c0_i32, %c0_i32_0 : i32, i32
  }
  func.func @transform_6(%arg0: i32) -> (i32, i32) {
    %c0_i32 = arith.constant 0 : i32
    %c0_i32_0 = arith.constant 0 : i32
    %c0_i32_1 = arith.constant 0 : i32
    return %c0_i32, %c0_i32_0 : i32, i32
  }
  func.func @transform_7(%arg0: i32) -> (i32, i32) {
    %c0_i32 = arith.constant 0 : i32
    %c0_i32_0 = arith.constant 0 : i32
    %c0_i32_1 = arith.constant 0 : i32
    return %c0_i32, %c0_i32_0 : i32, i32
  }
  func.func @transform_8(%arg0: i32) -> (i32, i32) {
    %c0_i32 = arith.constant 0 : i32
    %c0_i32_0 = arith.constant 0 : i32
    %c0_i32_1 = arith.constant 0 : i32
    return %c0_i32, %c0_i32_0 : i32, i32
  }
  func.func @transform_9(%arg0: i32) -> (i32, i32) {
    %c0_i32 = arith.constant 0 : i32
    %c0_i32_0 = arith.constant 0 : i32
    %c0_i32_1 = arith.constant 0 : i32
    return %c0_i32, %c0_i32_0 : i32, i32
  }
  func.func @transform_10(%arg0: i32) -> (i32, i32) {
    %c0_i32 = arith.constant 0 : i32
    %c0_i32_0 = arith.constant 0 : i32
    %c0_i32_1 = arith.constant 0 : i32
    return %c0_i32, %c0_i32_0 : i32, i32
  }
  func.func @transform_11(%arg0: i32) -> (i32, i32) {
    %c0_i32 = arith.constant 0 : i32
    %c0_i32_0 = arith.constant 0 : i32
    %c0_i32_1 = arith.constant 0 : i32
    return %c0_i32, %c0_i32_0 : i32, i32
  }
  func.func @transform_12(%arg0: i32) -> (i32, i32) {
    %c0_i32 = arith.constant 0 : i32
    %c0_i32_0 = arith.constant 0 : i32
    %c0_i32_1 = arith.constant 0 : i32
    return %c0_i32, %c0_i32_0 : i32, i32
  }
  func.func @transform_13(%arg0: i32) -> (i32, i32) {
    %c0_i32 = arith.constant 0 : i32
    %c0_i32_0 = arith.constant 0 : i32
    %c0_i32_1 = arith.constant 0 : i32
    return %c0_i32, %c0_i32_0 : i32, i32
  }
  func.func @transform_14(%arg0: i32) -> (i32, i32) {
    %c0_i32 = arith.constant 0 : i32
    %c0_i32_0 = arith.constant 0 : i32
    %c0_i32_1 = arith.constant 0 : i32
    return %c0_i32, %c0_i32_0 : i32, i32
  }
  func.func @transform_15(%arg0: i32) -> (i32, i32) {
    %c0_i32 = arith.constant 0 : i32
    %c0_i32_0 = arith.constant 0 : i32
    %c0_i32_1 = arith.constant 0 : i32
    return %c0_i32, %c0_i32_0 : i32, i32
  }
  func.func @transform_16(%arg0: i32) -> (i32, i32) {
    %c0_i32 = arith.constant 0 : i32
    %c0_i32_0 = arith.constant 0 : i32
    %c0_i32_1 = arith.constant 0 : i32
    return %c0_i32, %c0_i32_0 : i32, i32
  }
  func.func @transform_17(%arg0: i32) -> (i32, i32) {
    %c0_i32 = arith.constant 0 : i32
    %c0_i32_0 = arith.constant 0 : i32
    %c0_i32_1 = arith.constant 0 : i32
    return %c0_i32, %c0_i32_0 : i32, i32
  }
  func.func @transform_18(%arg0: i32) -> (i32, i32) {
    %c0_i32 = arith.constant 0 : i32
    %c0_i32_0 = arith.constant 0 : i32
    %c0_i32_1 = arith.constant 0 : i32
    return %c0_i32, %c0_i32_0 : i32, i32
  }
  func.func @transform_19(%arg0: i32) -> (i32, i32) {
    %c0_i32 = arith.constant 0 : i32
    %c0_i32_0 = arith.constant 0 : i32
    %c0_i32_1 = arith.constant 0 : i32
    return %c0_i32, %c0_i32_0 : i32, i32
  }
  func.func @transform_20(%arg0: i32) -> (i32, i32) {
    %c0_i32 = arith.constant 0 : i32
    %c0_i32_0 = arith.constant 0 : i32
    %c0_i32_1 = arith.constant 0 : i32
    return %c0_i32, %c0_i32_0 : i32, i32
  }
  func.func @transform_21(%arg0: i32) -> (i32, i32) {
    %c0_i32 = arith.constant 0 : i32
    %c0_i32_0 = arith.constant 0 : i32
    %c0_i32_1 = arith.constant 0 : i32
    return %c0_i32, %c0_i32_0 : i32, i32
  }
  func.func @transform_22(%arg0: i32) -> (i32, i32) {
    %c0_i32 = arith.constant 0 : i32
    %c0_i32_0 = arith.constant 0 : i32
    %c0_i32_1 = arith.constant 0 : i32
    return %c0_i32, %c0_i32_0 : i32, i32
  }
  func.func @transform_23(%arg0: i32) -> (i32, i32) {
    %c0_i32 = arith.constant 0 : i32
    %c0_i32_0 = arith.constant 0 : i32
    %c0_i32_1 = arith.constant 0 : i32
    return %c0_i32, %c0_i32_0 : i32, i32
  }
  func.func @transform_24(%arg0: i32) -> (i32, i32) {
    %c0_i32 = arith.constant 0 : i32
    %c0_i32_0 = arith.constant 0 : i32
    %c0_i32_1 = arith.constant 0 : i32
    return %c0_i32, %c0_i32_0 : i32, i32
  }
  func.func @transform_25(%arg0: i32) -> (i32, i32) {
    %c0_i32 = arith.constant 0 : i32
    %c0_i32_0 = arith.constant 0 : i32
    return %arg0, %c0_i32 : i32, i32
  }
}

</mosaic_0001>

<llo_original>
// kernel: complex_transformer_forward.3
$region0: #{complex_transformer_forward.3}
  #allocation0 [shape = 'u32[]', space=smem, size = 0x4, offset = 0x4, fixed_abs, tag = 'smem constant byte address 0x4 - core index']
  #allocation1 [shape = 'u32[144,128]{1,0:T(1,128)}', space=vmem, size = 0x12000, scoped, tag = 'internal scratch']
  %s0 = inlined_call_operand.vmem [shape: f32[16,32], index: 0, kind: input, shape index: {}]
  %s1 = inlined_call_operand.vmem [shape: f32[16,32], index: 1, kind: input, shape index: {}]
  %s2 = inlined_call_operand.vmem [shape: f32[8,32], index: 2, kind: input, shape index: {}]
  %s3 = inlined_call_operand.vmem [shape: bf16[32,512], index: 3, kind: input, shape index: {}]
  %s4 = inlined_call_operand.vmem [shape: f32[1,512], index: 4, kind: input, shape index: {}]
  %s5 = inlined_call_operand.vmem [shape: bf16[32,512], index: 5, kind: input, shape index: {}]
  %s6 = inlined_call_operand.vmem [shape: f32[1,512], index: 6, kind: input, shape index: {}]
  %s7 = inlined_call_operand.vmem [shape: bf16[512,64], index: 7, kind: input, shape index: {}]
  %s8 = inlined_call_operand.vmem [shape: f32[1,32], index: 8, kind: input, shape index: {}]
  %s9 = inlined_call_operand.vmem [shape: f32[1,32], index: 9, kind: input, shape index: {}]
  %s10 = inlined_call_operand.vmem [shape: f32[16,64], index: 10, kind: output, shape index: {}]
  %s11 = sld [smem:[#allocation0]]
  $region73: #{complex_transformer_forward.3} parent=0
    _
  %s13 = ssub.s32 1, %s11
  %s14 = scalar_select 0, %s13, %s11
  loop: start=0, step=1, limit=4
  $region2: #{complex_transformer_forward.3} parent=0 // loop_pre_header
    _
  $region3: #{complex_transformer_forward.3} parent=0 // loop_header
    %s16 = sphi 0, %s20
    %p17 = scmp.ge.s32.totalorder %s16, 4
    %s26 = sphi 0, %s28
    %s29 = sphi 0, %s26
    %s30 = sphi 0, %s29
    %s46 = sphi 0, %s30
    %s52 = sphi 0, %s54
    %s55 = sphi 0, %s52
    %s56 = sphi 0, %s55
    %s72 = sphi 0, %s56
    %s76 = sphi 0, %s76
    %s78 = sphi 0, %s76
    %s79 = sphi 0, %s78
    %s93 = sphi 0, %s79
    %s97 = sphi 0, %s97
    %s99 = sphi 0, %s97
    %s100 = sphi 0, %s99
    %s114 = sphi 0, %s100
    %s118 = sphi 0, %s118
    %s120 = sphi 0, %s118
    %s121 = sphi 0, %s120
    %s135 = sphi 0, %s121
    %s139 = sphi 0, %s139
    %s141 = sphi 0, %s139
    %s142 = sphi 0, %s141
    %s156 = sphi 0, %s142
    %s160 = sphi 0, %s160
    %s162 = sphi 0, %s160
    %s163 = sphi 0, %s162
    %s177 = sphi 0, %s163
    %s181 = sphi 0, %s181
    %s183 = sphi 0, %s181
    %s184 = sphi 0, %s183
    %s198 = sphi 0, %s184
    %s202 = sphi 0, %s202
    %s204 = sphi 0, %s202
    %s205 = sphi 0, %s204
    %s219 = sphi 0, %s205
    %s223 = sphi 0, %s223
    %s225 = sphi 0, %s223
    %s226 = sphi 0, %s225
    %s240 = sphi 0, %s226
    %s246 = sphi 0, %s248
    %s249 = sphi 0, %s246
    %s250 = sphi 0, %s249
    %s266 = sphi 0, %s250
  $region4: #{complex_transformer_forward.3} parent=0 // loop_header_branch
    %19 = sbr.rel (%p17) target = $region8
  $region5: #{complex_transformer_forward.3} parent=0 // loop_body
    %s21 = ssub.s32 %s16, 1
    %s22 = ssub.s32 %s16, 2
    %s23 = sadd.s32 %s16, 1
    %s24 = ssub.s32 %s16, %s23
    %p25 = scmp.eq.s32.totalorder %s24, 0
    %s27 = sadd.s32 %s26, 1
    %s28 = scalar_select %p25, %s26, %s27
    %p31 = pneg %p25
    %p32 = scmp.eq.s32.totalorder %s16, 1
    %p33 = por %p31, %p32
    %p34 = scmp.ne.s32.totalorder %s26, %s29
    %p35 = scmp.eq.s32.totalorder %s16, 0
    %p36 = por %p34, %p35
    %p37 = scmp.ne.s32.totalorder %s26, %s29
    %p38 = scmp.eq.s32.totalorder %s21, 1
    %p39 = por %p37, %p38
    %p40 = scmp.ne.s32.totalorder %s29, %s30
    %p41 = scmp.eq.s32.totalorder %s21, 0
    %p42 = por %p40, %p41
    %p43 = scmp.ne.s32.totalorder %s29, %s30
    %p44 = scmp.eq.s32.totalorder %s22, 1
    %p45 = por %p43, %p44
    %p47 = scmp.ne.s32.totalorder %s30, %s46
    %p48 = scmp.eq.s32.totalorder %s22, 0
    %p49 = por %p47, %p48
    %s50 = ssub.s32 %s16, %s23
    %p51 = scmp.eq.s32.totalorder %s50, 0
    %s53 = sadd.s32 %s52, 1
    %s54 = scalar_select %p51, %s52, %s53
    %p57 = pneg %p51
    %p58 = scmp.eq.s32.totalorder %s16, 1
    %p59 = por %p57, %p58
    %p60 = scmp.ne.s32.totalorder %s52, %s55
    %p61 = scmp.eq.s32.totalorder %s16, 0
    %p62 = por %p60, %p61
    %p63 = scmp.ne.s32.totalorder %s52, %s55
    %p64 = scmp.eq.s32.totalorder %s21, 1
    %p65 = por %p63, %p64
    %p66 = scmp.ne.s32.totalorder %s55, %s56
    %p67 = scmp.eq.s32.totalorder %s21, 0
    %p68 = por %p66, %p67
    %p69 = scmp.ne.s32.totalorder %s55, %s56
    %p70 = scmp.eq.s32.totalorder %s22, 1
    %p71 = por %p69, %p70
    %p73 = scmp.ne.s32.totalorder %s56, %s72
    %p74 = scmp.eq.s32.totalorder %s22, 0
    %p75 = por %p73, %p74
    %s77 = sadd.s32 %s76, 1
    %p80 = scmp.eq.s32.totalorder %s16, 1
    %p81 = scmp.ne.s32.totalorder %s76, %s78
    %p82 = scmp.eq.s32.totalorder %s16, 0
    %p83 = por %p81, %p82
    %p84 = scmp.ne.s32.totalorder %s76, %s78
    %p85 = scmp.eq.s32.totalorder %s21, 1
    %p86 = por %p84, %p85
    %p87 = scmp.ne.s32.totalorder %s78, %s79
    %p88 = scmp.eq.s32.totalorder %s21, 0
    %p89 = por %p87, %p88
    %p90 = scmp.ne.s32.totalorder %s78, %s79
    %p91 = scmp.eq.s32.totalorder %s22, 1
    %p92 = por %p90, %p91
    %p94 = scmp.ne.s32.totalorder %s79, %s93
    %p95 = scmp.eq.s32.totalorder %s22, 0
    %p96 = por %p94, %p95
    %s98 = sadd.s32 %s97, 1
    %p101 = scmp.eq.s32.totalorder %s16, 1
    %p102 = scmp.ne.s32.totalorder %s97, %s99
    %p103 = scmp.eq.s32.totalorder %s16, 0
    %p104 = por %p102, %p103
    %p105 = scmp.ne.s32.totalorder %s97, %s99
    %p106 = scmp.eq.s32.totalorder %s21, 1
    %p107 = por %p105, %p106
    %p108 = scmp.ne.s32.totalorder %s99, %s100
    %p109 = scmp.eq.s32.totalorder %s21, 0
    %p110 = por %p108, %p109
    %p111 = scmp.ne.s32.totalorder %s99, %s100
    %p112 = scmp.eq.s32.totalorder %s22, 1
    %p113 = por %p111, %p112
    %p115 = scmp.ne.s32.totalorder %s100, %s114
    %p116 = scmp.eq.s32.totalorder %s22, 0
    %p117 = por %p115, %p116
    %s119 = sadd.s32 %s118, 1
    %p122 = scmp.eq.s32.totalorder %s16, 1
    %p123 = scmp.ne.s32.totalorder %s118, %s120
    %p124 = scmp.eq.s32.totalorder %s16, 0
    %p125 = por %p123, %p124
    %p126 = scmp.ne.s32.totalorder %s118, %s120
    %p127 = scmp.eq.s32.totalorder %s21, 1
    %p128 = por %p126, %p127
    %p129 = scmp.ne.s32.totalorder %s120, %s121
    %p130 = scmp.eq.s32.totalorder %s21, 0
    %p131 = por %p129, %p130
    %p132 = scmp.ne.s32.totalorder %s120, %s121
    %p133 = scmp.eq.s32.totalorder %s22, 1
    %p134 = por %p132, %p133
    %p136 = scmp.ne.s32.totalorder %s121, %s135
    %p137 = scmp.eq.s32.totalorder %s22, 0
    %p138 = por %p136, %p137
    %s140 = sadd.s32 %s139, 1
    %p143 = scmp.eq.s32.totalorder %s16, 1
    %p144 = scmp.ne.s32.totalorder %s139, %s141
    %p145 = scmp.eq.s32.totalorder %s16, 0
    %p146 = por %p144, %p145
    %p147 = scmp.ne.s32.totalorder %s139, %s141
    %p148 = scmp.eq.s32.totalorder %s21, 1
    %p149 = por %p147, %p148
    %p150 = scmp.ne.s32.totalorder %s141, %s142
    %p151 = scmp.eq.s32.totalorder %s21, 0
    %p152 = por %p150, %p151
    %p153 = scmp.ne.s32.totalorder %s141, %s142
    %p154 = scmp.eq.s32.totalorder %s22, 1
    %p155 = por %p153, %p154
    %p157 = scmp.ne.s32.totalorder %s142, %s156
    %p158 = scmp.eq.s32.totalorder %s22, 0
    %p159 = por %p157, %p158
    %s161 = sadd.s32 %s160, 1
    %p164 = scmp.eq.s32.totalorder %s16, 1
    %p165 = scmp.ne.s32.totalorder %s160, %s162
    %p166 = scmp.eq.s32.totalorder %s16, 0
    %p167 = por %p165, %p166
    %p168 = scmp.ne.s32.totalorder %s160, %s162
    %p169 = scmp.eq.s32.totalorder %s21, 1
    %p170 = por %p168, %p169
    %p171 = scmp.ne.s32.totalorder %s162, %s163
    %p172 = scmp.eq.s32.totalorder %s21, 0
    %p173 = por %p171, %p172
    %p174 = scmp.ne.s32.totalorder %s162, %s163
    %p175 = scmp.eq.s32.totalorder %s22, 1
    %p176 = por %p174, %p175
    %p178 = scmp.ne.s32.totalorder %s163, %s177
    %p179 = scmp.eq.s32.totalorder %s22, 0
    %p180 = por %p178, %p179
    %s182 = sadd.s32 %s181, 1
    %p185 = scmp.eq.s32.totalorder %s16, 1
    %p186 = scmp.ne.s32.totalorder %s181, %s183
    %p187 = scmp.eq.s32.totalorder %s16, 0
    %p188 = por %p186, %p187
    %p189 = scmp.ne.s32.totalorder %s181, %s183
    %p190 = scmp.eq.s32.totalorder %s21, 1
    %p191 = por %p189, %p190
    %p192 = scmp.ne.s32.totalorder %s183, %s184
    %p193 = scmp.eq.s32.totalorder %s21, 0
    %p194 = por %p192, %p193
    %p195 = scmp.ne.s32.totalorder %s183, %s184
    %p196 = scmp.eq.s32.totalorder %s22, 1
    %p197 = por %p195, %p196
    %p199 = scmp.ne.s32.totalorder %s184, %s198
    %p200 = scmp.eq.s32.totalorder %s22, 0
    %p201 = por %p199, %p200
    %s203 = sadd.s32 %s202, 1
    %p206 = scmp.eq.s32.totalorder %s16, 1
    %p207 = scmp.ne.s32.totalorder %s202, %s204
    %p208 = scmp.eq.s32.totalorder %s16, 0
    %p209 = por %p207, %p208
    %p210 = scmp.ne.s32.totalorder %s202, %s204
    %p211 = scmp.eq.s32.totalorder %s21, 1
    %p212 = por %p210, %p211
    %p213 = scmp.ne.s32.totalorder %s204, %s205
    %p214 = scmp.eq.s32.totalorder %s21, 0
    %p215 = por %p213, %p214
    %p216 = scmp.ne.s32.totalorder %s204, %s205
    %p217 = scmp.eq.s32.totalorder %s22, 1
    %p218 = por %p216, %p217
    %p220 = scmp.ne.s32.totalorder %s205, %s219
    %p221 = scmp.eq.s32.totalorder %s22, 0
    %p222 = por %p220, %p221
    %s224 = sadd.s32 %s223, 1
    %p227 = scmp.eq.s32.totalorder %s16, 1
    %p228 = scmp.ne.s32.totalorder %s223, %s225
    %p229 = scmp.eq.s32.totalorder %s16, 0
    %p230 = por %p228, %p229
    %p231 = scmp.ne.s32.totalorder %s223, %s225
    %p232 = scmp.eq.s32.totalorder %s21, 1
    %p233 = por %p231, %p232
    %p234 = scmp.ne.s32.totalorder %s225, %s226
    %p235 = scmp.eq.s32.totalorder %s21, 0
    %p236 = por %p234, %p235
    %p237 = scmp.ne.s32.totalorder %s225, %s226
    %p238 = scmp.eq.s32.totalorder %s22, 1
    %p239 = por %p237, %p238
    %p241 = scmp.ne.s32.totalorder %s226, %s240
    %p242 = scmp.eq.s32.totalorder %s22, 0
    %p243 = por %p241, %p242
    %s244 = ssub.s32 %s16, %s23
    %p245 = scmp.eq.s32.totalorder %s244, 0
    %s247 = sadd.s32 %s246, 1
    %s248 = scalar_select %p245, %s246, %s247
    %p251 = pneg %p245
    %p252 = scmp.eq.s32.totalorder %s16, 1
    %p253 = por %p251, %p252
    %p254 = scmp.ne.s32.totalorder %s246, %s249
    %p255 = scmp.eq.s32.totalorder %s16, 0
    %p256 = por %p254, %p255
    %p257 = scmp.ne.s32.totalorder %s246, %s249
    %p258 = scmp.eq.s32.totalorder %s21, 1
    %p259 = por %p257, %p258
    %p260 = scmp.ne.s32.totalorder %s249, %s250
    %p261 = scmp.eq.s32.totalorder %s21, 0
    %p262 = por %p260, %p261
    %p263 = scmp.ne.s32.totalorder %s249, %s250
    %p264 = scmp.eq.s32.totalorder %s22, 1
    %p265 = por %p263, %p264
    %p267 = scmp.ne.s32.totalorder %s250, %s266
    %p268 = scmp.eq.s32.totalorder %s22, 0
    %p269 = por %p267, %p268
    %p270 = scmp.le.s32.totalorder 1, %s16
    %p271 = scmp.lt.s32.totalorder %s16, 3
    %p272 = pnand %p270, %p271
    %p273 = pneg %p272
    // Predicated region
    $region9: #{complex_transformer_forward.3} parent=5 // pred_check
      _
    $region10: #{complex_transformer_forward.3} parent=5 // pred_check_branch
      %275 = sbr.rel (%p272) target = $region12
    $region11: #{complex_transformer_forward.3} parent=5 // pred_region
      %s276 = ssub.s32 %s16, 1
      // Predicated region
      $region13: #{complex_transformer_forward.3} parent=11 // pred_check
        %p277 = pneg %p89
      $region14: #{complex_transformer_forward.3} parent=11 // pred_check_branch
        %279 = sbr.rel (%p277) target = $region16
      $region15: #{complex_transformer_forward.3} parent=11 // pred_region
        _
      $region16: #{complex_transformer_forward.3} parent=11 // pred_fallthru
        _
      // Predicated region
      $region17: #{complex_transformer_forward.3} parent=11 // pred_check
        %p280 = pneg %p110
      $region18: #{complex_transformer_forward.3} parent=11 // pred_check_branch
        %282 = sbr.rel (%p280) target = $region20
      $region19: #{complex_transformer_forward.3} parent=11 // pred_region
        _
      $region20: #{complex_transformer_forward.3} parent=11 // pred_fallthru
        _
      // Predicated region
      $region21: #{complex_transformer_forward.3} parent=11 // pred_check
        %p283 = pneg %p131
      $region22: #{complex_transformer_forward.3} parent=11 // pred_check_branch
        %285 = sbr.rel (%p283) target = $region24
      $region23: #{complex_transformer_forward.3} parent=11 // pred_region
        _
      $region24: #{complex_transformer_forward.3} parent=11 // pred_fallthru
        _
      // Predicated region
      $region25: #{complex_transformer_forward.3} parent=11 // pred_check
        %p286 = pneg %p152
      $region26: #{complex_transformer_forward.3} parent=11 // pred_check_branch
        %288 = sbr.rel (%p286) target = $region28
      $region27: #{complex_transformer_forward.3} parent=11 // pred_region
        _
      $region28: #{complex_transformer_forward.3} parent=11 // pred_fallthru
        _
      // Predicated region
      $region29: #{complex_transformer_forward.3} parent=11 // pred_check
        %p289 = pneg %p173
      $region30: #{complex_transformer_forward.3} parent=11 // pred_check_branch
        %291 = sbr.rel (%p289) target = $region32
      $region31: #{complex_transformer_forward.3} parent=11 // pred_region
        _
      $region32: #{complex_transformer_forward.3} parent=11 // pred_fallthru
        _
      // Predicated region
      $region33: #{complex_transformer_forward.3} parent=11 // pred_check
        %p292 = pneg %p194
      $region34: #{complex_transformer_forward.3} parent=11 // pred_check_branch
        %294 = sbr.rel (%p292) target = $region36
      $region35: #{complex_transformer_forward.3} parent=11 // pred_region
        _
      $region36: #{complex_transformer_forward.3} parent=11 // pred_fallthru
        _
      // Predicated region
      $region37: #{complex_transformer_forward.3} parent=11 // pred_check
        %p295 = pneg %p215
      $region38: #{complex_transformer_forward.3} parent=11 // pred_check_branch
        %297 = sbr.rel (%p295) target = $region40
      $region39: #{complex_transformer_forward.3} parent=11 // pred_region
        _
      $region40: #{complex_transformer_forward.3} parent=11 // pred_fallthru
        _
      // Predicated region
      $region41: #{complex_transformer_forward.3} parent=11 // pred_check
        %p298 = pneg %p236
      $region42: #{complex_transformer_forward.3} parent=11 // pred_check_branch
        %300 = sbr.rel (%p298) target = $region44
      $region43: #{complex_transformer_forward.3} parent=11 // pred_region
        _
      $region44: #{complex_transformer_forward.3} parent=11 // pred_fallthru
        _
    $region12: #{complex_transformer_forward.3} parent=5 // pred_fallthru
      _
    %p301 = scmp.lt.s32.totalorder %s16, 2
    // Predicated region
    $region45: #{complex_transformer_forward.3} parent=5 // pred_check
      %p302 = pneg %p301
    $region46: #{complex_transformer_forward.3} parent=5 // pred_check_branch
      %304 = sbr.rel (%p302) target = $region48
    $region47: #{complex_transformer_forward.3} parent=5 // pred_region
      // Predicated region
      $region49: #{complex_transformer_forward.3} parent=47 // pred_check
        %p305 = pneg %p36
      $region50: #{complex_transformer_forward.3} parent=47 // pred_check_branch
        %307 = sbr.rel (%p305) target = $region52
      $region51: #{complex_transformer_forward.3} parent=47 // pred_region
        %p308 = scmp.lt.s32.totalorder %s16, 1
        %s309 = scalar_select %p308, %s16, 1
        %s310 = smul.addr %s309, 8
        %s311 = scalar_lea.vmem %s0, %s310
      $region52: #{complex_transformer_forward.3} parent=47 // pred_fallthru
        _
      // Predicated region
      $region53: #{complex_transformer_forward.3} parent=47 // pred_check
        %p312 = pneg %p62
      $region54: #{complex_transformer_forward.3} parent=47 // pred_check_branch
        %314 = sbr.rel (%p312) target = $region56
      $region55: #{complex_transformer_forward.3} parent=47 // pred_region
        %p315 = scmp.lt.s32.totalorder %s16, 1
        %s316 = scalar_select %p315, %s16, 1
        %s317 = smul.addr %s316, 8
        %s318 = scalar_lea.vmem %s1, %s317
      $region56: #{complex_transformer_forward.3} parent=47 // pred_fallthru
        _
    $region48: #{complex_transformer_forward.3} parent=5 // pred_fallthru
      _
    %p319 = scmp.le.s32.totalorder 1, %s16
    %p320 = scmp.lt.s32.totalorder %s16, 3
    %p321 = pnand %p319, %p320
    %p322 = pneg %p321
    // Predicated region
    $region57: #{complex_transformer_forward.3} parent=5 // pred_check
      _
    $region58: #{complex_transformer_forward.3} parent=5 // pred_check_branch
      %324 = sbr.rel (%p321) target = $region60
    $region59: #{complex_transformer_forward.3} parent=5 // pred_region
      %s325 = ssub.s32 %s16, 1
      %p326 = scmp.lt.s32.totalorder %s21, 1
      %s327 = scalar_select %p326, %s21, 1
      %s328 = smul.addr %s327, 8
      %s329 = scalar_lea.vmem %s0, %s328
      %p330 = pneg %p42
      %p331 = pneg %p39
      %p332 = scmp.lt.s32.totalorder %s21, 1
      %s333 = scalar_select %p332, %s21, 1
      %s334 = smul.addr %s333, 8
      %s335 = scalar_lea.vmem %s1, %s334
      %p336 = pneg %p68
      %p337 = pneg %p65
      %p338 = pneg %p89
      %p339 = pneg %p86
      %p340 = pneg %p110
      %p341 = pneg %p107
      %p342 = pneg %p131
      %p343 = pneg %p128
      %p344 = pneg %p152
      %p345 = pneg %p149
      %p346 = pneg %p173
      %p347 = pneg %p170
      %p348 = pneg %p194
      %p349 = pneg %p191
      %p350 = pneg %p215
      %p351 = pneg %p212
      %p352 = pneg %p236
      %p353 = pneg %p233
      %p354 = pneg %p262
      %p355 = pneg %p259
      %p356 = scmp.lt.s32.totalorder %s21, 1
      %s357 = scalar_select %p356, %s21, 1
      %s358 = smul.addr %s357, 8
      %s359 = scalar_lea.vmem %s10, %s358
      %p360 = scmp.lt.s32.totalorder %s21, 1
      %s361 = scalar_select %p360, %s21, 1
      %s362 = smul.addr %s361, 8
      %s363 = scalar_lea.vmem %s0, %s362
      %p364 = scmp.lt.s32.totalorder %s21, 1
      %s365 = scalar_select %p364, %s21, 1
      %s366 = smul.addr %s365, 8
      %s367 = scalar_lea.vmem %s1, %s366
      %p368 = scmp.lt.s32.totalorder %s21, 1
      %s369 = scalar_select %p368, %s21, 1
      %s370 = smul.addr %s369, 8
      %s371 = scalar_lea.vmem %s10, %s370
      %v373 = vld [vmem:[%s363] sm:$0xff]
      %v374 = vpack.c.bf16 %v373, %v373
      %v375 = vld [vmem:[%s3] sm:$0xff]
      %v376 = vld [vmem:[%s3 + $0x8] sm:$0xff]
      %v377 = vld [vmem:[%s3 + $0x10] sm:$0xff]
      %v378 = vld [vmem:[%s3 + $0x18] sm:$0xff]
      %v379 = vld [vmem:[%s3 + $0x20] sm:$0xff]
      %v380 = vld [vmem:[%s3 + $0x28] sm:$0xff]
      %v381 = vld [vmem:[%s3 + $0x30] sm:$0xff]
      %v382 = vld [vmem:[%s3 + $0x38] sm:$0xff]
      %v383 = vld [vmem:[%s4] sm:$0xf]
      %v385 = vlaneseq
      %v386 = vshrl.u32 %v385, 7
      %v387 = vsub.s32 0, %v386
      %v388 = vrot.slane %v383, %v387
      %v389 = vlaneseq
      %v390 = vshrl.u32 %v389, 7
      %v391 = vsub.s32 1, %v390
      %v392 = vrot.slane %v383, %v391
      %v393 = vlaneseq
      %v394 = vshrl.u32 %v393, 7
      %v395 = vsub.s32 2, %v394
      %v396 = vrot.slane %v383, %v395
      %v397 = vlaneseq
      %v398 = vshrl.u32 %v397, 7
      %v399 = vsub.s32 3, %v398
      %v400 = vrot.slane %v383, %v399
      %v413 = vunpack.c.l.b16 %v375
      %v414 = vunpack.c.h.b16 %v375
      %v415 = vunpack.c.l.b16 %v376
      %v416 = vunpack.c.h.b16 %v376
      %v417 = vunpack.c.l.b16 %v377
      %v418 = vunpack.c.h.b16 %v377
      %v419 = vunpack.c.l.b16 %v378
      %v420 = vunpack.c.h.b16 %v378
      %v421 = vunpack.c.l.b16 %v379
      %v422 = vunpack.c.h.b16 %v379
      %v423 = vunpack.c.l.b16 %v380
      %v424 = vunpack.c.h.b16 %v380
      %v425 = vunpack.c.l.b16 %v381
      %v426 = vunpack.c.h.b16 %v381
      %v427 = vunpack.c.l.b16 %v382
      %v428 = vunpack.c.h.b16 %v382
      %v429 = vpack.c.b16 %v417, %v413
      %v430 = vpack.c.b16 %v418, %v414
      %v431 = vpack.c.b16 %v419, %v415
      %v432 = vpack.c.b16 %v420, %v416
      %v433 = vpack.c.b16 %v425, %v421
      %v434 = vpack.c.b16 %v426, %v422
      %v435 = vpack.c.b16 %v427, %v423
      %v436 = vpack.c.b16 %v428, %v424
      %vm445 = vcmask 261120
      %v447 = vsel %vm445, %v374, 0
      %449 = vmatprep.subr.bf16.mxu0 0
      %450 = vmatpush1.bf16.msra.mxu0 0
      %451 = vmatprep.subr.bf16.mxu0 0
      %452 = vmatpush1.bf16.msra.mxu0 0
      %453 = vmatprep.subr.bf16.mxu0 0
      %454 = vmatpush1.bf16.msra.mxu0 0
      %455 = vmatprep.subr.bf16.mxu0 0
      %456 = vmatpush1.bf16.msra.mxu0 0
      %457 = vmatprep.subr.bf16.mxu0 0
      %458 = vmatpush1.bf16.msra.mxu0 0
      %459 = vmatprep.subr.bf16.mxu0 0
      %460 = vmatpush1.bf16.msra.mxu0 0
      %461 = vmatprep.subr.bf16.mxu0 %v434
      %462 = vmatpush1.bf16.msra.mxu0 %v433
      %463 = vmatprep.subr.bf16.mxu0 %v430
      %464 = vmatpush1.bf16.msra.mxu0 %v429
      %465 = vmatprep.subr.bf16.mxu0 0
      %466 = vmatpush2.bf16.msra.mxu0 0
      %467 = vmatprep.subr.bf16.mxu0 0
      %468 = vmatpush2.bf16.msra.mxu0 0
      %469 = vmatprep.subr.bf16.mxu0 0
      %470 = vmatpush2.bf16.msra.mxu0 0
      %471 = vmatprep.subr.bf16.mxu0 0
      %472 = vmatpush2.bf16.msra.mxu0 0
      %473 = vmatprep.subr.bf16.mxu0 0
      %474 = vmatpush2.bf16.msra.mxu0 0
      %475 = vmatprep.subr.bf16.mxu0 0
      %476 = vmatpush2.bf16.msra.mxu0 0
      %477 = vmatprep.subr.bf16.mxu0 0
      %478 = vmatpush2.bf16.msra.mxu0 0
      %479 = vmatprep.subr.bf16.mxu0 0
      %480 = vmatpush2.bf16.msra.mxu0 0
      %481 = vmatprep.mubr.bf16.mxu0 0
      %482 = vmatmul.mubr.bf16.gmra.mxu0 %v447
      %v483 = vpop.f32.mrf.mxu0
      %v484 = vadd.f32 %v388, %v483
      %v485 = vpop.f32.mrf.mxu0
      %v486 = vadd.f32 %v392, %v485
      %v487 = vpop.f32.mrf.mxu0
      %v488 = vpop.f32.mrf.mxu0
      %489 = vdwg.mxu0
      %490 = vmatprep.subr.bf16.mxu0 0
      %491 = vmatpush1.bf16.msra.mxu0 0
      %492 = vmatprep.subr.bf16.mxu0 0
      %493 = vmatpush1.bf16.msra.mxu0 0
      %494 = vmatprep.subr.bf16.mxu0 0
      %495 = vmatpush1.bf16.msra.mxu0 0
      %496 = vmatprep.subr.bf16.mxu0 0
      %497 = vmatpush1.bf16.msra.mxu0 0
      %498 = vmatprep.subr.bf16.mxu0 0
      %499 = vmatpush1.bf16.msra.mxu0 0
      %500 = vmatprep.subr.bf16.mxu0 0
      %501 = vmatpush1.bf16.msra.mxu0 0
      %502 = vmatprep.subr.bf16.mxu0 %v436
      %503 = vmatpush1.bf16.msra.mxu0 %v435
      %504 = vmatprep.subr.bf16.mxu0 %v432
      %505 = vmatpush1.bf16.msra.mxu0 %v431
      %506 = vmatprep.subr.bf16.mxu0 0
      %507 = vmatpush2.bf16.msra.mxu0 0
      %508 = vmatprep.subr.bf16.mxu0 0
      %509 = vmatpush2.bf16.msra.mxu0 0
      %510 = vmatprep.subr.bf16.mxu0 0
      %511 = vmatpush2.bf16.msra.mxu0 0
      %512 = vmatprep.subr.bf16.mxu0 0
      %513 = vmatpush2.bf16.msra.mxu0 0
      %514 = vmatprep.subr.bf16.mxu0 0
      %515 = vmatpush2.bf16.msra.mxu0 0
      %516 = vmatprep.subr.bf16.mxu0 0
      %517 = vmatpush2.bf16.msra.mxu0 0
      %518 = vmatprep.subr.bf16.mxu0 0
      %519 = vmatpush2.bf16.msra.mxu0 0
      %520 = vmatprep.subr.bf16.mxu0 0
      %521 = vmatpush2.bf16.msra.mxu0 0
      %522 = vmatprep.mubr.bf16.mxu0 0
      %523 = vmatmul.mubr.bf16.gmra.mxu0 %v447
      %v524 = vpop.f32.mrf.mxu0
      %v525 = vadd.f32 %v396, %v524
      %v526 = vpop.f32.mrf.mxu0
      %v527 = vadd.f32 %v400, %v526
      %v528 = vpop.f32.mrf.mxu0
      %v529 = vpop.f32.mrf.mxu0
      %530 = vdwg.mxu0
      %v531 = vld [vmem:[%s367] sm:$0xff]
      %v532 = vpack.c.bf16 %v531, %v531
      %v533 = vld [vmem:[%s5] sm:$0xff]
      %v534 = vld [vmem:[%s5 + $0x8] sm:$0xff]
      %v535 = vld [vmem:[%s5 + $0x10] sm:$0xff]
      %v536 = vld [vmem:[%s5 + $0x18] sm:$0xff]
      %v537 = vld [vmem:[%s5 + $0x20] sm:$0xff]
      %v538 = vld [vmem:[%s5 + $0x28] sm:$0xff]
      %v539 = vld [vmem:[%s5 + $0x30] sm:$0xff]
      %v540 = vld [vmem:[%s5 + $0x38] sm:$0xff]
      %v541 = vld [vmem:[%s6] sm:$0xf]
      %v543 = vlaneseq
      %v544 = vshrl.u32 %v543, 7
      %v545 = vsub.s32 0, %v544
      %v546 = vrot.slane %v541, %v545
      %v547 = vlaneseq
      %v548 = vshrl.u32 %v547, 7
      %v549 = vsub.s32 1, %v548
      %v550 = vrot.slane %v541, %v549
      %v551 = vlaneseq
      %v552 = vshrl.u32 %v551, 7
      %v553 = vsub.s32 2, %v552
      %v554 = vrot.slane %v541, %v553
      %v555 = vlaneseq
      %v556 = vshrl.u32 %v555, 7
      %v557 = vsub.s32 3, %v556
      %v558 = vrot.slane %v541, %v557
      %v571 = vunpack.c.l.b16 %v533
      %v572 = vunpack.c.h.b16 %v533
      %v573 = vunpack.c.l.b16 %v534
      %v574 = vunpack.c.h.b16 %v534
      %v575 = vunpack.c.l.b16 %v535
      %v576 = vunpack.c.h.b16 %v535
      %v577 = vunpack.c.l.b16 %v536
      %v578 = vunpack.c.h.b16 %v536
      %v579 = vunpack.c.l.b16 %v537
      %v580 = vunpack.c.h.b16 %v537
      %v581 = vunpack.c.l.b16 %v538
      %v582 = vunpack.c.h.b16 %v538
      %v583 = vunpack.c.l.b16 %v539
      %v584 = vunpack.c.h.b16 %v539
      %v585 = vunpack.c.l.b16 %v540
      %v586 = vunpack.c.h.b16 %v540
      %v587 = vpack.c.b16 %v575, %v571
      %v588 = vpack.c.b16 %v576, %v572
      %v589 = vpack.c.b16 %v577, %v573
      %v590 = vpack.c.b16 %v578, %v574
      %v591 = vpack.c.b16 %v583, %v579
      %v592 = vpack.c.b16 %v584, %v580
      %v593 = vpack.c.b16 %v585, %v581
      %v594 = vpack.c.b16 %v586, %v582
      %v604 = vsel %vm445, %v532, 0
      %606 = vmatprep.subr.bf16.mxu0 0
      %607 = vmatpush1.bf16.msra.mxu0 0
      %608 = vmatprep.subr.bf16.mxu0 0
      %609 = vmatpush1.bf16.msra.mxu0 0
      %610 = vmatprep.subr.bf16.mxu0 0
      %611 = vmatpush1.bf16.msra.mxu0 0
      %612 = vmatprep.subr.bf16.mxu0 0
      %613 = vmatpush1.bf16.msra.mxu0 0
      %614 = vmatprep.subr.bf16.mxu0 0
      %615 = vmatpush1.bf16.msra.mxu0 0
      %616 = vmatprep.subr.bf16.mxu0 0
      %617 = vmatpush1.bf16.msra.mxu0 0
      %618 = vmatprep.subr.bf16.mxu0 %v592
      %619 = vmatpush1.bf16.msra.mxu0 %v591
      %620 = vmatprep.subr.bf16.mxu0 %v588
      %621 = vmatpush1.bf16.msra.mxu0 %v587
      %622 = vmatprep.subr.bf16.mxu0 0
      %623 = vmatpush2.bf16.msra.mxu0 0
      %624 = vmatprep.subr.bf16.mxu0 0
      %625 = vmatpush2.bf16.msra.mxu0 0
      %626 = vmatprep.subr.bf16.mxu0 0
      %627 = vmatpush2.bf16.msra.mxu0 0
      %628 = vmatprep.subr.bf16.mxu0 0
      %629 = vmatpush2.bf16.msra.mxu0 0
      %630 = vmatprep.subr.bf16.mxu0 0
      %631 = vmatpush2.bf16.msra.mxu0 0
      %632 = vmatprep.subr.bf16.mxu0 0
      %633 = vmatpush2.bf16.msra.mxu0 0
      %634 = vmatprep.subr.bf16.mxu0 0
      %635 = vmatpush2.bf16.msra.mxu0 0
      %636 = vmatprep.subr.bf16.mxu0 0
      %637 = vmatpush2.bf16.msra.mxu0 0
      %638 = vmatprep.mubr.bf16.mxu0 0
      %639 = vmatmul.mubr.bf16.gmra.mxu0 %v604
      %v640 = vpop.f32.mrf.mxu0
      %v641 = vadd.f32 %v546, %v640
      %v642 = vpop.f32.mrf.mxu0
      %v643 = vadd.f32 %v550, %v642
      %v644 = vpop.f32.mrf.mxu0
      %v645 = vpop.f32.mrf.mxu0
      %646 = vdwg.mxu0
      %647 = vmatprep.subr.bf16.mxu0 0
      %648 = vmatpush1.bf16.msra.mxu0 0
      %649 = vmatprep.subr.bf16.mxu0 0
      %650 = vmatpush1.bf16.msra.mxu0 0
      %651 = vmatprep.subr.bf16.mxu0 0
      %652 = vmatpush1.bf16.msra.mxu0 0
      %653 = vmatprep.subr.bf16.mxu0 0
      %654 = vmatpush1.bf16.msra.mxu0 0
      %655 = vmatprep.subr.bf16.mxu0 0
      %656 = vmatpush1.bf16.msra.mxu0 0
      %657 = vmatprep.subr.bf16.mxu0 0
      %658 = vmatpush1.bf16.msra.mxu0 0
      %659 = vmatprep.subr.bf16.mxu0 %v594
      %660 = vmatpush1.bf16.msra.mxu0 %v593
      %661 = vmatprep.subr.bf16.mxu0 %v590
      %662 = vmatpush1.bf16.msra.mxu0 %v589
      %663 = vmatprep.subr.bf16.mxu0 0
      %664 = vmatpush2.bf16.msra.mxu0 0
      %665 = vmatprep.subr.bf16.mxu0 0
      %666 = vmatpush2.bf16.msra.mxu0 0
      %667 = vmatprep.subr.bf16.mxu0 0
      %668 = vmatpush2.bf16.msra.mxu0 0
      %669 = vmatprep.subr.bf16.mxu0 0
      %670 = vmatpush2.bf16.msra.mxu0 0
      %671 = vmatprep.subr.bf16.mxu0 0
      %672 = vmatpush2.bf16.msra.mxu0 0
      %673 = vmatprep.subr.bf16.mxu0 0
      %674 = vmatpush2.bf16.msra.mxu0 0
      %675 = vmatprep.subr.bf16.mxu0 0
      %676 = vmatpush2.bf16.msra.mxu0 0
      %677 = vmatprep.subr.bf16.mxu0 0
      %678 = vmatpush2.bf16.msra.mxu0 0
      %679 = vmatprep.mubr.bf16.mxu0 0
      %680 = vmatmul.mubr.bf16.gmra.mxu0 %v604
      %v681 = vpop.f32.mrf.mxu0
      %v682 = vadd.f32 %v554, %v681
      %v683 = vpop.f32.mrf.mxu0
      %v684 = vadd.f32 %v558, %v683
      %v685 = vpop.f32.mrf.mxu0
      %v686 = vpop.f32.mrf.mxu0
      %687 = vdwg.mxu0
      %v688 = vpack.c.bf16 %v641, %v484
      %v689 = vpack.c.bf16 %v643, %v486
      %v690 = vpack.c.bf16 %v682, %v525
      %v691 = vpack.c.bf16 %v684, %v527
      %v692 = vld [vmem:[%s7] sm:$0xf]
      %v693 = vld [vmem:[%s7 + $0x4] sm:$0xf]
      %v694 = vld [vmem:[%s7 + $0x8] sm:$0xf]
      %v695 = vld [vmem:[%s7 + $0xc] sm:$0xf]
      %v696 = vld [vmem:[%s7 + $0x10] sm:$0xf]
      %v697 = vld [vmem:[%s7 + $0x14] sm:$0xf]
      %v698 = vld [vmem:[%s7 + $0x18] sm:$0xf]
      %v699 = vld [vmem:[%s7 + $0x1c] sm:$0xf]
      %v700 = vld [vmem:[%s7 + $0x20] sm:$0xf]
      %v701 = vld [vmem:[%s7 + $0x24] sm:$0xf]
      %v702 = vld [vmem:[%s7 + $0x28] sm:$0xf]
      %v703 = vld [vmem:[%s7 + $0x2c] sm:$0xf]
      %v704 = vld [vmem:[%s7 + $0x30] sm:$0xf]
      %v705 = vld [vmem:[%s7 + $0x34] sm:$0xf]
      %v706 = vld [vmem:[%s7 + $0x38] sm:$0xf]
      %v707 = vld [vmem:[%s7 + $0x3c] sm:$0xf]
      %v708 = vld [vmem:[%s7 + $0x40] sm:$0xf]
      %v709 = vld [vmem:[%s7 + $0x44] sm:$0xf]
      %v710 = vld [vmem:[%s7 + $0x48] sm:$0xf]
      %v711 = vld [vmem:[%s7 + $0x4c] sm:$0xf]
      %v712 = vld [vmem:[%s7 + $0x50] sm:$0xf]
      %v713 = vld [vmem:[%s7 + $0x54] sm:$0xf]
      %v714 = vld [vmem:[%s7 + $0x58] sm:$0xf]
      %v715 = vld [vmem:[%s7 + $0x5c] sm:$0xf]
      %v716 = vld [vmem:[%s7 + $0x60] sm:$0xf]
      %v717 = vld [vmem:[%s7 + $0x64] sm:$0xf]
      %v718 = vld [vmem:[%s7 + $0x68] sm:$0xf]
      %v719 = vld [vmem:[%s7 + $0x6c] sm:$0xf]
      %v720 = vld [vmem:[%s7 + $0x70] sm:$0xf]
      %v721 = vld [vmem:[%s7 + $0x74] sm:$0xf]
      %v722 = vld [vmem:[%s7 + $0x78] sm:$0xf]
      %v723 = vld [vmem:[%s7 + $0x7c] sm:$0xf]
      %v724 = vld [vmem:[%s7 + $0x80] sm:$0xf]
      %v725 = vld [vmem:[%s7 + $0x84] sm:$0xf]
      %v726 = vld [vmem:[%s7 + $0x88] sm:$0xf]
      %v727 = vld [vmem:[%s7 + $0x8c] sm:$0xf]
      %v728 = vld [vmem:[%s7 + $0x90] sm:$0xf]
      %v729 = vld [vmem:[%s7 + $0x94] sm:$0xf]
      %v730 = vld [vmem:[%s7 + $0x98] sm:$0xf]
      %v731 = vld [vmem:[%s7 + $0x9c] sm:$0xf]
      %v732 = vld [vmem:[%s7 + $0xa0] sm:$0xf]
      %v733 = vld [vmem:[%s7 + $0xa4] sm:$0xf]
      %v734 = vld [vmem:[%s7 + $0xa8] sm:$0xf]
      %v735 = vld [vmem:[%s7 + $0xac] sm:$0xf]
      %v736 = vld [vmem:[%s7 + $0xb0] sm:$0xf]
      %v737 = vld [vmem:[%s7 + $0xb4] sm:$0xf]
      %v738 = vld [vmem:[%s7 + $0xb8] sm:$0xf]
      %v739 = vld [vmem:[%s7 + $0xbc] sm:$0xf]
      %v740 = vld [vmem:[%s7 + $0xc0] sm:$0xf]
      %v741 = vld [vmem:[%s7 + $0xc4] sm:$0xf]
      %v742 = vld [vmem:[%s7 + $0xc8] sm:$0xf]
      %v743 = vld [vmem:[%s7 + $0xcc] sm:$0xf]
      %v744 = vld [vmem:[%s7 + $0xd0] sm:$0xf]
      %v745 = vld [vmem:[%s7 + $0xd4] sm:$0xf]
      %v746 = vld [vmem:[%s7 + $0xd8] sm:$0xf]
      %v747 = vld [vmem:[%s7 + $0xdc] sm:$0xf]
      %v748 = vld [vmem:[%s7 + $0xe0] sm:$0xf]
      %v749 = vld [vmem:[%s7 + $0xe4] sm:$0xf]
      %v750 = vld [vmem:[%s7 + $0xe8] sm:$0xf]
      %v751 = vld [vmem:[%s7 + $0xec] sm:$0xf]
      %v752 = vld [vmem:[%s7 + $0xf0] sm:$0xf]
      %v753 = vld [vmem:[%s7 + $0xf4] sm:$0xf]
      %v754 = vld [vmem:[%s7 + $0xf8] sm:$0xf]
      %v755 = vld [vmem:[%s7 + $0xfc] sm:$0xf]
      %v820 = vunpack.c.l.b16 %v692
      %v821 = vunpack.c.l.b16 %v693
      %v822 = vunpack.c.l.b16 %v694
      %v823 = vunpack.c.l.b16 %v695
      %v824 = vunpack.c.l.b16 %v696
      %v825 = vunpack.c.l.b16 %v697
      %v826 = vunpack.c.l.b16 %v698
      %v827 = vunpack.c.l.b16 %v699
      %v828 = vunpack.c.l.b16 %v700
      %v829 = vunpack.c.l.b16 %v701
      %v830 = vunpack.c.l.b16 %v702
      %v831 = vunpack.c.l.b16 %v703
      %v832 = vunpack.c.l.b16 %v704
      %v833 = vunpack.c.l.b16 %v705
      %v834 = vunpack.c.l.b16 %v706
      %v835 = vunpack.c.l.b16 %v707
      %v836 = vunpack.c.l.b16 %v708
      %v837 = vunpack.c.l.b16 %v709
      %v838 = vunpack.c.l.b16 %v710
      %v839 = vunpack.c.l.b16 %v711
      %v840 = vunpack.c.l.b16 %v712
      %v841 = vunpack.c.l.b16 %v713
      %v842 = vunpack.c.l.b16 %v714
      %v843 = vunpack.c.l.b16 %v715
      %v844 = vunpack.c.l.b16 %v716
      %v845 = vunpack.c.l.b16 %v717
      %v846 = vunpack.c.l.b16 %v718
      %v847 = vunpack.c.l.b16 %v719
      %v848 = vunpack.c.l.b16 %v720
      %v849 = vunpack.c.l.b16 %v721
      %v850 = vunpack.c.l.b16 %v722
      %v851 = vunpack.c.l.b16 %v723
      %v852 = vunpack.c.l.b16 %v724
      %v853 = vunpack.c.l.b16 %v725
      %v854 = vunpack.c.l.b16 %v726
      %v855 = vunpack.c.l.b16 %v727
      %v856 = vunpack.c.l.b16 %v728
      %v857 = vunpack.c.l.b16 %v729
      %v858 = vunpack.c.l.b16 %v730
      %v859 = vunpack.c.l.b16 %v731
      %v860 = vunpack.c.l.b16 %v732
      %v861 = vunpack.c.l.b16 %v733
      %v862 = vunpack.c.l.b16 %v734
      %v863 = vunpack.c.l.b16 %v735
      %v864 = vunpack.c.l.b16 %v736
      %v865 = vunpack.c.l.b16 %v737
      %v866 = vunpack.c.l.b16 %v738
      %v867 = vunpack.c.l.b16 %v739
      %v868 = vunpack.c.l.b16 %v740
      %v869 = vunpack.c.l.b16 %v741
      %v870 = vunpack.c.l.b16 %v742
      %v871 = vunpack.c.l.b16 %v743
      %v872 = vunpack.c.l.b16 %v744
      %v873 = vunpack.c.l.b16 %v745
      %v874 = vunpack.c.l.b16 %v746
      %v875 = vunpack.c.l.b16 %v747
      %v876 = vunpack.c.l.b16 %v748
      %v877 = vunpack.c.l.b16 %v749
      %v878 = vunpack.c.l.b16 %v750
      %v879 = vunpack.c.l.b16 %v751
      %v880 = vunpack.c.l.b16 %v752
      %v881 = vunpack.c.l.b16 %v753
      %v882 = vunpack.c.l.b16 %v754
      %v883 = vunpack.c.l.b16 %v755
      %v884 = vpack.c.b16 %v821, %v820
      %v885 = vpack.c.b16 %v823, %v822
      %v886 = vpack.c.b16 %v825, %v824
      %v887 = vpack.c.b16 %v827, %v826
      %v888 = vpack.c.b16 %v829, %v828
      %v889 = vpack.c.b16 %v831, %v830
      %v890 = vpack.c.b16 %v833, %v832
      %v891 = vpack.c.b16 %v835, %v834
      %v892 = vpack.c.b16 %v837, %v836
      %v893 = vpack.c.b16 %v839, %v838
      %v894 = vpack.c.b16 %v841, %v840
      %v895 = vpack.c.b16 %v843, %v842
      %v896 = vpack.c.b16 %v845, %v844
      %v897 = vpack.c.b16 %v847, %v846
      %v898 = vpack.c.b16 %v849, %v848
      %v899 = vpack.c.b16 %v851, %v850
      %v900 = vpack.c.b16 %v853, %v852
      %v901 = vpack.c.b16 %v855, %v854
      %v902 = vpack.c.b16 %v857, %v856
      %v903 = vpack.c.b16 %v859, %v858
      %v904 = vpack.c.b16 %v861, %v860
      %v905 = vpack.c.b16 %v863, %v862
      %v906 = vpack.c.b16 %v865, %v864
      %v907 = vpack.c.b16 %v867, %v866
      %v908 = vpack.c.b16 %v869, %v868
      %v909 = vpack.c.b16 %v871, %v870
      %v910 = vpack.c.b16 %v873, %v872
      %v911 = vpack.c.b16 %v875, %v874
      %v912 = vpack.c.b16 %v877, %v876
      %v913 = vpack.c.b16 %v879, %v878
      %v914 = vpack.c.b16 %v881, %v880
      %v915 = vpack.c.b16 %v883, %v882
      %948 = vmatprep.subr.bf16.mxu0 0
      %949 = vmatpush1.bf16.msra.mxu0 %v891
      %950 = vmatprep.subr.bf16.mxu0 0
      %951 = vmatpush1.bf16.msra.mxu0 %v890
      %952 = vmatprep.subr.bf16.mxu0 0
      %953 = vmatpush1.bf16.msra.mxu0 %v889
      %954 = vmatprep.subr.bf16.mxu0 0
      %955 = vmatpush1.bf16.msra.mxu0 %v888
      %956 = vmatprep.subr.bf16.mxu0 0
      %957 = vmatpush1.bf16.msra.mxu0 %v887
      %958 = vmatprep.subr.bf16.mxu0 0
      %959 = vmatpush1.bf16.msra.mxu0 %v886
      %960 = vmatprep.subr.bf16.mxu0 0
      %961 = vmatpush1.bf16.msra.mxu0 %v885
      %962 = vmatprep.subr.bf16.mxu0 0
      %963 = vmatpush1.bf16.msra.mxu0 %v884
      %964 = vmatprep.subr.bf16.mxu0 0
      %965 = vmatpush2.bf16.msra.mxu0 %v899
      %966 = vmatprep.subr.bf16.mxu0 0
      %967 = vmatpush2.bf16.msra.mxu0 %v898
      %968 = vmatprep.subr.bf16.mxu0 0
      %969 = vmatpush2.bf16.msra.mxu0 %v897
      %970 = vmatprep.subr.bf16.mxu0 0
      %971 = vmatpush2.bf16.msra.mxu0 %v896
      %972 = vmatprep.subr.bf16.mxu0 0
      %973 = vmatpush2.bf16.msra.mxu0 %v895
      %974 = vmatprep.subr.bf16.mxu0 0
      %975 = vmatpush2.bf16.msra.mxu0 %v894
      %976 = vmatprep.subr.bf16.mxu0 0
      %977 = vmatpush2.bf16.msra.mxu0 %v893
      %978 = vmatprep.subr.bf16.mxu0 0
      %979 = vmatpush2.bf16.msra.mxu0 %v892
      %980 = vmatprep.mubr.bf16.mxu0 %v689
      %981 = vmatmul.mubr.bf16.gmra.mxu0 %v688
      %v982 = vpop.f32.mrf.mxu0
      %v983 = vadd.f32 0.0, %v982
      %v984 = vpop.f32.mrf.mxu0
      %v985 = vpop.f32.mrf.mxu0
      %v986 = vadd.f32 0.0, %v985
      %v987 = vpop.f32.mrf.mxu0
      %988 = vdwg.mxu0
      %989 = vmatprep.subr.bf16.mxu0 0
      %990 = vmatpush1.bf16.msra.mxu0 %v907
      %991 = vmatprep.subr.bf16.mxu0 0
      %992 = vmatpush1.bf16.msra.mxu0 %v906
      %993 = vmatprep.subr.bf16.mxu0 0
      %994 = vmatpush1.bf16.msra.mxu0 %v905
      %995 = vmatprep.subr.bf16.mxu0 0
      %996 = vmatpush1.bf16.msra.mxu0 %v904
      %997 = vmatprep.subr.bf16.mxu0 0
      %998 = vmatpush1.bf16.msra.mxu0 %v903
      %999 = vmatprep.subr.bf16.mxu0 0
      %1000 = vmatpush1.bf16.msra.mxu0 %v902
      %1001 = vmatprep.subr.bf16.mxu0 0
      %1002 = vmatpush1.bf16.msra.mxu0 %v901
      %1003 = vmatprep.subr.bf16.mxu0 0
      %1004 = vmatpush1.bf16.msra.mxu0 %v900
      %1005 = vmatprep.subr.bf16.mxu0 0
      %1006 = vmatpush2.bf16.msra.mxu0 %v915
      %1007 = vmatprep.subr.bf16.mxu0 0
      %1008 = vmatpush2.bf16.msra.mxu0 %v914
      %1009 = vmatprep.subr.bf16.mxu0 0
      %1010 = vmatpush2.bf16.msra.mxu0 %v913
      %1011 = vmatprep.subr.bf16.mxu0 0
      %1012 = vmatpush2.bf16.msra.mxu0 %v912
      %1013 = vmatprep.subr.bf16.mxu0 0
      %1014 = vmatpush2.bf16.msra.mxu0 %v911
      %1015 = vmatprep.subr.bf16.mxu0 0
      %1016 = vmatpush2.bf16.msra.mxu0 %v910
      %1017 = vmatprep.subr.bf16.mxu0 0
      %1018 = vmatpush2.bf16.msra.mxu0 %v909
      %1019 = vmatprep.subr.bf16.mxu0 0
      %1020 = vmatpush2.bf16.msra.mxu0 %v908
      %1021 = vmatprep.mubr.bf16.mxu0 %v691
      %1022 = vmatmul.mubr.bf16.gmra.mxu0 %v690
      %v1023 = vpop.f32.mrf.mxu0
      %v1024 = vadd.f32 %v983, %v1023
      %v1025 = vpop.f32.mrf.mxu0
      %v1026 = vpop.f32.mrf.mxu0
      %v1027 = vadd.f32 %v986, %v1026
      %v1028 = vpop.f32.mrf.mxu0
      %1029 = vdwg.mxu0
      %v1030 = vld [vmem:[%s8] sm:$0x1]
      %v1031 = vld [vmem:[%s9] sm:$0x1]
      %1033 = vrot.lane.b32.xlu0 %v1027, 96
      %v1034 = vpop.permute.xlu0 %1033
      %v1036 = vsub.f32 %v1024, %v1034
      %v1038 = vlaneseq
      %v1039 = vshrl.u32 %v1038, 7
      %v1040 = vsub.s32 0, %v1039
      %v1041 = vrot.slane %v1030, %v1040
      %v1043 = vadd.f32 %v1036, %v1041
      %1045 = vrot.lane.b32.xlu0 %v1024, 96
      %v1046 = vpop.permute.xlu0 %1045
      %v1048 = vadd.f32 %v1027, %v1046
      %v1050 = vlaneseq
      %v1051 = vshrl.u32 %v1050, 7
      %v1052 = vsub.s32 0, %v1051
      %v1053 = vrot.slane %v1031, %v1052
      %v1055 = vadd.f32 %v1048, %v1053
      %v1056 = vld [vmem:[%s2] sm:$0xff]
      %v1057 = vmul.f32 %v1043, 5.656854
      %v1058 = vadd.f32 %v1057, %v1056
      %v1059 = vmul.f32 %v1055, 5.656854
      %v1060 = vadd.f32 %v1059, %v1056
      %1062 = vrot.lane.b32.xlu0 %v1060, 32
      %v1063 = vpop.permute.xlu0 %1062
      %v1065 = vsel %vm445, %v1058, %v1063
      %vm1066 = vcmask 523264
      %1067 = vst.msk [vmem:[%s371] sm:$0xff] %vm1066, %v1065
      %p1068 = scmp.lt.s32.totalorder %s21, 1
      %s1069 = scalar_select %p1068, %s21, 1
      %s1070 = smul.addr %s1069, 8
      %s1071 = scalar_lea.vmem %s10, %s1070
      // Predicated region
      $region61: #{complex_transformer_forward.3} parent=59 // pred_check
        %p1072 = pneg %p259
      $region62: #{complex_transformer_forward.3} parent=59 // pred_check_branch
        %1074 = sbr.rel (%p1072) target = $region64
      $region63: #{complex_transformer_forward.3} parent=59 // pred_region
        _
      $region64: #{complex_transformer_forward.3} parent=59 // pred_fallthru
        _
    $region60: #{complex_transformer_forward.3} parent=5 // pred_fallthru
      _
    %p1075 = scmp.le.s32.totalorder 2, %s16
    // Predicated region
    $region65: #{complex_transformer_forward.3} parent=5 // pred_check
      %p1076 = pneg %p1075
    $region66: #{complex_transformer_forward.3} parent=5 // pred_check_branch
      %1078 = sbr.rel (%p1076) target = $region68
    $region67: #{complex_transformer_forward.3} parent=5 // pred_region
      %s1079 = ssub.s32 %s16, 2
      // Predicated region
      $region69: #{complex_transformer_forward.3} parent=67 // pred_check
        %p1080 = pneg %p265
      $region70: #{complex_transformer_forward.3} parent=67 // pred_check_branch
        %1082 = sbr.rel (%p1080) target = $region72
      $region71: #{complex_transformer_forward.3} parent=67 // pred_region
        %p1083 = scmp.lt.s32.totalorder %s22, 1
        %s1084 = scalar_select %p1083, %s22, 1
        %s1085 = smul.addr %s1084, 8
        %s1086 = scalar_lea.vmem %s10, %s1085
      $region72: #{complex_transformer_forward.3} parent=67 // pred_fallthru
        _
    $region68: #{complex_transformer_forward.3} parent=5 // pred_fallthru
      _
  $region6: #{complex_transformer_forward.3} parent=0 // loop_footer
    %s20 = sadd.s32 1, %s16
  $region7: #{complex_transformer_forward.3} parent=0 // loop_footer_branch
    %15 = sbr.rel target = $region3
  $region8: #{complex_transformer_forward.3} parent=0 // loop_exit
    _

// kernel: complex_transformer_forward.5
$region0: #{complex_transformer_forward.5}
  #allocation0 [shape = 'u32[]', space=smem, size = 0x4, offset = 0x4, fixed_abs, tag = 'smem constant byte address 0x4 - core index']
  #allocation1 [shape = 'u32[144,128]{1,0:T(1,128)}', space=vmem, size = 0x12000, scoped, tag = 'internal scratch']
  %s0 = inlined_call_operand.vmem [shape: f32[16,64], index: 0, kind: input, shape index: {}]
  %s1 = inlined_call_operand.vmem [shape: f32[1,32], index: 1, kind: input, shape index: {}]
  %s2 = inlined_call_operand.vmem [shape: f32[1,32], index: 2, kind: input, shape index: {}]
  %s3 = inlined_call_operand.vmem [shape: f32[1,32], index: 3, kind: input, shape index: {}]
  %s4 = inlined_call_operand.vmem [shape: f32[1,32], index: 4, kind: input, shape index: {}]
  %s5 = inlined_call_operand.vmem [shape: bf16[32,192], index: 5, kind: input, shape index: {}]
  %s6 = inlined_call_operand.vmem [shape: f32[1,96], index: 6, kind: input, shape index: {}]
  %s7 = inlined_call_operand.vmem [shape: f32[1,96], index: 7, kind: input, shape index: {}]
  %s8 = inlined_call_operand.vmem [shape: bf16[32,64], index: 8, kind: input, shape index: {}]
  %s9 = inlined_call_operand.vmem [shape: f32[1,32], index: 9, kind: input, shape index: {}]
  %s10 = inlined_call_operand.vmem [shape: f32[1,32], index: 10, kind: input, shape index: {}]
  %s11 = inlined_call_operand.vmem [shape: f32[1,32], index: 11, kind: input, shape index: {}]
  %s12 = inlined_call_operand.vmem [shape: f32[1,32], index: 12, kind: input, shape index: {}]
  %s13 = inlined_call_operand.vmem [shape: f32[1,32], index: 13, kind: input, shape index: {}]
  %s14 = inlined_call_operand.vmem [shape: f32[1,32], index: 14, kind: input, shape index: {}]
  %s15 = inlined_call_operand.vmem [shape: bf16[32,256], index: 15, kind: input, shape index: {}]
  %s16 = inlined_call_operand.vmem [shape: f32[1,128], index: 16, kind: input, shape index: {}]
  %s17 = inlined_call_operand.hbm [shape: f32[1,128], index: 17, kind: input, shape index: {}]
  %s18 = inlined_call_operand.vmem [shape: bf16[128,64], index: 18, kind: input, shape index: {}]
  %s19 = inlined_call_operand.hbm [shape: f32[1,32], index: 19, kind: input, shape index: {}]
  %s20 = inlined_call_operand.hbm [shape: f32[1,32], index: 20, kind: input, shape index: {}]
  %s21 = inlined_call_operand.vmem [shape: f32[1,32], index: 21, kind: input, shape index: {}]
  %s22 = inlined_call_operand.vmem [shape: f32[1,32], index: 22, kind: input, shape index: {}]
  %s23 = inlined_call_operand.vmem [shape: f32[1,32], index: 23, kind: input, shape index: {}]
  %s24 = inlined_call_operand.vmem [shape: f32[1,32], index: 24, kind: input, shape index: {}]
  %s25 = inlined_call_operand.vmem [shape: f32[16,64], index: 25, kind: output, shape index: {}]
  %s26 = sld [smem:[#allocation0]]
  $region145: #{complex_transformer_forward.5} parent=0
    _
  %s28 = ssub.s32 1, %s26
  %s29 = scalar_select 0, %s28, %s26
  $region1: #{complex_transformer_forward.5} parent=0
    #allocation2 [shape = 'u8[512]{0}', space=vmem, size = 0x400, scoped, tag = 'input window, operand 17, single buffered']
    #allocation3 [shape = 's32[2]{0}', space=sflag, size = 0x8, scoped, tag = 'scoped memory for complex_transformer_forward.5']
    #allocation4 [shape = 'u8[512]{0}', space=vmem, size = 0x400, scoped, tag = 'input window, operand 19, single buffered']
    #allocation5 [shape = 's32[1]{0}', space=sflag, size = 0x4, scoped, tag = 'scoped memory for complex_transformer_forward.5']
    #allocation6 [shape = 'u8[512]{0}', space=vmem, size = 0x400, scoped, tag = 'input window, operand 20, single buffered']
    %30 = vsyncpa [#allocation3], 0
    %31 = vsyncpa [#allocation5], 0
    loop: start=0, step=1, limit=4
    $region2: #{complex_transformer_forward.5} parent=1 // loop_pre_header
      _
    $region3: #{complex_transformer_forward.5} parent=1 // loop_header
      %s33 = sphi 0, %s37
      %p34 = scmp.ge.s32.totalorder %s33, 4
      %s43 = sphi 0, %s45
      %s46 = sphi 0, %s43
      %s47 = sphi 0, %s46
      %s63 = sphi 0, %s47
      %s67 = sphi 0, %s67
      %s69 = sphi 0, %s67
      %s70 = sphi 0, %s69
      %s84 = sphi 0, %s70
      %s88 = sphi 0, %s88
      %s90 = sphi 0, %s88
      %s91 = sphi 0, %s90
      %s105 = sphi 0, %s91
      %s109 = sphi 0, %s109
      %s111 = sphi 0, %s109
      %s112 = sphi 0, %s111
      %s126 = sphi 0, %s112
      %s130 = sphi 0, %s130
      %s132 = sphi 0, %s130
      %s133 = sphi 0, %s132
      %s147 = sphi 0, %s133
      %s151 = sphi 0, %s151
      %s153 = sphi 0, %s151
      %s154 = sphi 0, %s153
      %s168 = sphi 0, %s154
      %s172 = sphi 0, %s172
      %s174 = sphi 0, %s172
      %s175 = sphi 0, %s174
      %s189 = sphi 0, %s175
      %s193 = sphi 0, %s193
      %s195 = sphi 0, %s193
      %s196 = sphi 0, %s195
      %s210 = sphi 0, %s196
      %s214 = sphi 0, %s214
      %s216 = sphi 0, %s214
      %s217 = sphi 0, %s216
      %s231 = sphi 0, %s217
      %s235 = sphi 0, %s235
      %s237 = sphi 0, %s235
      %s238 = sphi 0, %s237
      %s252 = sphi 0, %s238
      %s256 = sphi 0, %s256
      %s258 = sphi 0, %s256
      %s259 = sphi 0, %s258
      %s273 = sphi 0, %s259
      %s277 = sphi 0, %s277
      %s279 = sphi 0, %s277
      %s280 = sphi 0, %s279
      %s294 = sphi 0, %s280
      %s298 = sphi 0, %s298
      %s300 = sphi 0, %s298
      %s301 = sphi 0, %s300
      %s315 = sphi 0, %s301
      %s319 = sphi 0, %s319
      %s321 = sphi 0, %s319
      %s322 = sphi 0, %s321
      %s336 = sphi 0, %s322
      %s340 = sphi 0, %s340
      %s342 = sphi 0, %s340
      %s343 = sphi 0, %s342
      %s357 = sphi 0, %s343
      %s361 = sphi 0, %s361
      %s363 = sphi 0, %s361
      %s364 = sphi 0, %s363
      %s378 = sphi 0, %s364
      %s382 = sphi 0, %s382
      %s384 = sphi 0, %s382
      %s385 = sphi 0, %s384
      %s399 = sphi 0, %s385
      %s403 = sphi 0, %s403
      %s405 = sphi 0, %s403
      %s406 = sphi 0, %s405
      %s420 = sphi 0, %s406
      %s424 = sphi 0, %s424
      %s426 = sphi 0, %s424
      %s427 = sphi 0, %s426
      %s441 = sphi 0, %s427
      %s445 = sphi 0, %s445
      %s447 = sphi 0, %s445
      %s448 = sphi 0, %s447
      %s462 = sphi 0, %s448
      %s466 = sphi 0, %s466
      %s468 = sphi 0, %s466
      %s469 = sphi 0, %s468
      %s483 = sphi 0, %s469
      %s487 = sphi 0, %s487
      %s489 = sphi 0, %s487
      %s490 = sphi 0, %s489
      %s504 = sphi 0, %s490
      %s508 = sphi 0, %s508
      %s510 = sphi 0, %s508
      %s511 = sphi 0, %s510
      %s525 = sphi 0, %s511
      %s529 = sphi 0, %s529
      %s531 = sphi 0, %s529
      %s532 = sphi 0, %s531
      %s546 = sphi 0, %s532
      %s550 = sphi 0, %s550
      %s552 = sphi 0, %s550
      %s553 = sphi 0, %s552
      %s567 = sphi 0, %s553
      %s573 = sphi 0, %s575
      %s576 = sphi 0, %s573
      %s577 = sphi 0, %s576
      %s593 = sphi 0, %s577
    $region4: #{complex_transformer_forward.5} parent=1 // loop_header_branch
      %36 = sbr.rel (%p34) target = $region8
    $region5: #{complex_transformer_forward.5} parent=1 // loop_body
      %s38 = ssub.s32 %s33, 1
      %s39 = ssub.s32 %s33, 2
      %s40 = sadd.s32 %s33, 1
      %s41 = ssub.s32 %s33, %s40
      %p42 = scmp.eq.s32.totalorder %s41, 0
      %s44 = sadd.s32 %s43, 1
      %s45 = scalar_select %p42, %s43, %s44
      %p48 = pneg %p42
      %p49 = scmp.eq.s32.totalorder %s33, 1
      %p50 = por %p48, %p49
      %p51 = scmp.ne.s32.totalorder %s43, %s46
      %p52 = scmp.eq.s32.totalorder %s33, 0
      %p53 = por %p51, %p52
      %p54 = scmp.ne.s32.totalorder %s43, %s46
      %p55 = scmp.eq.s32.totalorder %s38, 1
      %p56 = por %p54, %p55
      %p57 = scmp.ne.s32.totalorder %s46, %s47
      %p58 = scmp.eq.s32.totalorder %s38, 0
      %p59 = por %p57, %p58
      %p60 = scmp.ne.s32.totalorder %s46, %s47
      %p61 = scmp.eq.s32.totalorder %s39, 1
      %p62 = por %p60, %p61
      %p64 = scmp.ne.s32.totalorder %s47, %s63
      %p65 = scmp.eq.s32.totalorder %s39, 0
      %p66 = por %p64, %p65
      %s68 = sadd.s32 %s67, 1
      %p71 = scmp.eq.s32.totalorder %s33, 1
      %p72 = scmp.ne.s32.totalorder %s67, %s69
      %p73 = scmp.eq.s32.totalorder %s33, 0
      %p74 = por %p72, %p73
      %p75 = scmp.ne.s32.totalorder %s67, %s69
      %p76 = scmp.eq.s32.totalorder %s38, 1
      %p77 = por %p75, %p76
      %p78 = scmp.ne.s32.totalorder %s69, %s70
      %p79 = scmp.eq.s32.totalorder %s38, 0
      %p80 = por %p78, %p79
      %p81 = scmp.ne.s32.totalorder %s69, %s70
      %p82 = scmp.eq.s32.totalorder %s39, 1
      %p83 = por %p81, %p82
      %p85 = scmp.ne.s32.totalorder %s70, %s84
      %p86 = scmp.eq.s32.totalorder %s39, 0
      %p87 = por %p85, %p86
      %s89 = sadd.s32 %s88, 1
      %p92 = scmp.eq.s32.totalorder %s33, 1
      %p93 = scmp.ne.s32.totalorder %s88, %s90
      %p94 = scmp.eq.s32.totalorder %s33, 0
      %p95 = por %p93, %p94
      %p96 = scmp.ne.s32.totalorder %s88, %s90
      %p97 = scmp.eq.s32.totalorder %s38, 1
      %p98 = por %p96, %p97
      %p99 = scmp.ne.s32.totalorder %s90, %s91
      %p100 = scmp.eq.s32.totalorder %s38, 0
      %p101 = por %p99, %p100
      %p102 = scmp.ne.s32.totalorder %s90, %s91
      %p103 = scmp.eq.s32.totalorder %s39, 1
      %p104 = por %p102, %p103
      %p106 = scmp.ne.s32.totalorder %s91, %s105
      %p107 = scmp.eq.s32.totalorder %s39, 0
      %p108 = por %p106, %p107
      %s110 = sadd.s32 %s109, 1
      %p113 = scmp.eq.s32.totalorder %s33, 1
      %p114 = scmp.ne.s32.totalorder %s109, %s111
      %p115 = scmp.eq.s32.totalorder %s33, 0
      %p116 = por %p114, %p115
      %p117 = scmp.ne.s32.totalorder %s109, %s111
      %p118 = scmp.eq.s32.totalorder %s38, 1
      %p119 = por %p117, %p118
      %p120 = scmp.ne.s32.totalorder %s111, %s112
      %p121 = scmp.eq.s32.totalorder %s38, 0
      %p122 = por %p120, %p121
      %p123 = scmp.ne.s32.totalorder %s111, %s112
      %p124 = scmp.eq.s32.totalorder %s39, 1
      %p125 = por %p123, %p124
      %p127 = scmp.ne.s32.totalorder %s112, %s126
      %p128 = scmp.eq.s32.totalorder %s39, 0
      %p129 = por %p127, %p128
      %s131 = sadd.s32 %s130, 1
      %p134 = scmp.eq.s32.totalorder %s33, 1
      %p135 = scmp.ne.s32.totalorder %s130, %s132
      %p136 = scmp.eq.s32.totalorder %s33, 0
      %p137 = por %p135, %p136
      %p138 = scmp.ne.s32.totalorder %s130, %s132
      %p139 = scmp.eq.s32.totalorder %s38, 1
      %p140 = por %p138, %p139
      %p141 = scmp.ne.s32.totalorder %s132, %s133
      %p142 = scmp.eq.s32.totalorder %s38, 0
      %p143 = por %p141, %p142
      %p144 = scmp.ne.s32.totalorder %s132, %s133
      %p145 = scmp.eq.s32.totalorder %s39, 1
      %p146 = por %p144, %p145
      %p148 = scmp.ne.s32.totalorder %s133, %s147
      %p149 = scmp.eq.s32.totalorder %s39, 0
      %p150 = por %p148, %p149
      %s152 = sadd.s32 %s151, 1
      %p155 = scmp.eq.s32.totalorder %s33, 1
      %p156 = scmp.ne.s32.totalorder %s151, %s153
      %p157 = scmp.eq.s32.totalorder %s33, 0
      %p158 = por %p156, %p157
      %p159 = scmp.ne.s32.totalorder %s151, %s153
      %p160 = scmp.eq.s32.totalorder %s38, 1
      %p161 = por %p159, %p160
      %p162 = scmp.ne.s32.totalorder %s153, %s154
      %p163 = scmp.eq.s32.totalorder %s38, 0
      %p164 = por %p162, %p163
      %p165 = scmp.ne.s32.totalorder %s153, %s154
      %p166 = scmp.eq.s32.totalorder %s39, 1
      %p167 = por %p165, %p166
      %p169 = scmp.ne.s32.totalorder %s154, %s168
      %p170 = scmp.eq.s32.totalorder %s39, 0
      %p171 = por %p169, %p170
      %s173 = sadd.s32 %s172, 1
      %p176 = scmp.eq.s32.totalorder %s33, 1
      %p177 = scmp.ne.s32.totalorder %s172, %s174
      %p178 = scmp.eq.s32.totalorder %s33, 0
      %p179 = por %p177, %p178
      %p180 = scmp.ne.s32.totalorder %s172, %s174
      %p181 = scmp.eq.s32.totalorder %s38, 1
      %p182 = por %p180, %p181
      %p183 = scmp.ne.s32.totalorder %s174, %s175
      %p184 = scmp.eq.s32.totalorder %s38, 0
      %p185 = por %p183, %p184
      %p186 = scmp.ne.s32.totalorder %s174, %s175
      %p187 = scmp.eq.s32.totalorder %s39, 1
      %p188 = por %p186, %p187
      %p190 = scmp.ne.s32.totalorder %s175, %s189
      %p191 = scmp.eq.s32.totalorder %s39, 0
      %p192 = por %p190, %p191
      %s194 = sadd.s32 %s193, 1
      %p197 = scmp.eq.s32.totalorder %s33, 1
      %p198 = scmp.ne.s32.totalorder %s193, %s195
      %p199 = scmp.eq.s32.totalorder %s33, 0
      %p200 = por %p198, %p199
      %p201 = scmp.ne.s32.totalorder %s193, %s195
      %p202 = scmp.eq.s32.totalorder %s38, 1
      %p203 = por %p201, %p202
      %p204 = scmp.ne.s32.totalorder %s195, %s196
      %p205 = scmp.eq.s32.totalorder %s38, 0
      %p206 = por %p204, %p205
      %p207 = scmp.ne.s32.totalorder %s195, %s196
      %p208 = scmp.eq.s32.totalorder %s39, 1
      %p209 = por %p207, %p208
      %p211 = scmp.ne.s32.totalorder %s196, %s210
      %p212 = scmp.eq.s32.totalorder %s39, 0
      %p213 = por %p211, %p212
      %s215 = sadd.s32 %s214, 1
      %p218 = scmp.eq.s32.totalorder %s33, 1
      %p219 = scmp.ne.s32.totalorder %s214, %s216
      %p220 = scmp.eq.s32.totalorder %s33, 0
      %p221 = por %p219, %p220
      %p222 = scmp.ne.s32.totalorder %s214, %s216
      %p223 = scmp.eq.s32.totalorder %s38, 1
      %p224 = por %p222, %p223
      %p225 = scmp.ne.s32.totalorder %s216, %s217
      %p226 = scmp.eq.s32.totalorder %s38, 0
      %p227 = por %p225, %p226
      %p228 = scmp.ne.s32.totalorder %s216, %s217
      %p229 = scmp.eq.s32.totalorder %s39, 1
      %p230 = por %p228, %p229
      %p232 = scmp.ne.s32.totalorder %s217, %s231
      %p233 = scmp.eq.s32.totalorder %s39, 0
      %p234 = por %p232, %p233
      %s236 = sadd.s32 %s235, 1
      %p239 = scmp.eq.s32.totalorder %s33, 1
      %p240 = scmp.ne.s32.totalorder %s235, %s237
      %p241 = scmp.eq.s32.totalorder %s33, 0
      %p242 = por %p240, %p241
      %p243 = scmp.ne.s32.totalorder %s235, %s237
      %p244 = scmp.eq.s32.totalorder %s38, 1
      %p245 = por %p243, %p244
      %p246 = scmp.ne.s32.totalorder %s237, %s238
      %p247 = scmp.eq.s32.totalorder %s38, 0
      %p248 = por %p246, %p247
      %p249 = scmp.ne.s32.totalorder %s237, %s238
      %p250 = scmp.eq.s32.totalorder %s39, 1
      %p251 = por %p249, %p250
      %p253 = scmp.ne.s32.totalorder %s238, %s252
      %p254 = scmp.eq.s32.totalorder %s39, 0
      %p255 = por %p253, %p254
      %s257 = sadd.s32 %s256, 1
      %p260 = scmp.eq.s32.totalorder %s33, 1
      %p261 = scmp.ne.s32.totalorder %s256, %s258
      %p262 = scmp.eq.s32.totalorder %s33, 0
      %p263 = por %p261, %p262
      %p264 = scmp.ne.s32.totalorder %s256, %s258
      %p265 = scmp.eq.s32.totalorder %s38, 1
      %p266 = por %p264, %p265
      %p267 = scmp.ne.s32.totalorder %s258, %s259
      %p268 = scmp.eq.s32.totalorder %s38, 0
      %p269 = por %p267, %p268
      %p270 = scmp.ne.s32.totalorder %s258, %s259
      %p271 = scmp.eq.s32.totalorder %s39, 1
      %p272 = por %p270, %p271
      %p274 = scmp.ne.s32.totalorder %s259, %s273
      %p275 = scmp.eq.s32.totalorder %s39, 0
      %p276 = por %p274, %p275
      %s278 = sadd.s32 %s277, 1
      %p281 = scmp.eq.s32.totalorder %s33, 1
      %p282 = scmp.ne.s32.totalorder %s277, %s279
      %p283 = scmp.eq.s32.totalorder %s33, 0
      %p284 = por %p282, %p283
      %p285 = scmp.ne.s32.totalorder %s277, %s279
      %p286 = scmp.eq.s32.totalorder %s38, 1
      %p287 = por %p285, %p286
      %p288 = scmp.ne.s32.totalorder %s279, %s280
      %p289 = scmp.eq.s32.totalorder %s38, 0
      %p290 = por %p288, %p289
      %p291 = scmp.ne.s32.totalorder %s279, %s280
      %p292 = scmp.eq.s32.totalorder %s39, 1
      %p293 = por %p291, %p292
      %p295 = scmp.ne.s32.totalorder %s280, %s294
      %p296 = scmp.eq.s32.totalorder %s39, 0
      %p297 = por %p295, %p296
      %s299 = sadd.s32 %s298, 1
      %p302 = scmp.eq.s32.totalorder %s33, 1
      %p303 = scmp.ne.s32.totalorder %s298, %s300
      %p304 = scmp.eq.s32.totalorder %s33, 0
      %p305 = por %p303, %p304
      %p306 = scmp.ne.s32.totalorder %s298, %s300
      %p307 = scmp.eq.s32.totalorder %s38, 1
      %p308 = por %p306, %p307
      %p309 = scmp.ne.s32.totalorder %s300, %s301
      %p310 = scmp.eq.s32.totalorder %s38, 0
      %p311 = por %p309, %p310
      %p312 = scmp.ne.s32.totalorder %s300, %s301
      %p313 = scmp.eq.s32.totalorder %s39, 1
      %p314 = por %p312, %p313
      %p316 = scmp.ne.s32.totalorder %s301, %s315
      %p317 = scmp.eq.s32.totalorder %s39, 0
      %p318 = por %p316, %p317
      %s320 = sadd.s32 %s319, 1
      %p323 = scmp.eq.s32.totalorder %s33, 1
      %p324 = scmp.ne.s32.totalorder %s319, %s321
      %p325 = scmp.eq.s32.totalorder %s33, 0
      %p326 = por %p324, %p325
      %p327 = scmp.ne.s32.totalorder %s319, %s321
      %p328 = scmp.eq.s32.totalorder %s38, 1
      %p329 = por %p327, %p328
      %p330 = scmp.ne.s32.totalorder %s321, %s322
      %p331 = scmp.eq.s32.totalorder %s38, 0
      %p332 = por %p330, %p331
      %p333 = scmp.ne.s32.totalorder %s321, %s322
      %p334 = scmp.eq.s32.totalorder %s39, 1
      %p335 = por %p333, %p334
      %p337 = scmp.ne.s32.totalorder %s322, %s336
      %p338 = scmp.eq.s32.totalorder %s39, 0
      %p339 = por %p337, %p338
      %s341 = sadd.s32 %s340, 1
      %p344 = scmp.eq.s32.totalorder %s33, 1
      %p345 = scmp.ne.s32.totalorder %s340, %s342
      %p346 = scmp.eq.s32.totalorder %s33, 0
      %p347 = por %p345, %p346
      %p348 = scmp.ne.s32.totalorder %s340, %s342
      %p349 = scmp.eq.s32.totalorder %s38, 1
      %p350 = por %p348, %p349
      %p351 = scmp.ne.s32.totalorder %s342, %s343
      %p352 = scmp.eq.s32.totalorder %s38, 0
      %p353 = por %p351, %p352
      %p354 = scmp.ne.s32.totalorder %s342, %s343
      %p355 = scmp.eq.s32.totalorder %s39, 1
      %p356 = por %p354, %p355
      %p358 = scmp.ne.s32.totalorder %s343, %s357
      %p359 = scmp.eq.s32.totalorder %s39, 0
      %p360 = por %p358, %p359
      %s362 = sadd.s32 %s361, 1
      %p365 = scmp.eq.s32.totalorder %s33, 1
      %p366 = scmp.ne.s32.totalorder %s361, %s363
      %p367 = scmp.eq.s32.totalorder %s33, 0
      %p368 = por %p366, %p367
      %p369 = scmp.ne.s32.totalorder %s361, %s363
      %p370 = scmp.eq.s32.totalorder %s38, 1
      %p371 = por %p369, %p370
      %p372 = scmp.ne.s32.totalorder %s363, %s364
      %p373 = scmp.eq.s32.totalorder %s38, 0
      %p374 = por %p372, %p373
      %p375 = scmp.ne.s32.totalorder %s363, %s364
      %p376 = scmp.eq.s32.totalorder %s39, 1
      %p377 = por %p375, %p376
      %p379 = scmp.ne.s32.totalorder %s364, %s378
      %p380 = scmp.eq.s32.totalorder %s39, 0
      %p381 = por %p379, %p380
      %s383 = sadd.s32 %s382, 1
      %p386 = scmp.eq.s32.totalorder %s33, 1
      %p387 = scmp.ne.s32.totalorder %s382, %s384
      %p388 = scmp.eq.s32.totalorder %s33, 0
      %p389 = por %p387, %p388
      %p390 = scmp.ne.s32.totalorder %s382, %s384
      %p391 = scmp.eq.s32.totalorder %s38, 1
      %p392 = por %p390, %p391
      %p393 = scmp.ne.s32.totalorder %s384, %s385
      %p394 = scmp.eq.s32.totalorder %s38, 0
      %p395 = por %p393, %p394
      %p396 = scmp.ne.s32.totalorder %s384, %s385
      %p397 = scmp.eq.s32.totalorder %s39, 1
      %p398 = por %p396, %p397
      %p400 = scmp.ne.s32.totalorder %s385, %s399
      %p401 = scmp.eq.s32.totalorder %s39, 0
      %p402 = por %p400, %p401
      %s404 = sadd.s32 %s403, 1
      %p407 = scmp.eq.s32.totalorder %s33, 1
      %p408 = scmp.ne.s32.totalorder %s403, %s405
      %p409 = scmp.eq.s32.totalorder %s33, 0
      %p410 = por %p408, %p409
      %p411 = scmp.ne.s32.totalorder %s403, %s405
      %p412 = scmp.eq.s32.totalorder %s38, 1
      %p413 = por %p411, %p412
      %p414 = scmp.ne.s32.totalorder %s405, %s406
      %p415 = scmp.eq.s32.totalorder %s38, 0
      %p416 = por %p414, %p415
      %p417 = scmp.ne.s32.totalorder %s405, %s406
      %p418 = scmp.eq.s32.totalorder %s39, 1
      %p419 = por %p417, %p418
      %p421 = scmp.ne.s32.totalorder %s406, %s420
      %p422 = scmp.eq.s32.totalorder %s39, 0
      %p423 = por %p421, %p422
      %s425 = sadd.s32 %s424, 1
      %p428 = scmp.eq.s32.totalorder %s33, 1
      %p429 = scmp.ne.s32.totalorder %s424, %s426
      %p430 = scmp.eq.s32.totalorder %s33, 0
      %p431 = por %p429, %p430
      %p432 = scmp.ne.s32.totalorder %s424, %s426
      %p433 = scmp.eq.s32.totalorder %s38, 1
      %p434 = por %p432, %p433
      %p435 = scmp.ne.s32.totalorder %s426, %s427
      %p436 = scmp.eq.s32.totalorder %s38, 0
      %p437 = por %p435, %p436
      %p438 = scmp.ne.s32.totalorder %s426, %s427
      %p439 = scmp.eq.s32.totalorder %s39, 1
      %p440 = por %p438, %p439
      %p442 = scmp.ne.s32.totalorder %s427, %s441
      %p443 = scmp.eq.s32.totalorder %s39, 0
      %p444 = por %p442, %p443
      %s446 = sadd.s32 %s445, 1
      %p449 = scmp.eq.s32.totalorder %s33, 1
      %p450 = scmp.ne.s32.totalorder %s445, %s447
      %p451 = scmp.eq.s32.totalorder %s33, 0
      %p452 = por %p450, %p451
      %p453 = scmp.ne.s32.totalorder %s445, %s447
      %p454 = scmp.eq.s32.totalorder %s38, 1
      %p455 = por %p453, %p454
      %p456 = scmp.ne.s32.totalorder %s447, %s448
      %p457 = scmp.eq.s32.totalorder %s38, 0
      %p458 = por %p456, %p457
      %p459 = scmp.ne.s32.totalorder %s447, %s448
      %p460 = scmp.eq.s32.totalorder %s39, 1
      %p461 = por %p459, %p460
      %p463 = scmp.ne.s32.totalorder %s448, %s462
      %p464 = scmp.eq.s32.totalorder %s39, 0
      %p465 = por %p463, %p464
      %s467 = sadd.s32 %s466, 1
      %p470 = scmp.eq.s32.totalorder %s33, 1
      %p471 = scmp.ne.s32.totalorder %s466, %s468
      %p472 = scmp.eq.s32.totalorder %s33, 0
      %p473 = por %p471, %p472
      %p474 = scmp.ne.s32.totalorder %s466, %s468
      %p475 = scmp.eq.s32.totalorder %s38, 1
      %p476 = por %p474, %p475
      %p477 = scmp.ne.s32.totalorder %s468, %s469
      %p478 = scmp.eq.s32.totalorder %s38, 0
      %p479 = por %p477, %p478
      %p480 = scmp.ne.s32.totalorder %s468, %s469
      %p481 = scmp.eq.s32.totalorder %s39, 1
      %p482 = por %p480, %p481
      %p484 = scmp.ne.s32.totalorder %s469, %s483
      %p485 = scmp.eq.s32.totalorder %s39, 0
      %p486 = por %p484, %p485
      %s488 = sadd.s32 %s487, 1
      %p491 = scmp.eq.s32.totalorder %s33, 1
      %p492 = scmp.ne.s32.totalorder %s487, %s489
      %p493 = scmp.eq.s32.totalorder %s33, 0
      %p494 = por %p492, %p493
      %p495 = scmp.ne.s32.totalorder %s487, %s489
      %p496 = scmp.eq.s32.totalorder %s38, 1
      %p497 = por %p495, %p496
      %p498 = scmp.ne.s32.totalorder %s489, %s490
      %p499 = scmp.eq.s32.totalorder %s38, 0
      %p500 = por %p498, %p499
      %p501 = scmp.ne.s32.totalorder %s489, %s490
      %p502 = scmp.eq.s32.totalorder %s39, 1
      %p503 = por %p501, %p502
      %p505 = scmp.ne.s32.totalorder %s490, %s504
      %p506 = scmp.eq.s32.totalorder %s39, 0
      %p507 = por %p505, %p506
      %s509 = sadd.s32 %s508, 1
      %p512 = scmp.eq.s32.totalorder %s33, 1
      %p513 = scmp.ne.s32.totalorder %s508, %s510
      %p514 = scmp.eq.s32.totalorder %s33, 0
      %p515 = por %p513, %p514
      %p516 = scmp.ne.s32.totalorder %s508, %s510
      %p517 = scmp.eq.s32.totalorder %s38, 1
      %p518 = por %p516, %p517
      %p519 = scmp.ne.s32.totalorder %s510, %s511
      %p520 = scmp.eq.s32.totalorder %s38, 0
      %p521 = por %p519, %p520
      %p522 = scmp.ne.s32.totalorder %s510, %s511
      %p523 = scmp.eq.s32.totalorder %s39, 1
      %p524 = por %p522, %p523
      %p526 = scmp.ne.s32.totalorder %s511, %s525
      %p527 = scmp.eq.s32.totalorder %s39, 0
      %p528 = por %p526, %p527
      %s530 = sadd.s32 %s529, 1
      %p533 = scmp.eq.s32.totalorder %s33, 1
      %p534 = scmp.ne.s32.totalorder %s529, %s531
      %p535 = scmp.eq.s32.totalorder %s33, 0
      %p536 = por %p534, %p535
      %p537 = scmp.ne.s32.totalorder %s529, %s531
      %p538 = scmp.eq.s32.totalorder %s38, 1
      %p539 = por %p537, %p538
      %p540 = scmp.ne.s32.totalorder %s531, %s532
      %p541 = scmp.eq.s32.totalorder %s38, 0
      %p542 = por %p540, %p541
      %p543 = scmp.ne.s32.totalorder %s531, %s532
      %p544 = scmp.eq.s32.totalorder %s39, 1
      %p545 = por %p543, %p544
      %p547 = scmp.ne.s32.totalorder %s532, %s546
      %p548 = scmp.eq.s32.totalorder %s39, 0
      %p549 = por %p547, %p548
      %s551 = sadd.s32 %s550, 1
      %p554 = scmp.eq.s32.totalorder %s33, 1
      %p555 = scmp.ne.s32.totalorder %s550, %s552
      %p556 = scmp.eq.s32.totalorder %s33, 0
      %p557 = por %p555, %p556
      %p558 = scmp.ne.s32.totalorder %s550, %s552
      %p559 = scmp.eq.s32.totalorder %s38, 1
      %p560 = por %p558, %p559
      %p561 = scmp.ne.s32.totalorder %s552, %s553
      %p562 = scmp.eq.s32.totalorder %s38, 0
      %p563 = por %p561, %p562
      %p564 = scmp.ne.s32.totalorder %s552, %s553
      %p565 = scmp.eq.s32.totalorder %s39, 1
      %p566 = por %p564, %p565
      %p568 = scmp.ne.s32.totalorder %s553, %s567
      %p569 = scmp.eq.s32.totalorder %s39, 0
      %p570 = por %p568, %p569
      %s571 = ssub.s32 %s33, %s40
      %p572 = scmp.eq.s32.totalorder %s571, 0
      %s574 = sadd.s32 %s573, 1
      %s575 = scalar_select %p572, %s573, %s574
      %p578 = pneg %p572
      %p579 = scmp.eq.s32.totalorder %s33, 1
      %p580 = por %p578, %p579
      %p581 = scmp.ne.s32.totalorder %s573, %s576
      %p582 = scmp.eq.s32.totalorder %s33, 0
      %p583 = por %p581, %p582
      %p584 = scmp.ne.s32.totalorder %s573, %s576
      %p585 = scmp.eq.s32.totalorder %s38, 1
      %p586 = por %p584, %p585
      %p587 = scmp.ne.s32.totalorder %s576, %s577
      %p588 = scmp.eq.s32.totalorder %s38, 0
      %p589 = por %p587, %p588
      %p590 = scmp.ne.s32.totalorder %s576, %s577
      %p591 = scmp.eq.s32.totalorder %s39, 1
      %p592 = por %p590, %p591
      %p594 = scmp.ne.s32.totalorder %s577, %s593
      %p595 = scmp.eq.s32.totalorder %s39, 0
      %p596 = por %p594, %p595
      %p597 = scmp.le.s32.totalorder 1, %s33
      %p598 = scmp.lt.s32.totalorder %s33, 3
      %p599 = pnand %p597, %p598
      %p600 = pneg %p599
      // Predicated region
      $region9: #{complex_transformer_forward.5} parent=5 // pred_check
        _
      $region10: #{complex_transformer_forward.5} parent=5 // pred_check_branch
        %602 = sbr.rel (%p599) target = $region12
      $region11: #{complex_transformer_forward.5} parent=5 // pred_region
        %s603 = ssub.s32 %s33, 1
        // Predicated region
        $region13: #{complex_transformer_forward.5} parent=11 // pred_check
          %p604 = pneg %p80
        $region14: #{complex_transformer_forward.5} parent=11 // pred_check_branch
          %606 = sbr.rel (%p604) target = $region16
        $region15: #{complex_transformer_forward.5} parent=11 // pred_region
          _
        $region16: #{complex_transformer_forward.5} parent=11 // pred_fallthru
          _
        // Predicated region
        $region17: #{complex_transformer_forward.5} parent=11 // pred_check
          %p607 = pneg %p101
        $region18: #{complex_transformer_forward.5} parent=11 // pred_check_branch
          %609 = sbr.rel (%p607) target = $region20
        $region19: #{complex_transformer_forward.5} parent=11 // pred_region
          _
        $region20: #{complex_transformer_forward.5} parent=11 // pred_fallthru
          _
        // Predicated region
        $region21: #{complex_transformer_forward.5} parent=11 // pred_check
          %p610 = pneg %p122
        $region22: #{complex_transformer_forward.5} parent=11 // pred_check_branch
          %612 = sbr.rel (%p610) target = $region24
        $region23: #{complex_transformer_forward.5} parent=11 // pred_region
          _
        $region24: #{complex_transformer_forward.5} parent=11 // pred_fallthru
          _
        // Predicated region
        $region25: #{complex_transformer_forward.5} parent=11 // pred_check
          %p613 = pneg %p143
        $region26: #{complex_transformer_forward.5} parent=11 // pred_check_branch
          %615 = sbr.rel (%p613) target = $region28
        $region27: #{complex_transformer_forward.5} parent=11 // pred_region
          _
        $region28: #{complex_transformer_forward.5} parent=11 // pred_fallthru
          _
        // Predicated region
        $region29: #{complex_transformer_forward.5} parent=11 // pred_check
          %p616 = pneg %p164
        $region30: #{complex_transformer_forward.5} parent=11 // pred_check_branch
          %618 = sbr.rel (%p616) target = $region32
        $region31: #{complex_transformer_forward.5} parent=11 // pred_region
          _
        $region32: #{complex_transformer_forward.5} parent=11 // pred_fallthru
          _
        // Predicated region
        $region33: #{complex_transformer_forward.5} parent=11 // pred_check
          %p619 = pneg %p185
        $region34: #{complex_transformer_forward.5} parent=11 // pred_check_branch
          %621 = sbr.rel (%p619) target = $region36
        $region35: #{complex_transformer_forward.5} parent=11 // pred_region
          _
        $region36: #{complex_transformer_forward.5} parent=11 // pred_fallthru
          _
        // Predicated region
        $region37: #{complex_transformer_forward.5} parent=11 // pred_check
          %p622 = pneg %p206
        $region38: #{complex_transformer_forward.5} parent=11 // pred_check_branch
          %624 = sbr.rel (%p622) target = $region40
        $region39: #{complex_transformer_forward.5} parent=11 // pred_region
          _
        $region40: #{complex_transformer_forward.5} parent=11 // pred_fallthru
          _
        // Predicated region
        $region41: #{complex_transformer_forward.5} parent=11 // pred_check
          %p625 = pneg %p227
        $region42: #{complex_transformer_forward.5} parent=11 // pred_check_branch
          %627 = sbr.rel (%p625) target = $region44
        $region43: #{complex_transformer_forward.5} parent=11 // pred_region
          _
        $region44: #{complex_transformer_forward.5} parent=11 // pred_fallthru
          _
        // Predicated region
        $region45: #{complex_transformer_forward.5} parent=11 // pred_check
          %p628 = pneg %p248
        $region46: #{complex_transformer_forward.5} parent=11 // pred_check_branch
          %630 = sbr.rel (%p628) target = $region48
        $region47: #{complex_transformer_forward.5} parent=11 // pred_region
          _
        $region48: #{complex_transformer_forward.5} parent=11 // pred_fallthru
          _
        // Predicated region
        $region49: #{complex_transformer_forward.5} parent=11 // pred_check
          %p631 = pneg %p269
        $region50: #{complex_transformer_forward.5} parent=11 // pred_check_branch
          %633 = sbr.rel (%p631) target = $region52
        $region51: #{complex_transformer_forward.5} parent=11 // pred_region
          _
        $region52: #{complex_transformer_forward.5} parent=11 // pred_fallthru
          _
        // Predicated region
        $region53: #{complex_transformer_forward.5} parent=11 // pred_check
          %p634 = pneg %p290
        $region54: #{complex_transformer_forward.5} parent=11 // pred_check_branch
          %636 = sbr.rel (%p634) target = $region56
        $region55: #{complex_transformer_forward.5} parent=11 // pred_region
          _
        $region56: #{complex_transformer_forward.5} parent=11 // pred_fallthru
          _
        // Predicated region
        $region57: #{complex_transformer_forward.5} parent=11 // pred_check
          %p637 = pneg %p311
        $region58: #{complex_transformer_forward.5} parent=11 // pred_check_branch
          %639 = sbr.rel (%p637) target = $region60
        $region59: #{complex_transformer_forward.5} parent=11 // pred_region
          _
        $region60: #{complex_transformer_forward.5} parent=11 // pred_fallthru
          _
        // Predicated region
        $region61: #{complex_transformer_forward.5} parent=11 // pred_check
          %p640 = pneg %p332
        $region62: #{complex_transformer_forward.5} parent=11 // pred_check_branch
          %642 = sbr.rel (%p640) target = $region64
        $region63: #{complex_transformer_forward.5} parent=11 // pred_region
          _
        $region64: #{complex_transformer_forward.5} parent=11 // pred_fallthru
          _
        // Predicated region
        $region65: #{complex_transformer_forward.5} parent=11 // pred_check
          %p643 = pneg %p353
        $region66: #{complex_transformer_forward.5} parent=11 // pred_check_branch
          %645 = sbr.rel (%p643) target = $region68
        $region67: #{complex_transformer_forward.5} parent=11 // pred_region
          _
        $region68: #{complex_transformer_forward.5} parent=11 // pred_fallthru
          _
        // Predicated region
        $region69: #{complex_transformer_forward.5} parent=11 // pred_check
          %p646 = pneg %p374
        $region70: #{complex_transformer_forward.5} parent=11 // pred_check_branch
          %648 = sbr.rel (%p646) target = $region72
        $region71: #{complex_transformer_forward.5} parent=11 // pred_region
          _
        $region72: #{complex_transformer_forward.5} parent=11 // pred_fallthru
          _
        // Predicated region
        $region73: #{complex_transformer_forward.5} parent=11 // pred_check
          %p649 = pneg %p395
        $region74: #{complex_transformer_forward.5} parent=11 // pred_check_branch
          %651 = sbr.rel (%p649) target = $region76
        $region75: #{complex_transformer_forward.5} parent=11 // pred_region
          _
        $region76: #{complex_transformer_forward.5} parent=11 // pred_fallthru
          _
        // Predicated region
        $region77: #{complex_transformer_forward.5} parent=11 // pred_check
          %p652 = pneg %p416
        $region78: #{complex_transformer_forward.5} parent=11 // pred_check_branch
          %654 = sbr.rel (%p652) target = $region80
        $region79: #{complex_transformer_forward.5} parent=11 // pred_region
          %s656 = ssub.s32 16, 16
          %657 = vsyncadd [#allocation3], %s656
          %s659 = sshll.u32 [#allocation2], 4
          %s660 = int_to_ptr.vmem [resolvable:$true] %s659
          %662 = dma.hbm_to_vmem [thread:$0]  %s17, 16, %s660, [#allocation3]
        $region80: #{complex_transformer_forward.5} parent=11 // pred_fallthru
          _
        // Predicated region
        $region81: #{complex_transformer_forward.5} parent=11 // pred_check
          %p663 = pneg %p437
        $region82: #{complex_transformer_forward.5} parent=11 // pred_check_branch
          %665 = sbr.rel (%p663) target = $region84
        $region83: #{complex_transformer_forward.5} parent=11 // pred_region
          _
        $region84: #{complex_transformer_forward.5} parent=11 // pred_fallthru
          _
        // Predicated region
        $region85: #{complex_transformer_forward.5} parent=11 // pred_check
          %p666 = pneg %p458
        $region86: #{complex_transformer_forward.5} parent=11 // pred_check_branch
          %668 = sbr.rel (%p666) target = $region88
        $region87: #{complex_transformer_forward.5} parent=11 // pred_region
          %s670 = ssub.s32 16, 16
          %671 = vsyncadd [#allocation5], %s670
          %s673 = sshll.u32 [#allocation4], 4
          %s674 = int_to_ptr.vmem [resolvable:$true] %s673
          %676 = dma.hbm_to_vmem [thread:$0]  %s19, 16, %s674, [#allocation5]
        $region88: #{complex_transformer_forward.5} parent=11 // pred_fallthru
          _
        // Predicated region
        $region89: #{complex_transformer_forward.5} parent=11 // pred_check
          %p677 = pneg %p479
        $region90: #{complex_transformer_forward.5} parent=11 // pred_check_branch
          %679 = sbr.rel (%p677) target = $region92
        $region91: #{complex_transformer_forward.5} parent=11 // pred_region
          %s681 = ssub.s32 16, 16
          %682 = vsyncadd [#allocation5], %s681
          %s684 = sshll.u32 [#allocation6], 4
          %s685 = int_to_ptr.vmem [resolvable:$true] %s684
          %687 = dma.hbm_to_vmem [thread:$0]  %s20, 16, %s685, [#allocation5]
        $region92: #{complex_transformer_forward.5} parent=11 // pred_fallthru
          _
        // Predicated region
        $region93: #{complex_transformer_forward.5} parent=11 // pred_check
          %p688 = pneg %p500
        $region94: #{complex_transformer_forward.5} parent=11 // pred_check_branch
          %690 = sbr.rel (%p688) target = $region96
        $region95: #{complex_transformer_forward.5} parent=11 // pred_region
          _
        $region96: #{complex_transformer_forward.5} parent=11 // pred_fallthru
          _
        // Predicated region
        $region97: #{complex_transformer_forward.5} parent=11 // pred_check
          %p691 = pneg %p521
        $region98: #{complex_transformer_forward.5} parent=11 // pred_check_branch
          %693 = sbr.rel (%p691) target = $region100
        $region99: #{complex_transformer_forward.5} parent=11 // pred_region
          _
        $region100: #{complex_transformer_forward.5} parent=11 // pred_fallthru
          _
        // Predicated region
        $region101: #{complex_transformer_forward.5} parent=11 // pred_check
          %p694 = pneg %p542
        $region102: #{complex_transformer_forward.5} parent=11 // pred_check_branch
          %696 = sbr.rel (%p694) target = $region104
        $region103: #{complex_transformer_forward.5} parent=11 // pred_region
          _
        $region104: #{complex_transformer_forward.5} parent=11 // pred_fallthru
          _
        // Predicated region
        $region105: #{complex_transformer_forward.5} parent=11 // pred_check
          %p697 = pneg %p563
        $region106: #{complex_transformer_forward.5} parent=11 // pred_check_branch
          %699 = sbr.rel (%p697) target = $region108
        $region107: #{complex_transformer_forward.5} parent=11 // pred_region
          _
        $region108: #{complex_transformer_forward.5} parent=11 // pred_fallthru
          _
      $region12: #{complex_transformer_forward.5} parent=5 // pred_fallthru
        _
      %p700 = scmp.lt.s32.totalorder %s33, 2
      // Predicated region
      $region109: #{complex_transformer_forward.5} parent=5 // pred_check
        %p701 = pneg %p700
      $region110: #{complex_transformer_forward.5} parent=5 // pred_check_branch
        %703 = sbr.rel (%p701) target = $region112
      $region111: #{complex_transformer_forward.5} parent=5 // pred_region
        // Predicated region
        $region113: #{complex_transformer_forward.5} parent=111 // pred_check
          %p704 = pneg %p53
        $region114: #{complex_transformer_forward.5} parent=111 // pred_check_branch
          %706 = sbr.rel (%p704) target = $region116
        $region115: #{complex_transformer_forward.5} parent=111 // pred_region
          %p707 = scmp.lt.s32.totalorder %s33, 1
          %s708 = scalar_select %p707, %s33, 1
          %s709 = smul.addr %s708, 8
          %s710 = scalar_lea.vmem %s0, %s709
        $region116: #{complex_transformer_forward.5} parent=111 // pred_fallthru
          _
      $region112: #{complex_transformer_forward.5} parent=5 // pred_fallthru
        _
      %p711 = scmp.le.s32.totalorder 1, %s33
      %p712 = scmp.lt.s32.totalorder %s33, 3
      %p713 = pnand %p711, %p712
      %p714 = pneg %p713
      // Predicated region
      $region117: #{complex_transformer_forward.5} parent=5 // pred_check
        _
      $region118: #{complex_transformer_forward.5} parent=5 // pred_check_branch
        %716 = sbr.rel (%p713) target = $region120
      $region119: #{complex_transformer_forward.5} parent=5 // pred_region
        %s717 = ssub.s32 %s33, 1
        // Predicated region
        $region121: #{complex_transformer_forward.5} parent=119 // pred_check
          %p718 = pneg %p416
        $region122: #{complex_transformer_forward.5} parent=119 // pred_check_branch
          %720 = sbr.rel (%p718) target = $region124
        $region123: #{complex_transformer_forward.5} parent=119 // pred_region
          %721 = dma.done [#allocation3], 16
        $region124: #{complex_transformer_forward.5} parent=119 // pred_fallthru
          _
        // Predicated region
        $region125: #{complex_transformer_forward.5} parent=119 // pred_check
          %p722 = pneg %p458
        $region126: #{complex_transformer_forward.5} parent=119 // pred_check_branch
          %724 = sbr.rel (%p722) target = $region128
        $region127: #{complex_transformer_forward.5} parent=119 // pred_region
          %725 = dma.done [#allocation5], 16
        $region128: #{complex_transformer_forward.5} parent=119 // pred_fallthru
          _
        // Predicated region
        $region129: #{complex_transformer_forward.5} parent=119 // pred_check
          %p726 = pneg %p479
        $region130: #{complex_transformer_forward.5} parent=119 // pred_check_branch
          %728 = sbr.rel (%p726) target = $region132
        $region131: #{complex_transformer_forward.5} parent=119 // pred_region
          %729 = dma.done [#allocation5], 16
        $region132: #{complex_transformer_forward.5} parent=119 // pred_fallthru
          _
        %p730 = scmp.lt.s32.totalorder %s38, 1
        %s731 = scalar_select %p730, %s38, 1
        %s732 = smul.addr %s731, 8
        %s733 = scalar_lea.vmem %s0, %s732
        %p734 = pneg %p59
        %p735 = pneg %p56
        %p736 = pneg %p80
        %p737 = pneg %p77
        %p738 = pneg %p101
        %p739 = pneg %p98
        %p740 = pneg %p122
        %p741 = pneg %p119
        %p742 = pneg %p143
        %p743 = pneg %p140
        %p744 = pneg %p164
        %p745 = pneg %p161
        %p746 = pneg %p185
        %p747 = pneg %p182
        %p748 = pneg %p206
        %p749 = pneg %p203
        %p750 = pneg %p227
        %p751 = pneg %p224
        %p752 = pneg %p248
        %p753 = pneg %p245
        %p754 = pneg %p269
        %p755 = pneg %p266
        %p756 = pneg %p290
        %p757 = pneg %p287
        %p758 = pneg %p311
        %p759 = pneg %p308
        %p760 = pneg %p332
        %p761 = pneg %p329
        %p762 = pneg %p353
        %p763 = pneg %p350
        %p764 = pneg %p374
        %p765 = pneg %p371
        %p766 = pneg %p395
        %p767 = pneg %p392
        %p768 = pneg %p416
        %p769 = pneg %p413
        %p770 = pneg %p437
        %p771 = pneg %p434
        %p772 = pneg %p458
        %p773 = pneg %p455
        %p774 = pneg %p479
        %p775 = pneg %p476
        %p776 = pneg %p500
        %p777 = pneg %p497
        %p778 = pneg %p521
        %p779 = pneg %p518
        %p780 = pneg %p542
        %p781 = pneg %p539
        %p782 = pneg %p563
        %p783 = pneg %p560
        %p784 = pneg %p589
        %p785 = pneg %p586
        %p786 = scmp.lt.s32.totalorder %s38, 1
        %s787 = scalar_select %p786, %s38, 1
        %s788 = smul.addr %s787, 8
        %s789 = scalar_lea.vmem %s25, %s788
        %p790 = scmp.lt.s32.totalorder %s38, 1
        %s791 = scalar_select %p790, %s38, 1
        %s792 = smul.addr %s791, 8
        %s793 = scalar_lea.vmem %s0, %s792
        %p794 = scmp.lt.s32.totalorder %s38, 1
        %s795 = scalar_select %p794, %s38, 1
        %s796 = smul.addr %s795, 8
        %s797 = scalar_lea.vmem %s25, %s796
        %v799 = vld [vmem:[%s793] sm:$0xff]
        %v800 = vld [vmem:[%s1] sm:$0x1]
        %v801 = vld [vmem:[%s2] sm:$0x1]
        %vm802 = vcmask 261120
        %v803 = vsel %vm802, %v799, 0.0
        %804 = vadd.xlane.f32.xlu0 %v803
        %v805 = vpop.xlane.xlu0 %804
        %v806 = vrcp.pop 32.0
        %v807 = vmul.f32 %v805, %v806
        %v808 = vsub.f32 %v799, %v807
        %v809 = vmul.f32 %v808, %v808
        %v810 = vsel %vm802, %v809, 0.0
        %811 = vadd.xlane.f32.xlu0 %v810
        %v812 = vpop.xlane.xlu0 %811
        %v813 = vmul.f32 %v812, %v806
        %v814 = vadd.f32 %v813, 1e-05
        %v815 = vrsqrt.pop %v814
        %v816 = vmul.f32 %v808, %v815
        %v818 = vlaneseq
        %v819 = vshrl.u32 %v818, 7
        %v820 = vsub.s32 0, %v819
        %v821 = vrot.slane %v800, %v820
        %v823 = vmul.f32 %v816, %v821
        %v825 = vlaneseq
        %v826 = vshrl.u32 %v825, 7
        %v827 = vsub.s32 0, %v826
        %v828 = vrot.slane %v801, %v827
        %v830 = vadd.f32 %v823, %v828
        %v831 = vld [vmem:[%s3] sm:$0x1]
        %v832 = vld [vmem:[%s4] sm:$0x1]
        %834 = vrot.lane.b32.xlu0 %v799, 96
        %v835 = vpop.permute.xlu0 %834
        %v837 = vsel %vm802, %v835, 0.0
        %838 = vadd.xlane.f32.xlu0 %v837
        %v839 = vpop.xlane.xlu0 %838
        %v840 = vmul.f32 %v839, %v806
        %v841 = vsub.f32 %v799, %v840
        %v842 = vmul.f32 %v841, %v841
        %844 = vrot.lane.b32.xlu0 %v842, 96
        %v845 = vpop.permute.xlu0 %844
        %v847 = vsel %vm802, %v845, 0.0
        %848 = vadd.xlane.f32.xlu0 %v847
        %v849 = vpop.xlane.xlu0 %848
        %v850 = vmul.f32 %v849, %v806
        %v851 = vadd.f32 %v850, 1e-05
        %v852 = vrsqrt.pop %v851
        %v853 = vmul.f32 %v841, %v852
        %v855 = vlaneseq
        %v856 = vshrl.u32 %v855, 7
        %v857 = vsub.s32 0, %v856
        %v858 = vrot.slane %v831, %v857
        %859 = vrot.lane.b32.xlu0 %v858, 32
        %v860 = vpop.permute.xlu0 %859
        %v862 = vmul.f32 %v853, %v860
        %v864 = vlaneseq
        %v865 = vshrl.u32 %v864, 7
        %v866 = vsub.s32 0, %v865
        %v867 = vrot.slane %v832, %v866
        %868 = vrot.lane.b32.xlu0 %v867, 32
        %v869 = vpop.permute.xlu0 %868
        %v871 = vadd.f32 %v862, %v869
        %873 = vrot.lane.b32.xlu0 %v871, 96
        %v874 = vpop.permute.xlu0 %873
        %v876 = vpack.c.bf16 %v874, %v830
        %v877 = vld [vmem:[%s5] sm:$0xff]
        %v878 = vld [vmem:[%s5 + $0x8] sm:$0xff]
        %v879 = vld [vmem:[%s5 + $0x10] sm:$0xff]
        %v880 = vld [vmem:[%s5 + $0x18] sm:$0xff]
        %v885 = vunpack.c.l.b16 %v877
        %v886 = vunpack.c.h.b16 %v877
        %v887 = vunpack.c.l.b16 %v878
        %v888 = vunpack.c.h.b16 %v878
        %v889 = vunpack.c.l.b16 %v879
        %v890 = vunpack.c.h.b16 %v879
        %v891 = vunpack.c.l.b16 %v880
        %v892 = vunpack.c.h.b16 %v880
        %v893 = vpack.c.b16 %v887, %v885
        %v894 = vpack.c.b16 %v888, %v886
        %v895 = vpack.c.b16 %v891, %v889
        %v896 = vpack.c.b16 %v892, %v890
        %v902 = vsel %vm802, %v876, 0
        %904 = vmatprep.subr.bf16.mxu0 0
        %905 = vmatpush1.bf16.msra.mxu0 0
        %906 = vmatprep.subr.bf16.mxu0 0
        %907 = vmatpush1.bf16.msra.mxu0 0
        %908 = vmatprep.subr.bf16.mxu0 0
        %909 = vmatpush1.bf16.msra.mxu0 0
        %910 = vmatprep.subr.bf16.mxu0 0
        %911 = vmatpush1.bf16.msra.mxu0 0
        %912 = vmatprep.subr.bf16.mxu0 0
        %913 = vmatpush1.bf16.msra.mxu0 0
        %914 = vmatprep.subr.bf16.mxu0 0
        %915 = vmatpush1.bf16.msra.mxu0 0
        %916 = vmatprep.subr.bf16.mxu0 %v896
        %917 = vmatpush1.bf16.msra.mxu0 %v895
        %918 = vmatprep.subr.bf16.mxu0 %v894
        %919 = vmatpush1.bf16.msra.mxu0 %v893
        %920 = vmatprep.subr.bf16.mxu0 0
        %921 = vmatpush2.bf16.msra.mxu0 0
        %922 = vmatprep.subr.bf16.mxu0 0
        %923 = vmatpush2.bf16.msra.mxu0 0
        %924 = vmatprep.subr.bf16.mxu0 0
        %925 = vmatpush2.bf16.msra.mxu0 0
        %926 = vmatprep.subr.bf16.mxu0 0
        %927 = vmatpush2.bf16.msra.mxu0 0
        %928 = vmatprep.subr.bf16.mxu0 0
        %929 = vmatpush2.bf16.msra.mxu0 0
        %930 = vmatprep.subr.bf16.mxu0 0
        %931 = vmatpush2.bf16.msra.mxu0 0
        %932 = vmatprep.subr.bf16.mxu0 0
        %933 = vmatpush2.bf16.msra.mxu0 0
        %934 = vmatprep.subr.bf16.mxu0 0
        %935 = vmatpush2.bf16.msra.mxu0 0
        %936 = vmatprep.mubr.bf16.mxu0 0
        %937 = vmatmul.mubr.bf16.gmra.mxu0 %v902
        %v938 = vpop.f32.mrf.mxu0
        %v939 = vadd.f32 0.0, %v938
        %v940 = vpop.f32.mrf.mxu0
        %v941 = vadd.f32 0.0, %v940
        %v942 = vpop.f32.mrf.mxu0
        %v943 = vadd.f32 0.0, %v942
        %v944 = vpop.f32.mrf.mxu0
        %v945 = vadd.f32 0.0, %v944
        %946 = vdwg.mxu0
        %v947 = vld [vmem:[%s6] sm:$0x1]
        %v948 = vld [vmem:[%s7] sm:$0x1]
        %951 = vrot.lane.b32.xlu0 %v943, 32
        %v952 = vpop.permute.xlu0 %951
        %953 = vrot.lane.b32.xlu0 %v945, 32
        %v954 = vpop.permute.xlu0 %953
        %v955 = vsel %vm802, %v952, %v954
        %v957 = vsub.f32 %v939, %v955
        %v959 = vlaneseq
        %v960 = vshrl.u32 %v959, 7
        %v961 = vsub.s32 0, %v960
        %v962 = vrot.slane %v947, %v961
        %v964 = vadd.f32 %v957, %v962
        %967 = vrot.lane.b32.xlu0 %v939, 32
        %v968 = vpop.permute.xlu0 %967
        %969 = vrot.lane.b32.xlu0 %v941, 32
        %v970 = vpop.permute.xlu0 %969
        %v971 = vsel %vm802, %v968, %v970
        %v973 = vadd.f32 %v943, %v971
        %v975 = vlaneseq
        %v976 = vshrl.u32 %v975, 7
        %v977 = vsub.s32 0, %v976
        %v978 = vrot.slane %v948, %v977
        %v980 = vadd.f32 %v973, %v978
        %v981 = vmul.f32 %v964, 0.35355338
        %983 = vrot.lane.b32.xlu0 %v981, 120
        %v984 = vpop.permute.xlu0 %983
        %986 = vrot.lane.b32.xlu0 %v981, 112
        %v987 = vpop.permute.xlu0 %986
        %989 = vrot.lane.b32.xlu0 %v981, 104
        %v990 = vpop.permute.xlu0 %989
        %v992 = vcombine.low %v981, %v987
        %v993 = vcombine.high %v981, %v987
        %v995 = vunpack.c.l.s4 1983009808
        %v996 = vunpack.c.0.s8 %v995
        %v997 = vlaneseq
        %v998 = vshrl.u32 %v997, 7
        %v999 = vsub.s32 %v996, %v998
        %v1000 = vrot.slane %v992, %v999
        %v1002 = vunpack.c.l.s4 1983009808
        %v1003 = vunpack.c.0.s8 %v1002
        %v1004 = vlaneseq
        %v1005 = vshrl.u32 %v1004, 7
        %v1006 = vsub.s32 %v1003, %v1005
        %v1007 = vrot.slane %v993, %v1006
        %v1008 = vcombine.low %v984, %v990
        %v1009 = vcombine.high %v984, %v990
        %v1011 = vunpack.c.l.s4 1983009808
        %v1012 = vunpack.c.0.s8 %v1011
        %v1013 = vlaneseq
        %v1014 = vshrl.u32 %v1013, 7
        %v1015 = vsub.s32 %v1012, %v1014
        %v1016 = vrot.slane %v1008, %v1015
        %v1018 = vunpack.c.l.s4 1983009808
        %v1019 = vunpack.c.0.s8 %v1018
        %v1020 = vlaneseq
        %v1021 = vshrl.u32 %v1020, 7
        %v1022 = vsub.s32 %v1019, %v1021
        %v1023 = vrot.slane %v1009, %v1022
        %v1024 = vcombine.low %v1000, %v1016
        %v1025 = vcombine.high %v1000, %v1016
        %v1027 = vunpack.c.l.s4 1934713408
        %v1028 = vunpack.c.0.s8 %v1027
        %v1029 = vlaneseq
        %v1030 = vshrl.u32 %v1029, 7
        %v1031 = vsub.s32 %v1028, %v1030
        %v1032 = vrot.slane %v1024, %v1031
        %v1034 = vunpack.c.l.s4 1934713408
        %v1035 = vunpack.c.0.s8 %v1034
        %v1036 = vlaneseq
        %v1037 = vshrl.u32 %v1036, 7
        %v1038 = vsub.s32 %v1035, %v1037
        %v1039 = vrot.slane %v1025, %v1038
        %v1040 = vcombine.low %v1007, %v1023
        %v1041 = vcombine.high %v1007, %v1023
        %v1043 = vunpack.c.l.s4 1934713408
        %v1044 = vunpack.c.0.s8 %v1043
        %v1045 = vlaneseq
        %v1046 = vshrl.u32 %v1045, 7
        %v1047 = vsub.s32 %v1044, %v1046
        %v1048 = vrot.slane %v1040, %v1047
        %v1050 = vunpack.c.l.s4 1934713408
        %v1051 = vunpack.c.0.s8 %v1050
        %v1052 = vlaneseq
        %v1053 = vshrl.u32 %v1052, 7
        %v1054 = vsub.s32 %v1051, %v1053
        %v1055 = vrot.slane %v1041, %v1054
        %v1056 = vcombine.high %v1032, 0.0
        %v1057 = vcombine.high %v1039, 0.0
        %v1058 = vcombine.high %v1048, 0.0
        %v1059 = vcombine.high %v1055, 0.0
        %v1060 = vcombine.low %v1032, %v1039
        %v1062 = vunpack.c.l.s4 1983009808
        %v1063 = vunpack.c.0.s8 %v1062
        %v1064 = vlaneseq
        %v1065 = vshrl.u32 %v1064, 7
        %v1066 = vsub.s32 %v1063, %v1065
        %v1067 = vrot.slane %v1060, %v1066
        %v1068 = vcombine.low %v1056, %v1057
        %v1070 = vunpack.c.l.s4 1983009808
        %v1071 = vunpack.c.0.s8 %v1070
        %v1072 = vlaneseq
        %v1073 = vshrl.u32 %v1072, 7
        %v1074 = vsub.s32 %v1071, %v1073
        %v1075 = vrot.slane %v1068, %v1074
        %v1076 = vcombine.low %v1048, %v1055
        %v1078 = vunpack.c.l.s4 1983009808
        %v1079 = vunpack.c.0.s8 %v1078
        %v1080 = vlaneseq
        %v1081 = vshrl.u32 %v1080, 7
        %v1082 = vsub.s32 %v1079, %v1081
        %v1083 = vrot.slane %v1076, %v1082
        %v1084 = vcombine.low %v1058, %v1059
        %v1086 = vunpack.c.l.s4 1983009808
        %v1087 = vunpack.c.0.s8 %v1086
        %v1088 = vlaneseq
        %v1089 = vshrl.u32 %v1088, 7
        %v1090 = vsub.s32 %v1087, %v1089
        %v1091 = vrot.slane %v1084, %v1090
        %v1092 = vcombine.low %v1067, %v1075
        %v1093 = vcombine.high %v1067, %v1075
        %v1095 = vunpack.c.l.s4 1934713408
        %v1096 = vunpack.c.0.s8 %v1095
        %v1097 = vlaneseq
        %v1098 = vshrl.u32 %v1097, 7
        %v1099 = vsub.s32 %v1096, %v1098
        %v1100 = vrot.slane %v1092, %v1099
        %v1102 = vunpack.c.l.s4 1934713408
        %v1103 = vunpack.c.0.s8 %v1102
        %v1104 = vlaneseq
        %v1105 = vshrl.u32 %v1104, 7
        %v1106 = vsub.s32 %v1103, %v1105
        %v1107 = vrot.slane %v1093, %v1106
        %v1108 = vcombine.low %v1083, %v1091
        %v1109 = vcombine.high %v1083, %v1091
        %v1111 = vunpack.c.l.s4 1934713408
        %v1112 = vunpack.c.0.s8 %v1111
        %v1113 = vlaneseq
        %v1114 = vshrl.u32 %v1113, 7
        %v1115 = vsub.s32 %v1112, %v1114
        %v1116 = vrot.slane %v1108, %v1115
        %v1118 = vunpack.c.l.s4 1934713408
        %v1119 = vunpack.c.0.s8 %v1118
        %v1120 = vlaneseq
        %v1121 = vshrl.u32 %v1120, 7
        %v1122 = vsub.s32 %v1119, %v1121
        %v1123 = vrot.slane %v1109, %v1122
        %v1124 = vcombine.low %v1100, %v1116
        %v1125 = vcombine.high %v1100, %v1116
        %v1126 = vcombine.low %v1107, %v1123
        %v1127 = vcombine.high %v1107, %v1123
        %v1128 = vpack.c.bf16 %v1124, %v1124
        %v1129 = vpack.c.bf16 %v1125, %v1125
        %v1130 = vpack.c.bf16 %v1126, %v1126
        %v1131 = vpack.c.bf16 %v1127, %v1127
        %v1132 = vmul.f32 %v980, 0.35355338
        %1134 = vrot.lane.b32.xlu0 %v1132, 120
        %v1135 = vpop.permute.xlu0 %1134
        %1137 = vrot.lane.b32.xlu0 %v1132, 112
        %v1138 = vpop.permute.xlu0 %1137
        %1140 = vrot.lane.b32.xlu0 %v1132, 104
        %v1141 = vpop.permute.xlu0 %1140
        %v1143 = vcombine.low %v1132, %v1138
        %v1144 = vcombine.high %v1132, %v1138
        %v1146 = vunpack.c.l.s4 1983009808
        %v1147 = vunpack.c.0.s8 %v1146
        %v1148 = vlaneseq
        %v1149 = vshrl.u32 %v1148, 7
        %v1150 = vsub.s32 %v1147, %v1149
        %v1151 = vrot.slane %v1143, %v1150
        %v1153 = vunpack.c.l.s4 1983009808
        %v1154 = vunpack.c.0.s8 %v1153
        %v1155 = vlaneseq
        %v1156 = vshrl.u32 %v1155, 7
        %v1157 = vsub.s32 %v1154, %v1156
        %v1158 = vrot.slane %v1144, %v1157
        %v1159 = vcombine.low %v1135, %v1141
        %v1160 = vcombine.high %v1135, %v1141
        %v1162 = vunpack.c.l.s4 1983009808
        %v1163 = vunpack.c.0.s8 %v1162
        %v1164 = vlaneseq
        %v1165 = vshrl.u32 %v1164, 7
        %v1166 = vsub.s32 %v1163, %v1165
        %v1167 = vrot.slane %v1159, %v1166
        %v1169 = vunpack.c.l.s4 1983009808
        %v1170 = vunpack.c.0.s8 %v1169
        %v1171 = vlaneseq
        %v1172 = vshrl.u32 %v1171, 7
        %v1173 = vsub.s32 %v1170, %v1172
        %v1174 = vrot.slane %v1160, %v1173
        %v1175 = vcombine.low %v1151, %v1167
        %v1176 = vcombine.high %v1151, %v1167
        %v1178 = vunpack.c.l.s4 1934713408
        %v1179 = vunpack.c.0.s8 %v1178
        %v1180 = vlaneseq
        %v1181 = vshrl.u32 %v1180, 7
        %v1182 = vsub.s32 %v1179, %v1181
        %v1183 = vrot.slane %v1175, %v1182
        %v1185 = vunpack.c.l.s4 1934713408
        %v1186 = vunpack.c.0.s8 %v1185
        %v1187 = vlaneseq
        %v1188 = vshrl.u32 %v1187, 7
        %v1189 = vsub.s32 %v1186, %v1188
        %v1190 = vrot.slane %v1176, %v1189
        %v1191 = vcombine.low %v1158, %v1174
        %v1192 = vcombine.high %v1158, %v1174
        %v1194 = vunpack.c.l.s4 1934713408
        %v1195 = vunpack.c.0.s8 %v1194
        %v1196 = vlaneseq
        %v1197 = vshrl.u32 %v1196, 7
        %v1198 = vsub.s32 %v1195, %v1197
        %v1199 = vrot.slane %v1191, %v1198
        %v1201 = vunpack.c.l.s4 1934713408
        %v1202 = vunpack.c.0.s8 %v1201
        %v1203 = vlaneseq
        %v1204 = vshrl.u32 %v1203, 7
        %v1205 = vsub.s32 %v1202, %v1204
        %v1206 = vrot.slane %v1192, %v1205
        %v1207 = vcombine.high %v1183, 0.0
        %v1208 = vcombine.high %v1190, 0.0
        %v1209 = vcombine.high %v1199, 0.0
        %v1210 = vcombine.high %v1206, 0.0
        %v1211 = vcombine.low %v1183, %v1190
        %v1213 = vunpack.c.l.s4 1983009808
        %v1214 = vunpack.c.0.s8 %v1213
        %v1215 = vlaneseq
        %v1216 = vshrl.u32 %v1215, 7
        %v1217 = vsub.s32 %v1214, %v1216
        %v1218 = vrot.slane %v1211, %v1217
        %v1219 = vcombine.low %v1207, %v1208
        %v1221 = vunpack.c.l.s4 1983009808
        %v1222 = vunpack.c.0.s8 %v1221
        %v1223 = vlaneseq
        %v1224 = vshrl.u32 %v1223, 7
        %v1225 = vsub.s32 %v1222, %v1224
        %v1226 = vrot.slane %v1219, %v1225
        %v1227 = vcombine.low %v1199, %v1206
        %v1229 = vunpack.c.l.s4 1983009808
        %v1230 = vunpack.c.0.s8 %v1229
        %v1231 = vlaneseq
        %v1232 = vshrl.u32 %v1231, 7
        %v1233 = vsub.s32 %v1230, %v1232
        %v1234 = vrot.slane %v1227, %v1233
        %v1235 = vcombine.low %v1209, %v1210
        %v1237 = vunpack.c.l.s4 1983009808
        %v1238 = vunpack.c.0.s8 %v1237
        %v1239 = vlaneseq
        %v1240 = vshrl.u32 %v1239, 7
        %v1241 = vsub.s32 %v1238, %v1240
        %v1242 = vrot.slane %v1235, %v1241
        %v1243 = vcombine.low %v1218, %v1226
        %v1244 = vcombine.high %v1218, %v1226
        %v1246 = vunpack.c.l.s4 1934713408
        %v1247 = vunpack.c.0.s8 %v1246
        %v1248 = vlaneseq
        %v1249 = vshrl.u32 %v1248, 7
        %v1250 = vsub.s32 %v1247, %v1249
        %v1251 = vrot.slane %v1243, %v1250
        %v1253 = vunpack.c.l.s4 1934713408
        %v1254 = vunpack.c.0.s8 %v1253
        %v1255 = vlaneseq
        %v1256 = vshrl.u32 %v1255, 7
        %v1257 = vsub.s32 %v1254, %v1256
        %v1258 = vrot.slane %v1244, %v1257
        %v1259 = vcombine.low %v1234, %v1242
        %v1260 = vcombine.high %v1234, %v1242
        %v1262 = vunpack.c.l.s4 1934713408
        %v1263 = vunpack.c.0.s8 %v1262
        %v1264 = vlaneseq
        %v1265 = vshrl.u32 %v1264, 7
        %v1266 = vsub.s32 %v1263, %v1265
        %v1267 = vrot.slane %v1259, %v1266
        %v1269 = vunpack.c.l.s4 1934713408
        %v1270 = vunpack.c.0.s8 %v1269
        %v1271 = vlaneseq
        %v1272 = vshrl.u32 %v1271, 7
        %v1273 = vsub.s32 %v1270, %v1272
        %v1274 = vrot.slane %v1260, %v1273
        %v1275 = vcombine.low %v1251, %v1267
        %v1276 = vcombine.high %v1251, %v1267
        %v1277 = vcombine.low %v1258, %v1274
        %v1278 = vcombine.high %v1258, %v1274
        %v1279 = vpack.c.bf16 %v1275, %v1275
        %v1280 = vpack.c.bf16 %v1276, %v1276
        %v1281 = vpack.c.bf16 %v1277, %v1277
        %v1282 = vpack.c.bf16 %v1278, %v1278
        %1284 = vrot.lane.b32.xlu0 %v964, 120
        %v1285 = vpop.permute.xlu0 %1284
        %1286 = vrot.lane.b32.xlu0 %v964, 112
        %v1287 = vpop.permute.xlu0 %1286
        %1288 = vrot.lane.b32.xlu0 %v964, 104
        %v1289 = vpop.permute.xlu0 %1288
        %1290 = vrot.lane.b32.xlu0 %v964, 96
        %v1291 = vpop.permute.xlu0 %1290
        %1292 = vrot.lane.b32.xlu0 %v1285, 96
        %v1293 = vpop.permute.xlu0 %1292
        %1294 = vrot.lane.b32.xlu0 %v1287, 96
        %v1295 = vpop.permute.xlu0 %1294
        %1296 = vrot.lane.b32.xlu0 %v1289, 96
        %v1297 = vpop.permute.xlu0 %1296
        %v1302 = vcombine.low %v1291, %v1295
        %v1303 = vcombine.high %v1291, %v1295
        %v1305 = vunpack.c.l.s4 1983009808
        %v1306 = vunpack.c.0.s8 %v1305
        %v1307 = vlaneseq
        %v1308 = vshrl.u32 %v1307, 7
        %v1309 = vsub.s32 %v1306, %v1308
        %v1310 = vrot.slane %v1302, %v1309
        %v1312 = vunpack.c.l.s4 1983009808
        %v1313 = vunpack.c.0.s8 %v1312
        %v1314 = vlaneseq
        %v1315 = vshrl.u32 %v1314, 7
        %v1316 = vsub.s32 %v1313, %v1315
        %v1317 = vrot.slane %v1303, %v1316
        %v1318 = vcombine.low %v1293, %v1297
        %v1319 = vcombine.high %v1293, %v1297
        %v1321 = vunpack.c.l.s4 1983009808
        %v1322 = vunpack.c.0.s8 %v1321
        %v1323 = vlaneseq
        %v1324 = vshrl.u32 %v1323, 7
        %v1325 = vsub.s32 %v1322, %v1324
        %v1326 = vrot.slane %v1318, %v1325
        %v1328 = vunpack.c.l.s4 1983009808
        %v1329 = vunpack.c.0.s8 %v1328
        %v1330 = vlaneseq
        %v1331 = vshrl.u32 %v1330, 7
        %v1332 = vsub.s32 %v1329, %v1331
        %v1333 = vrot.slane %v1319, %v1332
        %v1334 = vcombine.low %v1310, %v1326
        %v1335 = vcombine.high %v1310, %v1326
        %v1337 = vunpack.c.l.s4 1934713408
        %v1338 = vunpack.c.0.s8 %v1337
        %v1339 = vlaneseq
        %v1340 = vshrl.u32 %v1339, 7
        %v1341 = vsub.s32 %v1338, %v1340
        %v1342 = vrot.slane %v1334, %v1341
        %v1344 = vunpack.c.l.s4 1934713408
        %v1345 = vunpack.c.0.s8 %v1344
        %v1346 = vlaneseq
        %v1347 = vshrl.u32 %v1346, 7
        %v1348 = vsub.s32 %v1345, %v1347
        %v1349 = vrot.slane %v1335, %v1348
        %v1350 = vcombine.low %v1317, %v1333
        %v1351 = vcombine.high %v1317, %v1333
        %v1353 = vunpack.c.l.s4 1934713408
        %v1354 = vunpack.c.0.s8 %v1353
        %v1355 = vlaneseq
        %v1356 = vshrl.u32 %v1355, 7
        %v1357 = vsub.s32 %v1354, %v1356
        %v1358 = vrot.slane %v1350, %v1357
        %v1360 = vunpack.c.l.s4 1934713408
        %v1361 = vunpack.c.0.s8 %v1360
        %v1362 = vlaneseq
        %v1363 = vshrl.u32 %v1362, 7
        %v1364 = vsub.s32 %v1361, %v1363
        %v1365 = vrot.slane %v1351, %v1364
        %v1366 = vcombine.high %v1342, 0.0
        %v1367 = vcombine.high %v1349, 0.0
        %v1368 = vcombine.high %v1358, 0.0
        %v1369 = vcombine.high %v1365, 0.0
        %v1370 = vcombine.low %v1342, %v1349
        %v1372 = vunpack.c.l.s4 1983009808
        %v1373 = vunpack.c.0.s8 %v1372
        %v1374 = vlaneseq
        %v1375 = vshrl.u32 %v1374, 7
        %v1376 = vsub.s32 %v1373, %v1375
        %v1377 = vrot.slane %v1370, %v1376
        %v1378 = vcombine.low %v1366, %v1367
        %v1380 = vunpack.c.l.s4 1983009808
        %v1381 = vunpack.c.0.s8 %v1380
        %v1382 = vlaneseq
        %v1383 = vshrl.u32 %v1382, 7
        %v1384 = vsub.s32 %v1381, %v1383
        %v1385 = vrot.slane %v1378, %v1384
        %v1386 = vcombine.low %v1358, %v1365
        %v1388 = vunpack.c.l.s4 1983009808
        %v1389 = vunpack.c.0.s8 %v1388
        %v1390 = vlaneseq
        %v1391 = vshrl.u32 %v1390, 7
        %v1392 = vsub.s32 %v1389, %v1391
        %v1393 = vrot.slane %v1386, %v1392
        %v1394 = vcombine.low %v1368, %v1369
        %v1396 = vunpack.c.l.s4 1983009808
        %v1397 = vunpack.c.0.s8 %v1396
        %v1398 = vlaneseq
        %v1399 = vshrl.u32 %v1398, 7
        %v1400 = vsub.s32 %v1397, %v1399
        %v1401 = vrot.slane %v1394, %v1400
        %v1402 = vcombine.low %v1377, %v1385
        %v1403 = vcombine.high %v1377, %v1385
        %v1405 = vunpack.c.l.s4 1934713408
        %v1406 = vunpack.c.0.s8 %v1405
        %v1407 = vlaneseq
        %v1408 = vshrl.u32 %v1407, 7
        %v1409 = vsub.s32 %v1406, %v1408
        %v1410 = vrot.slane %v1402, %v1409
        %v1412 = vunpack.c.l.s4 1934713408
        %v1413 = vunpack.c.0.s8 %v1412
        %v1414 = vlaneseq
        %v1415 = vshrl.u32 %v1414, 7
        %v1416 = vsub.s32 %v1413, %v1415
        %v1417 = vrot.slane %v1403, %v1416
        %v1418 = vcombine.low %v1393, %v1401
        %v1419 = vcombine.high %v1393, %v1401
        %v1421 = vunpack.c.l.s4 1934713408
        %v1422 = vunpack.c.0.s8 %v1421
        %v1423 = vlaneseq
        %v1424 = vshrl.u32 %v1423, 7
        %v1425 = vsub.s32 %v1422, %v1424
        %v1426 = vrot.slane %v1418, %v1425
        %v1428 = vunpack.c.l.s4 1934713408
        %v1429 = vunpack.c.0.s8 %v1428
        %v1430 = vlaneseq
        %v1431 = vshrl.u32 %v1430, 7
        %v1432 = vsub.s32 %v1429, %v1431
        %v1433 = vrot.slane %v1419, %v1432
        %v1434 = vcombine.low %v1410, %v1426
        %v1435 = vcombine.high %v1410, %v1426
        %v1436 = vcombine.low %v1417, %v1433
        %v1437 = vcombine.high %v1417, %v1433
        %1439 = vrot.lane.b32.xlu0 %v980, 120
        %v1440 = vpop.permute.xlu0 %1439
        %1441 = vrot.lane.b32.xlu0 %v980, 112
        %v1442 = vpop.permute.xlu0 %1441
        %1443 = vrot.lane.b32.xlu0 %v980, 104
        %v1444 = vpop.permute.xlu0 %1443
        %1445 = vrot.lane.b32.xlu0 %v980, 96
        %v1446 = vpop.permute.xlu0 %1445
        %1447 = vrot.lane.b32.xlu0 %v1440, 96
        %v1448 = vpop.permute.xlu0 %1447
        %1449 = vrot.lane.b32.xlu0 %v1442, 96
        %v1450 = vpop.permute.xlu0 %1449
        %1451 = vrot.lane.b32.xlu0 %v1444, 96
        %v1452 = vpop.permute.xlu0 %1451
        %v1457 = vcombine.low %v1446, %v1450
        %v1458 = vcombine.high %v1446, %v1450
        %v1460 = vunpack.c.l.s4 1983009808
        %v1461 = vunpack.c.0.s8 %v1460
        %v1462 = vlaneseq
        %v1463 = vshrl.u32 %v1462, 7
        %v1464 = vsub.s32 %v1461, %v1463
        %v1465 = vrot.slane %v1457, %v1464
        %v1467 = vunpack.c.l.s4 1983009808
        %v1468 = vunpack.c.0.s8 %v1467
        %v1469 = vlaneseq
        %v1470 = vshrl.u32 %v1469, 7
        %v1471 = vsub.s32 %v1468, %v1470
        %v1472 = vrot.slane %v1458, %v1471
        %v1473 = vcombine.low %v1448, %v1452
        %v1474 = vcombine.high %v1448, %v1452
        %v1476 = vunpack.c.l.s4 1983009808
        %v1477 = vunpack.c.0.s8 %v1476
        %v1478 = vlaneseq
        %v1479 = vshrl.u32 %v1478, 7
        %v1480 = vsub.s32 %v1477, %v1479
        %v1481 = vrot.slane %v1473, %v1480
        %v1483 = vunpack.c.l.s4 1983009808
        %v1484 = vunpack.c.0.s8 %v1483
        %v1485 = vlaneseq
        %v1486 = vshrl.u32 %v1485, 7
        %v1487 = vsub.s32 %v1484, %v1486
        %v1488 = vrot.slane %v1474, %v1487
        %v1489 = vcombine.low %v1465, %v1481
        %v1490 = vcombine.high %v1465, %v1481
        %v1492 = vunpack.c.l.s4 1934713408
        %v1493 = vunpack.c.0.s8 %v1492
        %v1494 = vlaneseq
        %v1495 = vshrl.u32 %v1494, 7
        %v1496 = vsub.s32 %v1493, %v1495
        %v1497 = vrot.slane %v1489, %v1496
        %v1499 = vunpack.c.l.s4 1934713408
        %v1500 = vunpack.c.0.s8 %v1499
        %v1501 = vlaneseq
        %v1502 = vshrl.u32 %v1501, 7
        %v1503 = vsub.s32 %v1500, %v1502
        %v1504 = vrot.slane %v1490, %v1503
        %v1505 = vcombine.low %v1472, %v1488
        %v1506 = vcombine.high %v1472, %v1488
        %v1508 = vunpack.c.l.s4 1934713408
        %v1509 = vunpack.c.0.s8 %v1508
        %v1510 = vlaneseq
        %v1511 = vshrl.u32 %v1510, 7
        %v1512 = vsub.s32 %v1509, %v1511
        %v1513 = vrot.slane %v1505, %v1512
        %v1515 = vunpack.c.l.s4 1934713408
        %v1516 = vunpack.c.0.s8 %v1515
        %v1517 = vlaneseq
        %v1518 = vshrl.u32 %v1517, 7
        %v1519 = vsub.s32 %v1516, %v1518
        %v1520 = vrot.slane %v1506, %v1519
        %v1521 = vcombine.high %v1497, 0.0
        %v1522 = vcombine.high %v1504, 0.0
        %v1523 = vcombine.high %v1513, 0.0
        %v1524 = vcombine.high %v1520, 0.0
        %v1525 = vcombine.low %v1497, %v1504
        %v1527 = vunpack.c.l.s4 1983009808
        %v1528 = vunpack.c.0.s8 %v1527
        %v1529 = vlaneseq
        %v1530 = vshrl.u32 %v1529, 7
        %v1531 = vsub.s32 %v1528, %v1530
        %v1532 = vrot.slane %v1525, %v1531
        %v1533 = vcombine.low %v1521, %v1522
        %v1535 = vunpack.c.l.s4 1983009808
        %v1536 = vunpack.c.0.s8 %v1535
        %v1537 = vlaneseq
        %v1538 = vshrl.u32 %v1537, 7
        %v1539 = vsub.s32 %v1536, %v1538
        %v1540 = vrot.slane %v1533, %v1539
        %v1541 = vcombine.low %v1513, %v1520
        %v1543 = vunpack.c.l.s4 1983009808
        %v1544 = vunpack.c.0.s8 %v1543
        %v1545 = vlaneseq
        %v1546 = vshrl.u32 %v1545, 7
        %v1547 = vsub.s32 %v1544, %v1546
        %v1548 = vrot.slane %v1541, %v1547
        %v1549 = vcombine.low %v1523, %v1524
        %v1551 = vunpack.c.l.s4 1983009808
        %v1552 = vunpack.c.0.s8 %v1551
        %v1553 = vlaneseq
        %v1554 = vshrl.u32 %v1553, 7
        %v1555 = vsub.s32 %v1552, %v1554
        %v1556 = vrot.slane %v1549, %v1555
        %v1557 = vcombine.low %v1532, %v1540
        %v1558 = vcombine.high %v1532, %v1540
        %v1560 = vunpack.c.l.s4 1934713408
        %v1561 = vunpack.c.0.s8 %v1560
        %v1562 = vlaneseq
        %v1563 = vshrl.u32 %v1562, 7
        %v1564 = vsub.s32 %v1561, %v1563
        %v1565 = vrot.slane %v1557, %v1564
        %v1567 = vunpack.c.l.s4 1934713408
        %v1568 = vunpack.c.0.s8 %v1567
        %v1569 = vlaneseq
        %v1570 = vshrl.u32 %v1569, 7
        %v1571 = vsub.s32 %v1568, %v1570
        %v1572 = vrot.slane %v1558, %v1571
        %v1573 = vcombine.low %v1548, %v1556
        %v1574 = vcombine.high %v1548, %v1556
        %v1576 = vunpack.c.l.s4 1934713408
        %v1577 = vunpack.c.0.s8 %v1576
        %v1578 = vlaneseq
        %v1579 = vshrl.u32 %v1578, 7
        %v1580 = vsub.s32 %v1577, %v1579
        %v1581 = vrot.slane %v1573, %v1580
        %v1583 = vunpack.c.l.s4 1934713408
        %v1584 = vunpack.c.0.s8 %v1583
        %v1585 = vlaneseq
        %v1586 = vshrl.u32 %v1585, 7
        %v1587 = vsub.s32 %v1584, %v1586
        %v1588 = vrot.slane %v1574, %v1587
        %v1589 = vcombine.low %v1565, %v1581
        %v1590 = vcombine.high %v1565, %v1581
        %v1591 = vcombine.low %v1572, %v1588
        %v1592 = vcombine.high %v1572, %v1588
        %1593 = vrot.lane.b32.xlu0 %v964, 64
        %v1594 = vpop.permute.xlu0 %1593
        %1595 = vrot.lane.b32.xlu0 %v1285, 64
        %v1596 = vpop.permute.xlu0 %1595
        %1597 = vrot.lane.b32.xlu0 %v1287, 64
        %v1598 = vpop.permute.xlu0 %1597
        %1599 = vrot.lane.b32.xlu0 %v1289, 64
        %v1600 = vpop.permute.xlu0 %1599
        %v1605 = vcombine.low %v1594, %v1598
        %v1606 = vcombine.high %v1594, %v1598
        %v1608 = vunpack.c.l.s4 1983009808
        %v1609 = vunpack.c.0.s8 %v1608
        %v1610 = vlaneseq
        %v1611 = vshrl.u32 %v1610, 7
        %v1612 = vsub.s32 %v1609, %v1611
        %v1613 = vrot.slane %v1605, %v1612
        %v1615 = vunpack.c.l.s4 1983009808
        %v1616 = vunpack.c.0.s8 %v1615
        %v1617 = vlaneseq
        %v1618 = vshrl.u32 %v1617, 7
        %v1619 = vsub.s32 %v1616, %v1618
        %v1620 = vrot.slane %v1606, %v1619
        %v1621 = vcombine.low %v1596, %v1600
        %v1622 = vcombine.high %v1596, %v1600
        %v1624 = vunpack.c.l.s4 1983009808
        %v1625 = vunpack.c.0.s8 %v1624
        %v1626 = vlaneseq
        %v1627 = vshrl.u32 %v1626, 7
        %v1628 = vsub.s32 %v1625, %v1627
        %v1629 = vrot.slane %v1621, %v1628
        %v1631 = vunpack.c.l.s4 1983009808
        %v1632 = vunpack.c.0.s8 %v1631
        %v1633 = vlaneseq
        %v1634 = vshrl.u32 %v1633, 7
        %v1635 = vsub.s32 %v1632, %v1634
        %v1636 = vrot.slane %v1622, %v1635
        %v1637 = vcombine.low %v1613, %v1629
        %v1638 = vcombine.high %v1613, %v1629
        %v1640 = vunpack.c.l.s4 1934713408
        %v1641 = vunpack.c.0.s8 %v1640
        %v1642 = vlaneseq
        %v1643 = vshrl.u32 %v1642, 7
        %v1644 = vsub.s32 %v1641, %v1643
        %v1645 = vrot.slane %v1637, %v1644
        %v1647 = vunpack.c.l.s4 1934713408
        %v1648 = vunpack.c.0.s8 %v1647
        %v1649 = vlaneseq
        %v1650 = vshrl.u32 %v1649, 7
        %v1651 = vsub.s32 %v1648, %v1650
        %v1652 = vrot.slane %v1638, %v1651
        %v1653 = vcombine.low %v1620, %v1636
        %v1654 = vcombine.high %v1620, %v1636
        %v1656 = vunpack.c.l.s4 1934713408
        %v1657 = vunpack.c.0.s8 %v1656
        %v1658 = vlaneseq
        %v1659 = vshrl.u32 %v1658, 7
        %v1660 = vsub.s32 %v1657, %v1659
        %v1661 = vrot.slane %v1653, %v1660
        %v1663 = vunpack.c.l.s4 1934713408
        %v1664 = vunpack.c.0.s8 %v1663
        %v1665 = vlaneseq
        %v1666 = vshrl.u32 %v1665, 7
        %v1667 = vsub.s32 %v1664, %v1666
        %v1668 = vrot.slane %v1654, %v1667
        %v1669 = vcombine.high %v1645, 0.0
        %v1670 = vcombine.high %v1652, 0.0
        %v1671 = vcombine.high %v1661, 0.0
        %v1672 = vcombine.high %v1668, 0.0
        %v1673 = vcombine.low %v1645, %v1652
        %v1675 = vunpack.c.l.s4 1983009808
        %v1676 = vunpack.c.0.s8 %v1675
        %v1677 = vlaneseq
        %v1678 = vshrl.u32 %v1677, 7
        %v1679 = vsub.s32 %v1676, %v1678
        %v1680 = vrot.slane %v1673, %v1679
        %v1681 = vcombine.low %v1669, %v1670
        %v1683 = vunpack.c.l.s4 1983009808
        %v1684 = vunpack.c.0.s8 %v1683
        %v1685 = vlaneseq
        %v1686 = vshrl.u32 %v1685, 7
        %v1687 = vsub.s32 %v1684, %v1686
        %v1688 = vrot.slane %v1681, %v1687
        %v1689 = vcombine.low %v1661, %v1668
        %v1691 = vunpack.c.l.s4 1983009808
        %v1692 = vunpack.c.0.s8 %v1691
        %v1693 = vlaneseq
        %v1694 = vshrl.u32 %v1693, 7
        %v1695 = vsub.s32 %v1692, %v1694
        %v1696 = vrot.slane %v1689, %v1695
        %v1697 = vcombine.low %v1671, %v1672
        %v1699 = vunpack.c.l.s4 1983009808
        %v1700 = vunpack.c.0.s8 %v1699
        %v1701 = vlaneseq
        %v1702 = vshrl.u32 %v1701, 7
        %v1703 = vsub.s32 %v1700, %v1702
        %v1704 = vrot.slane %v1697, %v1703
        %v1705 = vcombine.low %v1680, %v1688
        %v1706 = vcombine.high %v1680, %v1688
        %v1708 = vunpack.c.l.s4 1934713408
        %v1709 = vunpack.c.0.s8 %v1708
        %v1710 = vlaneseq
        %v1711 = vshrl.u32 %v1710, 7
        %v1712 = vsub.s32 %v1709, %v1711
        %v1713 = vrot.slane %v1705, %v1712
        %v1715 = vunpack.c.l.s4 1934713408
        %v1716 = vunpack.c.0.s8 %v1715
        %v1717 = vlaneseq
        %v1718 = vshrl.u32 %v1717, 7
        %v1719 = vsub.s32 %v1716, %v1718
        %v1720 = vrot.slane %v1706, %v1719
        %v1721 = vcombine.low %v1696, %v1704
        %v1722 = vcombine.high %v1696, %v1704
        %v1724 = vunpack.c.l.s4 1934713408
        %v1725 = vunpack.c.0.s8 %v1724
        %v1726 = vlaneseq
        %v1727 = vshrl.u32 %v1726, 7
        %v1728 = vsub.s32 %v1725, %v1727
        %v1729 = vrot.slane %v1721, %v1728
        %v1731 = vunpack.c.l.s4 1934713408
        %v1732 = vunpack.c.0.s8 %v1731
        %v1733 = vlaneseq
        %v1734 = vshrl.u32 %v1733, 7
        %v1735 = vsub.s32 %v1732, %v1734
        %v1736 = vrot.slane %v1722, %v1735
        %v1737 = vcombine.low %v1713, %v1729
        %v1738 = vcombine.high %v1713, %v1729
        %v1739 = vcombine.low %v1720, %v1736
        %v1740 = vcombine.high %v1720, %v1736
        %1741 = vrot.lane.b32.xlu0 %v980, 64
        %v1742 = vpop.permute.xlu0 %1741
        %1743 = vrot.lane.b32.xlu0 %v1440, 64
        %v1744 = vpop.permute.xlu0 %1743
        %1745 = vrot.lane.b32.xlu0 %v1442, 64
        %v1746 = vpop.permute.xlu0 %1745
        %1747 = vrot.lane.b32.xlu0 %v1444, 64
        %v1748 = vpop.permute.xlu0 %1747
        %v1753 = vcombine.low %v1742, %v1746
        %v1754 = vcombine.high %v1742, %v1746
        %v1756 = vunpack.c.l.s4 1983009808
        %v1757 = vunpack.c.0.s8 %v1756
        %v1758 = vlaneseq
        %v1759 = vshrl.u32 %v1758, 7
        %v1760 = vsub.s32 %v1757, %v1759
        %v1761 = vrot.slane %v1753, %v1760
        %v1763 = vunpack.c.l.s4 1983009808
        %v1764 = vunpack.c.0.s8 %v1763
        %v1765 = vlaneseq
        %v1766 = vshrl.u32 %v1765, 7
        %v1767 = vsub.s32 %v1764, %v1766
        %v1768 = vrot.slane %v1754, %v1767
        %v1769 = vcombine.low %v1744, %v1748
        %v1770 = vcombine.high %v1744, %v1748
        %v1772 = vunpack.c.l.s4 1983009808
        %v1773 = vunpack.c.0.s8 %v1772
        %v1774 = vlaneseq
        %v1775 = vshrl.u32 %v1774, 7
        %v1776 = vsub.s32 %v1773, %v1775
        %v1777 = vrot.slane %v1769, %v1776
        %v1779 = vunpack.c.l.s4 1983009808
        %v1780 = vunpack.c.0.s8 %v1779
        %v1781 = vlaneseq
        %v1782 = vshrl.u32 %v1781, 7
        %v1783 = vsub.s32 %v1780, %v1782
        %v1784 = vrot.slane %v1770, %v1783
        %v1785 = vcombine.low %v1761, %v1777
        %v1786 = vcombine.high %v1761, %v1777
        %v1788 = vunpack.c.l.s4 1934713408
        %v1789 = vunpack.c.0.s8 %v1788
        %v1790 = vlaneseq
        %v1791 = vshrl.u32 %v1790, 7
        %v1792 = vsub.s32 %v1789, %v1791
        %v1793 = vrot.slane %v1785, %v1792
        %v1795 = vunpack.c.l.s4 1934713408
        %v1796 = vunpack.c.0.s8 %v1795
        %v1797 = vlaneseq
        %v1798 = vshrl.u32 %v1797, 7
        %v1799 = vsub.s32 %v1796, %v1798
        %v1800 = vrot.slane %v1786, %v1799
        %v1801 = vcombine.low %v1768, %v1784
        %v1802 = vcombine.high %v1768, %v1784
        %v1804 = vunpack.c.l.s4 1934713408
        %v1805 = vunpack.c.0.s8 %v1804
        %v1806 = vlaneseq
        %v1807 = vshrl.u32 %v1806, 7
        %v1808 = vsub.s32 %v1805, %v1807
        %v1809 = vrot.slane %v1801, %v1808
        %v1811 = vunpack.c.l.s4 1934713408
        %v1812 = vunpack.c.0.s8 %v1811
        %v1813 = vlaneseq
        %v1814 = vshrl.u32 %v1813, 7
        %v1815 = vsub.s32 %v1812, %v1814
        %v1816 = vrot.slane %v1802, %v1815
        %v1817 = vcombine.high %v1793, 0.0
        %v1818 = vcombine.high %v1800, 0.0
        %v1819 = vcombine.high %v1809, 0.0
        %v1820 = vcombine.high %v1816, 0.0
        %v1821 = vcombine.low %v1793, %v1800
        %v1823 = vunpack.c.l.s4 1983009808
        %v1824 = vunpack.c.0.s8 %v1823
        %v1825 = vlaneseq
        %v1826 = vshrl.u32 %v1825, 7
        %v1827 = vsub.s32 %v1824, %v1826
        %v1828 = vrot.slane %v1821, %v1827
        %v1829 = vcombine.low %v1817, %v1818
        %v1831 = vunpack.c.l.s4 1983009808
        %v1832 = vunpack.c.0.s8 %v1831
        %v1833 = vlaneseq
        %v1834 = vshrl.u32 %v1833, 7
        %v1835 = vsub.s32 %v1832, %v1834
        %v1836 = vrot.slane %v1829, %v1835
        %v1837 = vcombine.low %v1809, %v1816
        %v1839 = vunpack.c.l.s4 1983009808
        %v1840 = vunpack.c.0.s8 %v1839
        %v1841 = vlaneseq
        %v1842 = vshrl.u32 %v1841, 7
        %v1843 = vsub.s32 %v1840, %v1842
        %v1844 = vrot.slane %v1837, %v1843
        %v1845 = vcombine.low %v1819, %v1820
        %v1847 = vunpack.c.l.s4 1983009808
        %v1848 = vunpack.c.0.s8 %v1847
        %v1849 = vlaneseq
        %v1850 = vshrl.u32 %v1849, 7
        %v1851 = vsub.s32 %v1848, %v1850
        %v1852 = vrot.slane %v1845, %v1851
        %v1853 = vcombine.low %v1828, %v1836
        %v1854 = vcombine.high %v1828, %v1836
        %v1856 = vunpack.c.l.s4 1934713408
        %v1857 = vunpack.c.0.s8 %v1856
        %v1858 = vlaneseq
        %v1859 = vshrl.u32 %v1858, 7
        %v1860 = vsub.s32 %v1857, %v1859
        %v1861 = vrot.slane %v1853, %v1860
        %v1863 = vunpack.c.l.s4 1934713408
        %v1864 = vunpack.c.0.s8 %v1863
        %v1865 = vlaneseq
        %v1866 = vshrl.u32 %v1865, 7
        %v1867 = vsub.s32 %v1864, %v1866
        %v1868 = vrot.slane %v1854, %v1867
        %v1869 = vcombine.low %v1844, %v1852
        %v1870 = vcombine.high %v1844, %v1852
        %v1872 = vunpack.c.l.s4 1934713408
        %v1873 = vunpack.c.0.s8 %v1872
        %v1874 = vlaneseq
        %v1875 = vshrl.u32 %v1874, 7
        %v1876 = vsub.s32 %v1873, %v1875
        %v1877 = vrot.slane %v1869, %v1876
        %v1879 = vunpack.c.l.s4 1934713408
        %v1880 = vunpack.c.0.s8 %v1879
        %v1881 = vlaneseq
        %v1882 = vshrl.u32 %v1881, 7
        %v1883 = vsub.s32 %v1880, %v1882
        %v1884 = vrot.slane %v1870, %v1883
        %v1885 = vcombine.low %v1861, %v1877
        %v1886 = vcombine.high %v1861, %v1877
        %v1887 = vcombine.low %v1868, %v1884
        %v1888 = vcombine.high %v1868, %v1884
        %v1889 = vpack.c.bf16 %v1589, %v1434
        %v1890 = vpack.c.bf16 %v1590, %v1435
        %v1891 = vpack.c.bf16 %v1591, %v1436
        %v1892 = vpack.c.bf16 %v1592, %v1437
        %vm1893 = vcmask 64512
        %v1895 = vsel %vm1893, %v1128, 0
        %v1898 = vsel %vm1893, %v1889, 0
        %1900 = vmatprep.subr.bf16.mxu0 0
        %1901 = vmatpush1.bf16.xpose.msra.mxu0 0
        %1902 = vmatprep.subr.bf16.mxu0 0
        %1903 = vmatpush1.bf16.xpose.msra.mxu0 0
        %1904 = vmatprep.subr.bf16.mxu0 0
        %1905 = vmatpush1.bf16.xpose.msra.mxu0 0
        %1906 = vmatprep.subr.bf16.mxu0 0
        %1907 = vmatpush1.bf16.xpose.msra.mxu0 0
        %1908 = vmatprep.subr.bf16.mxu0 0
        %1909 = vmatpush1.bf16.xpose.msra.mxu0 0
        %1910 = vmatprep.subr.bf16.mxu0 0
        %1911 = vmatpush1.bf16.xpose.msra.mxu0 0
        %1912 = vmatprep.subr.bf16.mxu0 0
        %1913 = vmatpush1.bf16.xpose.msra.mxu0 0
        %1914 = vmatprep.subr.bf16.mxu0 0
        %1915 = vmatpush1.bf16.xpose.msra.mxu0 %v1898
        %1916 = vmatprep.subr.bf16.mxu0 0
        %1917 = vmatpush2.bf16.xpose.msra.mxu0 0
        %1918 = vmatprep.subr.bf16.mxu0 0
        %1919 = vmatpush2.bf16.xpose.msra.mxu0 0
        %1920 = vmatprep.subr.bf16.mxu0 0
        %1921 = vmatpush2.bf16.xpose.msra.mxu0 0
        %1922 = vmatprep.subr.bf16.mxu0 0
        %1923 = vmatpush2.bf16.xpose.msra.mxu0 0
        %1924 = vmatprep.subr.bf16.mxu0 0
        %1925 = vmatpush2.bf16.xpose.msra.mxu0 0
        %1926 = vmatprep.subr.bf16.mxu0 0
        %1927 = vmatpush2.bf16.xpose.msra.mxu0 0
        %1928 = vmatprep.subr.bf16.mxu0 0
        %1929 = vmatpush2.bf16.xpose.msra.mxu0 0
        %1930 = vmatprep.subr.bf16.mxu0 0
        %1931 = vmatpush2.bf16.xpose.msra.mxu0 0
        %1932 = vmatprep.mubr.bf16.mxu0 0
        %1933 = vmatmul.mubr.bf16.gmra.mxu0 %v1895
        %v1934 = vpop.f32.mrf.mxu0
        %v1935 = vadd.f32 0.0, %v1934
        %v1936 = vpop.f32.mrf.mxu0
        %v1937 = vpop.f32.mrf.mxu0
        %v1938 = vpop.f32.mrf.mxu0
        %1939 = vdwg.mxu0
        %v1941 = vsel %vm1893, %v1129, 0
        %v1944 = vsel %vm1893, %v1890, 0
        %1946 = vmatprep.subr.bf16.mxu0 0
        %1947 = vmatpush1.bf16.xpose.msra.mxu0 0
        %1948 = vmatprep.subr.bf16.mxu0 0
        %1949 = vmatpush1.bf16.xpose.msra.mxu0 0
        %1950 = vmatprep.subr.bf16.mxu0 0
        %1951 = vmatpush1.bf16.xpose.msra.mxu0 0
        %1952 = vmatprep.subr.bf16.mxu0 0
        %1953 = vmatpush1.bf16.xpose.msra.mxu0 0
        %1954 = vmatprep.subr.bf16.mxu0 0
        %1955 = vmatpush1.bf16.xpose.msra.mxu0 0
        %1956 = vmatprep.subr.bf16.mxu0 0
        %1957 = vmatpush1.bf16.xpose.msra.mxu0 0
        %1958 = vmatprep.subr.bf16.mxu0 0
        %1959 = vmatpush1.bf16.xpose.msra.mxu0 0
        %1960 = vmatprep.subr.bf16.mxu0 0
        %1961 = vmatpush1.bf16.xpose.msra.mxu0 %v1944
        %1962 = vmatprep.subr.bf16.mxu0 0
        %1963 = vmatpush2.bf16.xpose.msra.mxu0 0
        %1964 = vmatprep.subr.bf16.mxu0 0
        %1965 = vmatpush2.bf16.xpose.msra.mxu0 0
        %1966 = vmatprep.subr.bf16.mxu0 0
        %1967 = vmatpush2.bf16.xpose.msra.mxu0 0
        %1968 = vmatprep.subr.bf16.mxu0 0
        %1969 = vmatpush2.bf16.xpose.msra.mxu0 0
        %1970 = vmatprep.subr.bf16.mxu0 0
        %1971 = vmatpush2.bf16.xpose.msra.mxu0 0
        %1972 = vmatprep.subr.bf16.mxu0 0
        %1973 = vmatpush2.bf16.xpose.msra.mxu0 0
        %1974 = vmatprep.subr.bf16.mxu0 0
        %1975 = vmatpush2.bf16.xpose.msra.mxu0 0
        %1976 = vmatprep.subr.bf16.mxu0 0
        %1977 = vmatpush2.bf16.xpose.msra.mxu0 0
        %1978 = vmatprep.mubr.bf16.mxu0 0
        %1979 = vmatmul.mubr.bf16.gmra.mxu0 %v1941
        %v1980 = vpop.f32.mrf.mxu0
        %v1981 = vadd.f32 0.0, %v1980
        %v1982 = vpop.f32.mrf.mxu0
        %v1983 = vpop.f32.mrf.mxu0
        %v1984 = vpop.f32.mrf.mxu0
        %1985 = vdwg.mxu0
        %v1987 = vsel %vm1893, %v1130, 0
        %v1990 = vsel %vm1893, %v1891, 0
        %1992 = vmatprep.subr.bf16.mxu0 0
        %1993 = vmatpush1.bf16.xpose.msra.mxu0 0
        %1994 = vmatprep.subr.bf16.mxu0 0
        %1995 = vmatpush1.bf16.xpose.msra.mxu0 0
        %1996 = vmatprep.subr.bf16.mxu0 0
        %1997 = vmatpush1.bf16.xpose.msra.mxu0 0
        %1998 = vmatprep.subr.bf16.mxu0 0
        %1999 = vmatpush1.bf16.xpose.msra.mxu0 0
        %2000 = vmatprep.subr.bf16.mxu0 0
        %2001 = vmatpush1.bf16.xpose.msra.mxu0 0
        %2002 = vmatprep.subr.bf16.mxu0 0
        %2003 = vmatpush1.bf16.xpose.msra.mxu0 0
        %2004 = vmatprep.subr.bf16.mxu0 0
        %2005 = vmatpush1.bf16.xpose.msra.mxu0 0
        %2006 = vmatprep.subr.bf16.mxu0 0
        %2007 = vmatpush1.bf16.xpose.msra.mxu0 %v1990
        %2008 = vmatprep.subr.bf16.mxu0 0
        %2009 = vmatpush2.bf16.xpose.msra.mxu0 0
        %2010 = vmatprep.subr.bf16.mxu0 0
        %2011 = vmatpush2.bf16.xpose.msra.mxu0 0
        %2012 = vmatprep.subr.bf16.mxu0 0
        %2013 = vmatpush2.bf16.xpose.msra.mxu0 0
        %2014 = vmatprep.subr.bf16.mxu0 0
        %2015 = vmatpush2.bf16.xpose.msra.mxu0 0
        %2016 = vmatprep.subr.bf16.mxu0 0
        %2017 = vmatpush2.bf16.xpose.msra.mxu0 0
        %2018 = vmatprep.subr.bf16.mxu0 0
        %2019 = vmatpush2.bf16.xpose.msra.mxu0 0
        %2020 = vmatprep.subr.bf16.mxu0 0
        %2021 = vmatpush2.bf16.xpose.msra.mxu0 0
        %2022 = vmatprep.subr.bf16.mxu0 0
        %2023 = vmatpush2.bf16.xpose.msra.mxu0 0
        %2024 = vmatprep.mubr.bf16.mxu0 0
        %2025 = vmatmul.mubr.bf16.gmra.mxu0 %v1987
        %v2026 = vpop.f32.mrf.mxu0
        %v2027 = vadd.f32 0.0, %v2026
        %v2028 = vpop.f32.mrf.mxu0
        %v2029 = vpop.f32.mrf.mxu0
        %v2030 = vpop.f32.mrf.mxu0
        %2031 = vdwg.mxu0
        %v2033 = vsel %vm1893, %v1131, 0
        %v2036 = vsel %vm1893, %v1892, 0
        %2038 = vmatprep.subr.bf16.mxu0 0
        %2039 = vmatpush1.bf16.xpose.msra.mxu0 0
        %2040 = vmatprep.subr.bf16.mxu0 0
        %2041 = vmatpush1.bf16.xpose.msra.mxu0 0
        %2042 = vmatprep.subr.bf16.mxu0 0
        %2043 = vmatpush1.bf16.xpose.msra.mxu0 0
        %2044 = vmatprep.subr.bf16.mxu0 0
        %2045 = vmatpush1.bf16.xpose.msra.mxu0 0
        %2046 = vmatprep.subr.bf16.mxu0 0
        %2047 = vmatpush1.bf16.xpose.msra.mxu0 0
        %2048 = vmatprep.subr.bf16.mxu0 0
        %2049 = vmatpush1.bf16.xpose.msra.mxu0 0
        %2050 = vmatprep.subr.bf16.mxu0 0
        %2051 = vmatpush1.bf16.xpose.msra.mxu0 0
        %2052 = vmatprep.subr.bf16.mxu0 0
        %2053 = vmatpush1.bf16.xpose.msra.mxu0 %v2036
        %2054 = vmatprep.subr.bf16.mxu0 0
        %2055 = vmatpush2.bf16.xpose.msra.mxu0 0
        %2056 = vmatprep.subr.bf16.mxu0 0
        %2057 = vmatpush2.bf16.xpose.msra.mxu0 0
        %2058 = vmatprep.subr.bf16.mxu0 0
        %2059 = vmatpush2.bf16.xpose.msra.mxu0 0
        %2060 = vmatprep.subr.bf16.mxu0 0
        %2061 = vmatpush2.bf16.xpose.msra.mxu0 0
        %2062 = vmatprep.subr.bf16.mxu0 0
        %2063 = vmatpush2.bf16.xpose.msra.mxu0 0
        %2064 = vmatprep.subr.bf16.mxu0 0
        %2065 = vmatpush2.bf16.xpose.msra.mxu0 0
        %2066 = vmatprep.subr.bf16.mxu0 0
        %2067 = vmatpush2.bf16.xpose.msra.mxu0 0
        %2068 = vmatprep.subr.bf16.mxu0 0
        %2069 = vmatpush2.bf16.xpose.msra.mxu0 0
        %2070 = vmatprep.mubr.bf16.mxu0 0
        %2071 = vmatmul.mubr.bf16.gmra.mxu0 %v2033
        %v2072 = vpop.f32.mrf.mxu0
        %v2073 = vadd.f32 0.0, %v2072
        %v2074 = vpop.f32.mrf.mxu0
        %v2075 = vpop.f32.mrf.mxu0
        %v2076 = vpop.f32.mrf.mxu0
        %2077 = vdwg.mxu0
        %v2079 = vsel %vm1893, %v1279, 0
        %2081 = vmatprep.subr.bf16.mxu0 0
        %2082 = vmatpush1.bf16.xpose.msra.mxu0 0
        %2083 = vmatprep.subr.bf16.mxu0 0
        %2084 = vmatpush1.bf16.xpose.msra.mxu0 0
        %2085 = vmatprep.subr.bf16.mxu0 0
        %2086 = vmatpush1.bf16.xpose.msra.mxu0 0
        %2087 = vmatprep.subr.bf16.mxu0 0
        %2088 = vmatpush1.bf16.xpose.msra.mxu0 0
        %2089 = vmatprep.subr.bf16.mxu0 0
        %2090 = vmatpush1.bf16.xpose.msra.mxu0 0
        %2091 = vmatprep.subr.bf16.mxu0 0
        %2092 = vmatpush1.bf16.xpose.msra.mxu0 0
        %2093 = vmatprep.subr.bf16.mxu0 0
        %2094 = vmatpush1.bf16.xpose.msra.mxu0 0
        %2095 = vmatprep.subr.bf16.mxu0 0
        %2096 = vmatpush1.bf16.xpose.msra.mxu0 %v1898
        %2097 = vmatprep.subr.bf16.mxu0 0
        %2098 = vmatpush2.bf16.xpose.msra.mxu0 0
        %2099 = vmatprep.subr.bf16.mxu0 0
        %2100 = vmatpush2.bf16.xpose.msra.mxu0 0
        %2101 = vmatprep.subr.bf16.mxu0 0
        %2102 = vmatpush2.bf16.xpose.msra.mxu0 0
        %2103 = vmatprep.subr.bf16.mxu0 0
        %2104 = vmatpush2.bf16.xpose.msra.mxu0 0
        %2105 = vmatprep.subr.bf16.mxu0 0
        %2106 = vmatpush2.bf16.xpose.msra.mxu0 0
        %2107 = vmatprep.subr.bf16.mxu0 0
        %2108 = vmatpush2.bf16.xpose.msra.mxu0 0
        %2109 = vmatprep.subr.bf16.mxu0 0
        %2110 = vmatpush2.bf16.xpose.msra.mxu0 0
        %2111 = vmatprep.subr.bf16.mxu0 0
        %2112 = vmatpush2.bf16.xpose.msra.mxu0 0
        %2113 = vmatprep.mubr.bf16.mxu0 0
        %2114 = vmatmul.mubr.bf16.gmra.mxu0 %v2079
        %v2115 = vpop.f32.mrf.mxu0
        %v2116 = vadd.f32 0.0, %v2115
        %v2117 = vpop.f32.mrf.mxu0
        %v2118 = vpop.f32.mrf.mxu0
        %v2119 = vpop.f32.mrf.mxu0
        %2120 = vdwg.mxu0
        %v2122 = vsel %vm1893, %v1280, 0
        %2124 = vmatprep.subr.bf16.mxu0 0
        %2125 = vmatpush1.bf16.xpose.msra.mxu0 0
        %2126 = vmatprep.subr.bf16.mxu0 0
        %2127 = vmatpush1.bf16.xpose.msra.mxu0 0
        %2128 = vmatprep.subr.bf16.mxu0 0
        %2129 = vmatpush1.bf16.xpose.msra.mxu0 0
        %2130 = vmatprep.subr.bf16.mxu0 0
        %2131 = vmatpush1.bf16.xpose.msra.mxu0 0
        %2132 = vmatprep.subr.bf16.mxu0 0
        %2133 = vmatpush1.bf16.xpose.msra.mxu0 0
        %2134 = vmatprep.subr.bf16.mxu0 0
        %2135 = vmatpush1.bf16.xpose.msra.mxu0 0
        %2136 = vmatprep.subr.bf16.mxu0 0
        %2137 = vmatpush1.bf16.xpose.msra.mxu0 0
        %2138 = vmatprep.subr.bf16.mxu0 0
        %2139 = vmatpush1.bf16.xpose.msra.mxu0 %v1944
        %2140 = vmatprep.subr.bf16.mxu0 0
        %2141 = vmatpush2.bf16.xpose.msra.mxu0 0
        %2142 = vmatprep.subr.bf16.mxu0 0
        %2143 = vmatpush2.bf16.xpose.msra.mxu0 0
        %2144 = vmatprep.subr.bf16.mxu0 0
        %2145 = vmatpush2.bf16.xpose.msra.mxu0 0
        %2146 = vmatprep.subr.bf16.mxu0 0
        %2147 = vmatpush2.bf16.xpose.msra.mxu0 0
        %2148 = vmatprep.subr.bf16.mxu0 0
        %2149 = vmatpush2.bf16.xpose.msra.mxu0 0
        %2150 = vmatprep.subr.bf16.mxu0 0
        %2151 = vmatpush2.bf16.xpose.msra.mxu0 0
        %2152 = vmatprep.subr.bf16.mxu0 0
        %2153 = vmatpush2.bf16.xpose.msra.mxu0 0
        %2154 = vmatprep.subr.bf16.mxu0 0
        %2155 = vmatpush2.bf16.xpose.msra.mxu0 0
        %2156 = vmatprep.mubr.bf16.mxu0 0
        %2157 = vmatmul.mubr.bf16.gmra.mxu0 %v2122
        %v2158 = vpop.f32.mrf.mxu0
        %v2159 = vadd.f32 0.0, %v2158
        %v2160 = vpop.f32.mrf.mxu0
        %v2161 = vpop.f32.mrf.mxu0
        %v2162 = vpop.f32.mrf.mxu0
        %2163 = vdwg.mxu0
        %v2165 = vsel %vm1893, %v1281, 0
        %2167 = vmatprep.subr.bf16.mxu0 0
        %2168 = vmatpush1.bf16.xpose.msra.mxu0 0
        %2169 = vmatprep.subr.bf16.mxu0 0
        %2170 = vmatpush1.bf16.xpose.msra.mxu0 0
        %2171 = vmatprep.subr.bf16.mxu0 0
        %2172 = vmatpush1.bf16.xpose.msra.mxu0 0
        %2173 = vmatprep.subr.bf16.mxu0 0
        %2174 = vmatpush1.bf16.xpose.msra.mxu0 0
        %2175 = vmatprep.subr.bf16.mxu0 0
        %2176 = vmatpush1.bf16.xpose.msra.mxu0 0
        %2177 = vmatprep.subr.bf16.mxu0 0
        %2178 = vmatpush1.bf16.xpose.msra.mxu0 0
        %2179 = vmatprep.subr.bf16.mxu0 0
        %2180 = vmatpush1.bf16.xpose.msra.mxu0 0
        %2181 = vmatprep.subr.bf16.mxu0 0
        %2182 = vmatpush1.bf16.xpose.msra.mxu0 %v1990
        %2183 = vmatprep.subr.bf16.mxu0 0
        %2184 = vmatpush2.bf16.xpose.msra.mxu0 0
        %2185 = vmatprep.subr.bf16.mxu0 0
        %2186 = vmatpush2.bf16.xpose.msra.mxu0 0
        %2187 = vmatprep.subr.bf16.mxu0 0
        %2188 = vmatpush2.bf16.xpose.msra.mxu0 0
        %2189 = vmatprep.subr.bf16.mxu0 0
        %2190 = vmatpush2.bf16.xpose.msra.mxu0 0
        %2191 = vmatprep.subr.bf16.mxu0 0
        %2192 = vmatpush2.bf16.xpose.msra.mxu0 0
        %2193 = vmatprep.subr.bf16.mxu0 0
        %2194 = vmatpush2.bf16.xpose.msra.mxu0 0
        %2195 = vmatprep.subr.bf16.mxu0 0
        %2196 = vmatpush2.bf16.xpose.msra.mxu0 0
        %2197 = vmatprep.subr.bf16.mxu0 0
        %2198 = vmatpush2.bf16.xpose.msra.mxu0 0
        %2199 = vmatprep.mubr.bf16.mxu0 0
        %2200 = vmatmul.mubr.bf16.gmra.mxu0 %v2165
        %v2201 = vpop.f32.mrf.mxu0
        %v2202 = vadd.f32 0.0, %v2201
        %v2203 = vpop.f32.mrf.mxu0
        %v2204 = vpop.f32.mrf.mxu0
        %v2205 = vpop.f32.mrf.mxu0
        %2206 = vdwg.mxu0
        %v2208 = vsel %vm1893, %v1282, 0
        %2210 = vmatprep.subr.bf16.mxu0 0
        %2211 = vmatpush1.bf16.xpose.msra.mxu0 0
        %2212 = vmatprep.subr.bf16.mxu0 0
        %2213 = vmatpush1.bf16.xpose.msra.mxu0 0
        %2214 = vmatprep.subr.bf16.mxu0 0
        %2215 = vmatpush1.bf16.xpose.msra.mxu0 0
        %2216 = vmatprep.subr.bf16.mxu0 0
        %2217 = vmatpush1.bf16.xpose.msra.mxu0 0
        %2218 = vmatprep.subr.bf16.mxu0 0
        %2219 = vmatpush1.bf16.xpose.msra.mxu0 0
        %2220 = vmatprep.subr.bf16.mxu0 0
        %2221 = vmatpush1.bf16.xpose.msra.mxu0 0
        %2222 = vmatprep.subr.bf16.mxu0 0
        %2223 = vmatpush1.bf16.xpose.msra.mxu0 0
        %2224 = vmatprep.subr.bf16.mxu0 0
        %2225 = vmatpush1.bf16.xpose.msra.mxu0 %v2036
        %2226 = vmatprep.subr.bf16.mxu0 0
        %2227 = vmatpush2.bf16.xpose.msra.mxu0 0
        %2228 = vmatprep.subr.bf16.mxu0 0
        %2229 = vmatpush2.bf16.xpose.msra.mxu0 0
        %2230 = vmatprep.subr.bf16.mxu0 0
        %2231 = vmatpush2.bf16.xpose.msra.mxu0 0
        %2232 = vmatprep.subr.bf16.mxu0 0
        %2233 = vmatpush2.bf16.xpose.msra.mxu0 0
        %2234 = vmatprep.subr.bf16.mxu0 0
        %2235 = vmatpush2.bf16.xpose.msra.mxu0 0
        %2236 = vmatprep.subr.bf16.mxu0 0
        %2237 = vmatpush2.bf16.xpose.msra.mxu0 0
        %2238 = vmatprep.subr.bf16.mxu0 0
        %2239 = vmatpush2.bf16.xpose.msra.mxu0 0
        %2240 = vmatprep.subr.bf16.mxu0 0
        %2241 = vmatpush2.bf16.xpose.msra.mxu0 0
        %2242 = vmatprep.mubr.bf16.mxu0 0
        %2243 = vmatmul.mubr.bf16.gmra.mxu0 %v2208
        %v2244 = vpop.f32.mrf.mxu0
        %v2245 = vadd.f32 0.0, %v2244
        %v2246 = vpop.f32.mrf.mxu0
        %v2247 = vpop.f32.mrf.mxu0
        %v2248 = vpop.f32.mrf.mxu0
        %2249 = vdwg.mxu0
        %v2250 = vsel %vm1893, %v1935, -inf
        %2251 = vmax.xlane.f32.xlu0 %v2250
        %v2252 = vpop.xlane.xlu0 %2251
        %v2253 = vsel %vm1893, %v1981, -inf
        %2254 = vmax.xlane.f32.xlu0 %v2253
        %v2255 = vpop.xlane.xlu0 %2254
        %v2256 = vsel %vm1893, %v2027, -inf
        %2257 = vmax.xlane.f32.xlu0 %v2256
        %v2258 = vpop.xlane.xlu0 %2257
        %v2259 = vsel %vm1893, %v2073, -inf
        %2260 = vmax.xlane.f32.xlu0 %v2259
        %v2261 = vpop.xlane.xlu0 %2260
        %v2262 = vsub.f32 %v1935, %v2252
        %v2263 = vsub.f32 %v1981, %v2255
        %v2264 = vsub.f32 %v2027, %v2258
        %v2265 = vsub.f32 %v2073, %v2261
        %v2266 = vmul.f32 %v2262, 1.442695
        %v2267 = vpow.pop %v2266
        %v2268 = vmul.f32 %v2263, 1.442695
        %v2269 = vpow.pop %v2268
        %v2270 = vmul.f32 %v2264, 1.442695
        %v2271 = vpow.pop %v2270
        %v2272 = vmul.f32 %v2265, 1.442695
        %v2273 = vpow.pop %v2272
        %v2274 = vsel %vm1893, %v2267, 0.0
        %2275 = vadd.xlane.f32.xlu0 %v2274
        %v2276 = vpop.xlane.xlu0 %2275
        %v2277 = vsel %vm1893, %v2269, 0.0
        %2278 = vadd.xlane.f32.xlu0 %v2277
        %v2279 = vpop.xlane.xlu0 %2278
        %v2280 = vsel %vm1893, %v2271, 0.0
        %2281 = vadd.xlane.f32.xlu0 %v2280
        %v2282 = vpop.xlane.xlu0 %2281
        %v2283 = vsel %vm1893, %v2273, 0.0
        %2284 = vadd.xlane.f32.xlu0 %v2283
        %v2285 = vpop.xlane.xlu0 %2284
        %v2286 = vrcp.pop %v2276
        %v2287 = vmul.f32 %v2267, %v2286
        %v2288 = vrcp.pop %v2279
        %v2289 = vmul.f32 %v2269, %v2288
        %v2290 = vrcp.pop %v2282
        %v2291 = vmul.f32 %v2271, %v2290
        %v2292 = vrcp.pop %v2285
        %v2293 = vmul.f32 %v2273, %v2292
        %vm2294 = vcmask 130112
        %v2295 = vsel %vm2294, %v2116, -inf
        %2296 = vmax.xlane.f32.xlu0 %v2295
        %v2297 = vpop.xlane.xlu0 %2296
        %v2298 = vsel %vm2294, %v2159, -inf
        %2299 = vmax.xlane.f32.xlu0 %v2298
        %v2300 = vpop.xlane.xlu0 %2299
        %v2301 = vsel %vm2294, %v2202, -inf
        %2302 = vmax.xlane.f32.xlu0 %v2301
        %v2303 = vpop.xlane.xlu0 %2302
        %v2304 = vsel %vm2294, %v2245, -inf
        %2305 = vmax.xlane.f32.xlu0 %v2304
        %v2306 = vpop.xlane.xlu0 %2305
        %v2307 = vsub.f32 %v2116, %v2297
        %v2308 = vsub.f32 %v2159, %v2300
        %v2309 = vsub.f32 %v2202, %v2303
        %v2310 = vsub.f32 %v2245, %v2306
        %v2311 = vmul.f32 %v2307, 1.442695
        %v2312 = vpow.pop %v2311
        %v2313 = vmul.f32 %v2308, 1.442695
        %v2314 = vpow.pop %v2313
        %v2315 = vmul.f32 %v2309, 1.442695
        %v2316 = vpow.pop %v2315
        %v2317 = vmul.f32 %v2310, 1.442695
        %v2318 = vpow.pop %v2317
        %2323 = vrot.lane.b32.xlu0 %v2312, 120
        %v2324 = vpop.permute.xlu0 %2323
        %2325 = vrot.lane.b32.xlu0 %v2314, 120
        %v2326 = vpop.permute.xlu0 %2325
        %2327 = vrot.lane.b32.xlu0 %v2316, 120
        %v2328 = vpop.permute.xlu0 %2327
        %2329 = vrot.lane.b32.xlu0 %v2318, 120
        %v2330 = vpop.permute.xlu0 %2329
        %v2335 = vsel %vm1893, %v2324, 0.0
        %2336 = vadd.xlane.f32.xlu0 %v2335
        %v2337 = vpop.xlane.xlu0 %2336
        %v2338 = vsel %vm1893, %v2326, 0.0
        %2339 = vadd.xlane.f32.xlu0 %v2338
        %v2340 = vpop.xlane.xlu0 %2339
        %v2341 = vsel %vm1893, %v2328, 0.0
        %2342 = vadd.xlane.f32.xlu0 %v2341
        %v2343 = vpop.xlane.xlu0 %2342
        %v2344 = vsel %vm1893, %v2330, 0.0
        %2345 = vadd.xlane.f32.xlu0 %v2344
        %v2346 = vpop.xlane.xlu0 %2345
        %v2347 = vrcp.pop %v2337
        %v2348 = vmul.f32 %v2312, %v2347
        %v2349 = vrcp.pop %v2340
        %v2350 = vmul.f32 %v2314, %v2349
        %v2351 = vrcp.pop %v2343
        %v2352 = vmul.f32 %v2316, %v2351
        %v2353 = vrcp.pop %v2346
        %v2354 = vmul.f32 %v2318, %v2353
        %2359 = vrot.lane.b32.xlu0 %v2348, 120
        %v2360 = vpop.permute.xlu0 %2359
        %2361 = vrot.lane.b32.xlu0 %v2350, 120
        %v2362 = vpop.permute.xlu0 %2361
        %2363 = vrot.lane.b32.xlu0 %v2352, 120
        %v2364 = vpop.permute.xlu0 %2363
        %2365 = vrot.lane.b32.xlu0 %v2354, 120
        %v2366 = vpop.permute.xlu0 %2365
        %v2371 = vsub.f32 %v2287, %v2360
        %v2372 = vsub.f32 %v2289, %v2362
        %v2373 = vsub.f32 %v2291, %v2364
        %v2374 = vsub.f32 %v2293, %v2366
        %v2375 = vsel %vm2294, %v1935, -inf
        %2376 = vmax.xlane.f32.xlu0 %v2375
        %v2377 = vpop.xlane.xlu0 %2376
        %v2378 = vsel %vm2294, %v1981, -inf
        %2379 = vmax.xlane.f32.xlu0 %v2378
        %v2380 = vpop.xlane.xlu0 %2379
        %v2381 = vsel %vm2294, %v2027, -inf
        %2382 = vmax.xlane.f32.xlu0 %v2381
        %v2383 = vpop.xlane.xlu0 %2382
        %v2384 = vsel %vm2294, %v2073, -inf
        %2385 = vmax.xlane.f32.xlu0 %v2384
        %v2386 = vpop.xlane.xlu0 %2385
        %v2387 = vsub.f32 %v1935, %v2377
        %v2388 = vsub.f32 %v1981, %v2380
        %v2389 = vsub.f32 %v2027, %v2383
        %v2390 = vsub.f32 %v2073, %v2386
        %v2391 = vmul.f32 %v2387, 1.442695
        %v2392 = vpow.pop %v2391
        %v2393 = vmul.f32 %v2388, 1.442695
        %v2394 = vpow.pop %v2393
        %v2395 = vmul.f32 %v2389, 1.442695
        %v2396 = vpow.pop %v2395
        %v2397 = vmul.f32 %v2390, 1.442695
        %v2398 = vpow.pop %v2397
        %2403 = vrot.lane.b32.xlu0 %v2392, 120
        %v2404 = vpop.permute.xlu0 %2403
        %2405 = vrot.lane.b32.xlu0 %v2394, 120
        %v2406 = vpop.permute.xlu0 %2405
        %2407 = vrot.lane.b32.xlu0 %v2396, 120
        %v2408 = vpop.permute.xlu0 %2407
        %2409 = vrot.lane.b32.xlu0 %v2398, 120
        %v2410 = vpop.permute.xlu0 %2409
        %v2415 = vsel %vm1893, %v2404, 0.0
        %2416 = vadd.xlane.f32.xlu0 %v2415
        %v2417 = vpop.xlane.xlu0 %2416
        %v2418 = vsel %vm1893, %v2406, 0.0
        %2419 = vadd.xlane.f32.xlu0 %v2418
        %v2420 = vpop.xlane.xlu0 %2419
        %v2421 = vsel %vm1893, %v2408, 0.0
        %2422 = vadd.xlane.f32.xlu0 %v2421
        %v2423 = vpop.xlane.xlu0 %2422
        %v2424 = vsel %vm1893, %v2410, 0.0
        %2425 = vadd.xlane.f32.xlu0 %v2424
        %v2426 = vpop.xlane.xlu0 %2425
        %v2427 = vrcp.pop %v2417
        %v2428 = vmul.f32 %v2392, %v2427
        %v2429 = vrcp.pop %v2420
        %v2430 = vmul.f32 %v2394, %v2429
        %v2431 = vrcp.pop %v2423
        %v2432 = vmul.f32 %v2396, %v2431
        %v2433 = vrcp.pop %v2426
        %v2434 = vmul.f32 %v2398, %v2433
        %v2435 = vsel %vm1893, %v2116, -inf
        %2436 = vmax.xlane.f32.xlu0 %v2435
        %v2437 = vpop.xlane.xlu0 %2436
        %v2438 = vsel %vm1893, %v2159, -inf
        %2439 = vmax.xlane.f32.xlu0 %v2438
        %v2440 = vpop.xlane.xlu0 %2439
        %v2441 = vsel %vm1893, %v2202, -inf
        %2442 = vmax.xlane.f32.xlu0 %v2441
        %v2443 = vpop.xlane.xlu0 %2442
        %v2444 = vsel %vm1893, %v2245, -inf
        %2445 = vmax.xlane.f32.xlu0 %v2444
        %v2446 = vpop.xlane.xlu0 %2445
        %v2447 = vsub.f32 %v2116, %v2437
        %v2448 = vsub.f32 %v2159, %v2440
        %v2449 = vsub.f32 %v2202, %v2443
        %v2450 = vsub.f32 %v2245, %v2446
        %v2451 = vmul.f32 %v2447, 1.442695
        %v2452 = vpow.pop %v2451
        %v2453 = vmul.f32 %v2448, 1.442695
        %v2454 = vpow.pop %v2453
        %v2455 = vmul.f32 %v2449, 1.442695
        %v2456 = vpow.pop %v2455
        %v2457 = vmul.f32 %v2450, 1.442695
        %v2458 = vpow.pop %v2457
        %v2459 = vsel %vm1893, %v2452, 0.0
        %2460 = vadd.xlane.f32.xlu0 %v2459
        %v2461 = vpop.xlane.xlu0 %2460
        %v2462 = vsel %vm1893, %v2454, 0.0
        %2463 = vadd.xlane.f32.xlu0 %v2462
        %v2464 = vpop.xlane.xlu0 %2463
        %v2465 = vsel %vm1893, %v2456, 0.0
        %2466 = vadd.xlane.f32.xlu0 %v2465
        %v2467 = vpop.xlane.xlu0 %2466
        %v2468 = vsel %vm1893, %v2458, 0.0
        %2469 = vadd.xlane.f32.xlu0 %v2468
        %v2470 = vpop.xlane.xlu0 %2469
        %v2471 = vrcp.pop %v2461
        %v2472 = vmul.f32 %v2452, %v2471
        %v2473 = vrcp.pop %v2464
        %v2474 = vmul.f32 %v2454, %v2473
        %v2475 = vrcp.pop %v2467
        %v2476 = vmul.f32 %v2456, %v2475
        %v2477 = vrcp.pop %v2470
        %v2478 = vmul.f32 %v2458, %v2477
        %2483 = vrot.lane.b32.xlu0 %v2472, 8
        %v2484 = vpop.permute.xlu0 %2483
        %2485 = vrot.lane.b32.xlu0 %v2474, 8
        %v2486 = vpop.permute.xlu0 %2485
        %2487 = vrot.lane.b32.xlu0 %v2476, 8
        %v2488 = vpop.permute.xlu0 %2487
        %2489 = vrot.lane.b32.xlu0 %v2478, 8
        %v2490 = vpop.permute.xlu0 %2489
        %v2495 = vadd.f32 %v2428, %v2484
        %v2496 = vadd.f32 %v2430, %v2486
        %v2497 = vadd.f32 %v2432, %v2488
        %v2498 = vadd.f32 %v2434, %v2490
        %2503 = vrot.lane.b32.xlu0 %v1885, 8
        %v2504 = vpop.permute.xlu0 %2503
        %2505 = vrot.lane.b32.xlu0 %v1886, 8
        %v2506 = vpop.permute.xlu0 %2505
        %2507 = vrot.lane.b32.xlu0 %v1887, 8
        %v2508 = vpop.permute.xlu0 %2507
        %2509 = vrot.lane.b32.xlu0 %v1888, 8
        %v2510 = vpop.permute.xlu0 %2509
        %v2515 = vsel %vm1893, %v1737, %v2504
        %v2516 = vsel %vm1893, %v1738, %v2506
        %v2517 = vsel %vm1893, %v1739, %v2508
        %v2518 = vsel %vm1893, %v1740, %v2510
        %v2519 = vpack.c.bf16 %v2515, %v2515
        %v2520 = vpack.c.bf16 %v2516, %v2516
        %v2521 = vpack.c.bf16 %v2517, %v2517
        %v2522 = vpack.c.bf16 %v2518, %v2518
        %v2523 = vpack.c.bf16 %v2371, %v2371
        %v2524 = vpack.c.bf16 %v2372, %v2372
        %v2525 = vpack.c.bf16 %v2373, %v2373
        %v2526 = vpack.c.bf16 %v2374, %v2374
        %v2528 = vsel %vm1893, %v2523, 0
        %vm2530 = vcmask 1043456
        %v2532 = vsel %vm2530, %v2519, 0
        %2534 = vmatprep.subr.bf16.mxu0 0
        %2535 = vmatpush1.bf16.msra.mxu0 0
        %2536 = vmatprep.subr.bf16.mxu0 0
        %2537 = vmatpush1.bf16.msra.mxu0 0
        %2538 = vmatprep.subr.bf16.mxu0 0
        %2539 = vmatpush1.bf16.msra.mxu0 0
        %2540 = vmatprep.subr.bf16.mxu0 0
        %2541 = vmatpush1.bf16.msra.mxu0 0
        %2542 = vmatprep.subr.bf16.mxu0 0
        %2543 = vmatpush1.bf16.msra.mxu0 0
        %2544 = vmatprep.subr.bf16.mxu0 0
        %2545 = vmatpush1.bf16.msra.mxu0 0
        %2546 = vmatprep.subr.bf16.mxu0 0
        %2547 = vmatpush1.bf16.msra.mxu0 0
        %2548 = vmatprep.subr.bf16.mxu0 0
        %2549 = vmatpush1.bf16.msra.mxu0 %v2532
        %2550 = vmatprep.subr.bf16.mxu0 0
        %2551 = vmatpush2.bf16.msra.mxu0 0
        %2552 = vmatprep.subr.bf16.mxu0 0
        %2553 = vmatpush2.bf16.msra.mxu0 0
        %2554 = vmatprep.subr.bf16.mxu0 0
        %2555 = vmatpush2.bf16.msra.mxu0 0
        %2556 = vmatprep.subr.bf16.mxu0 0
        %2557 = vmatpush2.bf16.msra.mxu0 0
        %2558 = vmatprep.subr.bf16.mxu0 0
        %2559 = vmatpush2.bf16.msra.mxu0 0
        %2560 = vmatprep.subr.bf16.mxu0 0
        %2561 = vmatpush2.bf16.msra.mxu0 0
        %2562 = vmatprep.subr.bf16.mxu0 0
        %2563 = vmatpush2.bf16.msra.mxu0 0
        %2564 = vmatprep.subr.bf16.mxu0 0
        %2565 = vmatpush2.bf16.msra.mxu0 0
        %2566 = vmatprep.mubr.bf16.mxu0 0
        %2567 = vmatmul.mubr.bf16.gmra.mxu0 %v2528
        %v2568 = vpop.f32.mrf.mxu0
        %v2569 = vadd.f32 0.0, %v2568
        %v2570 = vpop.f32.mrf.mxu0
        %v2571 = vpop.f32.mrf.mxu0
        %v2572 = vpop.f32.mrf.mxu0
        %2573 = vdwg.mxu0
        %v2575 = vsel %vm1893, %v2524, 0
        %v2578 = vsel %vm2530, %v2520, 0
        %2580 = vmatprep.subr.bf16.mxu0 0
        %2581 = vmatpush1.bf16.msra.mxu0 0
        %2582 = vmatprep.subr.bf16.mxu0 0
        %2583 = vmatpush1.bf16.msra.mxu0 0
        %2584 = vmatprep.subr.bf16.mxu0 0
        %2585 = vmatpush1.bf16.msra.mxu0 0
        %2586 = vmatprep.subr.bf16.mxu0 0
        %2587 = vmatpush1.bf16.msra.mxu0 0
        %2588 = vmatprep.subr.bf16.mxu0 0
        %2589 = vmatpush1.bf16.msra.mxu0 0
        %2590 = vmatprep.subr.bf16.mxu0 0
        %2591 = vmatpush1.bf16.msra.mxu0 0
        %2592 = vmatprep.subr.bf16.mxu0 0
        %2593 = vmatpush1.bf16.msra.mxu0 0
        %2594 = vmatprep.subr.bf16.mxu0 0
        %2595 = vmatpush1.bf16.msra.mxu0 %v2578
        %2596 = vmatprep.subr.bf16.mxu0 0
        %2597 = vmatpush2.bf16.msra.mxu0 0
        %2598 = vmatprep.subr.bf16.mxu0 0
        %2599 = vmatpush2.bf16.msra.mxu0 0
        %2600 = vmatprep.subr.bf16.mxu0 0
        %2601 = vmatpush2.bf16.msra.mxu0 0
        %2602 = vmatprep.subr.bf16.mxu0 0
        %2603 = vmatpush2.bf16.msra.mxu0 0
        %2604 = vmatprep.subr.bf16.mxu0 0
        %2605 = vmatpush2.bf16.msra.mxu0 0
        %2606 = vmatprep.subr.bf16.mxu0 0
        %2607 = vmatpush2.bf16.msra.mxu0 0
        %2608 = vmatprep.subr.bf16.mxu0 0
        %2609 = vmatpush2.bf16.msra.mxu0 0
        %2610 = vmatprep.subr.bf16.mxu0 0
        %2611 = vmatpush2.bf16.msra.mxu0 0
        %2612 = vmatprep.mubr.bf16.mxu0 0
        %2613 = vmatmul.mubr.bf16.gmra.mxu0 %v2575
        %v2614 = vpop.f32.mrf.mxu0
        %v2615 = vadd.f32 0.0, %v2614
        %v2616 = vpop.f32.mrf.mxu0
        %v2617 = vpop.f32.mrf.mxu0
        %v2618 = vpop.f32.mrf.mxu0
        %2619 = vdwg.mxu0
        %v2621 = vsel %vm1893, %v2525, 0
        %v2624 = vsel %vm2530, %v2521, 0
        %2626 = vmatprep.subr.bf16.mxu0 0
        %2627 = vmatpush1.bf16.msra.mxu0 0
        %2628 = vmatprep.subr.bf16.mxu0 0
        %2629 = vmatpush1.bf16.msra.mxu0 0
        %2630 = vmatprep.subr.bf16.mxu0 0
        %2631 = vmatpush1.bf16.msra.mxu0 0
        %2632 = vmatprep.subr.bf16.mxu0 0
        %2633 = vmatpush1.bf16.msra.mxu0 0
        %2634 = vmatprep.subr.bf16.mxu0 0
        %2635 = vmatpush1.bf16.msra.mxu0 0
        %2636 = vmatprep.subr.bf16.mxu0 0
        %2637 = vmatpush1.bf16.msra.mxu0 0
        %2638 = vmatprep.subr.bf16.mxu0 0
        %2639 = vmatpush1.bf16.msra.mxu0 0
        %2640 = vmatprep.subr.bf16.mxu0 0
        %2641 = vmatpush1.bf16.msra.mxu0 %v2624
        %2642 = vmatprep.subr.bf16.mxu0 0
        %2643 = vmatpush2.bf16.msra.mxu0 0
        %2644 = vmatprep.subr.bf16.mxu0 0
        %2645 = vmatpush2.bf16.msra.mxu0 0
        %2646 = vmatprep.subr.bf16.mxu0 0
        %2647 = vmatpush2.bf16.msra.mxu0 0
        %2648 = vmatprep.subr.bf16.mxu0 0
        %2649 = vmatpush2.bf16.msra.mxu0 0
        %2650 = vmatprep.subr.bf16.mxu0 0
        %2651 = vmatpush2.bf16.msra.mxu0 0
        %2652 = vmatprep.subr.bf16.mxu0 0
        %2653 = vmatpush2.bf16.msra.mxu0 0
        %2654 = vmatprep.subr.bf16.mxu0 0
        %2655 = vmatpush2.bf16.msra.mxu0 0
        %2656 = vmatprep.subr.bf16.mxu0 0
        %2657 = vmatpush2.bf16.msra.mxu0 0
        %2658 = vmatprep.mubr.bf16.mxu0 0
        %2659 = vmatmul.mubr.bf16.gmra.mxu0 %v2621
        %v2660 = vpop.f32.mrf.mxu0
        %v2661 = vadd.f32 0.0, %v2660
        %v2662 = vpop.f32.mrf.mxu0
        %v2663 = vpop.f32.mrf.mxu0
        %v2664 = vpop.f32.mrf.mxu0
        %2665 = vdwg.mxu0
        %v2667 = vsel %vm1893, %v2526, 0
        %v2670 = vsel %vm2530, %v2522, 0
        %2672 = vmatprep.subr.bf16.mxu0 0
        %2673 = vmatpush1.bf16.msra.mxu0 0
        %2674 = vmatprep.subr.bf16.mxu0 0
        %2675 = vmatpush1.bf16.msra.mxu0 0
        %2676 = vmatprep.subr.bf16.mxu0 0
        %2677 = vmatpush1.bf16.msra.mxu0 0
        %2678 = vmatprep.subr.bf16.mxu0 0
        %2679 = vmatpush1.bf16.msra.mxu0 0
        %2680 = vmatprep.subr.bf16.mxu0 0
        %2681 = vmatpush1.bf16.msra.mxu0 0
        %2682 = vmatprep.subr.bf16.mxu0 0
        %2683 = vmatpush1.bf16.msra.mxu0 0
        %2684 = vmatprep.subr.bf16.mxu0 0
        %2685 = vmatpush1.bf16.msra.mxu0 0
        %2686 = vmatprep.subr.bf16.mxu0 0
        %2687 = vmatpush1.bf16.msra.mxu0 %v2670
        %2688 = vmatprep.subr.bf16.mxu0 0
        %2689 = vmatpush2.bf16.msra.mxu0 0
        %2690 = vmatprep.subr.bf16.mxu0 0
        %2691 = vmatpush2.bf16.msra.mxu0 0
        %2692 = vmatprep.subr.bf16.mxu0 0
        %2693 = vmatpush2.bf16.msra.mxu0 0
        %2694 = vmatprep.subr.bf16.mxu0 0
        %2695 = vmatpush2.bf16.msra.mxu0 0
        %2696 = vmatprep.subr.bf16.mxu0 0
        %2697 = vmatpush2.bf16.msra.mxu0 0
        %2698 = vmatprep.subr.bf16.mxu0 0
        %2699 = vmatpush2.bf16.msra.mxu0 0
        %2700 = vmatprep.subr.bf16.mxu0 0
        %2701 = vmatpush2.bf16.msra.mxu0 0
        %2702 = vmatprep.subr.bf16.mxu0 0
        %2703 = vmatpush2.bf16.msra.mxu0 0
        %2704 = vmatprep.mubr.bf16.mxu0 0
        %2705 = vmatmul.mubr.bf16.gmra.mxu0 %v2667
        %v2706 = vpop.f32.mrf.mxu0
        %v2707 = vadd.f32 0.0, %v2706
        %v2708 = vpop.f32.mrf.mxu0
        %v2709 = vpop.f32.mrf.mxu0
        %v2710 = vpop.f32.mrf.mxu0
        %2711 = vdwg.mxu0
        %v2712 = vpack.c.bf16 %v2495, %v2495
        %v2713 = vpack.c.bf16 %v2496, %v2496
        %v2714 = vpack.c.bf16 %v2497, %v2497
        %v2715 = vpack.c.bf16 %v2498, %v2498
        %2717 = vrot.lane.b32.xlu0 %v2712, 120
        %v2718 = vpop.permute.xlu0 %2717
        %v2720 = vsel %vm1893, %v2718, 0
        %2722 = vmatprep.subr.bf16.mxu0 0
        %2723 = vmatpush1.bf16.msra.mxu0 0
        %2724 = vmatprep.subr.bf16.mxu0 0
        %2725 = vmatpush1.bf16.msra.mxu0 0
        %2726 = vmatprep.subr.bf16.mxu0 0
        %2727 = vmatpush1.bf16.msra.mxu0 0
        %2728 = vmatprep.subr.bf16.mxu0 0
        %2729 = vmatpush1.bf16.msra.mxu0 0
        %2730 = vmatprep.subr.bf16.mxu0 0
        %2731 = vmatpush1.bf16.msra.mxu0 0
        %2732 = vmatprep.subr.bf16.mxu0 0
        %2733 = vmatpush1.bf16.msra.mxu0 0
        %2734 = vmatprep.subr.bf16.mxu0 0
        %2735 = vmatpush1.bf16.msra.mxu0 0
        %2736 = vmatprep.subr.bf16.mxu0 0
        %2737 = vmatpush1.bf16.msra.mxu0 %v2532
        %2738 = vmatprep.subr.bf16.mxu0 0
        %2739 = vmatpush2.bf16.msra.mxu0 0
        %2740 = vmatprep.subr.bf16.mxu0 0
        %2741 = vmatpush2.bf16.msra.mxu0 0
        %2742 = vmatprep.subr.bf16.mxu0 0
        %2743 = vmatpush2.bf16.msra.mxu0 0
        %2744 = vmatprep.subr.bf16.mxu0 0
        %2745 = vmatpush2.bf16.msra.mxu0 0
        %2746 = vmatprep.subr.bf16.mxu0 0
        %2747 = vmatpush2.bf16.msra.mxu0 0
        %2748 = vmatprep.subr.bf16.mxu0 0
        %2749 = vmatpush2.bf16.msra.mxu0 0
        %2750 = vmatprep.subr.bf16.mxu0 0
        %2751 = vmatpush2.bf16.msra.mxu0 0
        %2752 = vmatprep.subr.bf16.mxu0 0
        %2753 = vmatpush2.bf16.msra.mxu0 0
        %2754 = vmatprep.mubr.bf16.mxu0 0
        %2755 = vmatmul.mubr.bf16.gmra.mxu0 %v2720
        %v2756 = vpop.f32.mrf.mxu0
        %v2757 = vadd.f32 0.0, %v2756
        %v2758 = vpop.f32.mrf.mxu0
        %v2759 = vpop.f32.mrf.mxu0
        %v2760 = vpop.f32.mrf.mxu0
        %2761 = vdwg.mxu0
        %2763 = vrot.lane.b32.xlu0 %v2713, 120
        %v2764 = vpop.permute.xlu0 %2763
        %v2766 = vsel %vm1893, %v2764, 0
        %2768 = vmatprep.subr.bf16.mxu0 0
        %2769 = vmatpush1.bf16.msra.mxu0 0
        %2770 = vmatprep.subr.bf16.mxu0 0
        %2771 = vmatpush1.bf16.msra.mxu0 0
        %2772 = vmatprep.subr.bf16.mxu0 0
        %2773 = vmatpush1.bf16.msra.mxu0 0
        %2774 = vmatprep.subr.bf16.mxu0 0
        %2775 = vmatpush1.bf16.msra.mxu0 0
        %2776 = vmatprep.subr.bf16.mxu0 0
        %2777 = vmatpush1.bf16.msra.mxu0 0
        %2778 = vmatprep.subr.bf16.mxu0 0
        %2779 = vmatpush1.bf16.msra.mxu0 0
        %2780 = vmatprep.subr.bf16.mxu0 0
        %2781 = vmatpush1.bf16.msra.mxu0 0
        %2782 = vmatprep.subr.bf16.mxu0 0
        %2783 = vmatpush1.bf16.msra.mxu0 %v2578
        %2784 = vmatprep.subr.bf16.mxu0 0
        %2785 = vmatpush2.bf16.msra.mxu0 0
        %2786 = vmatprep.subr.bf16.mxu0 0
        %2787 = vmatpush2.bf16.msra.mxu0 0
        %2788 = vmatprep.subr.bf16.mxu0 0
        %2789 = vmatpush2.bf16.msra.mxu0 0
        %2790 = vmatprep.subr.bf16.mxu0 0
        %2791 = vmatpush2.bf16.msra.mxu0 0
        %2792 = vmatprep.subr.bf16.mxu0 0
        %2793 = vmatpush2.bf16.msra.mxu0 0
        %2794 = vmatprep.subr.bf16.mxu0 0
        %2795 = vmatpush2.bf16.msra.mxu0 0
        %2796 = vmatprep.subr.bf16.mxu0 0
        %2797 = vmatpush2.bf16.msra.mxu0 0
        %2798 = vmatprep.subr.bf16.mxu0 0
        %2799 = vmatpush2.bf16.msra.mxu0 0
        %2800 = vmatprep.mubr.bf16.mxu0 0
        %2801 = vmatmul.mubr.bf16.gmra.mxu0 %v2766
        %v2802 = vpop.f32.mrf.mxu0
        %v2803 = vadd.f32 0.0, %v2802
        %v2804 = vpop.f32.mrf.mxu0
        %v2805 = vpop.f32.mrf.mxu0
        %v2806 = vpop.f32.mrf.mxu0
        %2807 = vdwg.mxu0
        %2809 = vrot.lane.b32.xlu0 %v2714, 120
        %v2810 = vpop.permute.xlu0 %2809
        %v2812 = vsel %vm1893, %v2810, 0
        %2814 = vmatprep.subr.bf16.mxu0 0
        %2815 = vmatpush1.bf16.msra.mxu0 0
        %2816 = vmatprep.subr.bf16.mxu0 0
        %2817 = vmatpush1.bf16.msra.mxu0 0
        %2818 = vmatprep.subr.bf16.mxu0 0
        %2819 = vmatpush1.bf16.msra.mxu0 0
        %2820 = vmatprep.subr.bf16.mxu0 0
        %2821 = vmatpush1.bf16.msra.mxu0 0
        %2822 = vmatprep.subr.bf16.mxu0 0
        %2823 = vmatpush1.bf16.msra.mxu0 0
        %2824 = vmatprep.subr.bf16.mxu0 0
        %2825 = vmatpush1.bf16.msra.mxu0 0
        %2826 = vmatprep.subr.bf16.mxu0 0
        %2827 = vmatpush1.bf16.msra.mxu0 0
        %2828 = vmatprep.subr.bf16.mxu0 0
        %2829 = vmatpush1.bf16.msra.mxu0 %v2624
        %2830 = vmatprep.subr.bf16.mxu0 0
        %2831 = vmatpush2.bf16.msra.mxu0 0
        %2832 = vmatprep.subr.bf16.mxu0 0
        %2833 = vmatpush2.bf16.msra.mxu0 0
        %2834 = vmatprep.subr.bf16.mxu0 0
        %2835 = vmatpush2.bf16.msra.mxu0 0
        %2836 = vmatprep.subr.bf16.mxu0 0
        %2837 = vmatpush2.bf16.msra.mxu0 0
        %2838 = vmatprep.subr.bf16.mxu0 0
        %2839 = vmatpush2.bf16.msra.mxu0 0
        %2840 = vmatprep.subr.bf16.mxu0 0
        %2841 = vmatpush2.bf16.msra.mxu0 0
        %2842 = vmatprep.subr.bf16.mxu0 0
        %2843 = vmatpush2.bf16.msra.mxu0 0
        %2844 = vmatprep.subr.bf16.mxu0 0
        %2845 = vmatpush2.bf16.msra.mxu0 0
        %2846 = vmatprep.mubr.bf16.mxu0 0
        %2847 = vmatmul.mubr.bf16.gmra.mxu0 %v2812
        %v2848 = vpop.f32.mrf.mxu0
        %v2849 = vadd.f32 0.0, %v2848
        %v2850 = vpop.f32.mrf.mxu0
        %v2851 = vpop.f32.mrf.mxu0
        %v2852 = vpop.f32.mrf.mxu0
        %2853 = vdwg.mxu0
        %2855 = vrot.lane.b32.xlu0 %v2715, 120
        %v2856 = vpop.permute.xlu0 %2855
        %v2858 = vsel %vm1893, %v2856, 0
        %2860 = vmatprep.subr.bf16.mxu0 0
        %2861 = vmatpush1.bf16.msra.mxu0 0
        %2862 = vmatprep.subr.bf16.mxu0 0
        %2863 = vmatpush1.bf16.msra.mxu0 0
        %2864 = vmatprep.subr.bf16.mxu0 0
        %2865 = vmatpush1.bf16.msra.mxu0 0
        %2866 = vmatprep.subr.bf16.mxu0 0
        %2867 = vmatpush1.bf16.msra.mxu0 0
        %2868 = vmatprep.subr.bf16.mxu0 0
        %2869 = vmatpush1.bf16.msra.mxu0 0
        %2870 = vmatprep.subr.bf16.mxu0 0
        %2871 = vmatpush1.bf16.msra.mxu0 0
        %2872 = vmatprep.subr.bf16.mxu0 0
        %2873 = vmatpush1.bf16.msra.mxu0 0
        %2874 = vmatprep.subr.bf16.mxu0 0
        %2875 = vmatpush1.bf16.msra.mxu0 %v2670
        %2876 = vmatprep.subr.bf16.mxu0 0
        %2877 = vmatpush2.bf16.msra.mxu0 0
        %2878 = vmatprep.subr.bf16.mxu0 0
        %2879 = vmatpush2.bf16.msra.mxu0 0
        %2880 = vmatprep.subr.bf16.mxu0 0
        %2881 = vmatpush2.bf16.msra.mxu0 0
        %2882 = vmatprep.subr.bf16.mxu0 0
        %2883 = vmatpush2.bf16.msra.mxu0 0
        %2884 = vmatprep.subr.bf16.mxu0 0
        %2885 = vmatpush2.bf16.msra.mxu0 0
        %2886 = vmatprep.subr.bf16.mxu0 0
        %2887 = vmatpush2.bf16.msra.mxu0 0
        %2888 = vmatprep.subr.bf16.mxu0 0
        %2889 = vmatpush2.bf16.msra.mxu0 0
        %2890 = vmatprep.subr.bf16.mxu0 0
        %2891 = vmatpush2.bf16.msra.mxu0 0
        %2892 = vmatprep.mubr.bf16.mxu0 0
        %2893 = vmatmul.mubr.bf16.gmra.mxu0 %v2858
        %v2894 = vpop.f32.mrf.mxu0
        %v2895 = vadd.f32 0.0, %v2894
        %v2896 = vpop.f32.mrf.mxu0
        %v2897 = vpop.f32.mrf.mxu0
        %v2898 = vpop.f32.mrf.mxu0
        %2899 = vdwg.mxu0
        %2904 = vrot.lane.b32.xlu0 %v2757, 120
        %v2905 = vpop.permute.xlu0 %2904
        %2906 = vrot.lane.b32.xlu0 %v2803, 120
        %v2907 = vpop.permute.xlu0 %2906
        %2908 = vrot.lane.b32.xlu0 %v2849, 120
        %v2909 = vpop.permute.xlu0 %2908
        %2910 = vrot.lane.b32.xlu0 %v2895, 120
        %v2911 = vpop.permute.xlu0 %2910
        %v2916 = vsub.f32 %v2569, %v2905
        %v2917 = vsub.f32 %v2615, %v2907
        %v2918 = vsub.f32 %v2661, %v2909
        %v2919 = vsub.f32 %v2707, %v2911
        %v2920 = vcombine.low %v2916, %v2918
        %v2921 = vcombine.high %v2916, %v2918
        %v2923 = vunpack.c.l.s4 1983009808
        %v2924 = vunpack.c.0.s8 %v2923
        %v2925 = vlaneseq
        %v2926 = vshrl.u32 %v2925, 7
        %v2927 = vsub.s32 %v2924, %v2926
        %v2928 = vrot.slane %v2920, %v2927
        %v2930 = vunpack.c.l.s4 1983009808
        %v2931 = vunpack.c.0.s8 %v2930
        %v2932 = vlaneseq
        %v2933 = vshrl.u32 %v2932, 7
        %v2934 = vsub.s32 %v2931, %v2933
        %v2935 = vrot.slane %v2921, %v2934
        %v2936 = vcombine.low %v2917, %v2919
        %v2937 = vcombine.high %v2917, %v2919
        %v2939 = vunpack.c.l.s4 1983009808
        %v2940 = vunpack.c.0.s8 %v2939
        %v2941 = vlaneseq
        %v2942 = vshrl.u32 %v2941, 7
        %v2943 = vsub.s32 %v2940, %v2942
        %v2944 = vrot.slane %v2936, %v2943
        %v2946 = vunpack.c.l.s4 1983009808
        %v2947 = vunpack.c.0.s8 %v2946
        %v2948 = vlaneseq
        %v2949 = vshrl.u32 %v2948, 7
        %v2950 = vsub.s32 %v2947, %v2949
        %v2951 = vrot.slane %v2937, %v2950
        %v2952 = vcombine.low %v2928, %v2944
        %v2953 = vcombine.high %v2928, %v2944
        %v2955 = vunpack.c.l.s4 1934713408
        %v2956 = vunpack.c.0.s8 %v2955
        %v2957 = vlaneseq
        %v2958 = vshrl.u32 %v2957, 7
        %v2959 = vsub.s32 %v2956, %v2958
        %v2960 = vrot.slane %v2952, %v2959
        %v2962 = vunpack.c.l.s4 1934713408
        %v2963 = vunpack.c.0.s8 %v2962
        %v2964 = vlaneseq
        %v2965 = vshrl.u32 %v2964, 7
        %v2966 = vsub.s32 %v2963, %v2965
        %v2967 = vrot.slane %v2953, %v2966
        %v2968 = vcombine.low %v2935, %v2951
        %v2969 = vcombine.high %v2935, %v2951
        %v2971 = vunpack.c.l.s4 1934713408
        %v2972 = vunpack.c.0.s8 %v2971
        %v2973 = vlaneseq
        %v2974 = vshrl.u32 %v2973, 7
        %v2975 = vsub.s32 %v2972, %v2974
        %v2976 = vrot.slane %v2968, %v2975
        %v2978 = vunpack.c.l.s4 1934713408
        %v2979 = vunpack.c.0.s8 %v2978
        %v2980 = vlaneseq
        %v2981 = vshrl.u32 %v2980, 7
        %v2982 = vsub.s32 %v2979, %v2981
        %v2983 = vrot.slane %v2969, %v2982
        %v2984 = vcombine.high %v2960, 0.0
        %v2985 = vcombine.high %v2967, 0.0
        %v2986 = vcombine.high %v2976, 0.0
        %v2987 = vcombine.high %v2983, 0.0
        %v2988 = vcombine.low %v2960, %v2967
        %v2990 = vunpack.c.l.s4 1983009808
        %v2991 = vunpack.c.0.s8 %v2990
        %v2992 = vlaneseq
        %v2993 = vshrl.u32 %v2992, 7
        %v2994 = vsub.s32 %v2991, %v2993
        %v2995 = vrot.slane %v2988, %v2994
        %v2996 = vcombine.low %v2984, %v2985
        %v2998 = vunpack.c.l.s4 1983009808
        %v2999 = vunpack.c.0.s8 %v2998
        %v3000 = vlaneseq
        %v3001 = vshrl.u32 %v3000, 7
        %v3002 = vsub.s32 %v2999, %v3001
        %v3003 = vrot.slane %v2996, %v3002
        %v3004 = vcombine.low %v2976, %v2983
        %v3006 = vunpack.c.l.s4 1983009808
        %v3007 = vunpack.c.0.s8 %v3006
        %v3008 = vlaneseq
        %v3009 = vshrl.u32 %v3008, 7
        %v3010 = vsub.s32 %v3007, %v3009
        %v3011 = vrot.slane %v3004, %v3010
        %v3012 = vcombine.low %v2986, %v2987
        %v3014 = vunpack.c.l.s4 1983009808
        %v3015 = vunpack.c.0.s8 %v3014
        %v3016 = vlaneseq
        %v3017 = vshrl.u32 %v3016, 7
        %v3018 = vsub.s32 %v3015, %v3017
        %v3019 = vrot.slane %v3012, %v3018
        %v3020 = vcombine.low %v2995, %v3003
        %v3021 = vcombine.high %v2995, %v3003
        %v3023 = vunpack.c.l.s4 1934713408
        %v3024 = vunpack.c.0.s8 %v3023
        %v3025 = vlaneseq
        %v3026 = vshrl.u32 %v3025, 7
        %v3027 = vsub.s32 %v3024, %v3026
        %v3028 = vrot.slane %v3020, %v3027
        %v3030 = vunpack.c.l.s4 1934713408
        %v3031 = vunpack.c.0.s8 %v3030
        %v3032 = vlaneseq
        %v3033 = vshrl.u32 %v3032, 7
        %v3034 = vsub.s32 %v3031, %v3033
        %v3035 = vrot.slane %v3021, %v3034
        %v3036 = vcombine.low %v3011, %v3019
        %v3037 = vcombine.high %v3011, %v3019
        %v3039 = vunpack.c.l.s4 1934713408
        %v3040 = vunpack.c.0.s8 %v3039
        %v3041 = vlaneseq
        %v3042 = vshrl.u32 %v3041, 7
        %v3043 = vsub.s32 %v3040, %v3042
        %v3044 = vrot.slane %v3036, %v3043
        %v3046 = vunpack.c.l.s4 1934713408
        %v3047 = vunpack.c.0.s8 %v3046
        %v3048 = vlaneseq
        %v3049 = vshrl.u32 %v3048, 7
        %v3050 = vsub.s32 %v3047, %v3049
        %v3051 = vrot.slane %v3037, %v3050
        %v3052 = vcombine.low %v3028, %v3044
        %v3053 = vcombine.high %v3028, %v3044
        %v3054 = vcombine.low %v3035, %v3051
        %v3055 = vcombine.high %v3035, %v3051
        %3057 = vrot.lane.b32.xlu0 %v3053, 8
        %v3058 = vpop.permute.xlu0 %3057
        %3061 = vrot.lane.b32.xlu0 %v3054, 16
        %v3062 = vpop.permute.xlu0 %3061
        %3065 = vrot.lane.b32.xlu0 %v3055, 24
        %v3066 = vpop.permute.xlu0 %3065
        %v3068 = vsel %vm1893, %v3052, %v3058
        %vm3069 = vcmask 130048
        %v3070 = vsel %vm3069, %v3068, %v3062
        %vm3071 = vcmask 195584
        %v3072 = vsel %vm3071, %v3070, %v3066
        %3073 = vrot.lane.b32.xlu0 %v2757, 8
        %v3074 = vpop.permute.xlu0 %3073
        %3075 = vrot.lane.b32.xlu0 %v2803, 8
        %v3076 = vpop.permute.xlu0 %3075
        %3077 = vrot.lane.b32.xlu0 %v2849, 8
        %v3078 = vpop.permute.xlu0 %3077
        %3079 = vrot.lane.b32.xlu0 %v2895, 8
        %v3080 = vpop.permute.xlu0 %3079
        %v3085 = vadd.f32 %v2569, %v3074
        %v3086 = vadd.f32 %v2615, %v3076
        %v3087 = vadd.f32 %v2661, %v3078
        %v3088 = vadd.f32 %v2707, %v3080
        %3093 = vrot.lane.b32.xlu0 %v3085, 120
        %v3094 = vpop.permute.xlu0 %3093
        %3095 = vrot.lane.b32.xlu0 %v3086, 120
        %v3096 = vpop.permute.xlu0 %3095
        %3097 = vrot.lane.b32.xlu0 %v3087, 120
        %v3098 = vpop.permute.xlu0 %3097
        %3099 = vrot.lane.b32.xlu0 %v3088, 120
        %v3100 = vpop.permute.xlu0 %3099
        %v3105 = vcombine.low %v3094, %v3098
        %v3106 = vcombine.high %v3094, %v3098
        %v3108 = vunpack.c.l.s4 1983009808
        %v3109 = vunpack.c.0.s8 %v3108
        %v3110 = vlaneseq
        %v3111 = vshrl.u32 %v3110, 7
        %v3112 = vsub.s32 %v3109, %v3111
        %v3113 = vrot.slane %v3105, %v3112
        %v3115 = vunpack.c.l.s4 1983009808
        %v3116 = vunpack.c.0.s8 %v3115
        %v3117 = vlaneseq
        %v3118 = vshrl.u32 %v3117, 7
        %v3119 = vsub.s32 %v3116, %v3118
        %v3120 = vrot.slane %v3106, %v3119
        %v3121 = vcombine.low %v3096, %v3100
        %v3122 = vcombine.high %v3096, %v3100
        %v3124 = vunpack.c.l.s4 1983009808
        %v3125 = vunpack.c.0.s8 %v3124
        %v3126 = vlaneseq
        %v3127 = vshrl.u32 %v3126, 7
        %v3128 = vsub.s32 %v3125, %v3127
        %v3129 = vrot.slane %v3121, %v3128
        %v3131 = vunpack.c.l.s4 1983009808
        %v3132 = vunpack.c.0.s8 %v3131
        %v3133 = vlaneseq
        %v3134 = vshrl.u32 %v3133, 7
        %v3135 = vsub.s32 %v3132, %v3134
        %v3136 = vrot.slane %v3122, %v3135
        %v3137 = vcombine.low %v3113, %v3129
        %v3138 = vcombine.high %v3113, %v3129
        %v3140 = vunpack.c.l.s4 1934713408
        %v3141 = vunpack.c.0.s8 %v3140
        %v3142 = vlaneseq
        %v3143 = vshrl.u32 %v3142, 7
        %v3144 = vsub.s32 %v3141, %v3143
        %v3145 = vrot.slane %v3137, %v3144
        %v3147 = vunpack.c.l.s4 1934713408
        %v3148 = vunpack.c.0.s8 %v3147
        %v3149 = vlaneseq
        %v3150 = vshrl.u32 %v3149, 7
        %v3151 = vsub.s32 %v3148, %v3150
        %v3152 = vrot.slane %v3138, %v3151
        %v3153 = vcombine.low %v3120, %v3136
        %v3154 = vcombine.high %v3120, %v3136
        %v3156 = vunpack.c.l.s4 1934713408
        %v3157 = vunpack.c.0.s8 %v3156
        %v3158 = vlaneseq
        %v3159 = vshrl.u32 %v3158, 7
        %v3160 = vsub.s32 %v3157, %v3159
        %v3161 = vrot.slane %v3153, %v3160
        %v3163 = vunpack.c.l.s4 1934713408
        %v3164 = vunpack.c.0.s8 %v3163
        %v3165 = vlaneseq
        %v3166 = vshrl.u32 %v3165, 7
        %v3167 = vsub.s32 %v3164, %v3166
        %v3168 = vrot.slane %v3154, %v3167
        %v3169 = vcombine.high %v3145, 0.0
        %v3170 = vcombine.high %v3152, 0.0
        %v3171 = vcombine.high %v3161, 0.0
        %v3172 = vcombine.high %v3168, 0.0
        %v3173 = vcombine.low %v3145, %v3152
        %v3175 = vunpack.c.l.s4 1983009808
        %v3176 = vunpack.c.0.s8 %v3175
        %v3177 = vlaneseq
        %v3178 = vshrl.u32 %v3177, 7
        %v3179 = vsub.s32 %v3176, %v3178
        %v3180 = vrot.slane %v3173, %v3179
        %v3181 = vcombine.low %v3169, %v3170
        %v3183 = vunpack.c.l.s4 1983009808
        %v3184 = vunpack.c.0.s8 %v3183
        %v3185 = vlaneseq
        %v3186 = vshrl.u32 %v3185, 7
        %v3187 = vsub.s32 %v3184, %v3186
        %v3188 = vrot.slane %v3181, %v3187
        %v3189 = vcombine.low %v3161, %v3168
        %v3191 = vunpack.c.l.s4 1983009808
        %v3192 = vunpack.c.0.s8 %v3191
        %v3193 = vlaneseq
        %v3194 = vshrl.u32 %v3193, 7
        %v3195 = vsub.s32 %v3192, %v3194
        %v3196 = vrot.slane %v3189, %v3195
        %v3197 = vcombine.low %v3171, %v3172
        %v3199 = vunpack.c.l.s4 1983009808
        %v3200 = vunpack.c.0.s8 %v3199
        %v3201 = vlaneseq
        %v3202 = vshrl.u32 %v3201, 7
        %v3203 = vsub.s32 %v3200, %v3202
        %v3204 = vrot.slane %v3197, %v3203
        %v3205 = vcombine.low %v3180, %v3188
        %v3206 = vcombine.high %v3180, %v3188
        %v3208 = vunpack.c.l.s4 1934713408
        %v3209 = vunpack.c.0.s8 %v3208
        %v3210 = vlaneseq
        %v3211 = vshrl.u32 %v3210, 7
        %v3212 = vsub.s32 %v3209, %v3211
        %v3213 = vrot.slane %v3205, %v3212
        %v3215 = vunpack.c.l.s4 1934713408
        %v3216 = vunpack.c.0.s8 %v3215
        %v3217 = vlaneseq
        %v3218 = vshrl.u32 %v3217, 7
        %v3219 = vsub.s32 %v3216, %v3218
        %v3220 = vrot.slane %v3206, %v3219
        %v3221 = vcombine.low %v3196, %v3204
        %v3222 = vcombine.high %v3196, %v3204
        %v3224 = vunpack.c.l.s4 1934713408
        %v3225 = vunpack.c.0.s8 %v3224
        %v3226 = vlaneseq
        %v3227 = vshrl.u32 %v3226, 7
        %v3228 = vsub.s32 %v3225, %v3227
        %v3229 = vrot.slane %v3221, %v3228
        %v3231 = vunpack.c.l.s4 1934713408
        %v3232 = vunpack.c.0.s8 %v3231
        %v3233 = vlaneseq
        %v3234 = vshrl.u32 %v3233, 7
        %v3235 = vsub.s32 %v3232, %v3234
        %v3236 = vrot.slane %v3222, %v3235
        %v3237 = vcombine.low %v3213, %v3229
        %v3238 = vcombine.high %v3213, %v3229
        %v3239 = vcombine.low %v3220, %v3236
        %v3240 = vcombine.high %v3220, %v3236
        %3242 = vrot.lane.b32.xlu0 %v3238, 8
        %v3243 = vpop.permute.xlu0 %3242
        %3246 = vrot.lane.b32.xlu0 %v3239, 16
        %v3247 = vpop.permute.xlu0 %3246
        %3250 = vrot.lane.b32.xlu0 %v3240, 24
        %v3251 = vpop.permute.xlu0 %3250
        %v3253 = vsel %vm1893, %v3237, %v3243
        %v3254 = vsel %vm3069, %v3253, %v3247
        %v3255 = vsel %vm3071, %v3254, %v3251
        %v3256 = vpack.c.bf16 %v3255, %v3072
        %v3257 = vld [vmem:[%s8] sm:$0xf]
        %v3258 = vld [vmem:[%s8 + $0x4] sm:$0xf]
        %v3259 = vld [vmem:[%s8 + $0x8] sm:$0xf]
        %v3260 = vld [vmem:[%s8 + $0xc] sm:$0xf]
        %v3265 = vunpack.c.l.b16 %v3257
        %v3266 = vunpack.c.l.b16 %v3258
        %v3267 = vunpack.c.l.b16 %v3259
        %v3268 = vunpack.c.l.b16 %v3260
        %v3269 = vpack.c.b16 %v3266, %v3265
        %v3270 = vpack.c.b16 %v3268, %v3267
        %v3274 = vsel %vm802, %v3256, 0
        %3276 = vmatprep.subr.bf16.mxu0 0
        %3277 = vmatpush1.bf16.msra.mxu0 0
        %3278 = vmatprep.subr.bf16.mxu0 0
        %3279 = vmatpush1.bf16.msra.mxu0 0
        %3280 = vmatprep.subr.bf16.mxu0 0
        %3281 = vmatpush1.bf16.msra.mxu0 0
        %3282 = vmatprep.subr.bf16.mxu0 0
        %3283 = vmatpush1.bf16.msra.mxu0 0
        %3284 = vmatprep.subr.bf16.mxu0 0
        %3285 = vmatpush1.bf16.msra.mxu0 0
        %3286 = vmatprep.subr.bf16.mxu0 0
        %3287 = vmatpush1.bf16.msra.mxu0 0
        %3288 = vmatprep.subr.bf16.mxu0 0
        %3289 = vmatpush1.bf16.msra.mxu0 %v3270
        %3290 = vmatprep.subr.bf16.mxu0 0
        %3291 = vmatpush1.bf16.msra.mxu0 %v3269
        %3292 = vmatprep.subr.bf16.mxu0 0
        %3293 = vmatpush2.bf16.msra.mxu0 0
        %3294 = vmatprep.subr.bf16.mxu0 0
        %3295 = vmatpush2.bf16.msra.mxu0 0
        %3296 = vmatprep.subr.bf16.mxu0 0
        %3297 = vmatpush2.bf16.msra.mxu0 0
        %3298 = vmatprep.subr.bf16.mxu0 0
        %3299 = vmatpush2.bf16.msra.mxu0 0
        %3300 = vmatprep.subr.bf16.mxu0 0
        %3301 = vmatpush2.bf16.msra.mxu0 0
        %3302 = vmatprep.subr.bf16.mxu0 0
        %3303 = vmatpush2.bf16.msra.mxu0 0
        %3304 = vmatprep.subr.bf16.mxu0 0
        %3305 = vmatpush2.bf16.msra.mxu0 0
        %3306 = vmatprep.subr.bf16.mxu0 0
        %3307 = vmatpush2.bf16.msra.mxu0 0
        %3308 = vmatprep.mubr.bf16.mxu0 0
        %3309 = vmatmul.mubr.bf16.gmra.mxu0 %v3274
        %v3310 = vpop.f32.mrf.mxu0
        %v3311 = vadd.f32 0.0, %v3310
        %v3312 = vpop.f32.mrf.mxu0
        %v3313 = vpop.f32.mrf.mxu0
        %v3314 = vadd.f32 0.0, %v3313
        %v3315 = vpop.f32.mrf.mxu0
        %3316 = vdwg.mxu0
        %v3317 = vld [vmem:[%s9] sm:$0x1]
        %v3318 = vld [vmem:[%s10] sm:$0x1]
        %3320 = vrot.lane.b32.xlu0 %v3314, 96
        %v3321 = vpop.permute.xlu0 %3320
        %v3323 = vsub.f32 %v3311, %v3321
        %v3325 = vlaneseq
        %v3326 = vshrl.u32 %v3325, 7
        %v3327 = vsub.s32 0, %v3326
        %v3328 = vrot.slane %v3317, %v3327
        %v3330 = vadd.f32 %v3323, %v3328
        %3332 = vrot.lane.b32.xlu0 %v3311, 96
        %v3333 = vpop.permute.xlu0 %3332
        %v3335 = vadd.f32 %v3314, %v3333
        %v3337 = vlaneseq
        %v3338 = vshrl.u32 %v3337, 7
        %v3339 = vsub.s32 0, %v3338
        %v3340 = vrot.slane %v3318, %v3339
        %v3342 = vadd.f32 %v3335, %v3340
        %v3343 = vadd.f32 %v799, %v3330
        %3345 = vrot.lane.b32.xlu0 %v3342, 32
        %v3346 = vpop.permute.xlu0 %3345
        %v3348 = vadd.f32 %v799, %v3346
        %v3349 = vld [vmem:[%s11] sm:$0x1]
        %v3350 = vld [vmem:[%s12] sm:$0x1]
        %v3351 = vsel %vm802, %v3343, 0.0
        %3352 = vadd.xlane.f32.xlu0 %v3351
        %v3353 = vpop.xlane.xlu0 %3352
        %v3354 = vmul.f32 %v3353, %v806
        %v3355 = vsub.f32 %v3343, %v3354
        %v3356 = vmul.f32 %v3355, %v3355
        %v3357 = vsel %vm802, %v3356, 0.0
        %3358 = vadd.xlane.f32.xlu0 %v3357
        %v3359 = vpop.xlane.xlu0 %3358
        %v3360 = vmul.f32 %v3359, %v806
        %v3361 = vadd.f32 %v3360, 1e-05
        %v3362 = vrsqrt.pop %v3361
        %v3363 = vmul.f32 %v3355, %v3362
        %v3365 = vlaneseq
        %v3366 = vshrl.u32 %v3365, 7
        %v3367 = vsub.s32 0, %v3366
        %v3368 = vrot.slane %v3349, %v3367
        %v3370 = vmul.f32 %v3363, %v3368
        %v3372 = vlaneseq
        %v3373 = vshrl.u32 %v3372, 7
        %v3374 = vsub.s32 0, %v3373
        %v3375 = vrot.slane %v3350, %v3374
        %v3377 = vadd.f32 %v3370, %v3375
        %v3378 = vld [vmem:[%s13] sm:$0x1]
        %v3379 = vld [vmem:[%s14] sm:$0x1]
        %3381 = vrot.lane.b32.xlu0 %v3348, 96
        %v3382 = vpop.permute.xlu0 %3381
        %v3384 = vsel %vm802, %v3382, 0.0
        %3385 = vadd.xlane.f32.xlu0 %v3384
        %v3386 = vpop.xlane.xlu0 %3385
        %v3387 = vmul.f32 %v3386, %v806
        %v3388 = vsub.f32 %v3348, %v3387
        %v3389 = vmul.f32 %v3388, %v3388
        %3391 = vrot.lane.b32.xlu0 %v3389, 96
        %v3392 = vpop.permute.xlu0 %3391
        %v3394 = vsel %vm802, %v3392, 0.0
        %3395 = vadd.xlane.f32.xlu0 %v3394
        %v3396 = vpop.xlane.xlu0 %3395
        %v3397 = vmul.f32 %v3396, %v806
        %v3398 = vadd.f32 %v3397, 1e-05
        %v3399 = vrsqrt.pop %v3398
        %v3400 = vmul.f32 %v3388, %v3399
        %v3402 = vlaneseq
        %v3403 = vshrl.u32 %v3402, 7
        %v3404 = vsub.s32 0, %v3403
        %v3405 = vrot.slane %v3378, %v3404
        %3406 = vrot.lane.b32.xlu0 %v3405, 32
        %v3407 = vpop.permute.xlu0 %3406
        %v3409 = vmul.f32 %v3400, %v3407
        %v3411 = vlaneseq
        %v3412 = vshrl.u32 %v3411, 7
        %v3413 = vsub.s32 0, %v3412
        %v3414 = vrot.slane %v3379, %v3413
        %3415 = vrot.lane.b32.xlu0 %v3414, 32
        %v3416 = vpop.permute.xlu0 %3415
        %v3418 = vadd.f32 %v3409, %v3416
        %3420 = vrot.lane.b32.xlu0 %v3418, 96
        %v3421 = vpop.permute.xlu0 %3420
        %v3423 = vpack.c.bf16 %v3421, %v3377
        %v3424 = vld [vmem:[%s15] sm:$0xff]
        %v3425 = vld [vmem:[%s15 + $0x8] sm:$0xff]
        %v3426 = vld [vmem:[%s15 + $0x10] sm:$0xff]
        %v3427 = vld [vmem:[%s15 + $0x18] sm:$0xff]
        %v3432 = vunpack.c.l.b16 %v3424
        %v3433 = vunpack.c.h.b16 %v3424
        %v3434 = vunpack.c.l.b16 %v3425
        %v3435 = vunpack.c.h.b16 %v3425
        %v3436 = vunpack.c.l.b16 %v3426
        %v3437 = vunpack.c.h.b16 %v3426
        %v3438 = vunpack.c.l.b16 %v3427
        %v3439 = vunpack.c.h.b16 %v3427
        %v3440 = vpack.c.b16 %v3434, %v3432
        %v3441 = vpack.c.b16 %v3435, %v3433
        %v3442 = vpack.c.b16 %v3438, %v3436
        %v3443 = vpack.c.b16 %v3439, %v3437
        %v3449 = vsel %vm802, %v3423, 0
        %3451 = vmatprep.subr.bf16.mxu0 0
        %3452 = vmatpush1.bf16.msra.mxu0 0
        %3453 = vmatprep.subr.bf16.mxu0 0
        %3454 = vmatpush1.bf16.msra.mxu0 0
        %3455 = vmatprep.subr.bf16.mxu0 0
        %3456 = vmatpush1.bf16.msra.mxu0 0
        %3457 = vmatprep.subr.bf16.mxu0 0
        %3458 = vmatpush1.bf16.msra.mxu0 0
        %3459 = vmatprep.subr.bf16.mxu0 0
        %3460 = vmatpush1.bf16.msra.mxu0 0
        %3461 = vmatprep.subr.bf16.mxu0 0
        %3462 = vmatpush1.bf16.msra.mxu0 0
        %3463 = vmatprep.subr.bf16.mxu0 %v3443
        %3464 = vmatpush1.bf16.msra.mxu0 %v3442
        %3465 = vmatprep.subr.bf16.mxu0 %v3441
        %3466 = vmatpush1.bf16.msra.mxu0 %v3440
        %3467 = vmatprep.subr.bf16.mxu0 0
        %3468 = vmatpush2.bf16.msra.mxu0 0
        %3469 = vmatprep.subr.bf16.mxu0 0
        %3470 = vmatpush2.bf16.msra.mxu0 0
        %3471 = vmatprep.subr.bf16.mxu0 0
        %3472 = vmatpush2.bf16.msra.mxu0 0
        %3473 = vmatprep.subr.bf16.mxu0 0
        %3474 = vmatpush2.bf16.msra.mxu0 0
        %3475 = vmatprep.subr.bf16.mxu0 0
        %3476 = vmatpush2.bf16.msra.mxu0 0
        %3477 = vmatprep.subr.bf16.mxu0 0
        %3478 = vmatpush2.bf16.msra.mxu0 0
        %3479 = vmatprep.subr.bf16.mxu0 0
        %3480 = vmatpush2.bf16.msra.mxu0 0
        %3481 = vmatprep.subr.bf16.mxu0 0
        %3482 = vmatpush2.bf16.msra.mxu0 0
        %3483 = vmatprep.mubr.bf16.mxu0 0
        %3484 = vmatmul.mubr.bf16.gmra.mxu0 %v3449
        %v3485 = vpop.f32.mrf.mxu0
        %v3486 = vadd.f32 0.0, %v3485
        %v3487 = vpop.f32.mrf.mxu0
        %v3488 = vadd.f32 0.0, %v3487
        %v3489 = vpop.f32.mrf.mxu0
        %v3490 = vadd.f32 0.0, %v3489
        %v3491 = vpop.f32.mrf.mxu0
        %v3492 = vadd.f32 0.0, %v3491
        %3493 = vdwg.mxu0
        %v3494 = vld [vmem:[%s16] sm:$0x1]
        %v3495 = vld [vmem:[#allocation2] sm:$0x1]
        %v3496 = vsub.f32 %v3486, %v3492
        %v3498 = vlaneseq
        %v3499 = vshrl.u32 %v3498, 7
        %v3500 = vsub.s32 0, %v3499
        %v3501 = vrot.slane %v3494, %v3500
        %v3503 = vadd.f32 %v3496, %v3501
        %v3504 = vadd.f32 %v3490, %v3488
        %v3506 = vlaneseq
        %v3507 = vshrl.u32 %v3506, 7
        %v3508 = vsub.s32 0, %v3507
        %v3509 = vrot.slane %v3495, %v3508
        %v3511 = vadd.f32 %v3504, %v3509
        %v3512 = vmax.f32 %v3503, 0.0
        %v3513 = vmax.f32 %v3511, 0.0
        %v3514 = vpack.c.bf16 %v3513, %v3512
        %v3515 = vld [vmem:[%s18] sm:$0xf]
        %v3516 = vld [vmem:[%s18 + $0x4] sm:$0xf]
        %v3517 = vld [vmem:[%s18 + $0x8] sm:$0xf]
        %v3518 = vld [vmem:[%s18 + $0xc] sm:$0xf]
        %v3519 = vld [vmem:[%s18 + $0x10] sm:$0xf]
        %v3520 = vld [vmem:[%s18 + $0x14] sm:$0xf]
        %v3521 = vld [vmem:[%s18 + $0x18] sm:$0xf]
        %v3522 = vld [vmem:[%s18 + $0x1c] sm:$0xf]
        %v3523 = vld [vmem:[%s18 + $0x20] sm:$0xf]
        %v3524 = vld [vmem:[%s18 + $0x24] sm:$0xf]
        %v3525 = vld [vmem:[%s18 + $0x28] sm:$0xf]
        %v3526 = vld [vmem:[%s18 + $0x2c] sm:$0xf]
        %v3527 = vld [vmem:[%s18 + $0x30] sm:$0xf]
        %v3528 = vld [vmem:[%s18 + $0x34] sm:$0xf]
        %v3529 = vld [vmem:[%s18 + $0x38] sm:$0xf]
        %v3530 = vld [vmem:[%s18 + $0x3c] sm:$0xf]
        %v3547 = vunpack.c.l.b16 %v3515
        %v3548 = vunpack.c.l.b16 %v3516
        %v3549 = vunpack.c.l.b16 %v3517
        %v3550 = vunpack.c.l.b16 %v3518
        %v3551 = vunpack.c.l.b16 %v3519
        %v3552 = vunpack.c.l.b16 %v3520
        %v3553 = vunpack.c.l.b16 %v3521
        %v3554 = vunpack.c.l.b16 %v3522
        %v3555 = vunpack.c.l.b16 %v3523
        %v3556 = vunpack.c.l.b16 %v3524
        %v3557 = vunpack.c.l.b16 %v3525
        %v3558 = vunpack.c.l.b16 %v3526
        %v3559 = vunpack.c.l.b16 %v3527
        %v3560 = vunpack.c.l.b16 %v3528
        %v3561 = vunpack.c.l.b16 %v3529
        %v3562 = vunpack.c.l.b16 %v3530
        %v3563 = vpack.c.b16 %v3548, %v3547
        %v3564 = vpack.c.b16 %v3550, %v3549
        %v3565 = vpack.c.b16 %v3552, %v3551
        %v3566 = vpack.c.b16 %v3554, %v3553
        %v3567 = vpack.c.b16 %v3556, %v3555
        %v3568 = vpack.c.b16 %v3558, %v3557
        %v3569 = vpack.c.b16 %v3560, %v3559
        %v3570 = vpack.c.b16 %v3562, %v3561
        %3579 = vmatprep.subr.bf16.mxu0 0
        %3580 = vmatpush1.bf16.msra.mxu0 %v3570
        %3581 = vmatprep.subr.bf16.mxu0 0
        %3582 = vmatpush1.bf16.msra.mxu0 %v3569
        %3583 = vmatprep.subr.bf16.mxu0 0
        %3584 = vmatpush1.bf16.msra.mxu0 %v3568
        %3585 = vmatprep.subr.bf16.mxu0 0
        %3586 = vmatpush1.bf16.msra.mxu0 %v3567
        %3587 = vmatprep.subr.bf16.mxu0 0
        %3588 = vmatpush1.bf16.msra.mxu0 %v3566
        %3589 = vmatprep.subr.bf16.mxu0 0
        %3590 = vmatpush1.bf16.msra.mxu0 %v3565
        %3591 = vmatprep.subr.bf16.mxu0 0
        %3592 = vmatpush1.bf16.msra.mxu0 %v3564
        %3593 = vmatprep.subr.bf16.mxu0 0
        %3594 = vmatpush1.bf16.msra.mxu0 %v3563
        %3595 = vmatprep.subr.bf16.mxu0 0
        %3596 = vmatpush2.bf16.msra.mxu0 0
        %3597 = vmatprep.subr.bf16.mxu0 0
        %3598 = vmatpush2.bf16.msra.mxu0 0
        %3599 = vmatprep.subr.bf16.mxu0 0
        %3600 = vmatpush2.bf16.msra.mxu0 0
        %3601 = vmatprep.subr.bf16.mxu0 0
        %3602 = vmatpush2.bf16.msra.mxu0 0
        %3603 = vmatprep.subr.bf16.mxu0 0
        %3604 = vmatpush2.bf16.msra.mxu0 0
        %3605 = vmatprep.subr.bf16.mxu0 0
        %3606 = vmatpush2.bf16.msra.mxu0 0
        %3607 = vmatprep.subr.bf16.mxu0 0
        %3608 = vmatpush2.bf16.msra.mxu0 0
        %3609 = vmatprep.subr.bf16.mxu0 0
        %3610 = vmatpush2.bf16.msra.mxu0 0
        %3611 = vmatprep.mubr.bf16.mxu0 0
        %3612 = vmatmul.mubr.bf16.gmra.mxu0 %v3514
        %v3613 = vpop.f32.mrf.mxu0
        %v3614 = vadd.f32 0.0, %v3613
        %v3615 = vpop.f32.mrf.mxu0
        %v3616 = vpop.f32.mrf.mxu0
        %v3617 = vadd.f32 0.0, %v3616
        %v3618 = vpop.f32.mrf.mxu0
        %3619 = vdwg.mxu0
        %v3620 = vld [vmem:[#allocation4] sm:$0x1]
        %v3621 = vld [vmem:[#allocation6] sm:$0x1]
        %3623 = vrot.lane.b32.xlu0 %v3617, 96
        %v3624 = vpop.permute.xlu0 %3623
        %v3626 = vsub.f32 %v3614, %v3624
        %v3628 = vlaneseq
        %v3629 = vshrl.u32 %v3628, 7
        %v3630 = vsub.s32 0, %v3629
        %v3631 = vrot.slane %v3620, %v3630
        %v3633 = vadd.f32 %v3626, %v3631
        %3635 = vrot.lane.b32.xlu0 %v3614, 96
        %v3636 = vpop.permute.xlu0 %3635
        %v3638 = vadd.f32 %v3617, %v3636
        %v3640 = vlaneseq
        %v3641 = vshrl.u32 %v3640, 7
        %v3642 = vsub.s32 0, %v3641
        %v3643 = vrot.slane %v3621, %v3642
        %v3645 = vadd.f32 %v3638, %v3643
        %v3646 = vadd.f32 %v3343, %v3633
        %3648 = vrot.lane.b32.xlu0 %v3645, 32
        %v3649 = vpop.permute.xlu0 %3648
        %v3651 = vadd.f32 %v3348, %v3649
        %v3652 = vld [vmem:[%s21] sm:$0x1]
        %v3653 = vld [vmem:[%s22] sm:$0x1]
        %v3654 = vsel %vm802, %v3646, 0.0
        %3655 = vadd.xlane.f32.xlu0 %v3654
        %v3656 = vpop.xlane.xlu0 %3655
        %v3657 = vmul.f32 %v3656, %v806
        %v3658 = vsub.f32 %v3646, %v3657
        %v3659 = vmul.f32 %v3658, %v3658
        %v3660 = vsel %vm802, %v3659, 0.0
        %3661 = vadd.xlane.f32.xlu0 %v3660
        %v3662 = vpop.xlane.xlu0 %3661
        %v3663 = vmul.f32 %v3662, %v806
        %v3664 = vadd.f32 %v3663, 1e-05
        %v3665 = vrsqrt.pop %v3664
        %v3666 = vmul.f32 %v3658, %v3665
        %v3668 = vlaneseq
        %v3669 = vshrl.u32 %v3668, 7
        %v3670 = vsub.s32 0, %v3669
        %v3671 = vrot.slane %v3652, %v3670
        %v3673 = vmul.f32 %v3666, %v3671
        %v3675 = vlaneseq
        %v3676 = vshrl.u32 %v3675, 7
        %v3677 = vsub.s32 0, %v3676
        %v3678 = vrot.slane %v3653, %v3677
        %v3680 = vadd.f32 %v3673, %v3678
        %v3681 = vld [vmem:[%s23] sm:$0x1]
        %v3682 = vld [vmem:[%s24] sm:$0x1]
        %3684 = vrot.lane.b32.xlu0 %v3651, 96
        %v3685 = vpop.permute.xlu0 %3684
        %v3687 = vsel %vm802, %v3685, 0.0
        %3688 = vadd.xlane.f32.xlu0 %v3687
        %v3689 = vpop.xlane.xlu0 %3688
        %v3690 = vmul.f32 %v3689, %v806
        %v3691 = vsub.f32 %v3651, %v3690
        %v3692 = vmul.f32 %v3691, %v3691
        %3694 = vrot.lane.b32.xlu0 %v3692, 96
        %v3695 = vpop.permute.xlu0 %3694
        %v3697 = vsel %vm802, %v3695, 0.0
        %3698 = vadd.xlane.f32.xlu0 %v3697
        %v3699 = vpop.xlane.xlu0 %3698
        %v3700 = vmul.f32 %v3699, %v806
        %v3701 = vadd.f32 %v3700, 1e-05
        %v3702 = vrsqrt.pop %v3701
        %v3703 = vmul.f32 %v3691, %v3702
        %v3705 = vlaneseq
        %v3706 = vshrl.u32 %v3705, 7
        %v3707 = vsub.s32 0, %v3706
        %v3708 = vrot.slane %v3681, %v3707
        %3709 = vrot.lane.b32.xlu0 %v3708, 32
        %v3710 = vpop.permute.xlu0 %3709
        %v3712 = vmul.f32 %v3703, %v3710
        %v3714 = vlaneseq
        %v3715 = vshrl.u32 %v3714, 7
        %v3716 = vsub.s32 0, %v3715
        %v3717 = vrot.slane %v3682, %v3716
        %3718 = vrot.lane.b32.xlu0 %v3717, 32
        %v3719 = vpop.permute.xlu0 %3718
        %v3721 = vadd.f32 %v3712, %v3719
        %v3722 = vsel %vm802, %v3680, %v3721
        %vm3723 = vcmask 523264
        %3724 = vst.msk [vmem:[%s797] sm:$0xff] %vm3723, %v3722
        %p3725 = scmp.lt.s32.totalorder %s38, 1
        %s3726 = scalar_select %p3725, %s38, 1
        %s3727 = smul.addr %s3726, 8
        %s3728 = scalar_lea.vmem %s25, %s3727
        // Predicated region
        $region133: #{complex_transformer_forward.5} parent=119 // pred_check
          %p3729 = pneg %p586
        $region134: #{complex_transformer_forward.5} parent=119 // pred_check_branch
          %3731 = sbr.rel (%p3729) target = $region136
        $region135: #{complex_transformer_forward.5} parent=119 // pred_region
          _
        $region136: #{complex_transformer_forward.5} parent=119 // pred_fallthru
          _
      $region120: #{complex_transformer_forward.5} parent=5 // pred_fallthru
        _
      %p3732 = scmp.le.s32.totalorder 2, %s33
      // Predicated region
      $region137: #{complex_transformer_forward.5} parent=5 // pred_check
        %p3733 = pneg %p3732
      $region138: #{complex_transformer_forward.5} parent=5 // pred_check_branch
        %3735 = sbr.rel (%p3733) target = $region140
      $region139: #{complex_transformer_forward.5} parent=5 // pred_region
        %s3736 = ssub.s32 %s33, 2
        // Predicated region
        $region141: #{complex_transformer_forward.5} parent=139 // pred_check
          %p3737 = pneg %p592
        $region142: #{complex_transformer_forward.5} parent=139 // pred_check_branch
          %3739 = sbr.rel (%p3737) target = $region144
        $region143: #{complex_transformer_forward.5} parent=139 // pred_region
          %p3740 = scmp.lt.s32.totalorder %s39, 1
          %s3741 = scalar_select %p3740, %s39, 1
          %s3742 = smul.addr %s3741, 8
          %s3743 = scalar_lea.vmem %s25, %s3742
        $region144: #{complex_transformer_forward.5} parent=139 // pred_fallthru
          _
      $region140: #{complex_transformer_forward.5} parent=5 // pred_fallthru
        _
    $region6: #{complex_transformer_forward.5} parent=1 // loop_footer
      %s37 = sadd.s32 1, %s33
    $region7: #{complex_transformer_forward.5} parent=1 // loop_footer_branch
      %32 = sbr.rel target = $region3
    $region8: #{complex_transformer_forward.5} parent=1 // loop_exit
      _
    %3744 = vsyncpa [#allocation3], 1
    %s3745 = scalar_lea.sflag [#allocation3], 1
    %3746 = vsyncpa %s3745, 1
    %3747 = vsyncpa [#allocation5], 1

// kernel: complex_transformer_forward.4
$region0: #{complex_transformer_forward.4}
  #allocation0 [shape = 'u32[]', space=smem, size = 0x4, offset = 0x4, fixed_abs, tag = 'smem constant byte address 0x4 - core index']
  #allocation1 [shape = 'u32[144,128]{1,0:T(1,128)}', space=vmem, size = 0x12000, scoped, tag = 'internal scratch']
  %s0 = inlined_call_operand.vmem [shape: f32[16,64], index: 0, kind: input, shape index: {}]
  %s1 = inlined_call_operand.vmem [shape: f32[1,32], index: 1, kind: input, shape index: {}]
  %s2 = inlined_call_operand.vmem [shape: f32[1,32], index: 2, kind: input, shape index: {}]
  %s3 = inlined_call_operand.vmem [shape: f32[1,32], index: 3, kind: input, shape index: {}]
  %s4 = inlined_call_operand.vmem [shape: f32[1,32], index: 4, kind: input, shape index: {}]
  %s5 = inlined_call_operand.vmem [shape: bf16[32,192], index: 5, kind: input, shape index: {}]
  %s6 = inlined_call_operand.vmem [shape: f32[1,96], index: 6, kind: input, shape index: {}]
  %s7 = inlined_call_operand.vmem [shape: f32[1,96], index: 7, kind: input, shape index: {}]
  %s8 = inlined_call_operand.vmem [shape: bf16[32,64], index: 8, kind: input, shape index: {}]
  %s9 = inlined_call_operand.vmem [shape: f32[1,32], index: 9, kind: input, shape index: {}]
  %s10 = inlined_call_operand.vmem [shape: f32[1,32], index: 10, kind: input, shape index: {}]
  %s11 = inlined_call_operand.vmem [shape: f32[1,32], index: 11, kind: input, shape index: {}]
  %s12 = inlined_call_operand.vmem [shape: f32[1,32], index: 12, kind: input, shape index: {}]
  %s13 = inlined_call_operand.vmem [shape: f32[1,32], index: 13, kind: input, shape index: {}]
  %s14 = inlined_call_operand.vmem [shape: f32[1,32], index: 14, kind: input, shape index: {}]
  %s15 = inlined_call_operand.vmem [shape: bf16[32,256], index: 15, kind: input, shape index: {}]
  %s16 = inlined_call_operand.vmem [shape: f32[1,128], index: 16, kind: input, shape index: {}]
  %s17 = inlined_call_operand.vmem [shape: f32[1,128], index: 17, kind: input, shape index: {}]
  %s18 = inlined_call_operand.vmem [shape: bf16[128,64], index: 18, kind: input, shape index: {}]
  %s19 = inlined_call_operand.vmem [shape: f32[1,32], index: 19, kind: input, shape index: {}]
  %s20 = inlined_call_operand.vmem [shape: f32[1,32], index: 20, kind: input, shape index: {}]
  %s21 = inlined_call_operand.vmem [shape: f32[1,32], index: 21, kind: input, shape index: {}]
  %s22 = inlined_call_operand.vmem [shape: f32[1,32], index: 22, kind: input, shape index: {}]
  %s23 = inlined_call_operand.vmem [shape: f32[1,32], index: 23, kind: input, shape index: {}]
  %s24 = inlined_call_operand.vmem [shape: f32[1,32], index: 24, kind: input, shape index: {}]
  %s25 = inlined_call_operand.vmem [shape: f32[16,64], index: 25, kind: output, shape index: {}]
  %s26 = sld [smem:[#allocation0]]
  $region133: #{complex_transformer_forward.4} parent=0
    _
  %s28 = ssub.s32 1, %s26
  %s29 = scalar_select 0, %s28, %s26
  loop: start=0, step=1, limit=4
  $region2: #{complex_transformer_forward.4} parent=0 // loop_pre_header
    _
  $region3: #{complex_transformer_forward.4} parent=0 // loop_header
    %s31 = sphi 0, %s35
    %p32 = scmp.ge.s32.totalorder %s31, 4
    %s41 = sphi 0, %s43
    %s44 = sphi 0, %s41
    %s45 = sphi 0, %s44
    %s61 = sphi 0, %s45
    %s65 = sphi 0, %s65
    %s67 = sphi 0, %s65
    %s68 = sphi 0, %s67
    %s82 = sphi 0, %s68
    %s86 = sphi 0, %s86
    %s88 = sphi 0, %s86
    %s89 = sphi 0, %s88
    %s103 = sphi 0, %s89
    %s107 = sphi 0, %s107
    %s109 = sphi 0, %s107
    %s110 = sphi 0, %s109
    %s124 = sphi 0, %s110
    %s128 = sphi 0, %s128
    %s130 = sphi 0, %s128
    %s131 = sphi 0, %s130
    %s145 = sphi 0, %s131
    %s149 = sphi 0, %s149
    %s151 = sphi 0, %s149
    %s152 = sphi 0, %s151
    %s166 = sphi 0, %s152
    %s170 = sphi 0, %s170
    %s172 = sphi 0, %s170
    %s173 = sphi 0, %s172
    %s187 = sphi 0, %s173
    %s191 = sphi 0, %s191
    %s193 = sphi 0, %s191
    %s194 = sphi 0, %s193
    %s208 = sphi 0, %s194
    %s212 = sphi 0, %s212
    %s214 = sphi 0, %s212
    %s215 = sphi 0, %s214
    %s229 = sphi 0, %s215
    %s233 = sphi 0, %s233
    %s235 = sphi 0, %s233
    %s236 = sphi 0, %s235
    %s250 = sphi 0, %s236
    %s254 = sphi 0, %s254
    %s256 = sphi 0, %s254
    %s257 = sphi 0, %s256
    %s271 = sphi 0, %s257
    %s275 = sphi 0, %s275
    %s277 = sphi 0, %s275
    %s278 = sphi 0, %s277
    %s292 = sphi 0, %s278
    %s296 = sphi 0, %s296
    %s298 = sphi 0, %s296
    %s299 = sphi 0, %s298
    %s313 = sphi 0, %s299
    %s317 = sphi 0, %s317
    %s319 = sphi 0, %s317
    %s320 = sphi 0, %s319
    %s334 = sphi 0, %s320
    %s338 = sphi 0, %s338
    %s340 = sphi 0, %s338
    %s341 = sphi 0, %s340
    %s355 = sphi 0, %s341
    %s359 = sphi 0, %s359
    %s361 = sphi 0, %s359
    %s362 = sphi 0, %s361
    %s376 = sphi 0, %s362
    %s380 = sphi 0, %s380
    %s382 = sphi 0, %s380
    %s383 = sphi 0, %s382
    %s397 = sphi 0, %s383
    %s401 = sphi 0, %s401
    %s403 = sphi 0, %s401
    %s404 = sphi 0, %s403
    %s418 = sphi 0, %s404
    %s422 = sphi 0, %s422
    %s424 = sphi 0, %s422
    %s425 = sphi 0, %s424
    %s439 = sphi 0, %s425
    %s443 = sphi 0, %s443
    %s445 = sphi 0, %s443
    %s446 = sphi 0, %s445
    %s460 = sphi 0, %s446
    %s464 = sphi 0, %s464
    %s466 = sphi 0, %s464
    %s467 = sphi 0, %s466
    %s481 = sphi 0, %s467
    %s485 = sphi 0, %s485
    %s487 = sphi 0, %s485
    %s488 = sphi 0, %s487
    %s502 = sphi 0, %s488
    %s506 = sphi 0, %s506
    %s508 = sphi 0, %s506
    %s509 = sphi 0, %s508
    %s523 = sphi 0, %s509
    %s527 = sphi 0, %s527
    %s529 = sphi 0, %s527
    %s530 = sphi 0, %s529
    %s544 = sphi 0, %s530
    %s548 = sphi 0, %s548
    %s550 = sphi 0, %s548
    %s551 = sphi 0, %s550
    %s565 = sphi 0, %s551
    %s571 = sphi 0, %s573
    %s574 = sphi 0, %s571
    %s575 = sphi 0, %s574
    %s591 = sphi 0, %s575
  $region4: #{complex_transformer_forward.4} parent=0 // loop_header_branch
    %34 = sbr.rel (%p32) target = $region8
  $region5: #{complex_transformer_forward.4} parent=0 // loop_body
    %s36 = ssub.s32 %s31, 1
    %s37 = ssub.s32 %s31, 2
    %s38 = sadd.s32 %s31, 1
    %s39 = ssub.s32 %s31, %s38
    %p40 = scmp.eq.s32.totalorder %s39, 0
    %s42 = sadd.s32 %s41, 1
    %s43 = scalar_select %p40, %s41, %s42
    %p46 = pneg %p40
    %p47 = scmp.eq.s32.totalorder %s31, 1
    %p48 = por %p46, %p47
    %p49 = scmp.ne.s32.totalorder %s41, %s44
    %p50 = scmp.eq.s32.totalorder %s31, 0
    %p51 = por %p49, %p50
    %p52 = scmp.ne.s32.totalorder %s41, %s44
    %p53 = scmp.eq.s32.totalorder %s36, 1
    %p54 = por %p52, %p53
    %p55 = scmp.ne.s32.totalorder %s44, %s45
    %p56 = scmp.eq.s32.totalorder %s36, 0
    %p57 = por %p55, %p56
    %p58 = scmp.ne.s32.totalorder %s44, %s45
    %p59 = scmp.eq.s32.totalorder %s37, 1
    %p60 = por %p58, %p59
    %p62 = scmp.ne.s32.totalorder %s45, %s61
    %p63 = scmp.eq.s32.totalorder %s37, 0
    %p64 = por %p62, %p63
    %s66 = sadd.s32 %s65, 1
    %p69 = scmp.eq.s32.totalorder %s31, 1
    %p70 = scmp.ne.s32.totalorder %s65, %s67
    %p71 = scmp.eq.s32.totalorder %s31, 0
    %p72 = por %p70, %p71
    %p73 = scmp.ne.s32.totalorder %s65, %s67
    %p74 = scmp.eq.s32.totalorder %s36, 1
    %p75 = por %p73, %p74
    %p76 = scmp.ne.s32.totalorder %s67, %s68
    %p77 = scmp.eq.s32.totalorder %s36, 0
    %p78 = por %p76, %p77
    %p79 = scmp.ne.s32.totalorder %s67, %s68
    %p80 = scmp.eq.s32.totalorder %s37, 1
    %p81 = por %p79, %p80
    %p83 = scmp.ne.s32.totalorder %s68, %s82
    %p84 = scmp.eq.s32.totalorder %s37, 0
    %p85 = por %p83, %p84
    %s87 = sadd.s32 %s86, 1
    %p90 = scmp.eq.s32.totalorder %s31, 1
    %p91 = scmp.ne.s32.totalorder %s86, %s88
    %p92 = scmp.eq.s32.totalorder %s31, 0
    %p93 = por %p91, %p92
    %p94 = scmp.ne.s32.totalorder %s86, %s88
    %p95 = scmp.eq.s32.totalorder %s36, 1
    %p96 = por %p94, %p95
    %p97 = scmp.ne.s32.totalorder %s88, %s89
    %p98 = scmp.eq.s32.totalorder %s36, 0
    %p99 = por %p97, %p98
    %p100 = scmp.ne.s32.totalorder %s88, %s89
    %p101 = scmp.eq.s32.totalorder %s37, 1
    %p102 = por %p100, %p101
    %p104 = scmp.ne.s32.totalorder %s89, %s103
    %p105 = scmp.eq.s32.totalorder %s37, 0
    %p106 = por %p104, %p105
    %s108 = sadd.s32 %s107, 1
    %p111 = scmp.eq.s32.totalorder %s31, 1
    %p112 = scmp.ne.s32.totalorder %s107, %s109
    %p113 = scmp.eq.s32.totalorder %s31, 0
    %p114 = por %p112, %p113
    %p115 = scmp.ne.s32.totalorder %s107, %s109
    %p116 = scmp.eq.s32.totalorder %s36, 1
    %p117 = por %p115, %p116
    %p118 = scmp.ne.s32.totalorder %s109, %s110
    %p119 = scmp.eq.s32.totalorder %s36, 0
    %p120 = por %p118, %p119
    %p121 = scmp.ne.s32.totalorder %s109, %s110
    %p122 = scmp.eq.s32.totalorder %s37, 1
    %p123 = por %p121, %p122
    %p125 = scmp.ne.s32.totalorder %s110, %s124
    %p126 = scmp.eq.s32.totalorder %s37, 0
    %p127 = por %p125, %p126
    %s129 = sadd.s32 %s128, 1
    %p132 = scmp.eq.s32.totalorder %s31, 1
    %p133 = scmp.ne.s32.totalorder %s128, %s130
    %p134 = scmp.eq.s32.totalorder %s31, 0
    %p135 = por %p133, %p134
    %p136 = scmp.ne.s32.totalorder %s128, %s130
    %p137 = scmp.eq.s32.totalorder %s36, 1
    %p138 = por %p136, %p137
    %p139 = scmp.ne.s32.totalorder %s130, %s131
    %p140 = scmp.eq.s32.totalorder %s36, 0
    %p141 = por %p139, %p140
    %p142 = scmp.ne.s32.totalorder %s130, %s131
    %p143 = scmp.eq.s32.totalorder %s37, 1
    %p144 = por %p142, %p143
    %p146 = scmp.ne.s32.totalorder %s131, %s145
    %p147 = scmp.eq.s32.totalorder %s37, 0
    %p148 = por %p146, %p147
    %s150 = sadd.s32 %s149, 1
    %p153 = scmp.eq.s32.totalorder %s31, 1
    %p154 = scmp.ne.s32.totalorder %s149, %s151
    %p155 = scmp.eq.s32.totalorder %s31, 0
    %p156 = por %p154, %p155
    %p157 = scmp.ne.s32.totalorder %s149, %s151
    %p158 = scmp.eq.s32.totalorder %s36, 1
    %p159 = por %p157, %p158
    %p160 = scmp.ne.s32.totalorder %s151, %s152
    %p161 = scmp.eq.s32.totalorder %s36, 0
    %p162 = por %p160, %p161
    %p163 = scmp.ne.s32.totalorder %s151, %s152
    %p164 = scmp.eq.s32.totalorder %s37, 1
    %p165 = por %p163, %p164
    %p167 = scmp.ne.s32.totalorder %s152, %s166
    %p168 = scmp.eq.s32.totalorder %s37, 0
    %p169 = por %p167, %p168
    %s171 = sadd.s32 %s170, 1
    %p174 = scmp.eq.s32.totalorder %s31, 1
    %p175 = scmp.ne.s32.totalorder %s170, %s172
    %p176 = scmp.eq.s32.totalorder %s31, 0
    %p177 = por %p175, %p176
    %p178 = scmp.ne.s32.totalorder %s170, %s172
    %p179 = scmp.eq.s32.totalorder %s36, 1
    %p180 = por %p178, %p179
    %p181 = scmp.ne.s32.totalorder %s172, %s173
    %p182 = scmp.eq.s32.totalorder %s36, 0
    %p183 = por %p181, %p182
    %p184 = scmp.ne.s32.totalorder %s172, %s173
    %p185 = scmp.eq.s32.totalorder %s37, 1
    %p186 = por %p184, %p185
    %p188 = scmp.ne.s32.totalorder %s173, %s187
    %p189 = scmp.eq.s32.totalorder %s37, 0
    %p190 = por %p188, %p189
    %s192 = sadd.s32 %s191, 1
    %p195 = scmp.eq.s32.totalorder %s31, 1
    %p196 = scmp.ne.s32.totalorder %s191, %s193
    %p197 = scmp.eq.s32.totalorder %s31, 0
    %p198 = por %p196, %p197
    %p199 = scmp.ne.s32.totalorder %s191, %s193
    %p200 = scmp.eq.s32.totalorder %s36, 1
    %p201 = por %p199, %p200
    %p202 = scmp.ne.s32.totalorder %s193, %s194
    %p203 = scmp.eq.s32.totalorder %s36, 0
    %p204 = por %p202, %p203
    %p205 = scmp.ne.s32.totalorder %s193, %s194
    %p206 = scmp.eq.s32.totalorder %s37, 1
    %p207 = por %p205, %p206
    %p209 = scmp.ne.s32.totalorder %s194, %s208
    %p210 = scmp.eq.s32.totalorder %s37, 0
    %p211 = por %p209, %p210
    %s213 = sadd.s32 %s212, 1
    %p216 = scmp.eq.s32.totalorder %s31, 1
    %p217 = scmp.ne.s32.totalorder %s212, %s214
    %p218 = scmp.eq.s32.totalorder %s31, 0
    %p219 = por %p217, %p218
    %p220 = scmp.ne.s32.totalorder %s212, %s214
    %p221 = scmp.eq.s32.totalorder %s36, 1
    %p222 = por %p220, %p221
    %p223 = scmp.ne.s32.totalorder %s214, %s215
    %p224 = scmp.eq.s32.totalorder %s36, 0
    %p225 = por %p223, %p224
    %p226 = scmp.ne.s32.totalorder %s214, %s215
    %p227 = scmp.eq.s32.totalorder %s37, 1
    %p228 = por %p226, %p227
    %p230 = scmp.ne.s32.totalorder %s215, %s229
    %p231 = scmp.eq.s32.totalorder %s37, 0
    %p232 = por %p230, %p231
    %s234 = sadd.s32 %s233, 1
    %p237 = scmp.eq.s32.totalorder %s31, 1
    %p238 = scmp.ne.s32.totalorder %s233, %s235
    %p239 = scmp.eq.s32.totalorder %s31, 0
    %p240 = por %p238, %p239
    %p241 = scmp.ne.s32.totalorder %s233, %s235
    %p242 = scmp.eq.s32.totalorder %s36, 1
    %p243 = por %p241, %p242
    %p244 = scmp.ne.s32.totalorder %s235, %s236
    %p245 = scmp.eq.s32.totalorder %s36, 0
    %p246 = por %p244, %p245
    %p247 = scmp.ne.s32.totalorder %s235, %s236
    %p248 = scmp.eq.s32.totalorder %s37, 1
    %p249 = por %p247, %p248
    %p251 = scmp.ne.s32.totalorder %s236, %s250
    %p252 = scmp.eq.s32.totalorder %s37, 0
    %p253 = por %p251, %p252
    %s255 = sadd.s32 %s254, 1
    %p258 = scmp.eq.s32.totalorder %s31, 1
    %p259 = scmp.ne.s32.totalorder %s254, %s256
    %p260 = scmp.eq.s32.totalorder %s31, 0
    %p261 = por %p259, %p260
    %p262 = scmp.ne.s32.totalorder %s254, %s256
    %p263 = scmp.eq.s32.totalorder %s36, 1
    %p264 = por %p262, %p263
    %p265 = scmp.ne.s32.totalorder %s256, %s257
    %p266 = scmp.eq.s32.totalorder %s36, 0
    %p267 = por %p265, %p266
    %p268 = scmp.ne.s32.totalorder %s256, %s257
    %p269 = scmp.eq.s32.totalorder %s37, 1
    %p270 = por %p268, %p269
    %p272 = scmp.ne.s32.totalorder %s257, %s271
    %p273 = scmp.eq.s32.totalorder %s37, 0
    %p274 = por %p272, %p273
    %s276 = sadd.s32 %s275, 1
    %p279 = scmp.eq.s32.totalorder %s31, 1
    %p280 = scmp.ne.s32.totalorder %s275, %s277
    %p281 = scmp.eq.s32.totalorder %s31, 0
    %p282 = por %p280, %p281
    %p283 = scmp.ne.s32.totalorder %s275, %s277
    %p284 = scmp.eq.s32.totalorder %s36, 1
    %p285 = por %p283, %p284
    %p286 = scmp.ne.s32.totalorder %s277, %s278
    %p287 = scmp.eq.s32.totalorder %s36, 0
    %p288 = por %p286, %p287
    %p289 = scmp.ne.s32.totalorder %s277, %s278
    %p290 = scmp.eq.s32.totalorder %s37, 1
    %p291 = por %p289, %p290
    %p293 = scmp.ne.s32.totalorder %s278, %s292
    %p294 = scmp.eq.s32.totalorder %s37, 0
    %p295 = por %p293, %p294
    %s297 = sadd.s32 %s296, 1
    %p300 = scmp.eq.s32.totalorder %s31, 1
    %p301 = scmp.ne.s32.totalorder %s296, %s298
    %p302 = scmp.eq.s32.totalorder %s31, 0
    %p303 = por %p301, %p302
    %p304 = scmp.ne.s32.totalorder %s296, %s298
    %p305 = scmp.eq.s32.totalorder %s36, 1
    %p306 = por %p304, %p305
    %p307 = scmp.ne.s32.totalorder %s298, %s299
    %p308 = scmp.eq.s32.totalorder %s36, 0
    %p309 = por %p307, %p308
    %p310 = scmp.ne.s32.totalorder %s298, %s299
    %p311 = scmp.eq.s32.totalorder %s37, 1
    %p312 = por %p310, %p311
    %p314 = scmp.ne.s32.totalorder %s299, %s313
    %p315 = scmp.eq.s32.totalorder %s37, 0
    %p316 = por %p314, %p315
    %s318 = sadd.s32 %s317, 1
    %p321 = scmp.eq.s32.totalorder %s31, 1
    %p322 = scmp.ne.s32.totalorder %s317, %s319
    %p323 = scmp.eq.s32.totalorder %s31, 0
    %p324 = por %p322, %p323
    %p325 = scmp.ne.s32.totalorder %s317, %s319
    %p326 = scmp.eq.s32.totalorder %s36, 1
    %p327 = por %p325, %p326
    %p328 = scmp.ne.s32.totalorder %s319, %s320
    %p329 = scmp.eq.s32.totalorder %s36, 0
    %p330 = por %p328, %p329
    %p331 = scmp.ne.s32.totalorder %s319, %s320
    %p332 = scmp.eq.s32.totalorder %s37, 1
    %p333 = por %p331, %p332
    %p335 = scmp.ne.s32.totalorder %s320, %s334
    %p336 = scmp.eq.s32.totalorder %s37, 0
    %p337 = por %p335, %p336
    %s339 = sadd.s32 %s338, 1
    %p342 = scmp.eq.s32.totalorder %s31, 1
    %p343 = scmp.ne.s32.totalorder %s338, %s340
    %p344 = scmp.eq.s32.totalorder %s31, 0
    %p345 = por %p343, %p344
    %p346 = scmp.ne.s32.totalorder %s338, %s340
    %p347 = scmp.eq.s32.totalorder %s36, 1
    %p348 = por %p346, %p347
    %p349 = scmp.ne.s32.totalorder %s340, %s341
    %p350 = scmp.eq.s32.totalorder %s36, 0
    %p351 = por %p349, %p350
    %p352 = scmp.ne.s32.totalorder %s340, %s341
    %p353 = scmp.eq.s32.totalorder %s37, 1
    %p354 = por %p352, %p353
    %p356 = scmp.ne.s32.totalorder %s341, %s355
    %p357 = scmp.eq.s32.totalorder %s37, 0
    %p358 = por %p356, %p357
    %s360 = sadd.s32 %s359, 1
    %p363 = scmp.eq.s32.totalorder %s31, 1
    %p364 = scmp.ne.s32.totalorder %s359, %s361
    %p365 = scmp.eq.s32.totalorder %s31, 0
    %p366 = por %p364, %p365
    %p367 = scmp.ne.s32.totalorder %s359, %s361
    %p368 = scmp.eq.s32.totalorder %s36, 1
    %p369 = por %p367, %p368
    %p370 = scmp.ne.s32.totalorder %s361, %s362
    %p371 = scmp.eq.s32.totalorder %s36, 0
    %p372 = por %p370, %p371
    %p373 = scmp.ne.s32.totalorder %s361, %s362
    %p374 = scmp.eq.s32.totalorder %s37, 1
    %p375 = por %p373, %p374
    %p377 = scmp.ne.s32.totalorder %s362, %s376
    %p378 = scmp.eq.s32.totalorder %s37, 0
    %p379 = por %p377, %p378
    %s381 = sadd.s32 %s380, 1
    %p384 = scmp.eq.s32.totalorder %s31, 1
    %p385 = scmp.ne.s32.totalorder %s380, %s382
    %p386 = scmp.eq.s32.totalorder %s31, 0
    %p387 = por %p385, %p386
    %p388 = scmp.ne.s32.totalorder %s380, %s382
    %p389 = scmp.eq.s32.totalorder %s36, 1
    %p390 = por %p388, %p389
    %p391 = scmp.ne.s32.totalorder %s382, %s383
    %p392 = scmp.eq.s32.totalorder %s36, 0
    %p393 = por %p391, %p392
    %p394 = scmp.ne.s32.totalorder %s382, %s383
    %p395 = scmp.eq.s32.totalorder %s37, 1
    %p396 = por %p394, %p395
    %p398 = scmp.ne.s32.totalorder %s383, %s397
    %p399 = scmp.eq.s32.totalorder %s37, 0
    %p400 = por %p398, %p399
    %s402 = sadd.s32 %s401, 1
    %p405 = scmp.eq.s32.totalorder %s31, 1
    %p406 = scmp.ne.s32.totalorder %s401, %s403
    %p407 = scmp.eq.s32.totalorder %s31, 0
    %p408 = por %p406, %p407
    %p409 = scmp.ne.s32.totalorder %s401, %s403
    %p410 = scmp.eq.s32.totalorder %s36, 1
    %p411 = por %p409, %p410
    %p412 = scmp.ne.s32.totalorder %s403, %s404
    %p413 = scmp.eq.s32.totalorder %s36, 0
    %p414 = por %p412, %p413
    %p415 = scmp.ne.s32.totalorder %s403, %s404
    %p416 = scmp.eq.s32.totalorder %s37, 1
    %p417 = por %p415, %p416
    %p419 = scmp.ne.s32.totalorder %s404, %s418
    %p420 = scmp.eq.s32.totalorder %s37, 0
    %p421 = por %p419, %p420
    %s423 = sadd.s32 %s422, 1
    %p426 = scmp.eq.s32.totalorder %s31, 1
    %p427 = scmp.ne.s32.totalorder %s422, %s424
    %p428 = scmp.eq.s32.totalorder %s31, 0
    %p429 = por %p427, %p428
    %p430 = scmp.ne.s32.totalorder %s422, %s424
    %p431 = scmp.eq.s32.totalorder %s36, 1
    %p432 = por %p430, %p431
    %p433 = scmp.ne.s32.totalorder %s424, %s425
    %p434 = scmp.eq.s32.totalorder %s36, 0
    %p435 = por %p433, %p434
    %p436 = scmp.ne.s32.totalorder %s424, %s425
    %p437 = scmp.eq.s32.totalorder %s37, 1
    %p438 = por %p436, %p437
    %p440 = scmp.ne.s32.totalorder %s425, %s439
    %p441 = scmp.eq.s32.totalorder %s37, 0
    %p442 = por %p440, %p441
    %s444 = sadd.s32 %s443, 1
    %p447 = scmp.eq.s32.totalorder %s31, 1
    %p448 = scmp.ne.s32.totalorder %s443, %s445
    %p449 = scmp.eq.s32.totalorder %s31, 0
    %p450 = por %p448, %p449
    %p451 = scmp.ne.s32.totalorder %s443, %s445
    %p452 = scmp.eq.s32.totalorder %s36, 1
    %p453 = por %p451, %p452
    %p454 = scmp.ne.s32.totalorder %s445, %s446
    %p455 = scmp.eq.s32.totalorder %s36, 0
    %p456 = por %p454, %p455
    %p457 = scmp.ne.s32.totalorder %s445, %s446
    %p458 = scmp.eq.s32.totalorder %s37, 1
    %p459 = por %p457, %p458
    %p461 = scmp.ne.s32.totalorder %s446, %s460
    %p462 = scmp.eq.s32.totalorder %s37, 0
    %p463 = por %p461, %p462
    %s465 = sadd.s32 %s464, 1
    %p468 = scmp.eq.s32.totalorder %s31, 1
    %p469 = scmp.ne.s32.totalorder %s464, %s466
    %p470 = scmp.eq.s32.totalorder %s31, 0
    %p471 = por %p469, %p470
    %p472 = scmp.ne.s32.totalorder %s464, %s466
    %p473 = scmp.eq.s32.totalorder %s36, 1
    %p474 = por %p472, %p473
    %p475 = scmp.ne.s32.totalorder %s466, %s467
    %p476 = scmp.eq.s32.totalorder %s36, 0
    %p477 = por %p475, %p476
    %p478 = scmp.ne.s32.totalorder %s466, %s467
    %p479 = scmp.eq.s32.totalorder %s37, 1
    %p480 = por %p478, %p479
    %p482 = scmp.ne.s32.totalorder %s467, %s481
    %p483 = scmp.eq.s32.totalorder %s37, 0
    %p484 = por %p482, %p483
    %s486 = sadd.s32 %s485, 1
    %p489 = scmp.eq.s32.totalorder %s31, 1
    %p490 = scmp.ne.s32.totalorder %s485, %s487
    %p491 = scmp.eq.s32.totalorder %s31, 0
    %p492 = por %p490, %p491
    %p493 = scmp.ne.s32.totalorder %s485, %s487
    %p494 = scmp.eq.s32.totalorder %s36, 1
    %p495 = por %p493, %p494
    %p496 = scmp.ne.s32.totalorder %s487, %s488
    %p497 = scmp.eq.s32.totalorder %s36, 0
    %p498 = por %p496, %p497
    %p499 = scmp.ne.s32.totalorder %s487, %s488
    %p500 = scmp.eq.s32.totalorder %s37, 1
    %p501 = por %p499, %p500
    %p503 = scmp.ne.s32.totalorder %s488, %s502
    %p504 = scmp.eq.s32.totalorder %s37, 0
    %p505 = por %p503, %p504
    %s507 = sadd.s32 %s506, 1
    %p510 = scmp.eq.s32.totalorder %s31, 1
    %p511 = scmp.ne.s32.totalorder %s506, %s508
    %p512 = scmp.eq.s32.totalorder %s31, 0
    %p513 = por %p511, %p512
    %p514 = scmp.ne.s32.totalorder %s506, %s508
    %p515 = scmp.eq.s32.totalorder %s36, 1
    %p516 = por %p514, %p515
    %p517 = scmp.ne.s32.totalorder %s508, %s509
    %p518 = scmp.eq.s32.totalorder %s36, 0
    %p519 = por %p517, %p518
    %p520 = scmp.ne.s32.totalorder %s508, %s509
    %p521 = scmp.eq.s32.totalorder %s37, 1
    %p522 = por %p520, %p521
    %p524 = scmp.ne.s32.totalorder %s509, %s523
    %p525 = scmp.eq.s32.totalorder %s37, 0
    %p526 = por %p524, %p525
    %s528 = sadd.s32 %s527, 1
    %p531 = scmp.eq.s32.totalorder %s31, 1
    %p532 = scmp.ne.s32.totalorder %s527, %s529
    %p533 = scmp.eq.s32.totalorder %s31, 0
    %p534 = por %p532, %p533
    %p535 = scmp.ne.s32.totalorder %s527, %s529
    %p536 = scmp.eq.s32.totalorder %s36, 1
    %p537 = por %p535, %p536
    %p538 = scmp.ne.s32.totalorder %s529, %s530
    %p539 = scmp.eq.s32.totalorder %s36, 0
    %p540 = por %p538, %p539
    %p541 = scmp.ne.s32.totalorder %s529, %s530
    %p542 = scmp.eq.s32.totalorder %s37, 1
    %p543 = por %p541, %p542
    %p545 = scmp.ne.s32.totalorder %s530, %s544
    %p546 = scmp.eq.s32.totalorder %s37, 0
    %p547 = por %p545, %p546
    %s549 = sadd.s32 %s548, 1
    %p552 = scmp.eq.s32.totalorder %s31, 1
    %p553 = scmp.ne.s32.totalorder %s548, %s550
    %p554 = scmp.eq.s32.totalorder %s31, 0
    %p555 = por %p553, %p554
    %p556 = scmp.ne.s32.totalorder %s548, %s550
    %p557 = scmp.eq.s32.totalorder %s36, 1
    %p558 = por %p556, %p557
    %p559 = scmp.ne.s32.totalorder %s550, %s551
    %p560 = scmp.eq.s32.totalorder %s36, 0
    %p561 = por %p559, %p560
    %p562 = scmp.ne.s32.totalorder %s550, %s551
    %p563 = scmp.eq.s32.totalorder %s37, 1
    %p564 = por %p562, %p563
    %p566 = scmp.ne.s32.totalorder %s551, %s565
    %p567 = scmp.eq.s32.totalorder %s37, 0
    %p568 = por %p566, %p567
    %s569 = ssub.s32 %s31, %s38
    %p570 = scmp.eq.s32.totalorder %s569, 0
    %s572 = sadd.s32 %s571, 1
    %s573 = scalar_select %p570, %s571, %s572
    %p576 = pneg %p570
    %p577 = scmp.eq.s32.totalorder %s31, 1
    %p578 = por %p576, %p577
    %p579 = scmp.ne.s32.totalorder %s571, %s574
    %p580 = scmp.eq.s32.totalorder %s31, 0
    %p581 = por %p579, %p580
    %p582 = scmp.ne.s32.totalorder %s571, %s574
    %p583 = scmp.eq.s32.totalorder %s36, 1
    %p584 = por %p582, %p583
    %p585 = scmp.ne.s32.totalorder %s574, %s575
    %p586 = scmp.eq.s32.totalorder %s36, 0
    %p587 = por %p585, %p586
    %p588 = scmp.ne.s32.totalorder %s574, %s575
    %p589 = scmp.eq.s32.totalorder %s37, 1
    %p590 = por %p588, %p589
    %p592 = scmp.ne.s32.totalorder %s575, %s591
    %p593 = scmp.eq.s32.totalorder %s37, 0
    %p594 = por %p592, %p593
    %p595 = scmp.le.s32.totalorder 1, %s31
    %p596 = scmp.lt.s32.totalorder %s31, 3
    %p597 = pnand %p595, %p596
    %p598 = pneg %p597
    // Predicated region
    $region9: #{complex_transformer_forward.4} parent=5 // pred_check
      _
    $region10: #{complex_transformer_forward.4} parent=5 // pred_check_branch
      %600 = sbr.rel (%p597) target = $region12
    $region11: #{complex_transformer_forward.4} parent=5 // pred_region
      %s601 = ssub.s32 %s31, 1
      // Predicated region
      $region13: #{complex_transformer_forward.4} parent=11 // pred_check
        %p602 = pneg %p78
      $region14: #{complex_transformer_forward.4} parent=11 // pred_check_branch
        %604 = sbr.rel (%p602) target = $region16
      $region15: #{complex_transformer_forward.4} parent=11 // pred_region
        _
      $region16: #{complex_transformer_forward.4} parent=11 // pred_fallthru
        _
      // Predicated region
      $region17: #{complex_transformer_forward.4} parent=11 // pred_check
        %p605 = pneg %p99
      $region18: #{complex_transformer_forward.4} parent=11 // pred_check_branch
        %607 = sbr.rel (%p605) target = $region20
      $region19: #{complex_transformer_forward.4} parent=11 // pred_region
        _
      $region20: #{complex_transformer_forward.4} parent=11 // pred_fallthru
        _
      // Predicated region
      $region21: #{complex_transformer_forward.4} parent=11 // pred_check
        %p608 = pneg %p120
      $region22: #{complex_transformer_forward.4} parent=11 // pred_check_branch
        %610 = sbr.rel (%p608) target = $region24
      $region23: #{complex_transformer_forward.4} parent=11 // pred_region
        _
      $region24: #{complex_transformer_forward.4} parent=11 // pred_fallthru
        _
      // Predicated region
      $region25: #{complex_transformer_forward.4} parent=11 // pred_check
        %p611 = pneg %p141
      $region26: #{complex_transformer_forward.4} parent=11 // pred_check_branch
        %613 = sbr.rel (%p611) target = $region28
      $region27: #{complex_transformer_forward.4} parent=11 // pred_region
        _
      $region28: #{complex_transformer_forward.4} parent=11 // pred_fallthru
        _
      // Predicated region
      $region29: #{complex_transformer_forward.4} parent=11 // pred_check
        %p614 = pneg %p162
      $region30: #{complex_transformer_forward.4} parent=11 // pred_check_branch
        %616 = sbr.rel (%p614) target = $region32
      $region31: #{complex_transformer_forward.4} parent=11 // pred_region
        _
      $region32: #{complex_transformer_forward.4} parent=11 // pred_fallthru
        _
      // Predicated region
      $region33: #{complex_transformer_forward.4} parent=11 // pred_check
        %p617 = pneg %p183
      $region34: #{complex_transformer_forward.4} parent=11 // pred_check_branch
        %619 = sbr.rel (%p617) target = $region36
      $region35: #{complex_transformer_forward.4} parent=11 // pred_region
        _
      $region36: #{complex_transformer_forward.4} parent=11 // pred_fallthru
        _
      // Predicated region
      $region37: #{complex_transformer_forward.4} parent=11 // pred_check
        %p620 = pneg %p204
      $region38: #{complex_transformer_forward.4} parent=11 // pred_check_branch
        %622 = sbr.rel (%p620) target = $region40
      $region39: #{complex_transformer_forward.4} parent=11 // pred_region
        _
      $region40: #{complex_transformer_forward.4} parent=11 // pred_fallthru
        _
      // Predicated region
      $region41: #{complex_transformer_forward.4} parent=11 // pred_check
        %p623 = pneg %p225
      $region42: #{complex_transformer_forward.4} parent=11 // pred_check_branch
        %625 = sbr.rel (%p623) target = $region44
      $region43: #{complex_transformer_forward.4} parent=11 // pred_region
        _
      $region44: #{complex_transformer_forward.4} parent=11 // pred_fallthru
        _
      // Predicated region
      $region45: #{complex_transformer_forward.4} parent=11 // pred_check
        %p626 = pneg %p246
      $region46: #{complex_transformer_forward.4} parent=11 // pred_check_branch
        %628 = sbr.rel (%p626) target = $region48
      $region47: #{complex_transformer_forward.4} parent=11 // pred_region
        _
      $region48: #{complex_transformer_forward.4} parent=11 // pred_fallthru
        _
      // Predicated region
      $region49: #{complex_transformer_forward.4} parent=11 // pred_check
        %p629 = pneg %p267
      $region50: #{complex_transformer_forward.4} parent=11 // pred_check_branch
        %631 = sbr.rel (%p629) target = $region52
      $region51: #{complex_transformer_forward.4} parent=11 // pred_region
        _
      $region52: #{complex_transformer_forward.4} parent=11 // pred_fallthru
        _
      // Predicated region
      $region53: #{complex_transformer_forward.4} parent=11 // pred_check
        %p632 = pneg %p288
      $region54: #{complex_transformer_forward.4} parent=11 // pred_check_branch
        %634 = sbr.rel (%p632) target = $region56
      $region55: #{complex_transformer_forward.4} parent=11 // pred_region
        _
      $region56: #{complex_transformer_forward.4} parent=11 // pred_fallthru
        _
      // Predicated region
      $region57: #{complex_transformer_forward.4} parent=11 // pred_check
        %p635 = pneg %p309
      $region58: #{complex_transformer_forward.4} parent=11 // pred_check_branch
        %637 = sbr.rel (%p635) target = $region60
      $region59: #{complex_transformer_forward.4} parent=11 // pred_region
        _
      $region60: #{complex_transformer_forward.4} parent=11 // pred_fallthru
        _
      // Predicated region
      $region61: #{complex_transformer_forward.4} parent=11 // pred_check
        %p638 = pneg %p330
      $region62: #{complex_transformer_forward.4} parent=11 // pred_check_branch
        %640 = sbr.rel (%p638) target = $region64
      $region63: #{complex_transformer_forward.4} parent=11 // pred_region
        _
      $region64: #{complex_transformer_forward.4} parent=11 // pred_fallthru
        _
      // Predicated region
      $region65: #{complex_transformer_forward.4} parent=11 // pred_check
        %p641 = pneg %p351
      $region66: #{complex_transformer_forward.4} parent=11 // pred_check_branch
        %643 = sbr.rel (%p641) target = $region68
      $region67: #{complex_transformer_forward.4} parent=11 // pred_region
        _
      $region68: #{complex_transformer_forward.4} parent=11 // pred_fallthru
        _
      // Predicated region
      $region69: #{complex_transformer_forward.4} parent=11 // pred_check
        %p644 = pneg %p372
      $region70: #{complex_transformer_forward.4} parent=11 // pred_check_branch
        %646 = sbr.rel (%p644) target = $region72
      $region71: #{complex_transformer_forward.4} parent=11 // pred_region
        _
      $region72: #{complex_transformer_forward.4} parent=11 // pred_fallthru
        _
      // Predicated region
      $region73: #{complex_transformer_forward.4} parent=11 // pred_check
        %p647 = pneg %p393
      $region74: #{complex_transformer_forward.4} parent=11 // pred_check_branch
        %649 = sbr.rel (%p647) target = $region76
      $region75: #{complex_transformer_forward.4} parent=11 // pred_region
        _
      $region76: #{complex_transformer_forward.4} parent=11 // pred_fallthru
        _
      // Predicated region
      $region77: #{complex_transformer_forward.4} parent=11 // pred_check
        %p650 = pneg %p414
      $region78: #{complex_transformer_forward.4} parent=11 // pred_check_branch
        %652 = sbr.rel (%p650) target = $region80
      $region79: #{complex_transformer_forward.4} parent=11 // pred_region
        _
      $region80: #{complex_transformer_forward.4} parent=11 // pred_fallthru
        _
      // Predicated region
      $region81: #{complex_transformer_forward.4} parent=11 // pred_check
        %p653 = pneg %p435
      $region82: #{complex_transformer_forward.4} parent=11 // pred_check_branch
        %655 = sbr.rel (%p653) target = $region84
      $region83: #{complex_transformer_forward.4} parent=11 // pred_region
        _
      $region84: #{complex_transformer_forward.4} parent=11 // pred_fallthru
        _
      // Predicated region
      $region85: #{complex_transformer_forward.4} parent=11 // pred_check
        %p656 = pneg %p456
      $region86: #{complex_transformer_forward.4} parent=11 // pred_check_branch
        %658 = sbr.rel (%p656) target = $region88
      $region87: #{complex_transformer_forward.4} parent=11 // pred_region
        _
      $region88: #{complex_transformer_forward.4} parent=11 // pred_fallthru
        _
      // Predicated region
      $region89: #{complex_transformer_forward.4} parent=11 // pred_check
        %p659 = pneg %p477
      $region90: #{complex_transformer_forward.4} parent=11 // pred_check_branch
        %661 = sbr.rel (%p659) target = $region92
      $region91: #{complex_transformer_forward.4} parent=11 // pred_region
        _
      $region92: #{complex_transformer_forward.4} parent=11 // pred_fallthru
        _
      // Predicated region
      $region93: #{complex_transformer_forward.4} parent=11 // pred_check
        %p662 = pneg %p498
      $region94: #{complex_transformer_forward.4} parent=11 // pred_check_branch
        %664 = sbr.rel (%p662) target = $region96
      $region95: #{complex_transformer_forward.4} parent=11 // pred_region
        _
      $region96: #{complex_transformer_forward.4} parent=11 // pred_fallthru
        _
      // Predicated region
      $region97: #{complex_transformer_forward.4} parent=11 // pred_check
        %p665 = pneg %p519
      $region98: #{complex_transformer_forward.4} parent=11 // pred_check_branch
        %667 = sbr.rel (%p665) target = $region100
      $region99: #{complex_transformer_forward.4} parent=11 // pred_region
        _
      $region100: #{complex_transformer_forward.4} parent=11 // pred_fallthru
        _
      // Predicated region
      $region101: #{complex_transformer_forward.4} parent=11 // pred_check
        %p668 = pneg %p540
      $region102: #{complex_transformer_forward.4} parent=11 // pred_check_branch
        %670 = sbr.rel (%p668) target = $region104
      $region103: #{complex_transformer_forward.4} parent=11 // pred_region
        _
      $region104: #{complex_transformer_forward.4} parent=11 // pred_fallthru
        _
      // Predicated region
      $region105: #{complex_transformer_forward.4} parent=11 // pred_check
        %p671 = pneg %p561
      $region106: #{complex_transformer_forward.4} parent=11 // pred_check_branch
        %673 = sbr.rel (%p671) target = $region108
      $region107: #{complex_transformer_forward.4} parent=11 // pred_region
        _
      $region108: #{complex_transformer_forward.4} parent=11 // pred_fallthru
        _
    $region12: #{complex_transformer_forward.4} parent=5 // pred_fallthru
      _
    %p674 = scmp.lt.s32.totalorder %s31, 2
    // Predicated region
    $region109: #{complex_transformer_forward.4} parent=5 // pred_check
      %p675 = pneg %p674
    $region110: #{complex_transformer_forward.4} parent=5 // pred_check_branch
      %677 = sbr.rel (%p675) target = $region112
    $region111: #{complex_transformer_forward.4} parent=5 // pred_region
      // Predicated region
      $region113: #{complex_transformer_forward.4} parent=111 // pred_check
        %p678 = pneg %p51
      $region114: #{complex_transformer_forward.4} parent=111 // pred_check_branch
        %680 = sbr.rel (%p678) target = $region116
      $region115: #{complex_transformer_forward.4} parent=111 // pred_region
        %p681 = scmp.lt.s32.totalorder %s31, 1
        %s682 = scalar_select %p681, %s31, 1
        %s683 = smul.addr %s682, 8
        %s684 = scalar_lea.vmem %s0, %s683
      $region116: #{complex_transformer_forward.4} parent=111 // pred_fallthru
        _
    $region112: #{complex_transformer_forward.4} parent=5 // pred_fallthru
      _
    %p685 = scmp.le.s32.totalorder 1, %s31
    %p686 = scmp.lt.s32.totalorder %s31, 3
    %p687 = pnand %p685, %p686
    %p688 = pneg %p687
    // Predicated region
    $region117: #{complex_transformer_forward.4} parent=5 // pred_check
      _
    $region118: #{complex_transformer_forward.4} parent=5 // pred_check_branch
      %690 = sbr.rel (%p687) target = $region120
    $region119: #{complex_transformer_forward.4} parent=5 // pred_region
      %s691 = ssub.s32 %s31, 1
      %p692 = scmp.lt.s32.totalorder %s36, 1
      %s693 = scalar_select %p692, %s36, 1
      %s694 = smul.addr %s693, 8
      %s695 = scalar_lea.vmem %s0, %s694
      %p696 = pneg %p57
      %p697 = pneg %p54
      %p698 = pneg %p78
      %p699 = pneg %p75
      %p700 = pneg %p99
      %p701 = pneg %p96
      %p702 = pneg %p120
      %p703 = pneg %p117
      %p704 = pneg %p141
      %p705 = pneg %p138
      %p706 = pneg %p162
      %p707 = pneg %p159
      %p708 = pneg %p183
      %p709 = pneg %p180
      %p710 = pneg %p204
      %p711 = pneg %p201
      %p712 = pneg %p225
      %p713 = pneg %p222
      %p714 = pneg %p246
      %p715 = pneg %p243
      %p716 = pneg %p267
      %p717 = pneg %p264
      %p718 = pneg %p288
      %p719 = pneg %p285
      %p720 = pneg %p309
      %p721 = pneg %p306
      %p722 = pneg %p330
      %p723 = pneg %p327
      %p724 = pneg %p351
      %p725 = pneg %p348
      %p726 = pneg %p372
      %p727 = pneg %p369
      %p728 = pneg %p393
      %p729 = pneg %p390
      %p730 = pneg %p414
      %p731 = pneg %p411
      %p732 = pneg %p435
      %p733 = pneg %p432
      %p734 = pneg %p456
      %p735 = pneg %p453
      %p736 = pneg %p477
      %p737 = pneg %p474
      %p738 = pneg %p498
      %p739 = pneg %p495
      %p740 = pneg %p519
      %p741 = pneg %p516
      %p742 = pneg %p540
      %p743 = pneg %p537
      %p744 = pneg %p561
      %p745 = pneg %p558
      %p746 = pneg %p587
      %p747 = pneg %p584
      %p748 = scmp.lt.s32.totalorder %s36, 1
      %s749 = scalar_select %p748, %s36, 1
      %s750 = smul.addr %s749, 8
      %s751 = scalar_lea.vmem %s25, %s750
      %p752 = scmp.lt.s32.totalorder %s36, 1
      %s753 = scalar_select %p752, %s36, 1
      %s754 = smul.addr %s753, 8
      %s755 = scalar_lea.vmem %s0, %s754
      %p756 = scmp.lt.s32.totalorder %s36, 1
      %s757 = scalar_select %p756, %s36, 1
      %s758 = smul.addr %s757, 8
      %s759 = scalar_lea.vmem %s25, %s758
      %v761 = vld [vmem:[%s755] sm:$0xff]
      %v762 = vld [vmem:[%s1] sm:$0x1]
      %v763 = vld [vmem:[%s2] sm:$0x1]
      %vm764 = vcmask 261120
      %v765 = vsel %vm764, %v761, 0.0
      %766 = vadd.xlane.f32.xlu0 %v765
      %v767 = vpop.xlane.xlu0 %766
      %v768 = vrcp.pop 32.0
      %v769 = vmul.f32 %v767, %v768
      %v770 = vsub.f32 %v761, %v769
      %v771 = vmul.f32 %v770, %v770
      %v772 = vsel %vm764, %v771, 0.0
      %773 = vadd.xlane.f32.xlu0 %v772
      %v774 = vpop.xlane.xlu0 %773
      %v775 = vmul.f32 %v774, %v768
      %v776 = vadd.f32 %v775, 1e-05
      %v777 = vrsqrt.pop %v776
      %v778 = vmul.f32 %v770, %v777
      %v780 = vlaneseq
      %v781 = vshrl.u32 %v780, 7
      %v782 = vsub.s32 0, %v781
      %v783 = vrot.slane %v762, %v782
      %v785 = vmul.f32 %v778, %v783
      %v787 = vlaneseq
      %v788 = vshrl.u32 %v787, 7
      %v789 = vsub.s32 0, %v788
      %v790 = vrot.slane %v763, %v789
      %v792 = vadd.f32 %v785, %v790
      %v793 = vld [vmem:[%s3] sm:$0x1]
      %v794 = vld [vmem:[%s4] sm:$0x1]
      %796 = vrot.lane.b32.xlu0 %v761, 96
      %v797 = vpop.permute.xlu0 %796
      %v799 = vsel %vm764, %v797, 0.0
      %800 = vadd.xlane.f32.xlu0 %v799
      %v801 = vpop.xlane.xlu0 %800
      %v802 = vmul.f32 %v801, %v768
      %v803 = vsub.f32 %v761, %v802
      %v804 = vmul.f32 %v803, %v803
      %806 = vrot.lane.b32.xlu0 %v804, 96
      %v807 = vpop.permute.xlu0 %806
      %v809 = vsel %vm764, %v807, 0.0
      %810 = vadd.xlane.f32.xlu0 %v809
      %v811 = vpop.xlane.xlu0 %810
      %v812 = vmul.f32 %v811, %v768
      %v813 = vadd.f32 %v812, 1e-05
      %v814 = vrsqrt.pop %v813
      %v815 = vmul.f32 %v803, %v814
      %v817 = vlaneseq
      %v818 = vshrl.u32 %v817, 7
      %v819 = vsub.s32 0, %v818
      %v820 = vrot.slane %v793, %v819
      %821 = vrot.lane.b32.xlu0 %v820, 32
      %v822 = vpop.permute.xlu0 %821
      %v824 = vmul.f32 %v815, %v822
      %v826 = vlaneseq
      %v827 = vshrl.u32 %v826, 7
      %v828 = vsub.s32 0, %v827
      %v829 = vrot.slane %v794, %v828
      %830 = vrot.lane.b32.xlu0 %v829, 32
      %v831 = vpop.permute.xlu0 %830
      %v833 = vadd.f32 %v824, %v831
      %835 = vrot.lane.b32.xlu0 %v833, 96
      %v836 = vpop.permute.xlu0 %835
      %v838 = vpack.c.bf16 %v836, %v792
      %v839 = vld [vmem:[%s5] sm:$0xff]
      %v840 = vld [vmem:[%s5 + $0x8] sm:$0xff]
      %v841 = vld [vmem:[%s5 + $0x10] sm:$0xff]
      %v842 = vld [vmem:[%s5 + $0x18] sm:$0xff]
      %v847 = vunpack.c.l.b16 %v839
      %v848 = vunpack.c.h.b16 %v839
      %v849 = vunpack.c.l.b16 %v840
      %v850 = vunpack.c.h.b16 %v840
      %v851 = vunpack.c.l.b16 %v841
      %v852 = vunpack.c.h.b16 %v841
      %v853 = vunpack.c.l.b16 %v842
      %v854 = vunpack.c.h.b16 %v842
      %v855 = vpack.c.b16 %v849, %v847
      %v856 = vpack.c.b16 %v850, %v848
      %v857 = vpack.c.b16 %v853, %v851
      %v858 = vpack.c.b16 %v854, %v852
      %v864 = vsel %vm764, %v838, 0
      %866 = vmatprep.subr.bf16.mxu0 0
      %867 = vmatpush1.bf16.msra.mxu0 0
      %868 = vmatprep.subr.bf16.mxu0 0
      %869 = vmatpush1.bf16.msra.mxu0 0
      %870 = vmatprep.subr.bf16.mxu0 0
      %871 = vmatpush1.bf16.msra.mxu0 0
      %872 = vmatprep.subr.bf16.mxu0 0
      %873 = vmatpush1.bf16.msra.mxu0 0
      %874 = vmatprep.subr.bf16.mxu0 0
      %875 = vmatpush1.bf16.msra.mxu0 0
      %876 = vmatprep.subr.bf16.mxu0 0
      %877 = vmatpush1.bf16.msra.mxu0 0
      %878 = vmatprep.subr.bf16.mxu0 %v858
      %879 = vmatpush1.bf16.msra.mxu0 %v857
      %880 = vmatprep.subr.bf16.mxu0 %v856
      %881 = vmatpush1.bf16.msra.mxu0 %v855
      %882 = vmatprep.subr.bf16.mxu0 0
      %883 = vmatpush2.bf16.msra.mxu0 0
      %884 = vmatprep.subr.bf16.mxu0 0
      %885 = vmatpush2.bf16.msra.mxu0 0
      %886 = vmatprep.subr.bf16.mxu0 0
      %887 = vmatpush2.bf16.msra.mxu0 0
      %888 = vmatprep.subr.bf16.mxu0 0
      %889 = vmatpush2.bf16.msra.mxu0 0
      %890 = vmatprep.subr.bf16.mxu0 0
      %891 = vmatpush2.bf16.msra.mxu0 0
      %892 = vmatprep.subr.bf16.mxu0 0
      %893 = vmatpush2.bf16.msra.mxu0 0
      %894 = vmatprep.subr.bf16.mxu0 0
      %895 = vmatpush2.bf16.msra.mxu0 0
      %896 = vmatprep.subr.bf16.mxu0 0
      %897 = vmatpush2.bf16.msra.mxu0 0
      %898 = vmatprep.mubr.bf16.mxu0 0
      %899 = vmatmul.mubr.bf16.gmra.mxu0 %v864
      %v900 = vpop.f32.mrf.mxu0
      %v901 = vadd.f32 0.0, %v900
      %v902 = vpop.f32.mrf.mxu0
      %v903 = vadd.f32 0.0, %v902
      %v904 = vpop.f32.mrf.mxu0
      %v905 = vadd.f32 0.0, %v904
      %v906 = vpop.f32.mrf.mxu0
      %v907 = vadd.f32 0.0, %v906
      %908 = vdwg.mxu0
      %v909 = vld [vmem:[%s6] sm:$0x1]
      %v910 = vld [vmem:[%s7] sm:$0x1]
      %913 = vrot.lane.b32.xlu0 %v905, 32
      %v914 = vpop.permute.xlu0 %913
      %915 = vrot.lane.b32.xlu0 %v907, 32
      %v916 = vpop.permute.xlu0 %915
      %v917 = vsel %vm764, %v914, %v916
      %v919 = vsub.f32 %v901, %v917
      %v921 = vlaneseq
      %v922 = vshrl.u32 %v921, 7
      %v923 = vsub.s32 0, %v922
      %v924 = vrot.slane %v909, %v923
      %v926 = vadd.f32 %v919, %v924
      %929 = vrot.lane.b32.xlu0 %v901, 32
      %v930 = vpop.permute.xlu0 %929
      %931 = vrot.lane.b32.xlu0 %v903, 32
      %v932 = vpop.permute.xlu0 %931
      %v933 = vsel %vm764, %v930, %v932
      %v935 = vadd.f32 %v905, %v933
      %v937 = vlaneseq
      %v938 = vshrl.u32 %v937, 7
      %v939 = vsub.s32 0, %v938
      %v940 = vrot.slane %v910, %v939
      %v942 = vadd.f32 %v935, %v940
      %v943 = vmul.f32 %v926, 0.35355338
      %945 = vrot.lane.b32.xlu0 %v943, 120
      %v946 = vpop.permute.xlu0 %945
      %948 = vrot.lane.b32.xlu0 %v943, 112
      %v949 = vpop.permute.xlu0 %948
      %951 = vrot.lane.b32.xlu0 %v943, 104
      %v952 = vpop.permute.xlu0 %951
      %v954 = vcombine.low %v943, %v949
      %v955 = vcombine.high %v943, %v949
      %v957 = vunpack.c.l.s4 1983009808
      %v958 = vunpack.c.0.s8 %v957
      %v959 = vlaneseq
      %v960 = vshrl.u32 %v959, 7
      %v961 = vsub.s32 %v958, %v960
      %v962 = vrot.slane %v954, %v961
      %v964 = vunpack.c.l.s4 1983009808
      %v965 = vunpack.c.0.s8 %v964
      %v966 = vlaneseq
      %v967 = vshrl.u32 %v966, 7
      %v968 = vsub.s32 %v965, %v967
      %v969 = vrot.slane %v955, %v968
      %v970 = vcombine.low %v946, %v952
      %v971 = vcombine.high %v946, %v952
      %v973 = vunpack.c.l.s4 1983009808
      %v974 = vunpack.c.0.s8 %v973
      %v975 = vlaneseq
      %v976 = vshrl.u32 %v975, 7
      %v977 = vsub.s32 %v974, %v976
      %v978 = vrot.slane %v970, %v977
      %v980 = vunpack.c.l.s4 1983009808
      %v981 = vunpack.c.0.s8 %v980
      %v982 = vlaneseq
      %v983 = vshrl.u32 %v982, 7
      %v984 = vsub.s32 %v981, %v983
      %v985 = vrot.slane %v971, %v984
      %v986 = vcombine.low %v962, %v978
      %v987 = vcombine.high %v962, %v978
      %v989 = vunpack.c.l.s4 1934713408
      %v990 = vunpack.c.0.s8 %v989
      %v991 = vlaneseq
      %v992 = vshrl.u32 %v991, 7
      %v993 = vsub.s32 %v990, %v992
      %v994 = vrot.slane %v986, %v993
      %v996 = vunpack.c.l.s4 1934713408
      %v997 = vunpack.c.0.s8 %v996
      %v998 = vlaneseq
      %v999 = vshrl.u32 %v998, 7
      %v1000 = vsub.s32 %v997, %v999
      %v1001 = vrot.slane %v987, %v1000
      %v1002 = vcombine.low %v969, %v985
      %v1003 = vcombine.high %v969, %v985
      %v1005 = vunpack.c.l.s4 1934713408
      %v1006 = vunpack.c.0.s8 %v1005
      %v1007 = vlaneseq
      %v1008 = vshrl.u32 %v1007, 7
      %v1009 = vsub.s32 %v1006, %v1008
      %v1010 = vrot.slane %v1002, %v1009
      %v1012 = vunpack.c.l.s4 1934713408
      %v1013 = vunpack.c.0.s8 %v1012
      %v1014 = vlaneseq
      %v1015 = vshrl.u32 %v1014, 7
      %v1016 = vsub.s32 %v1013, %v1015
      %v1017 = vrot.slane %v1003, %v1016
      %v1018 = vcombine.high %v994, 0.0
      %v1019 = vcombine.high %v1001, 0.0
      %v1020 = vcombine.high %v1010, 0.0
      %v1021 = vcombine.high %v1017, 0.0
      %v1022 = vcombine.low %v994, %v1001
      %v1024 = vunpack.c.l.s4 1983009808
      %v1025 = vunpack.c.0.s8 %v1024
      %v1026 = vlaneseq
      %v1027 = vshrl.u32 %v1026, 7
      %v1028 = vsub.s32 %v1025, %v1027
      %v1029 = vrot.slane %v1022, %v1028
      %v1030 = vcombine.low %v1018, %v1019
      %v1032 = vunpack.c.l.s4 1983009808
      %v1033 = vunpack.c.0.s8 %v1032
      %v1034 = vlaneseq
      %v1035 = vshrl.u32 %v1034, 7
      %v1036 = vsub.s32 %v1033, %v1035
      %v1037 = vrot.slane %v1030, %v1036
      %v1038 = vcombine.low %v1010, %v1017
      %v1040 = vunpack.c.l.s4 1983009808
      %v1041 = vunpack.c.0.s8 %v1040
      %v1042 = vlaneseq
      %v1043 = vshrl.u32 %v1042, 7
      %v1044 = vsub.s32 %v1041, %v1043
      %v1045 = vrot.slane %v1038, %v1044
      %v1046 = vcombine.low %v1020, %v1021
      %v1048 = vunpack.c.l.s4 1983009808
      %v1049 = vunpack.c.0.s8 %v1048
      %v1050 = vlaneseq
      %v1051 = vshrl.u32 %v1050, 7
      %v1052 = vsub.s32 %v1049, %v1051
      %v1053 = vrot.slane %v1046, %v1052
      %v1054 = vcombine.low %v1029, %v1037
      %v1055 = vcombine.high %v1029, %v1037
      %v1057 = vunpack.c.l.s4 1934713408
      %v1058 = vunpack.c.0.s8 %v1057
      %v1059 = vlaneseq
      %v1060 = vshrl.u32 %v1059, 7
      %v1061 = vsub.s32 %v1058, %v1060
      %v1062 = vrot.slane %v1054, %v1061
      %v1064 = vunpack.c.l.s4 1934713408
      %v1065 = vunpack.c.0.s8 %v1064
      %v1066 = vlaneseq
      %v1067 = vshrl.u32 %v1066, 7
      %v1068 = vsub.s32 %v1065, %v1067
      %v1069 = vrot.slane %v1055, %v1068
      %v1070 = vcombine.low %v1045, %v1053
      %v1071 = vcombine.high %v1045, %v1053
      %v1073 = vunpack.c.l.s4 1934713408
      %v1074 = vunpack.c.0.s8 %v1073
      %v1075 = vlaneseq
      %v1076 = vshrl.u32 %v1075, 7
      %v1077 = vsub.s32 %v1074, %v1076
      %v1078 = vrot.slane %v1070, %v1077
      %v1080 = vunpack.c.l.s4 1934713408
      %v1081 = vunpack.c.0.s8 %v1080
      %v1082 = vlaneseq
      %v1083 = vshrl.u32 %v1082, 7
      %v1084 = vsub.s32 %v1081, %v1083
      %v1085 = vrot.slane %v1071, %v1084
      %v1086 = vcombine.low %v1062, %v1078
      %v1087 = vcombine.high %v1062, %v1078
      %v1088 = vcombine.low %v1069, %v1085
      %v1089 = vcombine.high %v1069, %v1085
      %v1090 = vpack.c.bf16 %v1086, %v1086
      %v1091 = vpack.c.bf16 %v1087, %v1087
      %v1092 = vpack.c.bf16 %v1088, %v1088
      %v1093 = vpack.c.bf16 %v1089, %v1089
      %v1094 = vmul.f32 %v942, 0.35355338
      %1096 = vrot.lane.b32.xlu0 %v1094, 120
      %v1097 = vpop.permute.xlu0 %1096
      %1099 = vrot.lane.b32.xlu0 %v1094, 112
      %v1100 = vpop.permute.xlu0 %1099
      %1102 = vrot.lane.b32.xlu0 %v1094, 104
      %v1103 = vpop.permute.xlu0 %1102
      %v1105 = vcombine.low %v1094, %v1100
      %v1106 = vcombine.high %v1094, %v1100
      %v1108 = vunpack.c.l.s4 1983009808
      %v1109 = vunpack.c.0.s8 %v1108
      %v1110 = vlaneseq
      %v1111 = vshrl.u32 %v1110, 7
      %v1112 = vsub.s32 %v1109, %v1111
      %v1113 = vrot.slane %v1105, %v1112
      %v1115 = vunpack.c.l.s4 1983009808
      %v1116 = vunpack.c.0.s8 %v1115
      %v1117 = vlaneseq
      %v1118 = vshrl.u32 %v1117, 7
      %v1119 = vsub.s32 %v1116, %v1118
      %v1120 = vrot.slane %v1106, %v1119
      %v1121 = vcombine.low %v1097, %v1103
      %v1122 = vcombine.high %v1097, %v1103
      %v1124 = vunpack.c.l.s4 1983009808
      %v1125 = vunpack.c.0.s8 %v1124
      %v1126 = vlaneseq
      %v1127 = vshrl.u32 %v1126, 7
      %v1128 = vsub.s32 %v1125, %v1127
      %v1129 = vrot.slane %v1121, %v1128
      %v1131 = vunpack.c.l.s4 1983009808
      %v1132 = vunpack.c.0.s8 %v1131
      %v1133 = vlaneseq
      %v1134 = vshrl.u32 %v1133, 7
      %v1135 = vsub.s32 %v1132, %v1134
      %v1136 = vrot.slane %v1122, %v1135
      %v1137 = vcombine.low %v1113, %v1129
      %v1138 = vcombine.high %v1113, %v1129
      %v1140 = vunpack.c.l.s4 1934713408
      %v1141 = vunpack.c.0.s8 %v1140
      %v1142 = vlaneseq
      %v1143 = vshrl.u32 %v1142, 7
      %v1144 = vsub.s32 %v1141, %v1143
      %v1145 = vrot.slane %v1137, %v1144
      %v1147 = vunpack.c.l.s4 1934713408
      %v1148 = vunpack.c.0.s8 %v1147
      %v1149 = vlaneseq
      %v1150 = vshrl.u32 %v1149, 7
      %v1151 = vsub.s32 %v1148, %v1150
      %v1152 = vrot.slane %v1138, %v1151
      %v1153 = vcombine.low %v1120, %v1136
      %v1154 = vcombine.high %v1120, %v1136
      %v1156 = vunpack.c.l.s4 1934713408
      %v1157 = vunpack.c.0.s8 %v1156
      %v1158 = vlaneseq
      %v1159 = vshrl.u32 %v1158, 7
      %v1160 = vsub.s32 %v1157, %v1159
      %v1161 = vrot.slane %v1153, %v1160
      %v1163 = vunpack.c.l.s4 1934713408
      %v1164 = vunpack.c.0.s8 %v1163
      %v1165 = vlaneseq
      %v1166 = vshrl.u32 %v1165, 7
      %v1167 = vsub.s32 %v1164, %v1166
      %v1168 = vrot.slane %v1154, %v1167
      %v1169 = vcombine.high %v1145, 0.0
      %v1170 = vcombine.high %v1152, 0.0
      %v1171 = vcombine.high %v1161, 0.0
      %v1172 = vcombine.high %v1168, 0.0
      %v1173 = vcombine.low %v1145, %v1152
      %v1175 = vunpack.c.l.s4 1983009808
      %v1176 = vunpack.c.0.s8 %v1175
      %v1177 = vlaneseq
      %v1178 = vshrl.u32 %v1177, 7
      %v1179 = vsub.s32 %v1176, %v1178
      %v1180 = vrot.slane %v1173, %v1179
      %v1181 = vcombine.low %v1169, %v1170
      %v1183 = vunpack.c.l.s4 1983009808
      %v1184 = vunpack.c.0.s8 %v1183
      %v1185 = vlaneseq
      %v1186 = vshrl.u32 %v1185, 7
      %v1187 = vsub.s32 %v1184, %v1186
      %v1188 = vrot.slane %v1181, %v1187
      %v1189 = vcombine.low %v1161, %v1168
      %v1191 = vunpack.c.l.s4 1983009808
      %v1192 = vunpack.c.0.s8 %v1191
      %v1193 = vlaneseq
      %v1194 = vshrl.u32 %v1193, 7
      %v1195 = vsub.s32 %v1192, %v1194
      %v1196 = vrot.slane %v1189, %v1195
      %v1197 = vcombine.low %v1171, %v1172
      %v1199 = vunpack.c.l.s4 1983009808
      %v1200 = vunpack.c.0.s8 %v1199
      %v1201 = vlaneseq
      %v1202 = vshrl.u32 %v1201, 7
      %v1203 = vsub.s32 %v1200, %v1202
      %v1204 = vrot.slane %v1197, %v1203
      %v1205 = vcombine.low %v1180, %v1188
      %v1206 = vcombine.high %v1180, %v1188
      %v1208 = vunpack.c.l.s4 1934713408
      %v1209 = vunpack.c.0.s8 %v1208
      %v1210 = vlaneseq
      %v1211 = vshrl.u32 %v1210, 7
      %v1212 = vsub.s32 %v1209, %v1211
      %v1213 = vrot.slane %v1205, %v1212
      %v1215 = vunpack.c.l.s4 1934713408
      %v1216 = vunpack.c.0.s8 %v1215
      %v1217 = vlaneseq
      %v1218 = vshrl.u32 %v1217, 7
      %v1219 = vsub.s32 %v1216, %v1218
      %v1220 = vrot.slane %v1206, %v1219
      %v1221 = vcombine.low %v1196, %v1204
      %v1222 = vcombine.high %v1196, %v1204
      %v1224 = vunpack.c.l.s4 1934713408
      %v1225 = vunpack.c.0.s8 %v1224
      %v1226 = vlaneseq
      %v1227 = vshrl.u32 %v1226, 7
      %v1228 = vsub.s32 %v1225, %v1227
      %v1229 = vrot.slane %v1221, %v1228
      %v1231 = vunpack.c.l.s4 1934713408
      %v1232 = vunpack.c.0.s8 %v1231
      %v1233 = vlaneseq
      %v1234 = vshrl.u32 %v1233, 7
      %v1235 = vsub.s32 %v1232, %v1234
      %v1236 = vrot.slane %v1222, %v1235
      %v1237 = vcombine.low %v1213, %v1229
      %v1238 = vcombine.high %v1213, %v1229
      %v1239 = vcombine.low %v1220, %v1236
      %v1240 = vcombine.high %v1220, %v1236
      %v1241 = vpack.c.bf16 %v1237, %v1237
      %v1242 = vpack.c.bf16 %v1238, %v1238
      %v1243 = vpack.c.bf16 %v1239, %v1239
      %v1244 = vpack.c.bf16 %v1240, %v1240
      %1246 = vrot.lane.b32.xlu0 %v926, 120
      %v1247 = vpop.permute.xlu0 %1246
      %1248 = vrot.lane.b32.xlu0 %v926, 112
      %v1249 = vpop.permute.xlu0 %1248
      %1250 = vrot.lane.b32.xlu0 %v926, 104
      %v1251 = vpop.permute.xlu0 %1250
      %1252 = vrot.lane.b32.xlu0 %v926, 96
      %v1253 = vpop.permute.xlu0 %1252
      %1254 = vrot.lane.b32.xlu0 %v1247, 96
      %v1255 = vpop.permute.xlu0 %1254
      %1256 = vrot.lane.b32.xlu0 %v1249, 96
      %v1257 = vpop.permute.xlu0 %1256
      %1258 = vrot.lane.b32.xlu0 %v1251, 96
      %v1259 = vpop.permute.xlu0 %1258
      %v1264 = vcombine.low %v1253, %v1257
      %v1265 = vcombine.high %v1253, %v1257
      %v1267 = vunpack.c.l.s4 1983009808
      %v1268 = vunpack.c.0.s8 %v1267
      %v1269 = vlaneseq
      %v1270 = vshrl.u32 %v1269, 7
      %v1271 = vsub.s32 %v1268, %v1270
      %v1272 = vrot.slane %v1264, %v1271
      %v1274 = vunpack.c.l.s4 1983009808
      %v1275 = vunpack.c.0.s8 %v1274
      %v1276 = vlaneseq
      %v1277 = vshrl.u32 %v1276, 7
      %v1278 = vsub.s32 %v1275, %v1277
      %v1279 = vrot.slane %v1265, %v1278
      %v1280 = vcombine.low %v1255, %v1259
      %v1281 = vcombine.high %v1255, %v1259
      %v1283 = vunpack.c.l.s4 1983009808
      %v1284 = vunpack.c.0.s8 %v1283
      %v1285 = vlaneseq
      %v1286 = vshrl.u32 %v1285, 7
      %v1287 = vsub.s32 %v1284, %v1286
      %v1288 = vrot.slane %v1280, %v1287
      %v1290 = vunpack.c.l.s4 1983009808
      %v1291 = vunpack.c.0.s8 %v1290
      %v1292 = vlaneseq
      %v1293 = vshrl.u32 %v1292, 7
      %v1294 = vsub.s32 %v1291, %v1293
      %v1295 = vrot.slane %v1281, %v1294
      %v1296 = vcombine.low %v1272, %v1288
      %v1297 = vcombine.high %v1272, %v1288
      %v1299 = vunpack.c.l.s4 1934713408
      %v1300 = vunpack.c.0.s8 %v1299
      %v1301 = vlaneseq
      %v1302 = vshrl.u32 %v1301, 7
      %v1303 = vsub.s32 %v1300, %v1302
      %v1304 = vrot.slane %v1296, %v1303
      %v1306 = vunpack.c.l.s4 1934713408
      %v1307 = vunpack.c.0.s8 %v1306
      %v1308 = vlaneseq
      %v1309 = vshrl.u32 %v1308, 7
      %v1310 = vsub.s32 %v1307, %v1309
      %v1311 = vrot.slane %v1297, %v1310
      %v1312 = vcombine.low %v1279, %v1295
      %v1313 = vcombine.high %v1279, %v1295
      %v1315 = vunpack.c.l.s4 1934713408
      %v1316 = vunpack.c.0.s8 %v1315
      %v1317 = vlaneseq
      %v1318 = vshrl.u32 %v1317, 7
      %v1319 = vsub.s32 %v1316, %v1318
      %v1320 = vrot.slane %v1312, %v1319
      %v1322 = vunpack.c.l.s4 1934713408
      %v1323 = vunpack.c.0.s8 %v1322
      %v1324 = vlaneseq
      %v1325 = vshrl.u32 %v1324, 7
      %v1326 = vsub.s32 %v1323, %v1325
      %v1327 = vrot.slane %v1313, %v1326
      %v1328 = vcombine.high %v1304, 0.0
      %v1329 = vcombine.high %v1311, 0.0
      %v1330 = vcombine.high %v1320, 0.0
      %v1331 = vcombine.high %v1327, 0.0
      %v1332 = vcombine.low %v1304, %v1311
      %v1334 = vunpack.c.l.s4 1983009808
      %v1335 = vunpack.c.0.s8 %v1334
      %v1336 = vlaneseq
      %v1337 = vshrl.u32 %v1336, 7
      %v1338 = vsub.s32 %v1335, %v1337
      %v1339 = vrot.slane %v1332, %v1338
      %v1340 = vcombine.low %v1328, %v1329
      %v1342 = vunpack.c.l.s4 1983009808
      %v1343 = vunpack.c.0.s8 %v1342
      %v1344 = vlaneseq
      %v1345 = vshrl.u32 %v1344, 7
      %v1346 = vsub.s32 %v1343, %v1345
      %v1347 = vrot.slane %v1340, %v1346
      %v1348 = vcombine.low %v1320, %v1327
      %v1350 = vunpack.c.l.s4 1983009808
      %v1351 = vunpack.c.0.s8 %v1350
      %v1352 = vlaneseq
      %v1353 = vshrl.u32 %v1352, 7
      %v1354 = vsub.s32 %v1351, %v1353
      %v1355 = vrot.slane %v1348, %v1354
      %v1356 = vcombine.low %v1330, %v1331
      %v1358 = vunpack.c.l.s4 1983009808
      %v1359 = vunpack.c.0.s8 %v1358
      %v1360 = vlaneseq
      %v1361 = vshrl.u32 %v1360, 7
      %v1362 = vsub.s32 %v1359, %v1361
      %v1363 = vrot.slane %v1356, %v1362
      %v1364 = vcombine.low %v1339, %v1347
      %v1365 = vcombine.high %v1339, %v1347
      %v1367 = vunpack.c.l.s4 1934713408
      %v1368 = vunpack.c.0.s8 %v1367
      %v1369 = vlaneseq
      %v1370 = vshrl.u32 %v1369, 7
      %v1371 = vsub.s32 %v1368, %v1370
      %v1372 = vrot.slane %v1364, %v1371
      %v1374 = vunpack.c.l.s4 1934713408
      %v1375 = vunpack.c.0.s8 %v1374
      %v1376 = vlaneseq
      %v1377 = vshrl.u32 %v1376, 7
      %v1378 = vsub.s32 %v1375, %v1377
      %v1379 = vrot.slane %v1365, %v1378
      %v1380 = vcombine.low %v1355, %v1363
      %v1381 = vcombine.high %v1355, %v1363
      %v1383 = vunpack.c.l.s4 1934713408
      %v1384 = vunpack.c.0.s8 %v1383
      %v1385 = vlaneseq
      %v1386 = vshrl.u32 %v1385, 7
      %v1387 = vsub.s32 %v1384, %v1386
      %v1388 = vrot.slane %v1380, %v1387
      %v1390 = vunpack.c.l.s4 1934713408
      %v1391 = vunpack.c.0.s8 %v1390
      %v1392 = vlaneseq
      %v1393 = vshrl.u32 %v1392, 7
      %v1394 = vsub.s32 %v1391, %v1393
      %v1395 = vrot.slane %v1381, %v1394
      %v1396 = vcombine.low %v1372, %v1388
      %v1397 = vcombine.high %v1372, %v1388
      %v1398 = vcombine.low %v1379, %v1395
      %v1399 = vcombine.high %v1379, %v1395
      %1401 = vrot.lane.b32.xlu0 %v942, 120
      %v1402 = vpop.permute.xlu0 %1401
      %1403 = vrot.lane.b32.xlu0 %v942, 112
      %v1404 = vpop.permute.xlu0 %1403
      %1405 = vrot.lane.b32.xlu0 %v942, 104
      %v1406 = vpop.permute.xlu0 %1405
      %1407 = vrot.lane.b32.xlu0 %v942, 96
      %v1408 = vpop.permute.xlu0 %1407
      %1409 = vrot.lane.b32.xlu0 %v1402, 96
      %v1410 = vpop.permute.xlu0 %1409
      %1411 = vrot.lane.b32.xlu0 %v1404, 96
      %v1412 = vpop.permute.xlu0 %1411
      %1413 = vrot.lane.b32.xlu0 %v1406, 96
      %v1414 = vpop.permute.xlu0 %1413
      %v1419 = vcombine.low %v1408, %v1412
      %v1420 = vcombine.high %v1408, %v1412
      %v1422 = vunpack.c.l.s4 1983009808
      %v1423 = vunpack.c.0.s8 %v1422
      %v1424 = vlaneseq
      %v1425 = vshrl.u32 %v1424, 7
      %v1426 = vsub.s32 %v1423, %v1425
      %v1427 = vrot.slane %v1419, %v1426
      %v1429 = vunpack.c.l.s4 1983009808
      %v1430 = vunpack.c.0.s8 %v1429
      %v1431 = vlaneseq
      %v1432 = vshrl.u32 %v1431, 7
      %v1433 = vsub.s32 %v1430, %v1432
      %v1434 = vrot.slane %v1420, %v1433
      %v1435 = vcombine.low %v1410, %v1414
      %v1436 = vcombine.high %v1410, %v1414
      %v1438 = vunpack.c.l.s4 1983009808
      %v1439 = vunpack.c.0.s8 %v1438
      %v1440 = vlaneseq
      %v1441 = vshrl.u32 %v1440, 7
      %v1442 = vsub.s32 %v1439, %v1441
      %v1443 = vrot.slane %v1435, %v1442
      %v1445 = vunpack.c.l.s4 1983009808
      %v1446 = vunpack.c.0.s8 %v1445
      %v1447 = vlaneseq
      %v1448 = vshrl.u32 %v1447, 7
      %v1449 = vsub.s32 %v1446, %v1448
      %v1450 = vrot.slane %v1436, %v1449
      %v1451 = vcombine.low %v1427, %v1443
      %v1452 = vcombine.high %v1427, %v1443
      %v1454 = vunpack.c.l.s4 1934713408
      %v1455 = vunpack.c.0.s8 %v1454
      %v1456 = vlaneseq
      %v1457 = vshrl.u32 %v1456, 7
      %v1458 = vsub.s32 %v1455, %v1457
      %v1459 = vrot.slane %v1451, %v1458
      %v1461 = vunpack.c.l.s4 1934713408
      %v1462 = vunpack.c.0.s8 %v1461
      %v1463 = vlaneseq
      %v1464 = vshrl.u32 %v1463, 7
      %v1465 = vsub.s32 %v1462, %v1464
      %v1466 = vrot.slane %v1452, %v1465
      %v1467 = vcombine.low %v1434, %v1450
      %v1468 = vcombine.high %v1434, %v1450
      %v1470 = vunpack.c.l.s4 1934713408
      %v1471 = vunpack.c.0.s8 %v1470
      %v1472 = vlaneseq
      %v1473 = vshrl.u32 %v1472, 7
      %v1474 = vsub.s32 %v1471, %v1473
      %v1475 = vrot.slane %v1467, %v1474
      %v1477 = vunpack.c.l.s4 1934713408
      %v1478 = vunpack.c.0.s8 %v1477
      %v1479 = vlaneseq
      %v1480 = vshrl.u32 %v1479, 7
      %v1481 = vsub.s32 %v1478, %v1480
      %v1482 = vrot.slane %v1468, %v1481
      %v1483 = vcombine.high %v1459, 0.0
      %v1484 = vcombine.high %v1466, 0.0
      %v1485 = vcombine.high %v1475, 0.0
      %v1486 = vcombine.high %v1482, 0.0
      %v1487 = vcombine.low %v1459, %v1466
      %v1489 = vunpack.c.l.s4 1983009808
      %v1490 = vunpack.c.0.s8 %v1489
      %v1491 = vlaneseq
      %v1492 = vshrl.u32 %v1491, 7
      %v1493 = vsub.s32 %v1490, %v1492
      %v1494 = vrot.slane %v1487, %v1493
      %v1495 = vcombine.low %v1483, %v1484
      %v1497 = vunpack.c.l.s4 1983009808
      %v1498 = vunpack.c.0.s8 %v1497
      %v1499 = vlaneseq
      %v1500 = vshrl.u32 %v1499, 7
      %v1501 = vsub.s32 %v1498, %v1500
      %v1502 = vrot.slane %v1495, %v1501
      %v1503 = vcombine.low %v1475, %v1482
      %v1505 = vunpack.c.l.s4 1983009808
      %v1506 = vunpack.c.0.s8 %v1505
      %v1507 = vlaneseq
      %v1508 = vshrl.u32 %v1507, 7
      %v1509 = vsub.s32 %v1506, %v1508
      %v1510 = vrot.slane %v1503, %v1509
      %v1511 = vcombine.low %v1485, %v1486
      %v1513 = vunpack.c.l.s4 1983009808
      %v1514 = vunpack.c.0.s8 %v1513
      %v1515 = vlaneseq
      %v1516 = vshrl.u32 %v1515, 7
      %v1517 = vsub.s32 %v1514, %v1516
      %v1518 = vrot.slane %v1511, %v1517
      %v1519 = vcombine.low %v1494, %v1502
      %v1520 = vcombine.high %v1494, %v1502
      %v1522 = vunpack.c.l.s4 1934713408
      %v1523 = vunpack.c.0.s8 %v1522
      %v1524 = vlaneseq
      %v1525 = vshrl.u32 %v1524, 7
      %v1526 = vsub.s32 %v1523, %v1525
      %v1527 = vrot.slane %v1519, %v1526
      %v1529 = vunpack.c.l.s4 1934713408
      %v1530 = vunpack.c.0.s8 %v1529
      %v1531 = vlaneseq
      %v1532 = vshrl.u32 %v1531, 7
      %v1533 = vsub.s32 %v1530, %v1532
      %v1534 = vrot.slane %v1520, %v1533
      %v1535 = vcombine.low %v1510, %v1518
      %v1536 = vcombine.high %v1510, %v1518
      %v1538 = vunpack.c.l.s4 1934713408
      %v1539 = vunpack.c.0.s8 %v1538
      %v1540 = vlaneseq
      %v1541 = vshrl.u32 %v1540, 7
      %v1542 = vsub.s32 %v1539, %v1541
      %v1543 = vrot.slane %v1535, %v1542
      %v1545 = vunpack.c.l.s4 1934713408
      %v1546 = vunpack.c.0.s8 %v1545
      %v1547 = vlaneseq
      %v1548 = vshrl.u32 %v1547, 7
      %v1549 = vsub.s32 %v1546, %v1548
      %v1550 = vrot.slane %v1536, %v1549
      %v1551 = vcombine.low %v1527, %v1543
      %v1552 = vcombine.high %v1527, %v1543
      %v1553 = vcombine.low %v1534, %v1550
      %v1554 = vcombine.high %v1534, %v1550
      %1555 = vrot.lane.b32.xlu0 %v926, 64
      %v1556 = vpop.permute.xlu0 %1555
      %1557 = vrot.lane.b32.xlu0 %v1247, 64
      %v1558 = vpop.permute.xlu0 %1557
      %1559 = vrot.lane.b32.xlu0 %v1249, 64
      %v1560 = vpop.permute.xlu0 %1559
      %1561 = vrot.lane.b32.xlu0 %v1251, 64
      %v1562 = vpop.permute.xlu0 %1561
      %v1567 = vcombine.low %v1556, %v1560
      %v1568 = vcombine.high %v1556, %v1560
      %v1570 = vunpack.c.l.s4 1983009808
      %v1571 = vunpack.c.0.s8 %v1570
      %v1572 = vlaneseq
      %v1573 = vshrl.u32 %v1572, 7
      %v1574 = vsub.s32 %v1571, %v1573
      %v1575 = vrot.slane %v1567, %v1574
      %v1577 = vunpack.c.l.s4 1983009808
      %v1578 = vunpack.c.0.s8 %v1577
      %v1579 = vlaneseq
      %v1580 = vshrl.u32 %v1579, 7
      %v1581 = vsub.s32 %v1578, %v1580
      %v1582 = vrot.slane %v1568, %v1581
      %v1583 = vcombine.low %v1558, %v1562
      %v1584 = vcombine.high %v1558, %v1562
      %v1586 = vunpack.c.l.s4 1983009808
      %v1587 = vunpack.c.0.s8 %v1586
      %v1588 = vlaneseq
      %v1589 = vshrl.u32 %v1588, 7
      %v1590 = vsub.s32 %v1587, %v1589
      %v1591 = vrot.slane %v1583, %v1590
      %v1593 = vunpack.c.l.s4 1983009808
      %v1594 = vunpack.c.0.s8 %v1593
      %v1595 = vlaneseq
      %v1596 = vshrl.u32 %v1595, 7
      %v1597 = vsub.s32 %v1594, %v1596
      %v1598 = vrot.slane %v1584, %v1597
      %v1599 = vcombine.low %v1575, %v1591
      %v1600 = vcombine.high %v1575, %v1591
      %v1602 = vunpack.c.l.s4 1934713408
      %v1603 = vunpack.c.0.s8 %v1602
      %v1604 = vlaneseq
      %v1605 = vshrl.u32 %v1604, 7
      %v1606 = vsub.s32 %v1603, %v1605
      %v1607 = vrot.slane %v1599, %v1606
      %v1609 = vunpack.c.l.s4 1934713408
      %v1610 = vunpack.c.0.s8 %v1609
      %v1611 = vlaneseq
      %v1612 = vshrl.u32 %v1611, 7
      %v1613 = vsub.s32 %v1610, %v1612
      %v1614 = vrot.slane %v1600, %v1613
      %v1615 = vcombine.low %v1582, %v1598
      %v1616 = vcombine.high %v1582, %v1598
      %v1618 = vunpack.c.l.s4 1934713408
      %v1619 = vunpack.c.0.s8 %v1618
      %v1620 = vlaneseq
      %v1621 = vshrl.u32 %v1620, 7
      %v1622 = vsub.s32 %v1619, %v1621
      %v1623 = vrot.slane %v1615, %v1622
      %v1625 = vunpack.c.l.s4 1934713408
      %v1626 = vunpack.c.0.s8 %v1625
      %v1627 = vlaneseq
      %v1628 = vshrl.u32 %v1627, 7
      %v1629 = vsub.s32 %v1626, %v1628
      %v1630 = vrot.slane %v1616, %v1629
      %v1631 = vcombine.high %v1607, 0.0
      %v1632 = vcombine.high %v1614, 0.0
      %v1633 = vcombine.high %v1623, 0.0
      %v1634 = vcombine.high %v1630, 0.0
      %v1635 = vcombine.low %v1607, %v1614
      %v1637 = vunpack.c.l.s4 1983009808
      %v1638 = vunpack.c.0.s8 %v1637
      %v1639 = vlaneseq
      %v1640 = vshrl.u32 %v1639, 7
      %v1641 = vsub.s32 %v1638, %v1640
      %v1642 = vrot.slane %v1635, %v1641
      %v1643 = vcombine.low %v1631, %v1632
      %v1645 = vunpack.c.l.s4 1983009808
      %v1646 = vunpack.c.0.s8 %v1645
      %v1647 = vlaneseq
      %v1648 = vshrl.u32 %v1647, 7
      %v1649 = vsub.s32 %v1646, %v1648
      %v1650 = vrot.slane %v1643, %v1649
      %v1651 = vcombine.low %v1623, %v1630
      %v1653 = vunpack.c.l.s4 1983009808
      %v1654 = vunpack.c.0.s8 %v1653
      %v1655 = vlaneseq
      %v1656 = vshrl.u32 %v1655, 7
      %v1657 = vsub.s32 %v1654, %v1656
      %v1658 = vrot.slane %v1651, %v1657
      %v1659 = vcombine.low %v1633, %v1634
      %v1661 = vunpack.c.l.s4 1983009808
      %v1662 = vunpack.c.0.s8 %v1661
      %v1663 = vlaneseq
      %v1664 = vshrl.u32 %v1663, 7
      %v1665 = vsub.s32 %v1662, %v1664
      %v1666 = vrot.slane %v1659, %v1665
      %v1667 = vcombine.low %v1642, %v1650
      %v1668 = vcombine.high %v1642, %v1650
      %v1670 = vunpack.c.l.s4 1934713408
      %v1671 = vunpack.c.0.s8 %v1670
      %v1672 = vlaneseq
      %v1673 = vshrl.u32 %v1672, 7
      %v1674 = vsub.s32 %v1671, %v1673
      %v1675 = vrot.slane %v1667, %v1674
      %v1677 = vunpack.c.l.s4 1934713408
      %v1678 = vunpack.c.0.s8 %v1677
      %v1679 = vlaneseq
      %v1680 = vshrl.u32 %v1679, 7
      %v1681 = vsub.s32 %v1678, %v1680
      %v1682 = vrot.slane %v1668, %v1681
      %v1683 = vcombine.low %v1658, %v1666
      %v1684 = vcombine.high %v1658, %v1666
      %v1686 = vunpack.c.l.s4 1934713408
      %v1687 = vunpack.c.0.s8 %v1686
      %v1688 = vlaneseq
      %v1689 = vshrl.u32 %v1688, 7
      %v1690 = vsub.s32 %v1687, %v1689
      %v1691 = vrot.slane %v1683, %v1690
      %v1693 = vunpack.c.l.s4 1934713408
      %v1694 = vunpack.c.0.s8 %v1693
      %v1695 = vlaneseq
      %v1696 = vshrl.u32 %v1695, 7
      %v1697 = vsub.s32 %v1694, %v1696
      %v1698 = vrot.slane %v1684, %v1697
      %v1699 = vcombine.low %v1675, %v1691
      %v1700 = vcombine.high %v1675, %v1691
      %v1701 = vcombine.low %v1682, %v1698
      %v1702 = vcombine.high %v1682, %v1698
      %1703 = vrot.lane.b32.xlu0 %v942, 64
      %v1704 = vpop.permute.xlu0 %1703
      %1705 = vrot.lane.b32.xlu0 %v1402, 64
      %v1706 = vpop.permute.xlu0 %1705
      %1707 = vrot.lane.b32.xlu0 %v1404, 64
      %v1708 = vpop.permute.xlu0 %1707
      %1709 = vrot.lane.b32.xlu0 %v1406, 64
      %v1710 = vpop.permute.xlu0 %1709
      %v1715 = vcombine.low %v1704, %v1708
      %v1716 = vcombine.high %v1704, %v1708
      %v1718 = vunpack.c.l.s4 1983009808
      %v1719 = vunpack.c.0.s8 %v1718
      %v1720 = vlaneseq
      %v1721 = vshrl.u32 %v1720, 7
      %v1722 = vsub.s32 %v1719, %v1721
      %v1723 = vrot.slane %v1715, %v1722
      %v1725 = vunpack.c.l.s4 1983009808
      %v1726 = vunpack.c.0.s8 %v1725
      %v1727 = vlaneseq
      %v1728 = vshrl.u32 %v1727, 7
      %v1729 = vsub.s32 %v1726, %v1728
      %v1730 = vrot.slane %v1716, %v1729
      %v1731 = vcombine.low %v1706, %v1710
      %v1732 = vcombine.high %v1706, %v1710
      %v1734 = vunpack.c.l.s4 1983009808
      %v1735 = vunpack.c.0.s8 %v1734
      %v1736 = vlaneseq
      %v1737 = vshrl.u32 %v1736, 7
      %v1738 = vsub.s32 %v1735, %v1737
      %v1739 = vrot.slane %v1731, %v1738
      %v1741 = vunpack.c.l.s4 1983009808
      %v1742 = vunpack.c.0.s8 %v1741
      %v1743 = vlaneseq
      %v1744 = vshrl.u32 %v1743, 7
      %v1745 = vsub.s32 %v1742, %v1744
      %v1746 = vrot.slane %v1732, %v1745
      %v1747 = vcombine.low %v1723, %v1739
      %v1748 = vcombine.high %v1723, %v1739
      %v1750 = vunpack.c.l.s4 1934713408
      %v1751 = vunpack.c.0.s8 %v1750
      %v1752 = vlaneseq
      %v1753 = vshrl.u32 %v1752, 7
      %v1754 = vsub.s32 %v1751, %v1753
      %v1755 = vrot.slane %v1747, %v1754
      %v1757 = vunpack.c.l.s4 1934713408
      %v1758 = vunpack.c.0.s8 %v1757
      %v1759 = vlaneseq
      %v1760 = vshrl.u32 %v1759, 7
      %v1761 = vsub.s32 %v1758, %v1760
      %v1762 = vrot.slane %v1748, %v1761
      %v1763 = vcombine.low %v1730, %v1746
      %v1764 = vcombine.high %v1730, %v1746
      %v1766 = vunpack.c.l.s4 1934713408
      %v1767 = vunpack.c.0.s8 %v1766
      %v1768 = vlaneseq
      %v1769 = vshrl.u32 %v1768, 7
      %v1770 = vsub.s32 %v1767, %v1769
      %v1771 = vrot.slane %v1763, %v1770
      %v1773 = vunpack.c.l.s4 1934713408
      %v1774 = vunpack.c.0.s8 %v1773
      %v1775 = vlaneseq
      %v1776 = vshrl.u32 %v1775, 7
      %v1777 = vsub.s32 %v1774, %v1776
      %v1778 = vrot.slane %v1764, %v1777
      %v1779 = vcombine.high %v1755, 0.0
      %v1780 = vcombine.high %v1762, 0.0
      %v1781 = vcombine.high %v1771, 0.0
      %v1782 = vcombine.high %v1778, 0.0
      %v1783 = vcombine.low %v1755, %v1762
      %v1785 = vunpack.c.l.s4 1983009808
      %v1786 = vunpack.c.0.s8 %v1785
      %v1787 = vlaneseq
      %v1788 = vshrl.u32 %v1787, 7
      %v1789 = vsub.s32 %v1786, %v1788
      %v1790 = vrot.slane %v1783, %v1789
      %v1791 = vcombine.low %v1779, %v1780
      %v1793 = vunpack.c.l.s4 1983009808
      %v1794 = vunpack.c.0.s8 %v1793
      %v1795 = vlaneseq
      %v1796 = vshrl.u32 %v1795, 7
      %v1797 = vsub.s32 %v1794, %v1796
      %v1798 = vrot.slane %v1791, %v1797
      %v1799 = vcombine.low %v1771, %v1778
      %v1801 = vunpack.c.l.s4 1983009808
      %v1802 = vunpack.c.0.s8 %v1801
      %v1803 = vlaneseq
      %v1804 = vshrl.u32 %v1803, 7
      %v1805 = vsub.s32 %v1802, %v1804
      %v1806 = vrot.slane %v1799, %v1805
      %v1807 = vcombine.low %v1781, %v1782
      %v1809 = vunpack.c.l.s4 1983009808
      %v1810 = vunpack.c.0.s8 %v1809
      %v1811 = vlaneseq
      %v1812 = vshrl.u32 %v1811, 7
      %v1813 = vsub.s32 %v1810, %v1812
      %v1814 = vrot.slane %v1807, %v1813
      %v1815 = vcombine.low %v1790, %v1798
      %v1816 = vcombine.high %v1790, %v1798
      %v1818 = vunpack.c.l.s4 1934713408
      %v1819 = vunpack.c.0.s8 %v1818
      %v1820 = vlaneseq
      %v1821 = vshrl.u32 %v1820, 7
      %v1822 = vsub.s32 %v1819, %v1821
      %v1823 = vrot.slane %v1815, %v1822
      %v1825 = vunpack.c.l.s4 1934713408
      %v1826 = vunpack.c.0.s8 %v1825
      %v1827 = vlaneseq
      %v1828 = vshrl.u32 %v1827, 7
      %v1829 = vsub.s32 %v1826, %v1828
      %v1830 = vrot.slane %v1816, %v1829
      %v1831 = vcombine.low %v1806, %v1814
      %v1832 = vcombine.high %v1806, %v1814
      %v1834 = vunpack.c.l.s4 1934713408
      %v1835 = vunpack.c.0.s8 %v1834
      %v1836 = vlaneseq
      %v1837 = vshrl.u32 %v1836, 7
      %v1838 = vsub.s32 %v1835, %v1837
      %v1839 = vrot.slane %v1831, %v1838
      %v1841 = vunpack.c.l.s4 1934713408
      %v1842 = vunpack.c.0.s8 %v1841
      %v1843 = vlaneseq
      %v1844 = vshrl.u32 %v1843, 7
      %v1845 = vsub.s32 %v1842, %v1844
      %v1846 = vrot.slane %v1832, %v1845
      %v1847 = vcombine.low %v1823, %v1839
      %v1848 = vcombine.high %v1823, %v1839
      %v1849 = vcombine.low %v1830, %v1846
      %v1850 = vcombine.high %v1830, %v1846
      %v1851 = vpack.c.bf16 %v1551, %v1396
      %v1852 = vpack.c.bf16 %v1552, %v1397
      %v1853 = vpack.c.bf16 %v1553, %v1398
      %v1854 = vpack.c.bf16 %v1554, %v1399
      %vm1855 = vcmask 64512
      %v1857 = vsel %vm1855, %v1090, 0
      %v1860 = vsel %vm1855, %v1851, 0
      %1862 = vmatprep.subr.bf16.mxu0 0
      %1863 = vmatpush1.bf16.xpose.msra.mxu0 0
      %1864 = vmatprep.subr.bf16.mxu0 0
      %1865 = vmatpush1.bf16.xpose.msra.mxu0 0
      %1866 = vmatprep.subr.bf16.mxu0 0
      %1867 = vmatpush1.bf16.xpose.msra.mxu0 0
      %1868 = vmatprep.subr.bf16.mxu0 0
      %1869 = vmatpush1.bf16.xpose.msra.mxu0 0
      %1870 = vmatprep.subr.bf16.mxu0 0
      %1871 = vmatpush1.bf16.xpose.msra.mxu0 0
      %1872 = vmatprep.subr.bf16.mxu0 0
      %1873 = vmatpush1.bf16.xpose.msra.mxu0 0
      %1874 = vmatprep.subr.bf16.mxu0 0
      %1875 = vmatpush1.bf16.xpose.msra.mxu0 0
      %1876 = vmatprep.subr.bf16.mxu0 0
      %1877 = vmatpush1.bf16.xpose.msra.mxu0 %v1860
      %1878 = vmatprep.subr.bf16.mxu0 0
      %1879 = vmatpush2.bf16.xpose.msra.mxu0 0
      %1880 = vmatprep.subr.bf16.mxu0 0
      %1881 = vmatpush2.bf16.xpose.msra.mxu0 0
      %1882 = vmatprep.subr.bf16.mxu0 0
      %1883 = vmatpush2.bf16.xpose.msra.mxu0 0
      %1884 = vmatprep.subr.bf16.mxu0 0
      %1885 = vmatpush2.bf16.xpose.msra.mxu0 0
      %1886 = vmatprep.subr.bf16.mxu0 0
      %1887 = vmatpush2.bf16.xpose.msra.mxu0 0
      %1888 = vmatprep.subr.bf16.mxu0 0
      %1889 = vmatpush2.bf16.xpose.msra.mxu0 0
      %1890 = vmatprep.subr.bf16.mxu0 0
      %1891 = vmatpush2.bf16.xpose.msra.mxu0 0
      %1892 = vmatprep.subr.bf16.mxu0 0
      %1893 = vmatpush2.bf16.xpose.msra.mxu0 0
      %1894 = vmatprep.mubr.bf16.mxu0 0
      %1895 = vmatmul.mubr.bf16.gmra.mxu0 %v1857
      %v1896 = vpop.f32.mrf.mxu0
      %v1897 = vadd.f32 0.0, %v1896
      %v1898 = vpop.f32.mrf.mxu0
      %v1899 = vpop.f32.mrf.mxu0
      %v1900 = vpop.f32.mrf.mxu0
      %1901 = vdwg.mxu0
      %v1903 = vsel %vm1855, %v1091, 0
      %v1906 = vsel %vm1855, %v1852, 0
      %1908 = vmatprep.subr.bf16.mxu0 0
      %1909 = vmatpush1.bf16.xpose.msra.mxu0 0
      %1910 = vmatprep.subr.bf16.mxu0 0
      %1911 = vmatpush1.bf16.xpose.msra.mxu0 0
      %1912 = vmatprep.subr.bf16.mxu0 0
      %1913 = vmatpush1.bf16.xpose.msra.mxu0 0
      %1914 = vmatprep.subr.bf16.mxu0 0
      %1915 = vmatpush1.bf16.xpose.msra.mxu0 0
      %1916 = vmatprep.subr.bf16.mxu0 0
      %1917 = vmatpush1.bf16.xpose.msra.mxu0 0
      %1918 = vmatprep.subr.bf16.mxu0 0
      %1919 = vmatpush1.bf16.xpose.msra.mxu0 0
      %1920 = vmatprep.subr.bf16.mxu0 0
      %1921 = vmatpush1.bf16.xpose.msra.mxu0 0
      %1922 = vmatprep.subr.bf16.mxu0 0
      %1923 = vmatpush1.bf16.xpose.msra.mxu0 %v1906
      %1924 = vmatprep.subr.bf16.mxu0 0
      %1925 = vmatpush2.bf16.xpose.msra.mxu0 0
      %1926 = vmatprep.subr.bf16.mxu0 0
      %1927 = vmatpush2.bf16.xpose.msra.mxu0 0
      %1928 = vmatprep.subr.bf16.mxu0 0
      %1929 = vmatpush2.bf16.xpose.msra.mxu0 0
      %1930 = vmatprep.subr.bf16.mxu0 0
      %1931 = vmatpush2.bf16.xpose.msra.mxu0 0
      %1932 = vmatprep.subr.bf16.mxu0 0
      %1933 = vmatpush2.bf16.xpose.msra.mxu0 0
      %1934 = vmatprep.subr.bf16.mxu0 0
      %1935 = vmatpush2.bf16.xpose.msra.mxu0 0
      %1936 = vmatprep.subr.bf16.mxu0 0
      %1937 = vmatpush2.bf16.xpose.msra.mxu0 0
      %1938 = vmatprep.subr.bf16.mxu0 0
      %1939 = vmatpush2.bf16.xpose.msra.mxu0 0
      %1940 = vmatprep.mubr.bf16.mxu0 0
      %1941 = vmatmul.mubr.bf16.gmra.mxu0 %v1903
      %v1942 = vpop.f32.mrf.mxu0
      %v1943 = vadd.f32 0.0, %v1942
      %v1944 = vpop.f32.mrf.mxu0
      %v1945 = vpop.f32.mrf.mxu0
      %v1946 = vpop.f32.mrf.mxu0
      %1947 = vdwg.mxu0
      %v1949 = vsel %vm1855, %v1092, 0
      %v1952 = vsel %vm1855, %v1853, 0
      %1954 = vmatprep.subr.bf16.mxu0 0
      %1955 = vmatpush1.bf16.xpose.msra.mxu0 0
      %1956 = vmatprep.subr.bf16.mxu0 0
      %1957 = vmatpush1.bf16.xpose.msra.mxu0 0
      %1958 = vmatprep.subr.bf16.mxu0 0
      %1959 = vmatpush1.bf16.xpose.msra.mxu0 0
      %1960 = vmatprep.subr.bf16.mxu0 0
      %1961 = vmatpush1.bf16.xpose.msra.mxu0 0
      %1962 = vmatprep.subr.bf16.mxu0 0
      %1963 = vmatpush1.bf16.xpose.msra.mxu0 0
      %1964 = vmatprep.subr.bf16.mxu0 0
      %1965 = vmatpush1.bf16.xpose.msra.mxu0 0
      %1966 = vmatprep.subr.bf16.mxu0 0
      %1967 = vmatpush1.bf16.xpose.msra.mxu0 0
      %1968 = vmatprep.subr.bf16.mxu0 0
      %1969 = vmatpush1.bf16.xpose.msra.mxu0 %v1952
      %1970 = vmatprep.subr.bf16.mxu0 0
      %1971 = vmatpush2.bf16.xpose.msra.mxu0 0
      %1972 = vmatprep.subr.bf16.mxu0 0
      %1973 = vmatpush2.bf16.xpose.msra.mxu0 0
      %1974 = vmatprep.subr.bf16.mxu0 0
      %1975 = vmatpush2.bf16.xpose.msra.mxu0 0
      %1976 = vmatprep.subr.bf16.mxu0 0
      %1977 = vmatpush2.bf16.xpose.msra.mxu0 0
      %1978 = vmatprep.subr.bf16.mxu0 0
      %1979 = vmatpush2.bf16.xpose.msra.mxu0 0
      %1980 = vmatprep.subr.bf16.mxu0 0
      %1981 = vmatpush2.bf16.xpose.msra.mxu0 0
      %1982 = vmatprep.subr.bf16.mxu0 0
      %1983 = vmatpush2.bf16.xpose.msra.mxu0 0
      %1984 = vmatprep.subr.bf16.mxu0 0
      %1985 = vmatpush2.bf16.xpose.msra.mxu0 0
      %1986 = vmatprep.mubr.bf16.mxu0 0
      %1987 = vmatmul.mubr.bf16.gmra.mxu0 %v1949
      %v1988 = vpop.f32.mrf.mxu0
      %v1989 = vadd.f32 0.0, %v1988
      %v1990 = vpop.f32.mrf.mxu0
      %v1991 = vpop.f32.mrf.mxu0
      %v1992 = vpop.f32.mrf.mxu0
      %1993 = vdwg.mxu0
      %v1995 = vsel %vm1855, %v1093, 0
      %v1998 = vsel %vm1855, %v1854, 0
      %2000 = vmatprep.subr.bf16.mxu0 0
      %2001 = vmatpush1.bf16.xpose.msra.mxu0 0
      %2002 = vmatprep.subr.bf16.mxu0 0
      %2003 = vmatpush1.bf16.xpose.msra.mxu0 0
      %2004 = vmatprep.subr.bf16.mxu0 0
      %2005 = vmatpush1.bf16.xpose.msra.mxu0 0
      %2006 = vmatprep.subr.bf16.mxu0 0
      %2007 = vmatpush1.bf16.xpose.msra.mxu0 0
      %2008 = vmatprep.subr.bf16.mxu0 0
      %2009 = vmatpush1.bf16.xpose.msra.mxu0 0
      %2010 = vmatprep.subr.bf16.mxu0 0
      %2011 = vmatpush1.bf16.xpose.msra.mxu0 0
      %2012 = vmatprep.subr.bf16.mxu0 0
      %2013 = vmatpush1.bf16.xpose.msra.mxu0 0
      %2014 = vmatprep.subr.bf16.mxu0 0
      %2015 = vmatpush1.bf16.xpose.msra.mxu0 %v1998
      %2016 = vmatprep.subr.bf16.mxu0 0
      %2017 = vmatpush2.bf16.xpose.msra.mxu0 0
      %2018 = vmatprep.subr.bf16.mxu0 0
      %2019 = vmatpush2.bf16.xpose.msra.mxu0 0
      %2020 = vmatprep.subr.bf16.mxu0 0
      %2021 = vmatpush2.bf16.xpose.msra.mxu0 0
      %2022 = vmatprep.subr.bf16.mxu0 0
      %2023 = vmatpush2.bf16.xpose.msra.mxu0 0
      %2024 = vmatprep.subr.bf16.mxu0 0
      %2025 = vmatpush2.bf16.xpose.msra.mxu0 0
      %2026 = vmatprep.subr.bf16.mxu0 0
      %2027 = vmatpush2.bf16.xpose.msra.mxu0 0
      %2028 = vmatprep.subr.bf16.mxu0 0
      %2029 = vmatpush2.bf16.xpose.msra.mxu0 0
      %2030 = vmatprep.subr.bf16.mxu0 0
      %2031 = vmatpush2.bf16.xpose.msra.mxu0 0
      %2032 = vmatprep.mubr.bf16.mxu0 0
      %2033 = vmatmul.mubr.bf16.gmra.mxu0 %v1995
      %v2034 = vpop.f32.mrf.mxu0
      %v2035 = vadd.f32 0.0, %v2034
      %v2036 = vpop.f32.mrf.mxu0
      %v2037 = vpop.f32.mrf.mxu0
      %v2038 = vpop.f32.mrf.mxu0
      %2039 = vdwg.mxu0
      %v2041 = vsel %vm1855, %v1241, 0
      %2043 = vmatprep.subr.bf16.mxu0 0
      %2044 = vmatpush1.bf16.xpose.msra.mxu0 0
      %2045 = vmatprep.subr.bf16.mxu0 0
      %2046 = vmatpush1.bf16.xpose.msra.mxu0 0
      %2047 = vmatprep.subr.bf16.mxu0 0
      %2048 = vmatpush1.bf16.xpose.msra.mxu0 0
      %2049 = vmatprep.subr.bf16.mxu0 0
      %2050 = vmatpush1.bf16.xpose.msra.mxu0 0
      %2051 = vmatprep.subr.bf16.mxu0 0
      %2052 = vmatpush1.bf16.xpose.msra.mxu0 0
      %2053 = vmatprep.subr.bf16.mxu0 0
      %2054 = vmatpush1.bf16.xpose.msra.mxu0 0
      %2055 = vmatprep.subr.bf16.mxu0 0
      %2056 = vmatpush1.bf16.xpose.msra.mxu0 0
      %2057 = vmatprep.subr.bf16.mxu0 0
      %2058 = vmatpush1.bf16.xpose.msra.mxu0 %v1860
      %2059 = vmatprep.subr.bf16.mxu0 0
      %2060 = vmatpush2.bf16.xpose.msra.mxu0 0
      %2061 = vmatprep.subr.bf16.mxu0 0
      %2062 = vmatpush2.bf16.xpose.msra.mxu0 0
      %2063 = vmatprep.subr.bf16.mxu0 0
      %2064 = vmatpush2.bf16.xpose.msra.mxu0 0
      %2065 = vmatprep.subr.bf16.mxu0 0
      %2066 = vmatpush2.bf16.xpose.msra.mxu0 0
      %2067 = vmatprep.subr.bf16.mxu0 0
      %2068 = vmatpush2.bf16.xpose.msra.mxu0 0
      %2069 = vmatprep.subr.bf16.mxu0 0
      %2070 = vmatpush2.bf16.xpose.msra.mxu0 0
      %2071 = vmatprep.subr.bf16.mxu0 0
      %2072 = vmatpush2.bf16.xpose.msra.mxu0 0
      %2073 = vmatprep.subr.bf16.mxu0 0
      %2074 = vmatpush2.bf16.xpose.msra.mxu0 0
      %2075 = vmatprep.mubr.bf16.mxu0 0
      %2076 = vmatmul.mubr.bf16.gmra.mxu0 %v2041
      %v2077 = vpop.f32.mrf.mxu0
      %v2078 = vadd.f32 0.0, %v2077
      %v2079 = vpop.f32.mrf.mxu0
      %v2080 = vpop.f32.mrf.mxu0
      %v2081 = vpop.f32.mrf.mxu0
      %2082 = vdwg.mxu0
      %v2084 = vsel %vm1855, %v1242, 0
      %2086 = vmatprep.subr.bf16.mxu0 0
      %2087 = vmatpush1.bf16.xpose.msra.mxu0 0
      %2088 = vmatprep.subr.bf16.mxu0 0
      %2089 = vmatpush1.bf16.xpose.msra.mxu0 0
      %2090 = vmatprep.subr.bf16.mxu0 0
      %2091 = vmatpush1.bf16.xpose.msra.mxu0 0
      %2092 = vmatprep.subr.bf16.mxu0 0
      %2093 = vmatpush1.bf16.xpose.msra.mxu0 0
      %2094 = vmatprep.subr.bf16.mxu0 0
      %2095 = vmatpush1.bf16.xpose.msra.mxu0 0
      %2096 = vmatprep.subr.bf16.mxu0 0
      %2097 = vmatpush1.bf16.xpose.msra.mxu0 0
      %2098 = vmatprep.subr.bf16.mxu0 0
      %2099 = vmatpush1.bf16.xpose.msra.mxu0 0
      %2100 = vmatprep.subr.bf16.mxu0 0
      %2101 = vmatpush1.bf16.xpose.msra.mxu0 %v1906
      %2102 = vmatprep.subr.bf16.mxu0 0
      %2103 = vmatpush2.bf16.xpose.msra.mxu0 0
      %2104 = vmatprep.subr.bf16.mxu0 0
      %2105 = vmatpush2.bf16.xpose.msra.mxu0 0
      %2106 = vmatprep.subr.bf16.mxu0 0
      %2107 = vmatpush2.bf16.xpose.msra.mxu0 0
      %2108 = vmatprep.subr.bf16.mxu0 0
      %2109 = vmatpush2.bf16.xpose.msra.mxu0 0
      %2110 = vmatprep.subr.bf16.mxu0 0
      %2111 = vmatpush2.bf16.xpose.msra.mxu0 0
      %2112 = vmatprep.subr.bf16.mxu0 0
      %2113 = vmatpush2.bf16.xpose.msra.mxu0 0
      %2114 = vmatprep.subr.bf16.mxu0 0
      %2115 = vmatpush2.bf16.xpose.msra.mxu0 0
      %2116 = vmatprep.subr.bf16.mxu0 0
      %2117 = vmatpush2.bf16.xpose.msra.mxu0 0
      %2118 = vmatprep.mubr.bf16.mxu0 0
      %2119 = vmatmul.mubr.bf16.gmra.mxu0 %v2084
      %v2120 = vpop.f32.mrf.mxu0
      %v2121 = vadd.f32 0.0, %v2120
      %v2122 = vpop.f32.mrf.mxu0
      %v2123 = vpop.f32.mrf.mxu0
      %v2124 = vpop.f32.mrf.mxu0
      %2125 = vdwg.mxu0
      %v2127 = vsel %vm1855, %v1243, 0
      %2129 = vmatprep.subr.bf16.mxu0 0
      %2130 = vmatpush1.bf16.xpose.msra.mxu0 0
      %2131 = vmatprep.subr.bf16.mxu0 0
      %2132 = vmatpush1.bf16.xpose.msra.mxu0 0
      %2133 = vmatprep.subr.bf16.mxu0 0
      %2134 = vmatpush1.bf16.xpose.msra.mxu0 0
      %2135 = vmatprep.subr.bf16.mxu0 0
      %2136 = vmatpush1.bf16.xpose.msra.mxu0 0
      %2137 = vmatprep.subr.bf16.mxu0 0
      %2138 = vmatpush1.bf16.xpose.msra.mxu0 0
      %2139 = vmatprep.subr.bf16.mxu0 0
      %2140 = vmatpush1.bf16.xpose.msra.mxu0 0
      %2141 = vmatprep.subr.bf16.mxu0 0
      %2142 = vmatpush1.bf16.xpose.msra.mxu0 0
      %2143 = vmatprep.subr.bf16.mxu0 0
      %2144 = vmatpush1.bf16.xpose.msra.mxu0 %v1952
      %2145 = vmatprep.subr.bf16.mxu0 0
      %2146 = vmatpush2.bf16.xpose.msra.mxu0 0
      %2147 = vmatprep.subr.bf16.mxu0 0
      %2148 = vmatpush2.bf16.xpose.msra.mxu0 0
      %2149 = vmatprep.subr.bf16.mxu0 0
      %2150 = vmatpush2.bf16.xpose.msra.mxu0 0
      %2151 = vmatprep.subr.bf16.mxu0 0
      %2152 = vmatpush2.bf16.xpose.msra.mxu0 0
      %2153 = vmatprep.subr.bf16.mxu0 0
      %2154 = vmatpush2.bf16.xpose.msra.mxu0 0
      %2155 = vmatprep.subr.bf16.mxu0 0
      %2156 = vmatpush2.bf16.xpose.msra.mxu0 0
      %2157 = vmatprep.subr.bf16.mxu0 0
      %2158 = vmatpush2.bf16.xpose.msra.mxu0 0
      %2159 = vmatprep.subr.bf16.mxu0 0
      %2160 = vmatpush2.bf16.xpose.msra.mxu0 0
      %2161 = vmatprep.mubr.bf16.mxu0 0
      %2162 = vmatmul.mubr.bf16.gmra.mxu0 %v2127
      %v2163 = vpop.f32.mrf.mxu0
      %v2164 = vadd.f32 0.0, %v2163
      %v2165 = vpop.f32.mrf.mxu0
      %v2166 = vpop.f32.mrf.mxu0
      %v2167 = vpop.f32.mrf.mxu0
      %2168 = vdwg.mxu0
      %v2170 = vsel %vm1855, %v1244, 0
      %2172 = vmatprep.subr.bf16.mxu0 0
      %2173 = vmatpush1.bf16.xpose.msra.mxu0 0
      %2174 = vmatprep.subr.bf16.mxu0 0
      %2175 = vmatpush1.bf16.xpose.msra.mxu0 0
      %2176 = vmatprep.subr.bf16.mxu0 0
      %2177 = vmatpush1.bf16.xpose.msra.mxu0 0
      %2178 = vmatprep.subr.bf16.mxu0 0
      %2179 = vmatpush1.bf16.xpose.msra.mxu0 0
      %2180 = vmatprep.subr.bf16.mxu0 0
      %2181 = vmatpush1.bf16.xpose.msra.mxu0 0
      %2182 = vmatprep.subr.bf16.mxu0 0
      %2183 = vmatpush1.bf16.xpose.msra.mxu0 0
      %2184 = vmatprep.subr.bf16.mxu0 0
      %2185 = vmatpush1.bf16.xpose.msra.mxu0 0
      %2186 = vmatprep.subr.bf16.mxu0 0
      %2187 = vmatpush1.bf16.xpose.msra.mxu0 %v1998
      %2188 = vmatprep.subr.bf16.mxu0 0
      %2189 = vmatpush2.bf16.xpose.msra.mxu0 0
      %2190 = vmatprep.subr.bf16.mxu0 0
      %2191 = vmatpush2.bf16.xpose.msra.mxu0 0
      %2192 = vmatprep.subr.bf16.mxu0 0
      %2193 = vmatpush2.bf16.xpose.msra.mxu0 0
      %2194 = vmatprep.subr.bf16.mxu0 0
      %2195 = vmatpush2.bf16.xpose.msra.mxu0 0
      %2196 = vmatprep.subr.bf16.mxu0 0
      %2197 = vmatpush2.bf16.xpose.msra.mxu0 0
      %2198 = vmatprep.subr.bf16.mxu0 0
      %2199 = vmatpush2.bf16.xpose.msra.mxu0 0
      %2200 = vmatprep.subr.bf16.mxu0 0
      %2201 = vmatpush2.bf16.xpose.msra.mxu0 0
      %2202 = vmatprep.subr.bf16.mxu0 0
      %2203 = vmatpush2.bf16.xpose.msra.mxu0 0
      %2204 = vmatprep.mubr.bf16.mxu0 0
      %2205 = vmatmul.mubr.bf16.gmra.mxu0 %v2170
      %v2206 = vpop.f32.mrf.mxu0
      %v2207 = vadd.f32 0.0, %v2206
      %v2208 = vpop.f32.mrf.mxu0
      %v2209 = vpop.f32.mrf.mxu0
      %v2210 = vpop.f32.mrf.mxu0
      %2211 = vdwg.mxu0
      %v2212 = vsel %vm1855, %v1897, -inf
      %2213 = vmax.xlane.f32.xlu0 %v2212
      %v2214 = vpop.xlane.xlu0 %2213
      %v2215 = vsel %vm1855, %v1943, -inf
      %2216 = vmax.xlane.f32.xlu0 %v2215
      %v2217 = vpop.xlane.xlu0 %2216
      %v2218 = vsel %vm1855, %v1989, -inf
      %2219 = vmax.xlane.f32.xlu0 %v2218
      %v2220 = vpop.xlane.xlu0 %2219
      %v2221 = vsel %vm1855, %v2035, -inf
      %2222 = vmax.xlane.f32.xlu0 %v2221
      %v2223 = vpop.xlane.xlu0 %2222
      %v2224 = vsub.f32 %v1897, %v2214
      %v2225 = vsub.f32 %v1943, %v2217
      %v2226 = vsub.f32 %v1989, %v2220
      %v2227 = vsub.f32 %v2035, %v2223
      %v2228 = vmul.f32 %v2224, 1.442695
      %v2229 = vpow.pop %v2228
      %v2230 = vmul.f32 %v2225, 1.442695
      %v2231 = vpow.pop %v2230
      %v2232 = vmul.f32 %v2226, 1.442695
      %v2233 = vpow.pop %v2232
      %v2234 = vmul.f32 %v2227, 1.442695
      %v2235 = vpow.pop %v2234
      %v2236 = vsel %vm1855, %v2229, 0.0
      %2237 = vadd.xlane.f32.xlu0 %v2236
      %v2238 = vpop.xlane.xlu0 %2237
      %v2239 = vsel %vm1855, %v2231, 0.0
      %2240 = vadd.xlane.f32.xlu0 %v2239
      %v2241 = vpop.xlane.xlu0 %2240
      %v2242 = vsel %vm1855, %v2233, 0.0
      %2243 = vadd.xlane.f32.xlu0 %v2242
      %v2244 = vpop.xlane.xlu0 %2243
      %v2245 = vsel %vm1855, %v2235, 0.0
      %2246 = vadd.xlane.f32.xlu0 %v2245
      %v2247 = vpop.xlane.xlu0 %2246
      %v2248 = vrcp.pop %v2238
      %v2249 = vmul.f32 %v2229, %v2248
      %v2250 = vrcp.pop %v2241
      %v2251 = vmul.f32 %v2231, %v2250
      %v2252 = vrcp.pop %v2244
      %v2253 = vmul.f32 %v2233, %v2252
      %v2254 = vrcp.pop %v2247
      %v2255 = vmul.f32 %v2235, %v2254
      %vm2256 = vcmask 130112
      %v2257 = vsel %vm2256, %v2078, -inf
      %2258 = vmax.xlane.f32.xlu0 %v2257
      %v2259 = vpop.xlane.xlu0 %2258
      %v2260 = vsel %vm2256, %v2121, -inf
      %2261 = vmax.xlane.f32.xlu0 %v2260
      %v2262 = vpop.xlane.xlu0 %2261
      %v2263 = vsel %vm2256, %v2164, -inf
      %2264 = vmax.xlane.f32.xlu0 %v2263
      %v2265 = vpop.xlane.xlu0 %2264
      %v2266 = vsel %vm2256, %v2207, -inf
      %2267 = vmax.xlane.f32.xlu0 %v2266
      %v2268 = vpop.xlane.xlu0 %2267
      %v2269 = vsub.f32 %v2078, %v2259
      %v2270 = vsub.f32 %v2121, %v2262
      %v2271 = vsub.f32 %v2164, %v2265
      %v2272 = vsub.f32 %v2207, %v2268
      %v2273 = vmul.f32 %v2269, 1.442695
      %v2274 = vpow.pop %v2273
      %v2275 = vmul.f32 %v2270, 1.442695
      %v2276 = vpow.pop %v2275
      %v2277 = vmul.f32 %v2271, 1.442695
      %v2278 = vpow.pop %v2277
      %v2279 = vmul.f32 %v2272, 1.442695
      %v2280 = vpow.pop %v2279
      %2285 = vrot.lane.b32.xlu0 %v2274, 120
      %v2286 = vpop.permute.xlu0 %2285
      %2287 = vrot.lane.b32.xlu0 %v2276, 120
      %v2288 = vpop.permute.xlu0 %2287
      %2289 = vrot.lane.b32.xlu0 %v2278, 120
      %v2290 = vpop.permute.xlu0 %2289
      %2291 = vrot.lane.b32.xlu0 %v2280, 120
      %v2292 = vpop.permute.xlu0 %2291
      %v2297 = vsel %vm1855, %v2286, 0.0
      %2298 = vadd.xlane.f32.xlu0 %v2297
      %v2299 = vpop.xlane.xlu0 %2298
      %v2300 = vsel %vm1855, %v2288, 0.0
      %2301 = vadd.xlane.f32.xlu0 %v2300
      %v2302 = vpop.xlane.xlu0 %2301
      %v2303 = vsel %vm1855, %v2290, 0.0
      %2304 = vadd.xlane.f32.xlu0 %v2303
      %v2305 = vpop.xlane.xlu0 %2304
      %v2306 = vsel %vm1855, %v2292, 0.0
      %2307 = vadd.xlane.f32.xlu0 %v2306
      %v2308 = vpop.xlane.xlu0 %2307
      %v2309 = vrcp.pop %v2299
      %v2310 = vmul.f32 %v2274, %v2309
      %v2311 = vrcp.pop %v2302
      %v2312 = vmul.f32 %v2276, %v2311
      %v2313 = vrcp.pop %v2305
      %v2314 = vmul.f32 %v2278, %v2313
      %v2315 = vrcp.pop %v2308
      %v2316 = vmul.f32 %v2280, %v2315
      %2321 = vrot.lane.b32.xlu0 %v2310, 120
      %v2322 = vpop.permute.xlu0 %2321
      %2323 = vrot.lane.b32.xlu0 %v2312, 120
      %v2324 = vpop.permute.xlu0 %2323
      %2325 = vrot.lane.b32.xlu0 %v2314, 120
      %v2326 = vpop.permute.xlu0 %2325
      %2327 = vrot.lane.b32.xlu0 %v2316, 120
      %v2328 = vpop.permute.xlu0 %2327
      %v2333 = vsub.f32 %v2249, %v2322
      %v2334 = vsub.f32 %v2251, %v2324
      %v2335 = vsub.f32 %v2253, %v2326
      %v2336 = vsub.f32 %v2255, %v2328
      %v2337 = vsel %vm2256, %v1897, -inf
      %2338 = vmax.xlane.f32.xlu0 %v2337
      %v2339 = vpop.xlane.xlu0 %2338
      %v2340 = vsel %vm2256, %v1943, -inf
      %2341 = vmax.xlane.f32.xlu0 %v2340
      %v2342 = vpop.xlane.xlu0 %2341
      %v2343 = vsel %vm2256, %v1989, -inf
      %2344 = vmax.xlane.f32.xlu0 %v2343
      %v2345 = vpop.xlane.xlu0 %2344
      %v2346 = vsel %vm2256, %v2035, -inf
      %2347 = vmax.xlane.f32.xlu0 %v2346
      %v2348 = vpop.xlane.xlu0 %2347
      %v2349 = vsub.f32 %v1897, %v2339
      %v2350 = vsub.f32 %v1943, %v2342
      %v2351 = vsub.f32 %v1989, %v2345
      %v2352 = vsub.f32 %v2035, %v2348
      %v2353 = vmul.f32 %v2349, 1.442695
      %v2354 = vpow.pop %v2353
      %v2355 = vmul.f32 %v2350, 1.442695
      %v2356 = vpow.pop %v2355
      %v2357 = vmul.f32 %v2351, 1.442695
      %v2358 = vpow.pop %v2357
      %v2359 = vmul.f32 %v2352, 1.442695
      %v2360 = vpow.pop %v2359
      %2365 = vrot.lane.b32.xlu0 %v2354, 120
      %v2366 = vpop.permute.xlu0 %2365
      %2367 = vrot.lane.b32.xlu0 %v2356, 120
      %v2368 = vpop.permute.xlu0 %2367
      %2369 = vrot.lane.b32.xlu0 %v2358, 120
      %v2370 = vpop.permute.xlu0 %2369
      %2371 = vrot.lane.b32.xlu0 %v2360, 120
      %v2372 = vpop.permute.xlu0 %2371
      %v2377 = vsel %vm1855, %v2366, 0.0
      %2378 = vadd.xlane.f32.xlu0 %v2377
      %v2379 = vpop.xlane.xlu0 %2378
      %v2380 = vsel %vm1855, %v2368, 0.0
      %2381 = vadd.xlane.f32.xlu0 %v2380
      %v2382 = vpop.xlane.xlu0 %2381
      %v2383 = vsel %vm1855, %v2370, 0.0
      %2384 = vadd.xlane.f32.xlu0 %v2383
      %v2385 = vpop.xlane.xlu0 %2384
      %v2386 = vsel %vm1855, %v2372, 0.0
      %2387 = vadd.xlane.f32.xlu0 %v2386
      %v2388 = vpop.xlane.xlu0 %2387
      %v2389 = vrcp.pop %v2379
      %v2390 = vmul.f32 %v2354, %v2389
      %v2391 = vrcp.pop %v2382
      %v2392 = vmul.f32 %v2356, %v2391
      %v2393 = vrcp.pop %v2385
      %v2394 = vmul.f32 %v2358, %v2393
      %v2395 = vrcp.pop %v2388
      %v2396 = vmul.f32 %v2360, %v2395
      %v2397 = vsel %vm1855, %v2078, -inf
      %2398 = vmax.xlane.f32.xlu0 %v2397
      %v2399 = vpop.xlane.xlu0 %2398
      %v2400 = vsel %vm1855, %v2121, -inf
      %2401 = vmax.xlane.f32.xlu0 %v2400
      %v2402 = vpop.xlane.xlu0 %2401
      %v2403 = vsel %vm1855, %v2164, -inf
      %2404 = vmax.xlane.f32.xlu0 %v2403
      %v2405 = vpop.xlane.xlu0 %2404
      %v2406 = vsel %vm1855, %v2207, -inf
      %2407 = vmax.xlane.f32.xlu0 %v2406
      %v2408 = vpop.xlane.xlu0 %2407
      %v2409 = vsub.f32 %v2078, %v2399
      %v2410 = vsub.f32 %v2121, %v2402
      %v2411 = vsub.f32 %v2164, %v2405
      %v2412 = vsub.f32 %v2207, %v2408
      %v2413 = vmul.f32 %v2409, 1.442695
      %v2414 = vpow.pop %v2413
      %v2415 = vmul.f32 %v2410, 1.442695
      %v2416 = vpow.pop %v2415
      %v2417 = vmul.f32 %v2411, 1.442695
      %v2418 = vpow.pop %v2417
      %v2419 = vmul.f32 %v2412, 1.442695
      %v2420 = vpow.pop %v2419
      %v2421 = vsel %vm1855, %v2414, 0.0
      %2422 = vadd.xlane.f32.xlu0 %v2421
      %v2423 = vpop.xlane.xlu0 %2422
      %v2424 = vsel %vm1855, %v2416, 0.0
      %2425 = vadd.xlane.f32.xlu0 %v2424
      %v2426 = vpop.xlane.xlu0 %2425
      %v2427 = vsel %vm1855, %v2418, 0.0
      %2428 = vadd.xlane.f32.xlu0 %v2427
      %v2429 = vpop.xlane.xlu0 %2428
      %v2430 = vsel %vm1855, %v2420, 0.0
      %2431 = vadd.xlane.f32.xlu0 %v2430
      %v2432 = vpop.xlane.xlu0 %2431
      %v2433 = vrcp.pop %v2423
      %v2434 = vmul.f32 %v2414, %v2433
      %v2435 = vrcp.pop %v2426
      %v2436 = vmul.f32 %v2416, %v2435
      %v2437 = vrcp.pop %v2429
      %v2438 = vmul.f32 %v2418, %v2437
      %v2439 = vrcp.pop %v2432
      %v2440 = vmul.f32 %v2420, %v2439
      %2445 = vrot.lane.b32.xlu0 %v2434, 8
      %v2446 = vpop.permute.xlu0 %2445
      %2447 = vrot.lane.b32.xlu0 %v2436, 8
      %v2448 = vpop.permute.xlu0 %2447
      %2449 = vrot.lane.b32.xlu0 %v2438, 8
      %v2450 = vpop.permute.xlu0 %2449
      %2451 = vrot.lane.b32.xlu0 %v2440, 8
      %v2452 = vpop.permute.xlu0 %2451
      %v2457 = vadd.f32 %v2390, %v2446
      %v2458 = vadd.f32 %v2392, %v2448
      %v2459 = vadd.f32 %v2394, %v2450
      %v2460 = vadd.f32 %v2396, %v2452
      %2465 = vrot.lane.b32.xlu0 %v1847, 8
      %v2466 = vpop.permute.xlu0 %2465
      %2467 = vrot.lane.b32.xlu0 %v1848, 8
      %v2468 = vpop.permute.xlu0 %2467
      %2469 = vrot.lane.b32.xlu0 %v1849, 8
      %v2470 = vpop.permute.xlu0 %2469
      %2471 = vrot.lane.b32.xlu0 %v1850, 8
      %v2472 = vpop.permute.xlu0 %2471
      %v2477 = vsel %vm1855, %v1699, %v2466
      %v2478 = vsel %vm1855, %v1700, %v2468
      %v2479 = vsel %vm1855, %v1701, %v2470
      %v2480 = vsel %vm1855, %v1702, %v2472
      %v2481 = vpack.c.bf16 %v2477, %v2477
      %v2482 = vpack.c.bf16 %v2478, %v2478
      %v2483 = vpack.c.bf16 %v2479, %v2479
      %v2484 = vpack.c.bf16 %v2480, %v2480
      %v2485 = vpack.c.bf16 %v2333, %v2333
      %v2486 = vpack.c.bf16 %v2334, %v2334
      %v2487 = vpack.c.bf16 %v2335, %v2335
      %v2488 = vpack.c.bf16 %v2336, %v2336
      %v2490 = vsel %vm1855, %v2485, 0
      %vm2492 = vcmask 1043456
      %v2494 = vsel %vm2492, %v2481, 0
      %2496 = vmatprep.subr.bf16.mxu0 0
      %2497 = vmatpush1.bf16.msra.mxu0 0
      %2498 = vmatprep.subr.bf16.mxu0 0
      %2499 = vmatpush1.bf16.msra.mxu0 0
      %2500 = vmatprep.subr.bf16.mxu0 0
      %2501 = vmatpush1.bf16.msra.mxu0 0
      %2502 = vmatprep.subr.bf16.mxu0 0
      %2503 = vmatpush1.bf16.msra.mxu0 0
      %2504 = vmatprep.subr.bf16.mxu0 0
      %2505 = vmatpush1.bf16.msra.mxu0 0
      %2506 = vmatprep.subr.bf16.mxu0 0
      %2507 = vmatpush1.bf16.msra.mxu0 0
      %2508 = vmatprep.subr.bf16.mxu0 0
      %2509 = vmatpush1.bf16.msra.mxu0 0
      %2510 = vmatprep.subr.bf16.mxu0 0
      %2511 = vmatpush1.bf16.msra.mxu0 %v2494
      %2512 = vmatprep.subr.bf16.mxu0 0
      %2513 = vmatpush2.bf16.msra.mxu0 0
      %2514 = vmatprep.subr.bf16.mxu0 0
      %2515 = vmatpush2.bf16.msra.mxu0 0
      %2516 = vmatprep.subr.bf16.mxu0 0
      %2517 = vmatpush2.bf16.msra.mxu0 0
      %2518 = vmatprep.subr.bf16.mxu0 0
      %2519 = vmatpush2.bf16.msra.mxu0 0
      %2520 = vmatprep.subr.bf16.mxu0 0
      %2521 = vmatpush2.bf16.msra.mxu0 0
      %2522 = vmatprep.subr.bf16.mxu0 0
      %2523 = vmatpush2.bf16.msra.mxu0 0
      %2524 = vmatprep.subr.bf16.mxu0 0
      %2525 = vmatpush2.bf16.msra.mxu0 0
      %2526 = vmatprep.subr.bf16.mxu0 0
      %2527 = vmatpush2.bf16.msra.mxu0 0
      %2528 = vmatprep.mubr.bf16.mxu0 0
      %2529 = vmatmul.mubr.bf16.gmra.mxu0 %v2490
      %v2530 = vpop.f32.mrf.mxu0
      %v2531 = vadd.f32 0.0, %v2530
      %v2532 = vpop.f32.mrf.mxu0
      %v2533 = vpop.f32.mrf.mxu0
      %v2534 = vpop.f32.mrf.mxu0
      %2535 = vdwg.mxu0
      %v2537 = vsel %vm1855, %v2486, 0
      %v2540 = vsel %vm2492, %v2482, 0
      %2542 = vmatprep.subr.bf16.mxu0 0
      %2543 = vmatpush1.bf16.msra.mxu0 0
      %2544 = vmatprep.subr.bf16.mxu0 0
      %2545 = vmatpush1.bf16.msra.mxu0 0
      %2546 = vmatprep.subr.bf16.mxu0 0
      %2547 = vmatpush1.bf16.msra.mxu0 0
      %2548 = vmatprep.subr.bf16.mxu0 0
      %2549 = vmatpush1.bf16.msra.mxu0 0
      %2550 = vmatprep.subr.bf16.mxu0 0
      %2551 = vmatpush1.bf16.msra.mxu0 0
      %2552 = vmatprep.subr.bf16.mxu0 0
      %2553 = vmatpush1.bf16.msra.mxu0 0
      %2554 = vmatprep.subr.bf16.mxu0 0
      %2555 = vmatpush1.bf16.msra.mxu0 0
      %2556 = vmatprep.subr.bf16.mxu0 0
      %2557 = vmatpush1.bf16.msra.mxu0 %v2540
      %2558 = vmatprep.subr.bf16.mxu0 0
      %2559 = vmatpush2.bf16.msra.mxu0 0
      %2560 = vmatprep.subr.bf16.mxu0 0
      %2561 = vmatpush2.bf16.msra.mxu0 0
      %2562 = vmatprep.subr.bf16.mxu0 0
      %2563 = vmatpush2.bf16.msra.mxu0 0
      %2564 = vmatprep.subr.bf16.mxu0 0
      %2565 = vmatpush2.bf16.msra.mxu0 0
      %2566 = vmatprep.subr.bf16.mxu0 0
      %2567 = vmatpush2.bf16.msra.mxu0 0
      %2568 = vmatprep.subr.bf16.mxu0 0
      %2569 = vmatpush2.bf16.msra.mxu0 0
      %2570 = vmatprep.subr.bf16.mxu0 0
      %2571 = vmatpush2.bf16.msra.mxu0 0
      %2572 = vmatprep.subr.bf16.mxu0 0
      %2573 = vmatpush2.bf16.msra.mxu0 0
      %2574 = vmatprep.mubr.bf16.mxu0 0
      %2575 = vmatmul.mubr.bf16.gmra.mxu0 %v2537
      %v2576 = vpop.f32.mrf.mxu0
      %v2577 = vadd.f32 0.0, %v2576
      %v2578 = vpop.f32.mrf.mxu0
      %v2579 = vpop.f32.mrf.mxu0
      %v2580 = vpop.f32.mrf.mxu0
      %2581 = vdwg.mxu0
      %v2583 = vsel %vm1855, %v2487, 0
      %v2586 = vsel %vm2492, %v2483, 0
      %2588 = vmatprep.subr.bf16.mxu0 0
      %2589 = vmatpush1.bf16.msra.mxu0 0
      %2590 = vmatprep.subr.bf16.mxu0 0
      %2591 = vmatpush1.bf16.msra.mxu0 0
      %2592 = vmatprep.subr.bf16.mxu0 0
      %2593 = vmatpush1.bf16.msra.mxu0 0
      %2594 = vmatprep.subr.bf16.mxu0 0
      %2595 = vmatpush1.bf16.msra.mxu0 0
      %2596 = vmatprep.subr.bf16.mxu0 0
      %2597 = vmatpush1.bf16.msra.mxu0 0
      %2598 = vmatprep.subr.bf16.mxu0 0
      %2599 = vmatpush1.bf16.msra.mxu0 0
      %2600 = vmatprep.subr.bf16.mxu0 0
      %2601 = vmatpush1.bf16.msra.mxu0 0
      %2602 = vmatprep.subr.bf16.mxu0 0
      %2603 = vmatpush1.bf16.msra.mxu0 %v2586
      %2604 = vmatprep.subr.bf16.mxu0 0
      %2605 = vmatpush2.bf16.msra.mxu0 0
      %2606 = vmatprep.subr.bf16.mxu0 0
      %2607 = vmatpush2.bf16.msra.mxu0 0
      %2608 = vmatprep.subr.bf16.mxu0 0
      %2609 = vmatpush2.bf16.msra.mxu0 0
      %2610 = vmatprep.subr.bf16.mxu0 0
      %2611 = vmatpush2.bf16.msra.mxu0 0
      %2612 = vmatprep.subr.bf16.mxu0 0
      %2613 = vmatpush2.bf16.msra.mxu0 0
      %2614 = vmatprep.subr.bf16.mxu0 0
      %2615 = vmatpush2.bf16.msra.mxu0 0
      %2616 = vmatprep.subr.bf16.mxu0 0
      %2617 = vmatpush2.bf16.msra.mxu0 0
      %2618 = vmatprep.subr.bf16.mxu0 0
      %2619 = vmatpush2.bf16.msra.mxu0 0
      %2620 = vmatprep.mubr.bf16.mxu0 0
      %2621 = vmatmul.mubr.bf16.gmra.mxu0 %v2583
      %v2622 = vpop.f32.mrf.mxu0
      %v2623 = vadd.f32 0.0, %v2622
      %v2624 = vpop.f32.mrf.mxu0
      %v2625 = vpop.f32.mrf.mxu0
      %v2626 = vpop.f32.mrf.mxu0
      %2627 = vdwg.mxu0
      %v2629 = vsel %vm1855, %v2488, 0
      %v2632 = vsel %vm2492, %v2484, 0
      %2634 = vmatprep.subr.bf16.mxu0 0
      %2635 = vmatpush1.bf16.msra.mxu0 0
      %2636 = vmatprep.subr.bf16.mxu0 0
      %2637 = vmatpush1.bf16.msra.mxu0 0
      %2638 = vmatprep.subr.bf16.mxu0 0
      %2639 = vmatpush1.bf16.msra.mxu0 0
      %2640 = vmatprep.subr.bf16.mxu0 0
      %2641 = vmatpush1.bf16.msra.mxu0 0
      %2642 = vmatprep.subr.bf16.mxu0 0
      %2643 = vmatpush1.bf16.msra.mxu0 0
      %2644 = vmatprep.subr.bf16.mxu0 0
      %2645 = vmatpush1.bf16.msra.mxu0 0
      %2646 = vmatprep.subr.bf16.mxu0 0
      %2647 = vmatpush1.bf16.msra.mxu0 0
      %2648 = vmatprep.subr.bf16.mxu0 0
      %2649 = vmatpush1.bf16.msra.mxu0 %v2632
      %2650 = vmatprep.subr.bf16.mxu0 0
      %2651 = vmatpush2.bf16.msra.mxu0 0
      %2652 = vmatprep.subr.bf16.mxu0 0
      %2653 = vmatpush2.bf16.msra.mxu0 0
      %2654 = vmatprep.subr.bf16.mxu0 0
      %2655 = vmatpush2.bf16.msra.mxu0 0
      %2656 = vmatprep.subr.bf16.mxu0 0
      %2657 = vmatpush2.bf16.msra.mxu0 0
      %2658 = vmatprep.subr.bf16.mxu0 0
      %2659 = vmatpush2.bf16.msra.mxu0 0
      %2660 = vmatprep.subr.bf16.mxu0 0
      %2661 = vmatpush2.bf16.msra.mxu0 0
      %2662 = vmatprep.subr.bf16.mxu0 0
      %2663 = vmatpush2.bf16.msra.mxu0 0
      %2664 = vmatprep.subr.bf16.mxu0 0
      %2665 = vmatpush2.bf16.msra.mxu0 0
      %2666 = vmatprep.mubr.bf16.mxu0 0
      %2667 = vmatmul.mubr.bf16.gmra.mxu0 %v2629
      %v2668 = vpop.f32.mrf.mxu0
      %v2669 = vadd.f32 0.0, %v2668
      %v2670 = vpop.f32.mrf.mxu0
      %v2671 = vpop.f32.mrf.mxu0
      %v2672 = vpop.f32.mrf.mxu0
      %2673 = vdwg.mxu0
      %v2674 = vpack.c.bf16 %v2457, %v2457
      %v2675 = vpack.c.bf16 %v2458, %v2458
      %v2676 = vpack.c.bf16 %v2459, %v2459
      %v2677 = vpack.c.bf16 %v2460, %v2460
      %2679 = vrot.lane.b32.xlu0 %v2674, 120
      %v2680 = vpop.permute.xlu0 %2679
      %v2682 = vsel %vm1855, %v2680, 0
      %2684 = vmatprep.subr.bf16.mxu0 0
      %2685 = vmatpush1.bf16.msra.mxu0 0
      %2686 = vmatprep.subr.bf16.mxu0 0
      %2687 = vmatpush1.bf16.msra.mxu0 0
      %2688 = vmatprep.subr.bf16.mxu0 0
      %2689 = vmatpush1.bf16.msra.mxu0 0
      %2690 = vmatprep.subr.bf16.mxu0 0
      %2691 = vmatpush1.bf16.msra.mxu0 0
      %2692 = vmatprep.subr.bf16.mxu0 0
      %2693 = vmatpush1.bf16.msra.mxu0 0
      %2694 = vmatprep.subr.bf16.mxu0 0
      %2695 = vmatpush1.bf16.msra.mxu0 0
      %2696 = vmatprep.subr.bf16.mxu0 0
      %2697 = vmatpush1.bf16.msra.mxu0 0
      %2698 = vmatprep.subr.bf16.mxu0 0
      %2699 = vmatpush1.bf16.msra.mxu0 %v2494
      %2700 = vmatprep.subr.bf16.mxu0 0
      %2701 = vmatpush2.bf16.msra.mxu0 0
      %2702 = vmatprep.subr.bf16.mxu0 0
      %2703 = vmatpush2.bf16.msra.mxu0 0
      %2704 = vmatprep.subr.bf16.mxu0 0
      %2705 = vmatpush2.bf16.msra.mxu0 0
      %2706 = vmatprep.subr.bf16.mxu0 0
      %2707 = vmatpush2.bf16.msra.mxu0 0
      %2708 = vmatprep.subr.bf16.mxu0 0
      %2709 = vmatpush2.bf16.msra.mxu0 0
      %2710 = vmatprep.subr.bf16.mxu0 0
      %2711 = vmatpush2.bf16.msra.mxu0 0
      %2712 = vmatprep.subr.bf16.mxu0 0
      %2713 = vmatpush2.bf16.msra.mxu0 0
      %2714 = vmatprep.subr.bf16.mxu0 0
      %2715 = vmatpush2.bf16.msra.mxu0 0
      %2716 = vmatprep.mubr.bf16.mxu0 0
      %2717 = vmatmul.mubr.bf16.gmra.mxu0 %v2682
      %v2718 = vpop.f32.mrf.mxu0
      %v2719 = vadd.f32 0.0, %v2718
      %v2720 = vpop.f32.mrf.mxu0
      %v2721 = vpop.f32.mrf.mxu0
      %v2722 = vpop.f32.mrf.mxu0
      %2723 = vdwg.mxu0
      %2725 = vrot.lane.b32.xlu0 %v2675, 120
      %v2726 = vpop.permute.xlu0 %2725
      %v2728 = vsel %vm1855, %v2726, 0
      %2730 = vmatprep.subr.bf16.mxu0 0
      %2731 = vmatpush1.bf16.msra.mxu0 0
      %2732 = vmatprep.subr.bf16.mxu0 0
      %2733 = vmatpush1.bf16.msra.mxu0 0
      %2734 = vmatprep.subr.bf16.mxu0 0
      %2735 = vmatpush1.bf16.msra.mxu0 0
      %2736 = vmatprep.subr.bf16.mxu0 0
      %2737 = vmatpush1.bf16.msra.mxu0 0
      %2738 = vmatprep.subr.bf16.mxu0 0
      %2739 = vmatpush1.bf16.msra.mxu0 0
      %2740 = vmatprep.subr.bf16.mxu0 0
      %2741 = vmatpush1.bf16.msra.mxu0 0
      %2742 = vmatprep.subr.bf16.mxu0 0
      %2743 = vmatpush1.bf16.msra.mxu0 0
      %2744 = vmatprep.subr.bf16.mxu0 0
      %2745 = vmatpush1.bf16.msra.mxu0 %v2540
      %2746 = vmatprep.subr.bf16.mxu0 0
      %2747 = vmatpush2.bf16.msra.mxu0 0
      %2748 = vmatprep.subr.bf16.mxu0 0
      %2749 = vmatpush2.bf16.msra.mxu0 0
      %2750 = vmatprep.subr.bf16.mxu0 0
      %2751 = vmatpush2.bf16.msra.mxu0 0
      %2752 = vmatprep.subr.bf16.mxu0 0
      %2753 = vmatpush2.bf16.msra.mxu0 0
      %2754 = vmatprep.subr.bf16.mxu0 0
      %2755 = vmatpush2.bf16.msra.mxu0 0
      %2756 = vmatprep.subr.bf16.mxu0 0
      %2757 = vmatpush2.bf16.msra.mxu0 0
      %2758 = vmatprep.subr.bf16.mxu0 0
      %2759 = vmatpush2.bf16.msra.mxu0 0
      %2760 = vmatprep.subr.bf16.mxu0 0
      %2761 = vmatpush2.bf16.msra.mxu0 0
      %2762 = vmatprep.mubr.bf16.mxu0 0
      %2763 = vmatmul.mubr.bf16.gmra.mxu0 %v2728
      %v2764 = vpop.f32.mrf.mxu0
      %v2765 = vadd.f32 0.0, %v2764
      %v2766 = vpop.f32.mrf.mxu0
      %v2767 = vpop.f32.mrf.mxu0
      %v2768 = vpop.f32.mrf.mxu0
      %2769 = vdwg.mxu0
      %2771 = vrot.lane.b32.xlu0 %v2676, 120
      %v2772 = vpop.permute.xlu0 %2771
      %v2774 = vsel %vm1855, %v2772, 0
      %2776 = vmatprep.subr.bf16.mxu0 0
      %2777 = vmatpush1.bf16.msra.mxu0 0
      %2778 = vmatprep.subr.bf16.mxu0 0
      %2779 = vmatpush1.bf16.msra.mxu0 0
      %2780 = vmatprep.subr.bf16.mxu0 0
      %2781 = vmatpush1.bf16.msra.mxu0 0
      %2782 = vmatprep.subr.bf16.mxu0 0
      %2783 = vmatpush1.bf16.msra.mxu0 0
      %2784 = vmatprep.subr.bf16.mxu0 0
      %2785 = vmatpush1.bf16.msra.mxu0 0
      %2786 = vmatprep.subr.bf16.mxu0 0
      %2787 = vmatpush1.bf16.msra.mxu0 0
      %2788 = vmatprep.subr.bf16.mxu0 0
      %2789 = vmatpush1.bf16.msra.mxu0 0
      %2790 = vmatprep.subr.bf16.mxu0 0
      %2791 = vmatpush1.bf16.msra.mxu0 %v2586
      %2792 = vmatprep.subr.bf16.mxu0 0
      %2793 = vmatpush2.bf16.msra.mxu0 0
      %2794 = vmatprep.subr.bf16.mxu0 0
      %2795 = vmatpush2.bf16.msra.mxu0 0
      %2796 = vmatprep.subr.bf16.mxu0 0
      %2797 = vmatpush2.bf16.msra.mxu0 0
      %2798 = vmatprep.subr.bf16.mxu0 0
      %2799 = vmatpush2.bf16.msra.mxu0 0
      %2800 = vmatprep.subr.bf16.mxu0 0
      %2801 = vmatpush2.bf16.msra.mxu0 0
      %2802 = vmatprep.subr.bf16.mxu0 0
      %2803 = vmatpush2.bf16.msra.mxu0 0
      %2804 = vmatprep.subr.bf16.mxu0 0
      %2805 = vmatpush2.bf16.msra.mxu0 0
      %2806 = vmatprep.subr.bf16.mxu0 0
      %2807 = vmatpush2.bf16.msra.mxu0 0
      %2808 = vmatprep.mubr.bf16.mxu0 0
      %2809 = vmatmul.mubr.bf16.gmra.mxu0 %v2774
      %v2810 = vpop.f32.mrf.mxu0
      %v2811 = vadd.f32 0.0, %v2810
      %v2812 = vpop.f32.mrf.mxu0
      %v2813 = vpop.f32.mrf.mxu0
      %v2814 = vpop.f32.mrf.mxu0
      %2815 = vdwg.mxu0
      %2817 = vrot.lane.b32.xlu0 %v2677, 120
      %v2818 = vpop.permute.xlu0 %2817
      %v2820 = vsel %vm1855, %v2818, 0
      %2822 = vmatprep.subr.bf16.mxu0 0
      %2823 = vmatpush1.bf16.msra.mxu0 0
      %2824 = vmatprep.subr.bf16.mxu0 0
      %2825 = vmatpush1.bf16.msra.mxu0 0
      %2826 = vmatprep.subr.bf16.mxu0 0
      %2827 = vmatpush1.bf16.msra.mxu0 0
      %2828 = vmatprep.subr.bf16.mxu0 0
      %2829 = vmatpush1.bf16.msra.mxu0 0
      %2830 = vmatprep.subr.bf16.mxu0 0
      %2831 = vmatpush1.bf16.msra.mxu0 0
      %2832 = vmatprep.subr.bf16.mxu0 0
      %2833 = vmatpush1.bf16.msra.mxu0 0
      %2834 = vmatprep.subr.bf16.mxu0 0
      %2835 = vmatpush1.bf16.msra.mxu0 0
      %2836 = vmatprep.subr.bf16.mxu0 0
      %2837 = vmatpush1.bf16.msra.mxu0 %v2632
      %2838 = vmatprep.subr.bf16.mxu0 0
      %2839 = vmatpush2.bf16.msra.mxu0 0
      %2840 = vmatprep.subr.bf16.mxu0 0
      %2841 = vmatpush2.bf16.msra.mxu0 0
      %2842 = vmatprep.subr.bf16.mxu0 0
      %2843 = vmatpush2.bf16.msra.mxu0 0
      %2844 = vmatprep.subr.bf16.mxu0 0
      %2845 = vmatpush2.bf16.msra.mxu0 0
      %2846 = vmatprep.subr.bf16.mxu0 0
      %2847 = vmatpush2.bf16.msra.mxu0 0
      %2848 = vmatprep.subr.bf16.mxu0 0
      %2849 = vmatpush2.bf16.msra.mxu0 0
      %2850 = vmatprep.subr.bf16.mxu0 0
      %2851 = vmatpush2.bf16.msra.mxu0 0
      %2852 = vmatprep.subr.bf16.mxu0 0
      %2853 = vmatpush2.bf16.msra.mxu0 0
      %2854 = vmatprep.mubr.bf16.mxu0 0
      %2855 = vmatmul.mubr.bf16.gmra.mxu0 %v2820
      %v2856 = vpop.f32.mrf.mxu0
      %v2857 = vadd.f32 0.0, %v2856
      %v2858 = vpop.f32.mrf.mxu0
      %v2859 = vpop.f32.mrf.mxu0
      %v2860 = vpop.f32.mrf.mxu0
      %2861 = vdwg.mxu0
      %2866 = vrot.lane.b32.xlu0 %v2719, 120
      %v2867 = vpop.permute.xlu0 %2866
      %2868 = vrot.lane.b32.xlu0 %v2765, 120
      %v2869 = vpop.permute.xlu0 %2868
      %2870 = vrot.lane.b32.xlu0 %v2811, 120
      %v2871 = vpop.permute.xlu0 %2870
      %2872 = vrot.lane.b32.xlu0 %v2857, 120
      %v2873 = vpop.permute.xlu0 %2872
      %v2878 = vsub.f32 %v2531, %v2867
      %v2879 = vsub.f32 %v2577, %v2869
      %v2880 = vsub.f32 %v2623, %v2871
      %v2881 = vsub.f32 %v2669, %v2873
      %v2882 = vcombine.low %v2878, %v2880
      %v2883 = vcombine.high %v2878, %v2880
      %v2885 = vunpack.c.l.s4 1983009808
      %v2886 = vunpack.c.0.s8 %v2885
      %v2887 = vlaneseq
      %v2888 = vshrl.u32 %v2887, 7
      %v2889 = vsub.s32 %v2886, %v2888
      %v2890 = vrot.slane %v2882, %v2889
      %v2892 = vunpack.c.l.s4 1983009808
      %v2893 = vunpack.c.0.s8 %v2892
      %v2894 = vlaneseq
      %v2895 = vshrl.u32 %v2894, 7
      %v2896 = vsub.s32 %v2893, %v2895
      %v2897 = vrot.slane %v2883, %v2896
      %v2898 = vcombine.low %v2879, %v2881
      %v2899 = vcombine.high %v2879, %v2881
      %v2901 = vunpack.c.l.s4 1983009808
      %v2902 = vunpack.c.0.s8 %v2901
      %v2903 = vlaneseq
      %v2904 = vshrl.u32 %v2903, 7
      %v2905 = vsub.s32 %v2902, %v2904
      %v2906 = vrot.slane %v2898, %v2905
      %v2908 = vunpack.c.l.s4 1983009808
      %v2909 = vunpack.c.0.s8 %v2908
      %v2910 = vlaneseq
      %v2911 = vshrl.u32 %v2910, 7
      %v2912 = vsub.s32 %v2909, %v2911
      %v2913 = vrot.slane %v2899, %v2912
      %v2914 = vcombine.low %v2890, %v2906
      %v2915 = vcombine.high %v2890, %v2906
      %v2917 = vunpack.c.l.s4 1934713408
      %v2918 = vunpack.c.0.s8 %v2917
      %v2919 = vlaneseq
      %v2920 = vshrl.u32 %v2919, 7
      %v2921 = vsub.s32 %v2918, %v2920
      %v2922 = vrot.slane %v2914, %v2921
      %v2924 = vunpack.c.l.s4 1934713408
      %v2925 = vunpack.c.0.s8 %v2924
      %v2926 = vlaneseq
      %v2927 = vshrl.u32 %v2926, 7
      %v2928 = vsub.s32 %v2925, %v2927
      %v2929 = vrot.slane %v2915, %v2928
      %v2930 = vcombine.low %v2897, %v2913
      %v2931 = vcombine.high %v2897, %v2913
      %v2933 = vunpack.c.l.s4 1934713408
      %v2934 = vunpack.c.0.s8 %v2933
      %v2935 = vlaneseq
      %v2936 = vshrl.u32 %v2935, 7
      %v2937 = vsub.s32 %v2934, %v2936
      %v2938 = vrot.slane %v2930, %v2937
      %v2940 = vunpack.c.l.s4 1934713408
      %v2941 = vunpack.c.0.s8 %v2940
      %v2942 = vlaneseq
      %v2943 = vshrl.u32 %v2942, 7
      %v2944 = vsub.s32 %v2941, %v2943
      %v2945 = vrot.slane %v2931, %v2944
      %v2946 = vcombine.high %v2922, 0.0
      %v2947 = vcombine.high %v2929, 0.0
      %v2948 = vcombine.high %v2938, 0.0
      %v2949 = vcombine.high %v2945, 0.0
      %v2950 = vcombine.low %v2922, %v2929
      %v2952 = vunpack.c.l.s4 1983009808
      %v2953 = vunpack.c.0.s8 %v2952
      %v2954 = vlaneseq
      %v2955 = vshrl.u32 %v2954, 7
      %v2956 = vsub.s32 %v2953, %v2955
      %v2957 = vrot.slane %v2950, %v2956
      %v2958 = vcombine.low %v2946, %v2947
      %v2960 = vunpack.c.l.s4 1983009808
      %v2961 = vunpack.c.0.s8 %v2960
      %v2962 = vlaneseq
      %v2963 = vshrl.u32 %v2962, 7
      %v2964 = vsub.s32 %v2961, %v2963
      %v2965 = vrot.slane %v2958, %v2964
      %v2966 = vcombine.low %v2938, %v2945
      %v2968 = vunpack.c.l.s4 1983009808
      %v2969 = vunpack.c.0.s8 %v2968
      %v2970 = vlaneseq
      %v2971 = vshrl.u32 %v2970, 7
      %v2972 = vsub.s32 %v2969, %v2971
      %v2973 = vrot.slane %v2966, %v2972
      %v2974 = vcombine.low %v2948, %v2949
      %v2976 = vunpack.c.l.s4 1983009808
      %v2977 = vunpack.c.0.s8 %v2976
      %v2978 = vlaneseq
      %v2979 = vshrl.u32 %v2978, 7
      %v2980 = vsub.s32 %v2977, %v2979
      %v2981 = vrot.slane %v2974, %v2980
      %v2982 = vcombine.low %v2957, %v2965
      %v2983 = vcombine.high %v2957, %v2965
      %v2985 = vunpack.c.l.s4 1934713408
      %v2986 = vunpack.c.0.s8 %v2985
      %v2987 = vlaneseq
      %v2988 = vshrl.u32 %v2987, 7
      %v2989 = vsub.s32 %v2986, %v2988
      %v2990 = vrot.slane %v2982, %v2989
      %v2992 = vunpack.c.l.s4 1934713408
      %v2993 = vunpack.c.0.s8 %v2992
      %v2994 = vlaneseq
      %v2995 = vshrl.u32 %v2994, 7
      %v2996 = vsub.s32 %v2993, %v2995
      %v2997 = vrot.slane %v2983, %v2996
      %v2998 = vcombine.low %v2973, %v2981
      %v2999 = vcombine.high %v2973, %v2981
      %v3001 = vunpack.c.l.s4 1934713408
      %v3002 = vunpack.c.0.s8 %v3001
      %v3003 = vlaneseq
      %v3004 = vshrl.u32 %v3003, 7
      %v3005 = vsub.s32 %v3002, %v3004
      %v3006 = vrot.slane %v2998, %v3005
      %v3008 = vunpack.c.l.s4 1934713408
      %v3009 = vunpack.c.0.s8 %v3008
      %v3010 = vlaneseq
      %v3011 = vshrl.u32 %v3010, 7
      %v3012 = vsub.s32 %v3009, %v3011
      %v3013 = vrot.slane %v2999, %v3012
      %v3014 = vcombine.low %v2990, %v3006
      %v3015 = vcombine.high %v2990, %v3006
      %v3016 = vcombine.low %v2997, %v3013
      %v3017 = vcombine.high %v2997, %v3013
      %3019 = vrot.lane.b32.xlu0 %v3015, 8
      %v3020 = vpop.permute.xlu0 %3019
      %3023 = vrot.lane.b32.xlu0 %v3016, 16
      %v3024 = vpop.permute.xlu0 %3023
      %3027 = vrot.lane.b32.xlu0 %v3017, 24
      %v3028 = vpop.permute.xlu0 %3027
      %v3030 = vsel %vm1855, %v3014, %v3020
      %vm3031 = vcmask 130048
      %v3032 = vsel %vm3031, %v3030, %v3024
      %vm3033 = vcmask 195584
      %v3034 = vsel %vm3033, %v3032, %v3028
      %3035 = vrot.lane.b32.xlu0 %v2719, 8
      %v3036 = vpop.permute.xlu0 %3035
      %3037 = vrot.lane.b32.xlu0 %v2765, 8
      %v3038 = vpop.permute.xlu0 %3037
      %3039 = vrot.lane.b32.xlu0 %v2811, 8
      %v3040 = vpop.permute.xlu0 %3039
      %3041 = vrot.lane.b32.xlu0 %v2857, 8
      %v3042 = vpop.permute.xlu0 %3041
      %v3047 = vadd.f32 %v2531, %v3036
      %v3048 = vadd.f32 %v2577, %v3038
      %v3049 = vadd.f32 %v2623, %v3040
      %v3050 = vadd.f32 %v2669, %v3042
      %3055 = vrot.lane.b32.xlu0 %v3047, 120
      %v3056 = vpop.permute.xlu0 %3055
      %3057 = vrot.lane.b32.xlu0 %v3048, 120
      %v3058 = vpop.permute.xlu0 %3057
      %3059 = vrot.lane.b32.xlu0 %v3049, 120
      %v3060 = vpop.permute.xlu0 %3059
      %3061 = vrot.lane.b32.xlu0 %v3050, 120
      %v3062 = vpop.permute.xlu0 %3061
      %v3067 = vcombine.low %v3056, %v3060
      %v3068 = vcombine.high %v3056, %v3060
      %v3070 = vunpack.c.l.s4 1983009808
      %v3071 = vunpack.c.0.s8 %v3070
      %v3072 = vlaneseq
      %v3073 = vshrl.u32 %v3072, 7
      %v3074 = vsub.s32 %v3071, %v3073
      %v3075 = vrot.slane %v3067, %v3074
      %v3077 = vunpack.c.l.s4 1983009808
      %v3078 = vunpack.c.0.s8 %v3077
      %v3079 = vlaneseq
      %v3080 = vshrl.u32 %v3079, 7
      %v3081 = vsub.s32 %v3078, %v3080
      %v3082 = vrot.slane %v3068, %v3081
      %v3083 = vcombine.low %v3058, %v3062
      %v3084 = vcombine.high %v3058, %v3062
      %v3086 = vunpack.c.l.s4 1983009808
      %v3087 = vunpack.c.0.s8 %v3086
      %v3088 = vlaneseq
      %v3089 = vshrl.u32 %v3088, 7
      %v3090 = vsub.s32 %v3087, %v3089
      %v3091 = vrot.slane %v3083, %v3090
      %v3093 = vunpack.c.l.s4 1983009808
      %v3094 = vunpack.c.0.s8 %v3093
      %v3095 = vlaneseq
      %v3096 = vshrl.u32 %v3095, 7
      %v3097 = vsub.s32 %v3094, %v3096
      %v3098 = vrot.slane %v3084, %v3097
      %v3099 = vcombine.low %v3075, %v3091
      %v3100 = vcombine.high %v3075, %v3091
      %v3102 = vunpack.c.l.s4 1934713408
      %v3103 = vunpack.c.0.s8 %v3102
      %v3104 = vlaneseq
      %v3105 = vshrl.u32 %v3104, 7
      %v3106 = vsub.s32 %v3103, %v3105
      %v3107 = vrot.slane %v3099, %v3106
      %v3109 = vunpack.c.l.s4 1934713408
      %v3110 = vunpack.c.0.s8 %v3109
      %v3111 = vlaneseq
      %v3112 = vshrl.u32 %v3111, 7
      %v3113 = vsub.s32 %v3110, %v3112
      %v3114 = vrot.slane %v3100, %v3113
      %v3115 = vcombine.low %v3082, %v3098
      %v3116 = vcombine.high %v3082, %v3098
      %v3118 = vunpack.c.l.s4 1934713408
      %v3119 = vunpack.c.0.s8 %v3118
      %v3120 = vlaneseq
      %v3121 = vshrl.u32 %v3120, 7
      %v3122 = vsub.s32 %v3119, %v3121
      %v3123 = vrot.slane %v3115, %v3122
      %v3125 = vunpack.c.l.s4 1934713408
      %v3126 = vunpack.c.0.s8 %v3125
      %v3127 = vlaneseq
      %v3128 = vshrl.u32 %v3127, 7
      %v3129 = vsub.s32 %v3126, %v3128
      %v3130 = vrot.slane %v3116, %v3129
      %v3131 = vcombine.high %v3107, 0.0
      %v3132 = vcombine.high %v3114, 0.0
      %v3133 = vcombine.high %v3123, 0.0
      %v3134 = vcombine.high %v3130, 0.0
      %v3135 = vcombine.low %v3107, %v3114
      %v3137 = vunpack.c.l.s4 1983009808
      %v3138 = vunpack.c.0.s8 %v3137
      %v3139 = vlaneseq
      %v3140 = vshrl.u32 %v3139, 7
      %v3141 = vsub.s32 %v3138, %v3140
      %v3142 = vrot.slane %v3135, %v3141
      %v3143 = vcombine.low %v3131, %v3132
      %v3145 = vunpack.c.l.s4 1983009808
      %v3146 = vunpack.c.0.s8 %v3145
      %v3147 = vlaneseq
      %v3148 = vshrl.u32 %v3147, 7
      %v3149 = vsub.s32 %v3146, %v3148
      %v3150 = vrot.slane %v3143, %v3149
      %v3151 = vcombine.low %v3123, %v3130
      %v3153 = vunpack.c.l.s4 1983009808
      %v3154 = vunpack.c.0.s8 %v3153
      %v3155 = vlaneseq
      %v3156 = vshrl.u32 %v3155, 7
      %v3157 = vsub.s32 %v3154, %v3156
      %v3158 = vrot.slane %v3151, %v3157
      %v3159 = vcombine.low %v3133, %v3134
      %v3161 = vunpack.c.l.s4 1983009808
      %v3162 = vunpack.c.0.s8 %v3161
      %v3163 = vlaneseq
      %v3164 = vshrl.u32 %v3163, 7
      %v3165 = vsub.s32 %v3162, %v3164
      %v3166 = vrot.slane %v3159, %v3165
      %v3167 = vcombine.low %v3142, %v3150
      %v3168 = vcombine.high %v3142, %v3150
      %v3170 = vunpack.c.l.s4 1934713408
      %v3171 = vunpack.c.0.s8 %v3170
      %v3172 = vlaneseq
      %v3173 = vshrl.u32 %v3172, 7
      %v3174 = vsub.s32 %v3171, %v3173
      %v3175 = vrot.slane %v3167, %v3174
      %v3177 = vunpack.c.l.s4 1934713408
      %v3178 = vunpack.c.0.s8 %v3177
      %v3179 = vlaneseq
      %v3180 = vshrl.u32 %v3179, 7
      %v3181 = vsub.s32 %v3178, %v3180
      %v3182 = vrot.slane %v3168, %v3181
      %v3183 = vcombine.low %v3158, %v3166
      %v3184 = vcombine.high %v3158, %v3166
      %v3186 = vunpack.c.l.s4 1934713408
      %v3187 = vunpack.c.0.s8 %v3186
      %v3188 = vlaneseq
      %v3189 = vshrl.u32 %v3188, 7
      %v3190 = vsub.s32 %v3187, %v3189
      %v3191 = vrot.slane %v3183, %v3190
      %v3193 = vunpack.c.l.s4 1934713408
      %v3194 = vunpack.c.0.s8 %v3193
      %v3195 = vlaneseq
      %v3196 = vshrl.u32 %v3195, 7
      %v3197 = vsub.s32 %v3194, %v3196
      %v3198 = vrot.slane %v3184, %v3197
      %v3199 = vcombine.low %v3175, %v3191
      %v3200 = vcombine.high %v3175, %v3191
      %v3201 = vcombine.low %v3182, %v3198
      %v3202 = vcombine.high %v3182, %v3198
      %3204 = vrot.lane.b32.xlu0 %v3200, 8
      %v3205 = vpop.permute.xlu0 %3204
      %3208 = vrot.lane.b32.xlu0 %v3201, 16
      %v3209 = vpop.permute.xlu0 %3208
      %3212 = vrot.lane.b32.xlu0 %v3202, 24
      %v3213 = vpop.permute.xlu0 %3212
      %v3215 = vsel %vm1855, %v3199, %v3205
      %v3216 = vsel %vm3031, %v3215, %v3209
      %v3217 = vsel %vm3033, %v3216, %v3213
      %v3218 = vpack.c.bf16 %v3217, %v3034
      %v3219 = vld [vmem:[%s8] sm:$0xf]
      %v3220 = vld [vmem:[%s8 + $0x4] sm:$0xf]
      %v3221 = vld [vmem:[%s8 + $0x8] sm:$0xf]
      %v3222 = vld [vmem:[%s8 + $0xc] sm:$0xf]
      %v3227 = vunpack.c.l.b16 %v3219
      %v3228 = vunpack.c.l.b16 %v3220
      %v3229 = vunpack.c.l.b16 %v3221
      %v3230 = vunpack.c.l.b16 %v3222
      %v3231 = vpack.c.b16 %v3228, %v3227
      %v3232 = vpack.c.b16 %v3230, %v3229
      %v3236 = vsel %vm764, %v3218, 0
      %3238 = vmatprep.subr.bf16.mxu0 0
      %3239 = vmatpush1.bf16.msra.mxu0 0
      %3240 = vmatprep.subr.bf16.mxu0 0
      %3241 = vmatpush1.bf16.msra.mxu0 0
      %3242 = vmatprep.subr.bf16.mxu0 0
      %3243 = vmatpush1.bf16.msra.mxu0 0
      %3244 = vmatprep.subr.bf16.mxu0 0
      %3245 = vmatpush1.bf16.msra.mxu0 0
      %3246 = vmatprep.subr.bf16.mxu0 0
      %3247 = vmatpush1.bf16.msra.mxu0 0
      %3248 = vmatprep.subr.bf16.mxu0 0
      %3249 = vmatpush1.bf16.msra.mxu0 0
      %3250 = vmatprep.subr.bf16.mxu0 0
      %3251 = vmatpush1.bf16.msra.mxu0 %v3232
      %3252 = vmatprep.subr.bf16.mxu0 0
      %3253 = vmatpush1.bf16.msra.mxu0 %v3231
      %3254 = vmatprep.subr.bf16.mxu0 0
      %3255 = vmatpush2.bf16.msra.mxu0 0
      %3256 = vmatprep.subr.bf16.mxu0 0
      %3257 = vmatpush2.bf16.msra.mxu0 0
      %3258 = vmatprep.subr.bf16.mxu0 0
      %3259 = vmatpush2.bf16.msra.mxu0 0
      %3260 = vmatprep.subr.bf16.mxu0 0
      %3261 = vmatpush2.bf16.msra.mxu0 0
      %3262 = vmatprep.subr.bf16.mxu0 0
      %3263 = vmatpush2.bf16.msra.mxu0 0
      %3264 = vmatprep.subr.bf16.mxu0 0
      %3265 = vmatpush2.bf16.msra.mxu0 0
      %3266 = vmatprep.subr.bf16.mxu0 0
      %3267 = vmatpush2.bf16.msra.mxu0 0
      %3268 = vmatprep.subr.bf16.mxu0 0
      %3269 = vmatpush2.bf16.msra.mxu0 0
      %3270 = vmatprep.mubr.bf16.mxu0 0
      %3271 = vmatmul.mubr.bf16.gmra.mxu0 %v3236
      %v3272 = vpop.f32.mrf.mxu0
      %v3273 = vadd.f32 0.0, %v3272
      %v3274 = vpop.f32.mrf.mxu0
      %v3275 = vpop.f32.mrf.mxu0
      %v3276 = vadd.f32 0.0, %v3275
      %v3277 = vpop.f32.mrf.mxu0
      %3278 = vdwg.mxu0
      %v3279 = vld [vmem:[%s9] sm:$0x1]
      %v3280 = vld [vmem:[%s10] sm:$0x1]
      %3282 = vrot.lane.b32.xlu0 %v3276, 96
      %v3283 = vpop.permute.xlu0 %3282
      %v3285 = vsub.f32 %v3273, %v3283
      %v3287 = vlaneseq
      %v3288 = vshrl.u32 %v3287, 7
      %v3289 = vsub.s32 0, %v3288
      %v3290 = vrot.slane %v3279, %v3289
      %v3292 = vadd.f32 %v3285, %v3290
      %3294 = vrot.lane.b32.xlu0 %v3273, 96
      %v3295 = vpop.permute.xlu0 %3294
      %v3297 = vadd.f32 %v3276, %v3295
      %v3299 = vlaneseq
      %v3300 = vshrl.u32 %v3299, 7
      %v3301 = vsub.s32 0, %v3300
      %v3302 = vrot.slane %v3280, %v3301
      %v3304 = vadd.f32 %v3297, %v3302
      %v3305 = vadd.f32 %v761, %v3292
      %3307 = vrot.lane.b32.xlu0 %v3304, 32
      %v3308 = vpop.permute.xlu0 %3307
      %v3310 = vadd.f32 %v761, %v3308
      %v3311 = vld [vmem:[%s11] sm:$0x1]
      %v3312 = vld [vmem:[%s12] sm:$0x1]
      %v3313 = vsel %vm764, %v3305, 0.0
      %3314 = vadd.xlane.f32.xlu0 %v3313
      %v3315 = vpop.xlane.xlu0 %3314
      %v3316 = vmul.f32 %v3315, %v768
      %v3317 = vsub.f32 %v3305, %v3316
      %v3318 = vmul.f32 %v3317, %v3317
      %v3319 = vsel %vm764, %v3318, 0.0
      %3320 = vadd.xlane.f32.xlu0 %v3319
      %v3321 = vpop.xlane.xlu0 %3320
      %v3322 = vmul.f32 %v3321, %v768
      %v3323 = vadd.f32 %v3322, 1e-05
      %v3324 = vrsqrt.pop %v3323
      %v3325 = vmul.f32 %v3317, %v3324
      %v3327 = vlaneseq
      %v3328 = vshrl.u32 %v3327, 7
      %v3329 = vsub.s32 0, %v3328
      %v3330 = vrot.slane %v3311, %v3329
      %v3332 = vmul.f32 %v3325, %v3330
      %v3334 = vlaneseq
      %v3335 = vshrl.u32 %v3334, 7
      %v3336 = vsub.s32 0, %v3335
      %v3337 = vrot.slane %v3312, %v3336
      %v3339 = vadd.f32 %v3332, %v3337
      %v3340 = vld [vmem:[%s13] sm:$0x1]
      %v3341 = vld [vmem:[%s14] sm:$0x1]
      %3343 = vrot.lane.b32.xlu0 %v3310, 96
      %v3344 = vpop.permute.xlu0 %3343
      %v3346 = vsel %vm764, %v3344, 0.0
      %3347 = vadd.xlane.f32.xlu0 %v3346
      %v3348 = vpop.xlane.xlu0 %3347
      %v3349 = vmul.f32 %v3348, %v768
      %v3350 = vsub.f32 %v3310, %v3349
      %v3351 = vmul.f32 %v3350, %v3350
      %3353 = vrot.lane.b32.xlu0 %v3351, 96
      %v3354 = vpop.permute.xlu0 %3353
      %v3356 = vsel %vm764, %v3354, 0.0
      %3357 = vadd.xlane.f32.xlu0 %v3356
      %v3358 = vpop.xlane.xlu0 %3357
      %v3359 = vmul.f32 %v3358, %v768
      %v3360 = vadd.f32 %v3359, 1e-05
      %v3361 = vrsqrt.pop %v3360
      %v3362 = vmul.f32 %v3350, %v3361
      %v3364 = vlaneseq
      %v3365 = vshrl.u32 %v3364, 7
      %v3366 = vsub.s32 0, %v3365
      %v3367 = vrot.slane %v3340, %v3366
      %3368 = vrot.lane.b32.xlu0 %v3367, 32
      %v3369 = vpop.permute.xlu0 %3368
      %v3371 = vmul.f32 %v3362, %v3369
      %v3373 = vlaneseq
      %v3374 = vshrl.u32 %v3373, 7
      %v3375 = vsub.s32 0, %v3374
      %v3376 = vrot.slane %v3341, %v3375
      %3377 = vrot.lane.b32.xlu0 %v3376, 32
      %v3378 = vpop.permute.xlu0 %3377
      %v3380 = vadd.f32 %v3371, %v3378
      %3382 = vrot.lane.b32.xlu0 %v3380, 96
      %v3383 = vpop.permute.xlu0 %3382
      %v3385 = vpack.c.bf16 %v3383, %v3339
      %v3386 = vld [vmem:[%s15] sm:$0xff]
      %v3387 = vld [vmem:[%s15 + $0x8] sm:$0xff]
      %v3388 = vld [vmem:[%s15 + $0x10] sm:$0xff]
      %v3389 = vld [vmem:[%s15 + $0x18] sm:$0xff]
      %v3394 = vunpack.c.l.b16 %v3386
      %v3395 = vunpack.c.h.b16 %v3386
      %v3396 = vunpack.c.l.b16 %v3387
      %v3397 = vunpack.c.h.b16 %v3387
      %v3398 = vunpack.c.l.b16 %v3388
      %v3399 = vunpack.c.h.b16 %v3388
      %v3400 = vunpack.c.l.b16 %v3389
      %v3401 = vunpack.c.h.b16 %v3389
      %v3402 = vpack.c.b16 %v3396, %v3394
      %v3403 = vpack.c.b16 %v3397, %v3395
      %v3404 = vpack.c.b16 %v3400, %v3398
      %v3405 = vpack.c.b16 %v3401, %v3399
      %v3411 = vsel %vm764, %v3385, 0
      %3413 = vmatprep.subr.bf16.mxu0 0
      %3414 = vmatpush1.bf16.msra.mxu0 0
      %3415 = vmatprep.subr.bf16.mxu0 0
      %3416 = vmatpush1.bf16.msra.mxu0 0
      %3417 = vmatprep.subr.bf16.mxu0 0
      %3418 = vmatpush1.bf16.msra.mxu0 0
      %3419 = vmatprep.subr.bf16.mxu0 0
      %3420 = vmatpush1.bf16.msra.mxu0 0
      %3421 = vmatprep.subr.bf16.mxu0 0
      %3422 = vmatpush1.bf16.msra.mxu0 0
      %3423 = vmatprep.subr.bf16.mxu0 0
      %3424 = vmatpush1.bf16.msra.mxu0 0
      %3425 = vmatprep.subr.bf16.mxu0 %v3405
      %3426 = vmatpush1.bf16.msra.mxu0 %v3404
      %3427 = vmatprep.subr.bf16.mxu0 %v3403
      %3428 = vmatpush1.bf16.msra.mxu0 %v3402
      %3429 = vmatprep.subr.bf16.mxu0 0
      %3430 = vmatpush2.bf16.msra.mxu0 0
      %3431 = vmatprep.subr.bf16.mxu0 0
      %3432 = vmatpush2.bf16.msra.mxu0 0
      %3433 = vmatprep.subr.bf16.mxu0 0
      %3434 = vmatpush2.bf16.msra.mxu0 0
      %3435 = vmatprep.subr.bf16.mxu0 0
      %3436 = vmatpush2.bf16.msra.mxu0 0
      %3437 = vmatprep.subr.bf16.mxu0 0
      %3438 = vmatpush2.bf16.msra.mxu0 0
      %3439 = vmatprep.subr.bf16.mxu0 0
      %3440 = vmatpush2.bf16.msra.mxu0 0
      %3441 = vmatprep.subr.bf16.mxu0 0
      %3442 = vmatpush2.bf16.msra.mxu0 0
      %3443 = vmatprep.subr.bf16.mxu0 0
      %3444 = vmatpush2.bf16.msra.mxu0 0
      %3445 = vmatprep.mubr.bf16.mxu0 0
      %3446 = vmatmul.mubr.bf16.gmra.mxu0 %v3411
      %v3447 = vpop.f32.mrf.mxu0
      %v3448 = vadd.f32 0.0, %v3447
      %v3449 = vpop.f32.mrf.mxu0
      %v3450 = vadd.f32 0.0, %v3449
      %v3451 = vpop.f32.mrf.mxu0
      %v3452 = vadd.f32 0.0, %v3451
      %v3453 = vpop.f32.mrf.mxu0
      %v3454 = vadd.f32 0.0, %v3453
      %3455 = vdwg.mxu0
      %v3456 = vld [vmem:[%s16] sm:$0x1]
      %v3457 = vld [vmem:[%s17] sm:$0x1]
      %v3458 = vsub.f32 %v3448, %v3454
      %v3460 = vlaneseq
      %v3461 = vshrl.u32 %v3460, 7
      %v3462 = vsub.s32 0, %v3461
      %v3463 = vrot.slane %v3456, %v3462
      %v3465 = vadd.f32 %v3458, %v3463
      %v3466 = vadd.f32 %v3452, %v3450
      %v3468 = vlaneseq
      %v3469 = vshrl.u32 %v3468, 7
      %v3470 = vsub.s32 0, %v3469
      %v3471 = vrot.slane %v3457, %v3470
      %v3473 = vadd.f32 %v3466, %v3471
      %v3474 = vmax.f32 %v3465, 0.0
      %v3475 = vmax.f32 %v3473, 0.0
      %v3476 = vpack.c.bf16 %v3475, %v3474
      %v3477 = vld [vmem:[%s18] sm:$0xf]
      %v3478 = vld [vmem:[%s18 + $0x4] sm:$0xf]
      %v3479 = vld [vmem:[%s18 + $0x8] sm:$0xf]
      %v3480 = vld [vmem:[%s18 + $0xc] sm:$0xf]
      %v3481 = vld [vmem:[%s18 + $0x10] sm:$0xf]
      %v3482 = vld [vmem:[%s18 + $0x14] sm:$0xf]
      %v3483 = vld [vmem:[%s18 + $0x18] sm:$0xf]
      %v3484 = vld [vmem:[%s18 + $0x1c] sm:$0xf]
      %v3485 = vld [vmem:[%s18 + $0x20] sm:$0xf]
      %v3486 = vld [vmem:[%s18 + $0x24] sm:$0xf]
      %v3487 = vld [vmem:[%s18 + $0x28] sm:$0xf]
      %v3488 = vld [vmem:[%s18 + $0x2c] sm:$0xf]
      %v3489 = vld [vmem:[%s18 + $0x30] sm:$0xf]
      %v3490 = vld [vmem:[%s18 + $0x34] sm:$0xf]
      %v3491 = vld [vmem:[%s18 + $0x38] sm:$0xf]
      %v3492 = vld [vmem:[%s18 + $0x3c] sm:$0xf]
      %v3509 = vunpack.c.l.b16 %v3477
      %v3510 = vunpack.c.l.b16 %v3478
      %v3511 = vunpack.c.l.b16 %v3479
      %v3512 = vunpack.c.l.b16 %v3480
      %v3513 = vunpack.c.l.b16 %v3481
      %v3514 = vunpack.c.l.b16 %v3482
      %v3515 = vunpack.c.l.b16 %v3483
      %v3516 = vunpack.c.l.b16 %v3484
      %v3517 = vunpack.c.l.b16 %v3485
      %v3518 = vunpack.c.l.b16 %v3486
      %v3519 = vunpack.c.l.b16 %v3487
      %v3520 = vunpack.c.l.b16 %v3488
      %v3521 = vunpack.c.l.b16 %v3489
      %v3522 = vunpack.c.l.b16 %v3490
      %v3523 = vunpack.c.l.b16 %v3491
      %v3524 = vunpack.c.l.b16 %v3492
      %v3525 = vpack.c.b16 %v3510, %v3509
      %v3526 = vpack.c.b16 %v3512, %v3511
      %v3527 = vpack.c.b16 %v3514, %v3513
      %v3528 = vpack.c.b16 %v3516, %v3515
      %v3529 = vpack.c.b16 %v3518, %v3517
      %v3530 = vpack.c.b16 %v3520, %v3519
      %v3531 = vpack.c.b16 %v3522, %v3521
      %v3532 = vpack.c.b16 %v3524, %v3523
      %3541 = vmatprep.subr.bf16.mxu0 0
      %3542 = vmatpush1.bf16.msra.mxu0 %v3532
      %3543 = vmatprep.subr.bf16.mxu0 0
      %3544 = vmatpush1.bf16.msra.mxu0 %v3531
      %3545 = vmatprep.subr.bf16.mxu0 0
      %3546 = vmatpush1.bf16.msra.mxu0 %v3530
      %3547 = vmatprep.subr.bf16.mxu0 0
      %3548 = vmatpush1.bf16.msra.mxu0 %v3529
      %3549 = vmatprep.subr.bf16.mxu0 0
      %3550 = vmatpush1.bf16.msra.mxu0 %v3528
      %3551 = vmatprep.subr.bf16.mxu0 0
      %3552 = vmatpush1.bf16.msra.mxu0 %v3527
      %3553 = vmatprep.subr.bf16.mxu0 0
      %3554 = vmatpush1.bf16.msra.mxu0 %v3526
      %3555 = vmatprep.subr.bf16.mxu0 0
      %3556 = vmatpush1.bf16.msra.mxu0 %v3525
      %3557 = vmatprep.subr.bf16.mxu0 0
      %3558 = vmatpush2.bf16.msra.mxu0 0
      %3559 = vmatprep.subr.bf16.mxu0 0
      %3560 = vmatpush2.bf16.msra.mxu0 0
      %3561 = vmatprep.subr.bf16.mxu0 0
      %3562 = vmatpush2.bf16.msra.mxu0 0
      %3563 = vmatprep.subr.bf16.mxu0 0
      %3564 = vmatpush2.bf16.msra.mxu0 0
      %3565 = vmatprep.subr.bf16.mxu0 0
      %3566 = vmatpush2.bf16.msra.mxu0 0
      %3567 = vmatprep.subr.bf16.mxu0 0
      %3568 = vmatpush2.bf16.msra.mxu0 0
      %3569 = vmatprep.subr.bf16.mxu0 0
      %3570 = vmatpush2.bf16.msra.mxu0 0
      %3571 = vmatprep.subr.bf16.mxu0 0
      %3572 = vmatpush2.bf16.msra.mxu0 0
      %3573 = vmatprep.mubr.bf16.mxu0 0
      %3574 = vmatmul.mubr.bf16.gmra.mxu0 %v3476
      %v3575 = vpop.f32.mrf.mxu0
      %v3576 = vadd.f32 0.0, %v3575
      %v3577 = vpop.f32.mrf.mxu0
      %v3578 = vpop.f32.mrf.mxu0
      %v3579 = vadd.f32 0.0, %v3578
      %v3580 = vpop.f32.mrf.mxu0
      %3581 = vdwg.mxu0
      %v3582 = vld [vmem:[%s19] sm:$0x1]
      %v3583 = vld [vmem:[%s20] sm:$0x1]
      %3585 = vrot.lane.b32.xlu0 %v3579, 96
      %v3586 = vpop.permute.xlu0 %3585
      %v3588 = vsub.f32 %v3576, %v3586
      %v3590 = vlaneseq
      %v3591 = vshrl.u32 %v3590, 7
      %v3592 = vsub.s32 0, %v3591
      %v3593 = vrot.slane %v3582, %v3592
      %v3595 = vadd.f32 %v3588, %v3593
      %3597 = vrot.lane.b32.xlu0 %v3576, 96
      %v3598 = vpop.permute.xlu0 %3597
      %v3600 = vadd.f32 %v3579, %v3598
      %v3602 = vlaneseq
      %v3603 = vshrl.u32 %v3602, 7
      %v3604 = vsub.s32 0, %v3603
      %v3605 = vrot.slane %v3583, %v3604
      %v3607 = vadd.f32 %v3600, %v3605
      %v3608 = vadd.f32 %v3305, %v3595
      %3610 = vrot.lane.b32.xlu0 %v3607, 32
      %v3611 = vpop.permute.xlu0 %3610
      %v3613 = vadd.f32 %v3310, %v3611
      %v3614 = vsel %vm764, %v3608, %v3613
      %vm3615 = vcmask 523264
      %3616 = vst.msk [vmem:[%s759] sm:$0xff] %vm3615, %v3614
      %p3617 = scmp.lt.s32.totalorder %s36, 1
      %s3618 = scalar_select %p3617, %s36, 1
      %s3619 = smul.addr %s3618, 8
      %s3620 = scalar_lea.vmem %s25, %s3619
      // Predicated region
      $region121: #{complex_transformer_forward.4} parent=119 // pred_check
        %p3621 = pneg %p584
      $region122: #{complex_transformer_forward.4} parent=119 // pred_check_branch
        %3623 = sbr.rel (%p3621) target = $region124
      $region123: #{complex_transformer_forward.4} parent=119 // pred_region
        _
      $region124: #{complex_transformer_forward.4} parent=119 // pred_fallthru
        _
    $region120: #{complex_transformer_forward.4} parent=5 // pred_fallthru
      _
    %p3624 = scmp.le.s32.totalorder 2, %s31
    // Predicated region
    $region125: #{complex_transformer_forward.4} parent=5 // pred_check
      %p3625 = pneg %p3624
    $region126: #{complex_transformer_forward.4} parent=5 // pred_check_branch
      %3627 = sbr.rel (%p3625) target = $region128
    $region127: #{complex_transformer_forward.4} parent=5 // pred_region
      %s3628 = ssub.s32 %s31, 2
      // Predicated region
      $region129: #{complex_transformer_forward.4} parent=127 // pred_check
        %p3629 = pneg %p590
      $region130: #{complex_transformer_forward.4} parent=127 // pred_check_branch
        %3631 = sbr.rel (%p3629) target = $region132
      $region131: #{complex_transformer_forward.4} parent=127 // pred_region
        %p3632 = scmp.lt.s32.totalorder %s37, 1
        %s3633 = scalar_select %p3632, %s37, 1
        %s3634 = smul.addr %s3633, 8
        %s3635 = scalar_lea.vmem %s25, %s3634
      $region132: #{complex_transformer_forward.4} parent=127 // pred_fallthru
        _
    $region128: #{complex_transformer_forward.4} parent=5 // pred_fallthru
      _
  $region6: #{complex_transformer_forward.4} parent=0 // loop_footer
    %s35 = sadd.s32 1, %s31
  $region7: #{complex_transformer_forward.4} parent=0 // loop_footer_branch
    %30 = sbr.rel target = $region3
  $region8: #{complex_transformer_forward.4} parent=0 // loop_exit
    _

</llo_original>
